<compile_context>
chip_gen: v6e
topology: v6e:2x2x1
jax: 0.10.0
libtpu: 0.0.40
codegen_flags: <defaults>
</compile_context>

<pallas_src>
import math
import functools

import jax
import jax.numpy as jnp
from jax import lax
from jax.experimental import pallas as pl
from jax.experimental.pallas import tpu as pltpu


def _layernorm_f32(x, w, b, eps=1e-5):
    xf = x.astype(jnp.float32)
    mu = jnp.mean(xf, axis=-1, keepdims=True)
    var = jnp.mean(jnp.square(xf - mu), axis=-1, keepdims=True)
    return (xf - mu) * lax.rsqrt(var + eps) * w.astype(jnp.float32) + b.astype(jnp.float32)


def _gelu(x, approx):
    if approx:
        # tanh approximation -> EUP slot (nearly free once matmuls are bf16)
        return jax.nn.gelu(x, approximate=True)
    # nn.GELU() default = exact erf-based GELU (bit-faithful to the torch module)
    return 0.5 * x * (1.0 + lax.erf(x * (1.0 / math.sqrt(2.0))))


def gpt_block_kernel(x_ref,
                     ln1w_ref, ln1b_ref,
                     wqkv_ref, bqkv_ref,
                     wprh_ref, bpr_ref,
                     ln2w_ref, ln2b_ref,
                     wfc_ref, bfc_ref,
                     wp2_ref, bp2_ref,
                     o_ref,
                     q_scr, k_scr, v_scr, x1_scr,
                     *, n_head, q_tile, h_tile, compute_dtype, approx_recip, gelu_approx):
    x = x_ref[0]                                  # (T, C)
    T, C = x.shape
    H = n_head
    hd = C // H
    cd = compute_dtype
    scale = 1.0 / math.sqrt(hd)

    x_f32 = x.astype(jnp.float32)

    # ---------- LN1 + fused QKV projection (whole sequence: K/V needed by every query tile)
    h1 = _layernorm_f32(x_f32, ln1w_ref[...], ln1b_ref[...])                 # (T, C) f32
    qkv = jnp.dot(h1.astype(cd), wqkv_ref[...],
                  preferred_element_type=jnp.float32)
    qkv = qkv + bqkv_ref[...]                                                # (T, 3C) f32

    # Head-major q/k/v written straight into VMEM scratch (no stacked live per-head values).
    # 1/sqrt(hd) is folded into q (O(T*C)) instead of scaling the O(T^2) scores.
    for h in range(H):
        q_scr[h] = (qkv[:, 0 * C + h * hd:0 * C + (h + 1) * hd] * scale).astype(cd)
        k_scr[h] = qkv[:, 1 * C + h * hd:1 * C + (h + 1) * hd].astype(cd)
        v_scr[h] = qkv[:, 2 * C + h * hd:2 * C + (h + 1) * hd].astype(cd)

    # causal mask pieces for the diagonal tile, hoisted out of all loops
    r = lax.broadcasted_iota(jnp.int32, (q_tile, q_tile), 0)
    c = lax.broadcasted_iota(jnp.int32, (q_tile, q_tile), 1)
    diag_mask = r >= c

    wprh = wprh_ref[...]                          # (H, hd, C) compute dtype
    bpr = bpr_ref[...]                            # (1, C)  f32

    n_q = T // q_tile
    unroll_kv = n_q <= 8                          # small T: fully unrolled; large T: bounded loop

    for qi in range(n_q):                         # static loop over query tiles
        q0 = qi * q_tile
        q_t = q_scr[:, q0:q0 + q_tile, :]         # (H, TQ, hd)

        m_i = jnp.full((H, q_tile, 1), -1e30, jnp.float32)
        l_i = jnp.zeros((H, q_tile, 1), jnp.float32)
        acc = jnp.zeros((H, q_tile, hd), jnp.float32)

        def kv_block(k0, m_i, l_i, acc, mask):
            k_t = k_scr[:, pl.ds(k0, q_tile), :]
            v_t = v_scr[:, pl.ds(k0, q_tile), :]
            s = jnp.einsum('hqd,hkd->hqk', q_t, k_t,
                           preferred_element_type=jnp.float32)              # (H, TQ, TK) f32
            if mask is not None:
                s = jnp.where(mask, s, -1e30)
            m_new = jnp.maximum(m_i, jnp.max(s, axis=-1, keepdims=True))
            alpha = jnp.exp(m_i - m_new)
            p = jnp.exp(s - m_new)
            l_new = alpha * l_i + jnp.sum(p, axis=-1, keepdims=True)
            acc_new = alpha * acc + jnp.einsum('hqk,hkd->hqd', p.astype(cd), v_t,
                                               preferred_element_type=jnp.float32)
            return m_new, l_new, acc_new

        if unroll_kv:
            for ki in range(qi + 1):              # tiles above the causal diagonal skipped
                mask = diag_mask if ki == qi else None
                m_i, l_i, acc = kv_block(ki * q_tile, m_i, l_i, acc, mask)
        else:
            def body(ki, carry):
                m, l, a = carry
                k0 = pl.multiple_of(ki * q_tile, q_tile)
                mask = (q0 + r) >= (ki * q_tile + c)
                return kv_block(k0, m, l, a, mask)
            m_i, l_i, acc = lax.fori_loop(0, qi + 1, body, (m_i, l_i, acc))

        attn = acc * pl.reciprocal(l_i, approx=approx_recip)                 # (H, TQ, hd) f32

        # concat-free output projection: head-batched matmul, then sum over heads
        yh = jnp.einsum('hqd,hdc->hqc', attn.astype(cd), wprh,
                        preferred_element_type=jnp.float32)                  # (H, TQ, C) f32
        y = bpr + yh[0]
        for h in range(1, H):
            y = y + yh[h]
        x1_scr[q0:q0 + q_tile, :] = x_f32[q0:q0 + q_tile, :] + y             # residual 1

    # ---------- LN2 + MLP, hoisted out of the q-tile loop: weights read once per grid step,
    # tiled over the 4C hidden dim so no (T, 4C) intermediate is ever live
    x1 = x1_scr[...]                                                         # (T, C) f32
    h2 = _layernorm_f32(x1, ln2w_ref[...], ln2b_ref[...]).astype(cd)
    n_h = (4 * C) // h_tile
    mlp = jnp.zeros((T, C), jnp.float32)
    for t in range(n_h):                          # static loop over hidden tiles
        lo = t * h_tile
        f = jnp.dot(h2, wfc_ref[:, lo:lo + h_tile], preferred_element_type=jnp.float32)
        f = f + bfc_ref[:, lo:lo + h_tile]
        f = _gelu(f, gelu_approx)
        mlp = mlp + jnp.dot(f.astype(cd), wp2_ref[lo:lo + h_tile, :],
                            preferred_element_type=jnp.float32)
    o_ref[0] = (x1 + mlp + bp2_ref[...]).astype(o_ref.dtype)                 # residual 2


def _pick_tile(n, target, align):
    d = min(n, target)
    while d >= align:
        if n % d == 0 and d % align == 0:
            return d
        d -= 1
    d = min(n, target)
    while n % d:
        d -= 1
    return d


def _pick_vmem_limit_bytes():
    # v7x: 64 MiB physical -> leave headroom; v5e/v6e: 128 MiB physical -> raise above the default.
    try:
        info = pltpu.get_tpu_info()
        cap = getattr(info, "vmem_capacity_bytes", None)
        if cap:
            return int(min(cap * 7 // 8, 112 * 1024 * 1024))
    except Exception:
        pass
    return 64 * 1024 * 1024


def gpt_block(x, params, n_head, *, q_tile=None, h_tile=None, compute_dtype=None,
              approx_recip=True, gelu_approx=False):
    B, T, C = x.shape
    assert C % n_head == 0
    hd = C // n_head
    (ln1w, ln1b, wqkv, bqkv, wpr, bpr, ln2w, ln2b, wfc, bfc, wp2, bp2) = params

    if compute_dtype is None:
        compute_dtype = jnp.bfloat16     # bf16 MXU inputs, f32 accumulation
    cd = compute_dtype

    if q_tile is None:
        q_tile = _pick_tile(T, target=256, align=8)
    if h_tile is None:
        h_tile = _pick_tile(4 * C, target=512, align=128)
    assert T % q_tile == 0 and (4 * C) % h_tile == 0

    f32 = jnp.float32
    # Wrapper-side dtype handling: big matmul weights in compute dtype (halves DMA + VMEM),
    # biases / LayerNorm params in f32 (added onto f32 accumulators).
    wqkv_c = wqkv.astype(cd)
    wprh_c = wpr.astype(cd).reshape(n_head, hd, C)    # head-major rows for concat-free out-proj
    wfc_c = wfc.astype(cd)
    wp2_c = wp2.astype(cd)
    ln1w_f, ln1b_f = ln1w.astype(f32), ln1b.astype(f32)
    ln2w_f, ln2b_f = ln2w.astype(f32), ln2b.astype(f32)
    bqkv_f, bpr_f, bfc_f, bp2_f = (a.astype(f32) for a in (bqkv, bpr, bfc, bp2))

    cost = pl.CostEstimate(
        flops=int(B * (24 * T * C * C + 2 * T * T * C)),
        transcendentals=int(B * (4 * T * C + n_head * T * T // 2)),
        bytes_accessed=int(2 * x.size * x.dtype.itemsize
                           + 12 * C * C * jnp.dtype(cd).itemsize),
    )
    vmem_limit = _pick_vmem_limit_bytes()

    kernel = functools.partial(gpt_block_kernel, n_head=n_head, q_tile=q_tile, h_tile=h_tile,
                               compute_dtype=cd, approx_recip=approx_recip,
                               gelu_approx=gelu_approx)

    def build(single_buffer_weights):
        def wspec(shape):
            idx = lambda b, _n=len(shape): (0,) * _n
            if single_buffer_weights:
                # constant-index blocks: double buffering is pure VMEM waste
                return pl.BlockSpec(shape, idx, pipeline_mode=pl.Buffered(buffer_count=1))
            return pl.BlockSpec(shape, idx)

        in_specs = [
            pl.BlockSpec((1, T, C), lambda b: (b, 0, 0)),               # x (pipelined over batch)
            wspec((1, C)), wspec((1, C)),                               # ln1 w,b
            wspec((C, 3 * C)), wspec((1, 3 * C)),                       # c_attn W,b
            wspec((n_head, hd, C)), wspec((1, C)),                      # attn c_proj W (head-major), b
            wspec((1, C)), wspec((1, C)),                               # ln2 w,b
            wspec((C, 4 * C)), wspec((1, 4 * C)),                       # mlp c_fc W,b
            wspec((4 * C, C)), wspec((1, C)),                           # mlp c_proj W,b
        ]
        out_spec = pl.BlockSpec((1, T, C), lambda b: (b, 0, 0))

        return pl.pallas_call(
            kernel,
            out_shape=jax.ShapeDtypeStruct((B, T, C), x.dtype),
            grid=(B,),
            in_specs=in_specs,
            out_specs=out_spec,
            scratch_shapes=[
                pltpu.VMEM((n_head, T, hd), cd),        # q (head-major)
                pltpu.VMEM((n_head, T, hd), cd),        # k
                pltpu.VMEM((n_head, T, hd), cd),        # v
                pltpu.VMEM((T, C), jnp.float32),        # attention residual (x1)
            ],
            compiler_params=pltpu.CompilerParams(
                dimension_semantics=("parallel",),
                vmem_limit_bytes=vmem_limit),
            cost_estimate=cost,
        )(x, ln1w_f, ln1b_f, wqkv_c, bqkv_f, wprh_c, bpr_f,
          ln2w_f, ln2b_f, wfc_c, bfc_f, wp2_c, bp2_f)

    try:
        return build(True)
    except Exception:
        # pipeline_mode=pl.Buffered(1) not supported by this jax version: fall back to defaults
        return build(False)


# ----------------- pure-JAX reference (for verification) -----------------
def gpt_block_ref(x, params, n_head):
    (ln1w, ln1b, wqkv, bqkv, wpr, bpr, ln2w, ln2b, wfc, bfc, wp2, bp2) = params
    B, T, C = x.shape
    hd = C // n_head

    def ln(v, w, b):
        mu = v.mean(-1, keepdims=True)
        var = ((v - mu) ** 2).mean(-1, keepdims=True)
        return (v - mu) / jnp.sqrt(var + 1e-5) * w[0] + b[0]

    h = ln(x, ln1w, ln1b)
    qkv = h @ wqkv + bqkv[0]
    q, k, v = jnp.split(qkv, 3, axis=-1)
    q = q.reshape(B, T, n_head, hd).transpose(0, 2, 1, 3)
    k = k.reshape(B, T, n_head, hd).transpose(0, 2, 1, 3)
    v = v.reshape(B, T, n_head, hd).transpose(0, 2, 1, 3)
    s = jnp.einsum("bhtd,bhsd->bhts", q, k) / math.sqrt(hd)
    mask = jnp.tril(jnp.ones((T, T), dtype=bool))
    s = jnp.where(mask, s, -1e30)
    p = jax.nn.softmax(s, axis=-1)
    y = jnp.einsum("bhts,bhsd->bhtd", p, v).transpose(0, 2, 1, 3).reshape(B, T, C)
    x = x + (y @ wpr + bpr[0])
    h2 = ln(x, ln2w, ln2b)
    f = h2 @ wfc + bfc[0]
    f = 0.5 * f * (1.0 + lax.erf(f / math.sqrt(2.0)))
    x = x + (f @ wp2 + bp2[0])
    return x


if __name__ == "__main__":
    # small but non-trivial: 2 query tiles (causal tile-skip path) and 2 MLP hidden tiles
    B, T, C, H = 2, 16, 64, 4
    key = jax.random.PRNGKey(0)
    ks = jax.random.split(key, 8)

    x = jax.random.normal(ks[0], (B, T, C), dtype=jnp.float32)

    s = 0.02
    params = (
        jnp.ones((1, C), jnp.float32),                                   # ln1 weight
        jnp.zeros((1, C), jnp.float32),                                  # ln1 bias
        s * jax.random.normal(ks[1], (C, 3 * C), jnp.float32),           # c_attn W (in,out)
        s * jax.random.normal(ks[2], (1, 3 * C), jnp.float32),           # c_attn b
        s * jax.random.normal(ks[3], (C, C), jnp.float32),               # attn c_proj W
        jnp.zeros((1, C), jnp.float32),                                  # attn c_proj b
        jnp.ones((1, C), jnp.float32),                                   # ln2 weight
        jnp.zeros((1, C), jnp.float32),                                  # ln2 bias
        s * jax.random.normal(ks[4], (C, 4 * C), jnp.float32),           # mlp c_fc W
        s * jax.random.normal(ks[5], (1, 4 * C), jnp.float32),           # mlp c_fc b
        s * jax.random.normal(ks[6], (4 * C, C), jnp.float32),           # mlp c_proj W
        jnp.zeros((1, C), jnp.float32),                                  # mlp c_proj b
    )

    ref = gpt_block_ref(x, params, H)

    # exact path (f32 MXU inputs, exact reciprocal / GELU): tight tolerance vs reference
    out_f32 = gpt_block(x, params, H, q_tile=8, h_tile=128,
                        compute_dtype=jnp.float32, approx_recip=False)
    out_f32 = jax.block_until_ready(out_f32)
    assert out_f32.shape == (B, T, C)
    err = float(jnp.max(jnp.abs(out_f32 - ref)))
    assert jnp.allclose(out_f32, ref, atol=1e-4, rtol=1e-4), \
        f"f32 path mismatch vs reference (max abs err {err})"

    # default fast path (bf16 MXU inputs, f32 accumulation, approx reciprocal): loose tolerance
    out_fast = gpt_block(x, params, H, q_tile=8, h_tile=128)
    out_fast = jax.block_until_ready(out_fast)
    err_fast = float(jnp.max(jnp.abs(out_fast - ref)))
    assert jnp.allclose(out_fast, ref, atol=5e-2, rtol=5e-2), \
        f"bf16 path mismatch vs reference (max abs err {err_fast})"

    print("KERNEL_OK")
</pallas_src>

<mosaic_0001>
module attributes {stable_mosaic.version = 11 : i64} {
  func.func @gpt_block_kernel(%arg0: i32, %arg1: memref<1x16x64xf32, #tpu.memory_space<vmem>>, %arg2: memref<1x64xf32, #tpu.memory_space<vmem>>, %arg3: memref<1x64xf32, #tpu.memory_space<vmem>>, %arg4: memref<64x192xf32, #tpu.memory_space<vmem>>, %arg5: memref<1x192xf32, #tpu.memory_space<vmem>>, %arg6: memref<4x16x64xf32, #tpu.memory_space<vmem>>, %arg7: memref<1x64xf32, #tpu.memory_space<vmem>>, %arg8: memref<1x64xf32, #tpu.memory_space<vmem>>, %arg9: memref<1x64xf32, #tpu.memory_space<vmem>>, %arg10: memref<64x256xf32, #tpu.memory_space<vmem>>, %arg11: memref<1x256xf32, #tpu.memory_space<vmem>>, %arg12: memref<256x64xf32, #tpu.memory_space<vmem>>, %arg13: memref<1x64xf32, #tpu.memory_space<vmem>>, %arg14: memref<1x16x64xf32, #tpu.memory_space<vmem>>, %arg15: memref<4x16x16xf32, #tpu.memory_space<vmem>>, %arg16: memref<4x16x16xf32, #tpu.memory_space<vmem>>, %arg17: memref<4x16x16xf32, #tpu.memory_space<vmem>>, %arg18: memref<16x64xf32, #tpu.memory_space<vmem>>) attributes {dimension_semantics = [#tpu.dimension_semantics<parallel>], iteration_bounds = array<i64: 2>, scalar_prefetch = 0 : i64, scratch_operands = 4 : i64, tpu.core_type = #tpu.core_type<tc>, window_params = [{transform_indices = @transform_0, window_bounds = array<i64: 1, 16, 64>}, {pipeline_mode = #tpu.pipeline_mode<synchronous>, transform_indices = @transform_1, window_bounds = array<i64: 1, 64>}, {pipeline_mode = #tpu.pipeline_mode<synchronous>, transform_indices = @transform_2, window_bounds = array<i64: 1, 64>}, {pipeline_mode = #tpu.pipeline_mode<synchronous>, transform_indices = @transform_3, window_bounds = array<i64: 64, 192>}, {pipeline_mode = #tpu.pipeline_mode<synchronous>, transform_indices = @transform_4, window_bounds = array<i64: 1, 192>}, {pipeline_mode = #tpu.pipeline_mode<synchronous>, transform_indices = @transform_5, window_bounds = array<i64: 4, 16, 64>}, {pipeline_mode = #tpu.pipeline_mode<synchronous>, transform_indices = @transform_6, window_bounds = array<i64: 1, 64>}, {pipeline_mode = #tpu.pipeline_mode<synchronous>, transform_indices = @transform_7, window_bounds = array<i64: 1, 64>}, {pipeline_mode = #tpu.pipeline_mode<synchronous>, transform_indices = @transform_8, window_bounds = array<i64: 1, 64>}, {pipeline_mode = #tpu.pipeline_mode<synchronous>, transform_indices = @transform_9, window_bounds = array<i64: 64, 256>}, {pipeline_mode = #tpu.pipeline_mode<synchronous>, transform_indices = @transform_10, window_bounds = array<i64: 1, 256>}, {pipeline_mode = #tpu.pipeline_mode<synchronous>, transform_indices = @transform_11, window_bounds = array<i64: 256, 64>}, {pipeline_mode = #tpu.pipeline_mode<synchronous>, transform_indices = @transform_12, window_bounds = array<i64: 1, 64>}, {transform_indices = @transform_13, window_bounds = array<i64: 1, 16, 64>}]} {
    %c0 = arith.constant 0 : index
    %c0_0 = arith.constant 0 : index
    %c0_1 = arith.constant 0 : index
    %0 = vector.load %arg1[%c0, %c0_0, %c0_1] : memref<1x16x64xf32, #tpu.memory_space<vmem>>, vector<1x16x64xf32>
    %1 = vector.shape_cast %0 : vector<1x16x64xf32> to vector<16x64xf32>
    %c0_2 = arith.constant 0 : index
    %c0_3 = arith.constant 0 : index
    %2 = vector.load %arg2[%c0_2, %c0_3] : memref<1x64xf32, #tpu.memory_space<vmem>>, vector<1x64xf32>
    %c0_4 = arith.constant 0 : index
    %c0_5 = arith.constant 0 : index
    %3 = vector.load %arg3[%c0_4, %c0_5] : memref<1x64xf32, #tpu.memory_space<vmem>>, vector<1x64xf32>
    %cst = arith.constant dense<0.000000e+00> : vector<16xf32>
    %4 = vector.multi_reduction <add>, %1, %cst [1] : vector<16x64xf32> to vector<16xf32>
    %5 = vector.shape_cast %4 : vector<16xf32> to vector<16x1xf32>
    %cst_6 = arith.constant 6.400000e+01 : f32
    %6 = vector.broadcast %cst_6 : f32 to vector<16x1xf32>
    %7 = arith.divf %5, %6 : vector<16x1xf32>
    %8 = vector.broadcast %7 : vector<16x1xf32> to vector<16x64xf32>
    %9 = arith.subf %1, %8 : vector<16x64xf32>
    %10 = arith.mulf %9, %9 : vector<16x64xf32>
    %cst_7 = arith.constant dense<0.000000e+00> : vector<16xf32>
    %11 = vector.multi_reduction <add>, %10, %cst_7 [1] : vector<16x64xf32> to vector<16xf32>
    %12 = vector.shape_cast %11 : vector<16xf32> to vector<16x1xf32>
    %cst_8 = arith.constant 6.400000e+01 : f32
    %13 = vector.broadcast %cst_8 : f32 to vector<16x1xf32>
    %14 = arith.divf %12, %13 : vector<16x1xf32>
    %15 = vector.broadcast %7 : vector<16x1xf32> to vector<16x64xf32>
    %16 = arith.subf %1, %15 : vector<16x64xf32>
    %cst_9 = arith.constant 9.99999974E-6 : f32
    %17 = vector.broadcast %cst_9 : f32 to vector<16x1xf32>
    %18 = arith.addf %14, %17 : vector<16x1xf32>
    %19 = math.rsqrt %18 : vector<16x1xf32>
    %20 = vector.broadcast %19 : vector<16x1xf32> to vector<16x64xf32>
    %21 = arith.mulf %16, %20 : vector<16x64xf32>
    %22 = vector.broadcast %2 : vector<1x64xf32> to vector<16x64xf32>
    %23 = arith.mulf %21, %22 : vector<16x64xf32>
    %24 = vector.broadcast %3 : vector<1x64xf32> to vector<16x64xf32>
    %25 = arith.addf %23, %24 : vector<16x64xf32>
    %c0_10 = arith.constant 0 : index
    %c0_11 = arith.constant 0 : index
    %26 = vector.load %arg4[%c0_10, %c0_11] : memref<64x192xf32, #tpu.memory_space<vmem>>, vector<64x192xf32>
    %cst_12 = arith.constant dense<0.000000e+00> : vector<16x192xf32>
    %27 = tpu.matmul %25, %26, %cst_12 {dimension_numbers = #tpu.dot_dimension_numbers<[1], [0], [0], [1], [0, 0, 1, 1], [], []>} : vector<16x64xf32>, vector<64x192xf32>, vector<16x192xf32> -> vector<16x192xf32>
    %c0_13 = arith.constant 0 : index
    %c0_14 = arith.constant 0 : index
    %28 = vector.load %arg5[%c0_13, %c0_14] : memref<1x192xf32, #tpu.memory_space<vmem>>, vector<1x192xf32>
    %29 = vector.broadcast %28 : vector<1x192xf32> to vector<16x192xf32>
    %30 = arith.addf %27, %29 : vector<16x192xf32>
    %31 = vector.extract_strided_slice %30 {offsets = [0, 0], sizes = [16, 16], strides = [1, 1]} : vector<16x192xf32> to vector<16x16xf32>
    %cst_15 = arith.constant 2.500000e-01 : f32
    %32 = vector.broadcast %cst_15 : f32 to vector<16x16xf32>
    %33 = arith.mulf %31, %32 : vector<16x16xf32>
    %c0_16 = arith.constant 0 : index
    %c0_17 = arith.constant 0 : index
    %c0_18 = arith.constant 0 : index
    %34 = vector.load %arg15[%c0_16, %c0_17, %c0_18] : memref<4x16x16xf32, #tpu.memory_space<vmem>>, vector<1x16x16xf32>
    %35 = vector.shape_cast %34 : vector<1x16x16xf32> to vector<16x16xf32>
    %36 = vector.shape_cast %33 : vector<16x16xf32> to vector<1x16x16xf32>
    tpu.vector_store %arg15[%c0_16, %c0_17, %c0_18], %36 {strides = array<i32>} : memref<4x16x16xf32, #tpu.memory_space<vmem>>, vector<1x16x16xf32>,
    %37 = vector.extract_strided_slice %30 {offsets = [0, 64], sizes = [16, 16], strides = [1, 1]} : vector<16x192xf32> to vector<16x16xf32>
    %c0_19 = arith.constant 0 : index
    %c0_20 = arith.constant 0 : index
    %c0_21 = arith.constant 0 : index
    %38 = vector.load %arg16[%c0_19, %c0_20, %c0_21] : memref<4x16x16xf32, #tpu.memory_space<vmem>>, vector<1x16x16xf32>
    %39 = vector.shape_cast %38 : vector<1x16x16xf32> to vector<16x16xf32>
    %40 = vector.shape_cast %37 : vector<16x16xf32> to vector<1x16x16xf32>
    tpu.vector_store %arg16[%c0_19, %c0_20, %c0_21], %40 {strides = array<i32>} : memref<4x16x16xf32, #tpu.memory_space<vmem>>, vector<1x16x16xf32>,
    %41 = vector.extract_strided_slice %30 {offsets = [0, 128], sizes = [16, 16], strides = [1, 1]} : vector<16x192xf32> to vector<16x16xf32>
    %c0_22 = arith.constant 0 : index
    %c0_23 = arith.constant 0 : index
    %c0_24 = arith.constant 0 : index
    %42 = vector.load %arg17[%c0_22, %c0_23, %c0_24] : memref<4x16x16xf32, #tpu.memory_space<vmem>>, vector<1x16x16xf32>
    %43 = vector.shape_cast %42 : vector<1x16x16xf32> to vector<16x16xf32>
    %44 = vector.shape_cast %41 : vector<16x16xf32> to vector<1x16x16xf32>
    tpu.vector_store %arg17[%c0_22, %c0_23, %c0_24], %44 {strides = array<i32>} : memref<4x16x16xf32, #tpu.memory_space<vmem>>, vector<1x16x16xf32>,
    %45 = vector.extract_strided_slice %30 {offsets = [0, 16], sizes = [16, 16], strides = [1, 1]} : vector<16x192xf32> to vector<16x16xf32>
    %cst_25 = arith.constant 2.500000e-01 : f32
    %46 = vector.broadcast %cst_25 : f32 to vector<16x16xf32>
    %47 = arith.mulf %45, %46 : vector<16x16xf32>
    %c1 = arith.constant 1 : index
    %c0_26 = arith.constant 0 : index
    %c0_27 = arith.constant 0 : index
    %48 = vector.load %arg15[%c1, %c0_26, %c0_27] : memref<4x16x16xf32, #tpu.memory_space<vmem>>, vector<1x16x16xf32>
    %49 = vector.shape_cast %48 : vector<1x16x16xf32> to vector<16x16xf32>
    %50 = vector.shape_cast %47 : vector<16x16xf32> to vector<1x16x16xf32>
    tpu.vector_store %arg15[%c1, %c0_26, %c0_27], %50 {strides = array<i32>} : memref<4x16x16xf32, #tpu.memory_space<vmem>>, vector<1x16x16xf32>,
    %51 = vector.extract_strided_slice %30 {offsets = [0, 80], sizes = [16, 16], strides = [1, 1]} : vector<16x192xf32> to vector<16x16xf32>
    %c1_28 = arith.constant 1 : index
    %c0_29 = arith.constant 0 : index
    %c0_30 = arith.constant 0 : index
    %52 = vector.load %arg16[%c1_28, %c0_29, %c0_30] : memref<4x16x16xf32, #tpu.memory_space<vmem>>, vector<1x16x16xf32>
    %53 = vector.shape_cast %52 : vector<1x16x16xf32> to vector<16x16xf32>
    %54 = vector.shape_cast %51 : vector<16x16xf32> to vector<1x16x16xf32>
    tpu.vector_store %arg16[%c1_28, %c0_29, %c0_30], %54 {strides = array<i32>} : memref<4x16x16xf32, #tpu.memory_space<vmem>>, vector<1x16x16xf32>,
    %55 = vector.extract_strided_slice %30 {offsets = [0, 144], sizes = [16, 16], strides = [1, 1]} : vector<16x192xf32> to vector<16x16xf32>
    %c1_31 = arith.constant 1 : index
    %c0_32 = arith.constant 0 : index
    %c0_33 = arith.constant 0 : index
    %56 = vector.load %arg17[%c1_31, %c0_32, %c0_33] : memref<4x16x16xf32, #tpu.memory_space<vmem>>, vector<1x16x16xf32>
    %57 = vector.shape_cast %56 : vector<1x16x16xf32> to vector<16x16xf32>
    %58 = vector.shape_cast %55 : vector<16x16xf32> to vector<1x16x16xf32>
    tpu.vector_store %arg17[%c1_31, %c0_32, %c0_33], %58 {strides = array<i32>} : memref<4x16x16xf32, #tpu.memory_space<vmem>>, vector<1x16x16xf32>,
    %59 = vector.extract_strided_slice %30 {offsets = [0, 32], sizes = [16, 16], strides = [1, 1]} : vector<16x192xf32> to vector<16x16xf32>
    %cst_34 = arith.constant 2.500000e-01 : f32
    %60 = vector.broadcast %cst_34 : f32 to vector<16x16xf32>
    %61 = arith.mulf %59, %60 : vector<16x16xf32>
    %c2 = arith.constant 2 : index
    %c0_35 = arith.constant 0 : index
    %c0_36 = arith.constant 0 : index
    %62 = vector.load %arg15[%c2, %c0_35, %c0_36] : memref<4x16x16xf32, #tpu.memory_space<vmem>>, vector<1x16x16xf32>
    %63 = vector.shape_cast %62 : vector<1x16x16xf32> to vector<16x16xf32>
    %64 = vector.shape_cast %61 : vector<16x16xf32> to vector<1x16x16xf32>
    tpu.vector_store %arg15[%c2, %c0_35, %c0_36], %64 {strides = array<i32>} : memref<4x16x16xf32, #tpu.memory_space<vmem>>, vector<1x16x16xf32>,
    %65 = vector.extract_strided_slice %30 {offsets = [0, 96], sizes = [16, 16], strides = [1, 1]} : vector<16x192xf32> to vector<16x16xf32>
    %c2_37 = arith.constant 2 : index
    %c0_38 = arith.constant 0 : index
    %c0_39 = arith.constant 0 : index
    %66 = vector.load %arg16[%c2_37, %c0_38, %c0_39] : memref<4x16x16xf32, #tpu.memory_space<vmem>>, vector<1x16x16xf32>
    %67 = vector.shape_cast %66 : vector<1x16x16xf32> to vector<16x16xf32>
    %68 = vector.shape_cast %65 : vector<16x16xf32> to vector<1x16x16xf32>
    tpu.vector_store %arg16[%c2_37, %c0_38, %c0_39], %68 {strides = array<i32>} : memref<4x16x16xf32, #tpu.memory_space<vmem>>, vector<1x16x16xf32>,
    %69 = vector.extract_strided_slice %30 {offsets = [0, 160], sizes = [16, 16], strides = [1, 1]} : vector<16x192xf32> to vector<16x16xf32>
    %c2_40 = arith.constant 2 : index
    %c0_41 = arith.constant 0 : index
    %c0_42 = arith.constant 0 : index
    %70 = vector.load %arg17[%c2_40, %c0_41, %c0_42] : memref<4x16x16xf32, #tpu.memory_space<vmem>>, vector<1x16x16xf32>
    %71 = vector.shape_cast %70 : vector<1x16x16xf32> to vector<16x16xf32>
    %72 = vector.shape_cast %69 : vector<16x16xf32> to vector<1x16x16xf32>
    tpu.vector_store %arg17[%c2_40, %c0_41, %c0_42], %72 {strides = array<i32>} : memref<4x16x16xf32, #tpu.memory_space<vmem>>, vector<1x16x16xf32>,
    %73 = vector.extract_strided_slice %30 {offsets = [0, 48], sizes = [16, 16], strides = [1, 1]} : vector<16x192xf32> to vector<16x16xf32>
    %cst_43 = arith.constant 2.500000e-01 : f32
    %74 = vector.broadcast %cst_43 : f32 to vector<16x16xf32>
    %75 = arith.mulf %73, %74 : vector<16x16xf32>
    %c3 = arith.constant 3 : index
    %c0_44 = arith.constant 0 : index
    %c0_45 = arith.constant 0 : index
    %76 = vector.load %arg15[%c3, %c0_44, %c0_45] : memref<4x16x16xf32, #tpu.memory_space<vmem>>, vector<1x16x16xf32>
    %77 = vector.shape_cast %76 : vector<1x16x16xf32> to vector<16x16xf32>
    %78 = vector.shape_cast %75 : vector<16x16xf32> to vector<1x16x16xf32>
    tpu.vector_store %arg15[%c3, %c0_44, %c0_45], %78 {strides = array<i32>} : memref<4x16x16xf32, #tpu.memory_space<vmem>>, vector<1x16x16xf32>,
    %79 = vector.extract_strided_slice %30 {offsets = [0, 112], sizes = [16, 16], strides = [1, 1]} : vector<16x192xf32> to vector<16x16xf32>
    %c3_46 = arith.constant 3 : index
    %c0_47 = arith.constant 0 : index
    %c0_48 = arith.constant 0 : index
    %80 = vector.load %arg16[%c3_46, %c0_47, %c0_48] : memref<4x16x16xf32, #tpu.memory_space<vmem>>, vector<1x16x16xf32>
    %81 = vector.shape_cast %80 : vector<1x16x16xf32> to vector<16x16xf32>
    %82 = vector.shape_cast %79 : vector<16x16xf32> to vector<1x16x16xf32>
    tpu.vector_store %arg16[%c3_46, %c0_47, %c0_48], %82 {strides = array<i32>} : memref<4x16x16xf32, #tpu.memory_space<vmem>>, vector<1x16x16xf32>,
    %83 = vector.extract_strided_slice %30 {offsets = [0, 176], sizes = [16, 16], strides = [1, 1]} : vector<16x192xf32> to vector<16x16xf32>
    %c3_49 = arith.constant 3 : index
    %c0_50 = arith.constant 0 : index
    %c0_51 = arith.constant 0 : index
    %84 = vector.load %arg17[%c3_49, %c0_50, %c0_51] : memref<4x16x16xf32, #tpu.memory_space<vmem>>, vector<1x16x16xf32>
    %85 = vector.shape_cast %84 : vector<1x16x16xf32> to vector<16x16xf32>
    %86 = vector.shape_cast %83 : vector<16x16xf32> to vector<1x16x16xf32>
    tpu.vector_store %arg17[%c3_49, %c0_50, %c0_51], %86 {strides = array<i32>} : memref<4x16x16xf32, #tpu.memory_space<vmem>>, vector<1x16x16xf32>,
    %87 = tpu.iota {dimensions = array<i32: 0>} : vector<8x8xi32>
    %88 = tpu.iota {dimensions = array<i32: 1>} : vector<8x8xi32>
    %89 = arith.cmpi sge, %87, %88 : vector<8x8xi32>
    %c0_52 = arith.constant 0 : index
    %c0_53 = arith.constant 0 : index
    %c0_54 = arith.constant 0 : index
    %90 = vector.load %arg6[%c0_52, %c0_53, %c0_54] : memref<4x16x64xf32, #tpu.memory_space<vmem>>, vector<4x16x64xf32>
    %c0_55 = arith.constant 0 : index
    %c0_56 = arith.constant 0 : index
    %91 = vector.load %arg7[%c0_55, %c0_56] : memref<1x64xf32, #tpu.memory_space<vmem>>, vector<1x64xf32>
    %c0_57 = arith.constant 0 : index
    %c0_58 = arith.constant 0 : index
    %c0_59 = arith.constant 0 : index
    %92 = vector.load %arg15[%c0_57, %c0_58, %c0_59] : memref<4x16x16xf32, #tpu.memory_space<vmem>>, vector<4x8x16xf32>
    %cst_60 = arith.constant -1.000000e+30 : f32
    %93 = vector.broadcast %cst_60 : f32 to vector<4x8x1xf32>
    %cst_61 = arith.constant 0.000000e+00 : f32
    %94 = vector.broadcast %cst_61 : f32 to vector<4x8x1xf32>
    %cst_62 = arith.constant 0.000000e+00 : f32
    %95 = vector.broadcast %cst_62 : f32 to vector<4x8x16xf32>
    %c0_63 = arith.constant 0 : index
    %c0_64 = arith.constant 0 : index
    %c0_65 = arith.constant 0 : index
    %96 = vector.load %arg16[%c0_63, %c0_64, %c0_65] : memref<4x16x16xf32, #tpu.memory_space<vmem>>, vector<4x8x16xf32>
    %c0_66 = arith.constant 0 : index
    %c0_67 = arith.constant 0 : index
    %c0_68 = arith.constant 0 : index
    %97 = vector.load %arg17[%c0_66, %c0_67, %c0_68] : memref<4x16x16xf32, #tpu.memory_space<vmem>>, vector<4x8x16xf32>
    "tpu.trace_start"() <{level = 10 : i32, message = "hqd,hkd->hqk"}> : () -> ()
    %cst_69 = arith.constant dense<0.000000e+00> : vector<4x8x8xf32>
    %98 = tpu.matmul %92, %96, %cst_69 {dimension_numbers = #tpu.dot_dimension_numbers<[2], [2], [1], [1], [0, 0, 0, 1, 1, 1], [0], [0]>} : vector<4x8x16xf32>, vector<4x8x16xf32>, vector<4x8x8xf32> -> vector<4x8x8xf32>
    %cst_70 = arith.constant -1.000000e+30 : f32
    "tpu.trace_stop"() : () -> ()
    %99 = vector.shape_cast %89 : vector<8x8xi1> to vector<1x8x8xi1>
    %100 = vector.broadcast %99 : vector<1x8x8xi1> to vector<4x8x8xi1>
    %101 = vector.broadcast %cst_70 : f32 to vector<4x8x8xf32>
    %102 = arith.select %100, %98, %101 : vector<4x8x8xi1>, vector<4x8x8xf32>
    %cst_71 = arith.constant dense<0xFF800000> : vector<4x8xf32>
    %103 = vector.multi_reduction <maximumf>, %102, %cst_71 [2] : vector<4x8x8xf32> to vector<4x8xf32>
    %104 = vector.shape_cast %103 : vector<4x8xf32> to vector<4x8x1xf32>
    %105 = arith.maximumf %93, %104 : vector<4x8x1xf32>
    %106 = arith.subf %93, %105 : vector<4x8x1xf32>
    %107 = math.exp %106 : vector<4x8x1xf32>
    %108 = vector.broadcast %105 : vector<4x8x1xf32> to vector<4x8x8xf32>
    %109 = arith.subf %102, %108 : vector<4x8x8xf32>
    %110 = math.exp %109 : vector<4x8x8xf32>
    %111 = arith.mulf %107, %94 : vector<4x8x1xf32>
    %cst_72 = arith.constant dense<0.000000e+00> : vector<4x8xf32>
    %112 = vector.multi_reduction <add>, %110, %cst_72 [2] : vector<4x8x8xf32> to vector<4x8xf32>
    %113 = vector.shape_cast %112 : vector<4x8xf32> to vector<4x8x1xf32>
    %114 = arith.addf %111, %113 : vector<4x8x1xf32>
    %115 = vector.broadcast %107 : vector<4x8x1xf32> to vector<4x8x16xf32>
    %116 = arith.mulf %115, %95 : vector<4x8x16xf32>
    "tpu.trace_start"() <{level = 10 : i32, message = "hqk,hkd->hqd"}> : () -> ()
    %cst_73 = arith.constant dense<0.000000e+00> : vector<4x8x16xf32>
    %117 = tpu.matmul %110, %97, %cst_73 {dimension_numbers = #tpu.dot_dimension_numbers<[2], [1], [1], [2], [0, 0, 0, 1, 1, 2], [0], [0]>} : vector<4x8x8xf32>, vector<4x8x16xf32>, vector<4x8x16xf32> -> vector<4x8x16xf32>
    "tpu.trace_stop"() : () -> ()
    %118 = arith.addf %116, %117 : vector<4x8x16xf32>
    %119 = tpu.reciprocal %114 : vector<4x8x1xf32> -> vector<4x8x1xf32>
    %120 = vector.broadcast %119 : vector<4x8x1xf32> to vector<4x8x16xf32>
    %121 = arith.mulf %118, %120 : vector<4x8x16xf32>
    "tpu.trace_start"() <{level = 10 : i32, message = "hqd,hdc->hqc"}> : () -> ()
    %cst_74 = arith.constant dense<0.000000e+00> : vector<4x8x64xf32>
    %122 = tpu.matmul %121, %90, %cst_74 {dimension_numbers = #tpu.dot_dimension_numbers<[2], [1], [1], [2], [0, 0, 0, 1, 1, 2], [0], [0]>} : vector<4x8x16xf32>, vector<4x16x64xf32>, vector<4x8x64xf32> -> vector<4x8x64xf32>
    "tpu.trace_stop"() : () -> ()
    %123 = vector.extract_strided_slice %122 {offsets = [0, 0, 0], sizes = [1, 8, 64], strides = [1, 1, 1]} : vector<4x8x64xf32> to vector<1x8x64xf32>
    %124 = vector.shape_cast %123 : vector<1x8x64xf32> to vector<8x64xf32>
    %125 = vector.broadcast %91 : vector<1x64xf32> to vector<8x64xf32>
    %126 = arith.addf %125, %124 : vector<8x64xf32>
    %127 = vector.extract_strided_slice %122 {offsets = [1, 0, 0], sizes = [1, 8, 64], strides = [1, 1, 1]} : vector<4x8x64xf32> to vector<1x8x64xf32>
    %128 = vector.shape_cast %127 : vector<1x8x64xf32> to vector<8x64xf32>
    %129 = arith.addf %126, %128 : vector<8x64xf32>
    %130 = vector.extract_strided_slice %122 {offsets = [2, 0, 0], sizes = [1, 8, 64], strides = [1, 1, 1]} : vector<4x8x64xf32> to vector<1x8x64xf32>
    %131 = vector.shape_cast %130 : vector<1x8x64xf32> to vector<8x64xf32>
    %132 = arith.addf %129, %131 : vector<8x64xf32>
    %133 = vector.extract_strided_slice %122 {offsets = [3, 0, 0], sizes = [1, 8, 64], strides = [1, 1, 1]} : vector<4x8x64xf32> to vector<1x8x64xf32>
    %134 = vector.shape_cast %133 : vector<1x8x64xf32> to vector<8x64xf32>
    %135 = arith.addf %132, %134 : vector<8x64xf32>
    %136 = vector.extract_strided_slice %1 {offsets = [0, 0], sizes = [8, 64], strides = [1, 1]} : vector<16x64xf32> to vector<8x64xf32>
    %137 = arith.addf %136, %135 : vector<8x64xf32>
    %c0_75 = arith.constant 0 : index
    %c0_76 = arith.constant 0 : index
    %138 = vector.load %arg18[%c0_75, %c0_76] : memref<16x64xf32, #tpu.memory_space<vmem>>, vector<8x64xf32>
    tpu.vector_store %arg18[%c0_75, %c0_76], %137 {strides = array<i32>} : memref<16x64xf32, #tpu.memory_space<vmem>>, vector<8x64xf32>,
    %c0_77 = arith.constant 0 : index
    %c8 = arith.constant 8 : index
    %c0_78 = arith.constant 0 : index
    %139 = vector.load %arg15[%c0_77, %c8, %c0_78] : memref<4x16x16xf32, #tpu.memory_space<vmem>>, vector<4x8x16xf32>
    %cst_79 = arith.constant -1.000000e+30 : f32
    %140 = vector.broadcast %cst_79 : f32 to vector<4x8x1xf32>
    %cst_80 = arith.constant 0.000000e+00 : f32
    %141 = vector.broadcast %cst_80 : f32 to vector<4x8x1xf32>
    %cst_81 = arith.constant 0.000000e+00 : f32
    %142 = vector.broadcast %cst_81 : f32 to vector<4x8x16xf32>
    %c0_82 = arith.constant 0 : index
    %c0_83 = arith.constant 0 : index
    %c0_84 = arith.constant 0 : index
    %143 = vector.load %arg16[%c0_82, %c0_83, %c0_84] : memref<4x16x16xf32, #tpu.memory_space<vmem>>, vector<4x8x16xf32>
    %c0_85 = arith.constant 0 : index
    %c0_86 = arith.constant 0 : index
    %c0_87 = arith.constant 0 : index
    %144 = vector.load %arg17[%c0_85, %c0_86, %c0_87] : memref<4x16x16xf32, #tpu.memory_space<vmem>>, vector<4x8x16xf32>
    "tpu.trace_start"() <{level = 10 : i32, message = "hqd,hkd->hqk"}> : () -> ()
    %cst_88 = arith.constant dense<0.000000e+00> : vector<4x8x8xf32>
    %145 = tpu.matmul %139, %143, %cst_88 {dimension_numbers = #tpu.dot_dimension_numbers<[2], [2], [1], [1], [0, 0, 0, 1, 1, 1], [0], [0]>} : vector<4x8x16xf32>, vector<4x8x16xf32>, vector<4x8x8xf32> -> vector<4x8x8xf32>
    "tpu.trace_stop"() : () -> ()
    %cst_89 = arith.constant dense<0xFF800000> : vector<4x8xf32>
    %146 = vector.multi_reduction <maximumf>, %145, %cst_89 [2] : vector<4x8x8xf32> to vector<4x8xf32>
    %147 = vector.shape_cast %146 : vector<4x8xf32> to vector<4x8x1xf32>
    %148 = arith.maximumf %140, %147 : vector<4x8x1xf32>
    %149 = arith.subf %140, %148 : vector<4x8x1xf32>
    %150 = math.exp %149 : vector<4x8x1xf32>
    %151 = vector.broadcast %148 : vector<4x8x1xf32> to vector<4x8x8xf32>
    %152 = arith.subf %145, %151 : vector<4x8x8xf32>
    %153 = math.exp %152 : vector<4x8x8xf32>
    %154 = arith.mulf %150, %141 : vector<4x8x1xf32>
    %cst_90 = arith.constant dense<0.000000e+00> : vector<4x8xf32>
    %155 = vector.multi_reduction <add>, %153, %cst_90 [2] : vector<4x8x8xf32> to vector<4x8xf32>
    %156 = vector.shape_cast %155 : vector<4x8xf32> to vector<4x8x1xf32>
    %157 = arith.addf %154, %156 : vector<4x8x1xf32>
    %158 = vector.broadcast %150 : vector<4x8x1xf32> to vector<4x8x16xf32>
    %159 = arith.mulf %158, %142 : vector<4x8x16xf32>
    "tpu.trace_start"() <{level = 10 : i32, message = "hqk,hkd->hqd"}> : () -> ()
    %cst_91 = arith.constant dense<0.000000e+00> : vector<4x8x16xf32>
    %160 = tpu.matmul %153, %144, %cst_91 {dimension_numbers = #tpu.dot_dimension_numbers<[2], [1], [1], [2], [0, 0, 0, 1, 1, 2], [0], [0]>} : vector<4x8x8xf32>, vector<4x8x16xf32>, vector<4x8x16xf32> -> vector<4x8x16xf32>
    "tpu.trace_stop"() : () -> ()
    %161 = arith.addf %159, %160 : vector<4x8x16xf32>
    %c0_92 = arith.constant 0 : index
    %c8_93 = arith.constant 8 : index
    %c0_94 = arith.constant 0 : index
    %162 = vector.load %arg16[%c0_92, %c8_93, %c0_94] : memref<4x16x16xf32, #tpu.memory_space<vmem>>, vector<4x8x16xf32>
    %c0_95 = arith.constant 0 : index
    %c8_96 = arith.constant 8 : index
    %c0_97 = arith.constant 0 : index
    %163 = vector.load %arg17[%c0_95, %c8_96, %c0_97] : memref<4x16x16xf32, #tpu.memory_space<vmem>>, vector<4x8x16xf32>
    "tpu.trace_start"() <{level = 10 : i32, message = "hqd,hkd->hqk"}> : () -> ()
    %cst_98 = arith.constant dense<0.000000e+00> : vector<4x8x8xf32>
    %164 = tpu.matmul %139, %162, %cst_98 {dimension_numbers = #tpu.dot_dimension_numbers<[2], [2], [1], [1], [0, 0, 0, 1, 1, 1], [0], [0]>} : vector<4x8x16xf32>, vector<4x8x16xf32>, vector<4x8x8xf32> -> vector<4x8x8xf32>
    %cst_99 = arith.constant -1.000000e+30 : f32
    "tpu.trace_stop"() : () -> ()
    %165 = vector.shape_cast %89 : vector<8x8xi1> to vector<1x8x8xi1>
    %166 = vector.broadcast %165 : vector<1x8x8xi1> to vector<4x8x8xi1>
    %167 = vector.broadcast %cst_99 : f32 to vector<4x8x8xf32>
    %168 = arith.select %166, %164, %167 : vector<4x8x8xi1>, vector<4x8x8xf32>
    %cst_100 = arith.constant dense<0xFF800000> : vector<4x8xf32>
    %169 = vector.multi_reduction <maximumf>, %168, %cst_100 [2] : vector<4x8x8xf32> to vector<4x8xf32>
    %170 = vector.shape_cast %169 : vector<4x8xf32> to vector<4x8x1xf32>
    %171 = arith.maximumf %148, %170 : vector<4x8x1xf32>
    %172 = arith.subf %148, %171 : vector<4x8x1xf32>
    %173 = math.exp %172 : vector<4x8x1xf32>
    %174 = vector.broadcast %171 : vector<4x8x1xf32> to vector<4x8x8xf32>
    %175 = arith.subf %168, %174 : vector<4x8x8xf32>
    %176 = math.exp %175 : vector<4x8x8xf32>
    %177 = arith.mulf %173, %157 : vector<4x8x1xf32>
    %cst_101 = arith.constant dense<0.000000e+00> : vector<4x8xf32>
    %178 = vector.multi_reduction <add>, %176, %cst_101 [2] : vector<4x8x8xf32> to vector<4x8xf32>
    %179 = vector.shape_cast %178 : vector<4x8xf32> to vector<4x8x1xf32>
    %180 = arith.addf %177, %179 : vector<4x8x1xf32>
    %181 = vector.broadcast %173 : vector<4x8x1xf32> to vector<4x8x16xf32>
    %182 = arith.mulf %181, %161 : vector<4x8x16xf32>
    "tpu.trace_start"() <{level = 10 : i32, message = "hqk,hkd->hqd"}> : () -> ()
    %cst_102 = arith.constant dense<0.000000e+00> : vector<4x8x16xf32>
    %183 = tpu.matmul %176, %163, %cst_102 {dimension_numbers = #tpu.dot_dimension_numbers<[2], [1], [1], [2], [0, 0, 0, 1, 1, 2], [0], [0]>} : vector<4x8x8xf32>, vector<4x8x16xf32>, vector<4x8x16xf32> -> vector<4x8x16xf32>
    "tpu.trace_stop"() : () -> ()
    %184 = arith.addf %182, %183 : vector<4x8x16xf32>
    %185 = tpu.reciprocal %180 : vector<4x8x1xf32> -> vector<4x8x1xf32>
    %186 = vector.broadcast %185 : vector<4x8x1xf32> to vector<4x8x16xf32>
    %187 = arith.mulf %184, %186 : vector<4x8x16xf32>
    "tpu.trace_start"() <{level = 10 : i32, message = "hqd,hdc->hqc"}> : () -> ()
    %cst_103 = arith.constant dense<0.000000e+00> : vector<4x8x64xf32>
    %188 = tpu.matmul %187, %90, %cst_103 {dimension_numbers = #tpu.dot_dimension_numbers<[2], [1], [1], [2], [0, 0, 0, 1, 1, 2], [0], [0]>} : vector<4x8x16xf32>, vector<4x16x64xf32>, vector<4x8x64xf32> -> vector<4x8x64xf32>
    "tpu.trace_stop"() : () -> ()
    %189 = vector.extract_strided_slice %188 {offsets = [0, 0, 0], sizes = [1, 8, 64], strides = [1, 1, 1]} : vector<4x8x64xf32> to vector<1x8x64xf32>
    %190 = vector.shape_cast %189 : vector<1x8x64xf32> to vector<8x64xf32>
    %191 = vector.broadcast %91 : vector<1x64xf32> to vector<8x64xf32>
    %192 = arith.addf %191, %190 : vector<8x64xf32>
    %193 = vector.extract_strided_slice %188 {offsets = [1, 0, 0], sizes = [1, 8, 64], strides = [1, 1, 1]} : vector<4x8x64xf32> to vector<1x8x64xf32>
    %194 = vector.shape_cast %193 : vector<1x8x64xf32> to vector<8x64xf32>
    %195 = arith.addf %192, %194 : vector<8x64xf32>
    %196 = vector.extract_strided_slice %188 {offsets = [2, 0, 0], sizes = [1, 8, 64], strides = [1, 1, 1]} : vector<4x8x64xf32> to vector<1x8x64xf32>
    %197 = vector.shape_cast %196 : vector<1x8x64xf32> to vector<8x64xf32>
    %198 = arith.addf %195, %197 : vector<8x64xf32>
    %199 = vector.extract_strided_slice %188 {offsets = [3, 0, 0], sizes = [1, 8, 64], strides = [1, 1, 1]} : vector<4x8x64xf32> to vector<1x8x64xf32>
    %200 = vector.shape_cast %199 : vector<1x8x64xf32> to vector<8x64xf32>
    %201 = arith.addf %198, %200 : vector<8x64xf32>
    %202 = vector.extract_strided_slice %1 {offsets = [8, 0], sizes = [8, 64], strides = [1, 1]} : vector<16x64xf32> to vector<8x64xf32>
    %203 = arith.addf %202, %201 : vector<8x64xf32>
    %c8_104 = arith.constant 8 : index
    %c0_105 = arith.constant 0 : index
    %204 = vector.load %arg18[%c8_104, %c0_105] : memref<16x64xf32, #tpu.memory_space<vmem>>, vector<8x64xf32>
    tpu.vector_store %arg18[%c8_104, %c0_105], %203 {strides = array<i32>} : memref<16x64xf32, #tpu.memory_space<vmem>>, vector<8x64xf32>,
    %c0_106 = arith.constant 0 : index
    %c0_107 = arith.constant 0 : index
    %205 = vector.load %arg18[%c0_106, %c0_107] : memref<16x64xf32, #tpu.memory_space<vmem>>, vector<16x64xf32>
    %c0_108 = arith.constant 0 : index
    %c0_109 = arith.constant 0 : index
    %206 = vector.load %arg8[%c0_108, %c0_109] : memref<1x64xf32, #tpu.memory_space<vmem>>, vector<1x64xf32>
    %c0_110 = arith.constant 0 : index
    %c0_111 = arith.constant 0 : index
    %207 = vector.load %arg9[%c0_110, %c0_111] : memref<1x64xf32, #tpu.memory_space<vmem>>, vector<1x64xf32>
    %cst_112 = arith.constant dense<0.000000e+00> : vector<16xf32>
    %208 = vector.multi_reduction <add>, %205, %cst_112 [1] : vector<16x64xf32> to vector<16xf32>
    %209 = vector.shape_cast %208 : vector<16xf32> to vector<16x1xf32>
    %cst_113 = arith.constant 6.400000e+01 : f32
    %210 = vector.broadcast %cst_113 : f32 to vector<16x1xf32>
    %211 = arith.divf %209, %210 : vector<16x1xf32>
    %212 = vector.broadcast %211 : vector<16x1xf32> to vector<16x64xf32>
    %213 = arith.subf %205, %212 : vector<16x64xf32>
    %214 = arith.mulf %213, %213 : vector<16x64xf32>
    %cst_114 = arith.constant dense<0.000000e+00> : vector<16xf32>
    %215 = vector.multi_reduction <add>, %214, %cst_114 [1] : vector<16x64xf32> to vector<16xf32>
    %216 = vector.shape_cast %215 : vector<16xf32> to vector<16x1xf32>
    %cst_115 = arith.constant 6.400000e+01 : f32
    %217 = vector.broadcast %cst_115 : f32 to vector<16x1xf32>
    %218 = arith.divf %216, %217 : vector<16x1xf32>
    %219 = vector.broadcast %211 : vector<16x1xf32> to vector<16x64xf32>
    %220 = arith.subf %205, %219 : vector<16x64xf32>
    %cst_116 = arith.constant 9.99999974E-6 : f32
    %221 = vector.broadcast %cst_116 : f32 to vector<16x1xf32>
    %222 = arith.addf %218, %221 : vector<16x1xf32>
    %223 = math.rsqrt %222 : vector<16x1xf32>
    %224 = vector.broadcast %223 : vector<16x1xf32> to vector<16x64xf32>
    %225 = arith.mulf %220, %224 : vector<16x64xf32>
    %226 = vector.broadcast %206 : vector<1x64xf32> to vector<16x64xf32>
    %227 = arith.mulf %225, %226 : vector<16x64xf32>
    %228 = vector.broadcast %207 : vector<1x64xf32> to vector<16x64xf32>
    %229 = arith.addf %227, %228 : vector<16x64xf32>
    %cst_117 = arith.constant 0.000000e+00 : f32
    %230 = vector.broadcast %cst_117 : f32 to vector<16x64xf32>
    %c0_118 = arith.constant 0 : index
    %c0_119 = arith.constant 0 : index
    %231 = vector.load %arg10[%c0_118, %c0_119] : memref<64x256xf32, #tpu.memory_space<vmem>>, vector<64x128xf32>
    %cst_120 = arith.constant dense<0.000000e+00> : vector<16x128xf32>
    %232 = tpu.matmul %229, %231, %cst_120 {dimension_numbers = #tpu.dot_dimension_numbers<[1], [0], [0], [1], [0, 0, 1, 1], [], []>} : vector<16x64xf32>, vector<64x128xf32>, vector<16x128xf32> -> vector<16x128xf32>
    %c0_121 = arith.constant 0 : index
    %c0_122 = arith.constant 0 : index
    %233 = vector.load %arg11[%c0_121, %c0_122] : memref<1x256xf32, #tpu.memory_space<vmem>>, vector<1x128xf32>
    %234 = vector.broadcast %233 : vector<1x128xf32> to vector<16x128xf32>
    %235 = arith.addf %232, %234 : vector<16x128xf32>
    %cst_123 = arith.constant 5.000000e-01 : f32
    %236 = vector.broadcast %cst_123 : f32 to vector<16x128xf32>
    %237 = arith.mulf %236, %235 : vector<16x128xf32>
    %cst_124 = arith.constant 0.707106769 : f32
    %238 = vector.broadcast %cst_124 : f32 to vector<16x128xf32>
    %239 = arith.mulf %235, %238 : vector<16x128xf32>
    %240 = math.erf %239 : vector<16x128xf32>
    %cst_125 = arith.constant 1.000000e+00 : f32
    %241 = vector.broadcast %cst_125 : f32 to vector<16x128xf32>
    %242 = arith.addf %241, %240 : vector<16x128xf32>
    %243 = arith.mulf %237, %242 : vector<16x128xf32>
    %c0_126 = arith.constant 0 : index
    %c0_127 = arith.constant 0 : index
    %244 = vector.load %arg12[%c0_126, %c0_127] : memref<256x64xf32, #tpu.memory_space<vmem>>, vector<128x64xf32>
    %cst_128 = arith.constant dense<0.000000e+00> : vector<16x64xf32>
    %245 = tpu.matmul %243, %244, %cst_128 {dimension_numbers = #tpu.dot_dimension_numbers<[1], [0], [0], [1], [0, 0, 1, 1], [], []>} : vector<16x128xf32>, vector<128x64xf32>, vector<16x64xf32> -> vector<16x64xf32>
    %246 = arith.addf %230, %245 : vector<16x64xf32>
    %c0_129 = arith.constant 0 : index
    %c128 = arith.constant 128 : index
    %247 = vector.load %arg10[%c0_129, %c128] : memref<64x256xf32, #tpu.memory_space<vmem>>, vector<64x128xf32>
    %cst_130 = arith.constant dense<0.000000e+00> : vector<16x128xf32>
    %248 = tpu.matmul %229, %247, %cst_130 {dimension_numbers = #tpu.dot_dimension_numbers<[1], [0], [0], [1], [0, 0, 1, 1], [], []>} : vector<16x64xf32>, vector<64x128xf32>, vector<16x128xf32> -> vector<16x128xf32>
    %c0_131 = arith.constant 0 : index
    %c128_132 = arith.constant 128 : index
    %249 = vector.load %arg11[%c0_131, %c128_132] : memref<1x256xf32, #tpu.memory_space<vmem>>, vector<1x128xf32>
    %250 = vector.broadcast %249 : vector<1x128xf32> to vector<16x128xf32>
    %251 = arith.addf %248, %250 : vector<16x128xf32>
    %cst_133 = arith.constant 5.000000e-01 : f32
    %252 = vector.broadcast %cst_133 : f32 to vector<16x128xf32>
    %253 = arith.mulf %252, %251 : vector<16x128xf32>
    %cst_134 = arith.constant 0.707106769 : f32
    %254 = vector.broadcast %cst_134 : f32 to vector<16x128xf32>
    %255 = arith.mulf %251, %254 : vector<16x128xf32>
    %256 = math.erf %255 : vector<16x128xf32>
    %cst_135 = arith.constant 1.000000e+00 : f32
    %257 = vector.broadcast %cst_135 : f32 to vector<16x128xf32>
    %258 = arith.addf %257, %256 : vector<16x128xf32>
    %259 = arith.mulf %253, %258 : vector<16x128xf32>
    %c128_136 = arith.constant 128 : index
    %c0_137 = arith.constant 0 : index
    %260 = vector.load %arg12[%c128_136, %c0_137] : memref<256x64xf32, #tpu.memory_space<vmem>>, vector<128x64xf32>
    %cst_138 = arith.constant dense<0.000000e+00> : vector<16x64xf32>
    %261 = tpu.matmul %259, %260, %cst_138 {dimension_numbers = #tpu.dot_dimension_numbers<[1], [0], [0], [1], [0, 0, 1, 1], [], []>} : vector<16x128xf32>, vector<128x64xf32>, vector<16x64xf32> -> vector<16x64xf32>
    %262 = arith.addf %246, %261 : vector<16x64xf32>
    %263 = arith.addf %205, %262 : vector<16x64xf32>
    %c0_139 = arith.constant 0 : index
    %c0_140 = arith.constant 0 : index
    %264 = vector.load %arg13[%c0_139, %c0_140] : memref<1x64xf32, #tpu.memory_space<vmem>>, vector<1x64xf32>
    %265 = vector.broadcast %264 : vector<1x64xf32> to vector<16x64xf32>
    %266 = arith.addf %263, %265 : vector<16x64xf32>
    %c0_141 = arith.constant 0 : index
    %c0_142 = arith.constant 0 : index
    %c0_143 = arith.constant 0 : index
    %267 = vector.load %arg14[%c0_141, %c0_142, %c0_143] : memref<1x16x64xf32, #tpu.memory_space<vmem>>, vector<1x16x64xf32>
    %268 = vector.shape_cast %267 : vector<1x16x64xf32> to vector<16x64xf32>
    %269 = vector.shape_cast %266 : vector<16x64xf32> to vector<1x16x64xf32>
    tpu.vector_store %arg14[%c0_141, %c0_142, %c0_143], %269 {strides = array<i32>} : memref<1x16x64xf32, #tpu.memory_space<vmem>>, vector<1x16x64xf32>,
    return
  }
  func.func @transform_0(%arg0: i32) -> (i32, i32, i32) {
    %c0_i32 = arith.constant 0 : i32
    %c0_i32_0 = arith.constant 0 : i32
    %c0_i32_1 = arith.constant 0 : i32
    return %arg0, %c0_i32, %c0_i32_0 : i32, i32, i32
  }
  func.func @transform_1(%arg0: i32) -> (i32, i32) {
    %c0_i32 = arith.constant 0 : i32
    %c0_i32_0 = arith.constant 0 : i32
    %c0_i32_1 = arith.constant 0 : i32
    return %c0_i32, %c0_i32_0 : i32, i32
  }
  func.func @transform_2(%arg0: i32) -> (i32, i32) {
    %c0_i32 = arith.constant 0 : i32
    %c0_i32_0 = arith.constant 0 : i32
    %c0_i32_1 = arith.constant 0 : i32
    return %c0_i32, %c0_i32_0 : i32, i32
  }
  func.func @transform_3(%arg0: i32) -> (i32, i32) {
    %c0_i32 = arith.constant 0 : i32
    %c0_i32_0 = arith.constant 0 : i32
    %c0_i32_1 = arith.constant 0 : i32
    return %c0_i32, %c0_i32_0 : i32, i32
  }
  func.func @transform_4(%arg0: i32) -> (i32, i32) {
    %c0_i32 = arith.constant 0 : i32
    %c0_i32_0 = arith.constant 0 : i32
    %c0_i32_1 = arith.constant 0 : i32
    return %c0_i32, %c0_i32_0 : i32, i32
  }
  func.func @transform_5(%arg0: i32) -> (i32, i32, i32) {
    %c0_i32 = arith.constant 0 : i32
    %c0_i32_0 = arith.constant 0 : i32
    %c0_i32_1 = arith.constant 0 : i32
    %c0_i32_2 = arith.constant 0 : i32
    return %c0_i32, %c0_i32_0, %c0_i32_1 : i32, i32, i32
  }
  func.func @transform_6(%arg0: i32) -> (i32, i32) {
    %c0_i32 = arith.constant 0 : i32
    %c0_i32_0 = arith.constant 0 : i32
    %c0_i32_1 = arith.constant 0 : i32
    return %c0_i32, %c0_i32_0 : i32, i32
  }
  func.func @transform_7(%arg0: i32) -> (i32, i32) {
    %c0_i32 = arith.constant 0 : i32
    %c0_i32_0 = arith.constant 0 : i32
    %c0_i32_1 = arith.constant 0 : i32
    return %c0_i32, %c0_i32_0 : i32, i32
  }
  func.func @transform_8(%arg0: i32) -> (i32, i32) {
    %c0_i32 = arith.constant 0 : i32
    %c0_i32_0 = arith.constant 0 : i32
    %c0_i32_1 = arith.constant 0 : i32
    return %c0_i32, %c0_i32_0 : i32, i32
  }
  func.func @transform_9(%arg0: i32) -> (i32, i32) {
    %c0_i32 = arith.constant 0 : i32
    %c0_i32_0 = arith.constant 0 : i32
    %c0_i32_1 = arith.constant 0 : i32
    return %c0_i32, %c0_i32_0 : i32, i32
  }
  func.func @transform_10(%arg0: i32) -> (i32, i32) {
    %c0_i32 = arith.constant 0 : i32
    %c0_i32_0 = arith.constant 0 : i32
    %c0_i32_1 = arith.constant 0 : i32
    return %c0_i32, %c0_i32_0 : i32, i32
  }
  func.func @transform_11(%arg0: i32) -> (i32, i32) {
    %c0_i32 = arith.constant 0 : i32
    %c0_i32_0 = arith.constant 0 : i32
    %c0_i32_1 = arith.constant 0 : i32
    return %c0_i32, %c0_i32_0 : i32, i32
  }
  func.func @transform_12(%arg0: i32) -> (i32, i32) {
    %c0_i32 = arith.constant 0 : i32
    %c0_i32_0 = arith.constant 0 : i32
    %c0_i32_1 = arith.constant 0 : i32
    return %c0_i32, %c0_i32_0 : i32, i32
  }
  func.func @transform_13(%arg0: i32) -> (i32, i32, i32) {
    %c0_i32 = arith.constant 0 : i32
    %c0_i32_0 = arith.constant 0 : i32
    %c0_i32_1 = arith.constant 0 : i32
    return %arg0, %c0_i32, %c0_i32_0 : i32, i32, i32
  }
}

module attributes {stable_mosaic.version = 11 : i64} {
  func.func @gpt_block_kernel(%arg0: i32, %arg1: memref<1x16x64xf32, #tpu.memory_space<vmem>>, %arg2: memref<1x64xf32, #tpu.memory_space<vmem>>, %arg3: memref<1x64xf32, #tpu.memory_space<vmem>>, %arg4: memref<64x192xf32, #tpu.memory_space<vmem>>, %arg5: memref<1x192xf32, #tpu.memory_space<vmem>>, %arg6: memref<4x16x64xf32, #tpu.memory_space<vmem>>, %arg7: memref<1x64xf32, #tpu.memory_space<vmem>>, %arg8: memref<1x64xf32, #tpu.memory_space<vmem>>, %arg9: memref<1x64xf32, #tpu.memory_space<vmem>>, %arg10: memref<64x256xf32, #tpu.memory_space<vmem>>, %arg11: memref<1x256xf32, #tpu.memory_space<vmem>>, %arg12: memref<256x64xf32, #tpu.memory_space<vmem>>, %arg13: memref<1x64xf32, #tpu.memory_space<vmem>>, %arg14: memref<1x16x64xf32, #tpu.memory_space<vmem>>, %arg15: memref<4x16x16xf32, #tpu.memory_space<vmem>>, %arg16: memref<4x16x16xf32, #tpu.memory_space<vmem>>, %arg17: memref<4x16x16xf32, #tpu.memory_space<vmem>>, %arg18: memref<16x64xf32, #tpu.memory_space<vmem>>) attributes {dimension_semantics = [#tpu.dimension_semantics<parallel>], iteration_bounds = array<i64: 2>, scalar_prefetch = 0 : i64, scratch_operands = 4 : i64, tpu.core_type = #tpu.core_type<tc>, window_params = [{transform_indices = @transform_0, window_bounds = array<i64: 1, 16, 64>}, {pipeline_mode = #tpu.pipeline_mode<synchronous>, transform_indices = @transform_1, window_bounds = array<i64: 1, 64>}, {pipeline_mode = #tpu.pipeline_mode<synchronous>, transform_indices = @transform_2, window_bounds = array<i64: 1, 64>}, {pipeline_mode = #tpu.pipeline_mode<synchronous>, transform_indices = @transform_3, window_bounds = array<i64: 64, 192>}, {pipeline_mode = #tpu.pipeline_mode<synchronous>, transform_indices = @transform_4, window_bounds = array<i64: 1, 192>}, {pipeline_mode = #tpu.pipeline_mode<synchronous>, transform_indices = @transform_5, window_bounds = array<i64: 4, 16, 64>}, {pipeline_mode = #tpu.pipeline_mode<synchronous>, transform_indices = @transform_6, window_bounds = array<i64: 1, 64>}, {pipeline_mode = #tpu.pipeline_mode<synchronous>, transform_indices = @transform_7, window_bounds = array<i64: 1, 64>}, {pipeline_mode = #tpu.pipeline_mode<synchronous>, transform_indices = @transform_8, window_bounds = array<i64: 1, 64>}, {pipeline_mode = #tpu.pipeline_mode<synchronous>, transform_indices = @transform_9, window_bounds = array<i64: 64, 256>}, {pipeline_mode = #tpu.pipeline_mode<synchronous>, transform_indices = @transform_10, window_bounds = array<i64: 1, 256>}, {pipeline_mode = #tpu.pipeline_mode<synchronous>, transform_indices = @transform_11, window_bounds = array<i64: 256, 64>}, {pipeline_mode = #tpu.pipeline_mode<synchronous>, transform_indices = @transform_12, window_bounds = array<i64: 1, 64>}, {transform_indices = @transform_13, window_bounds = array<i64: 1, 16, 64>}]} {
    %c0 = arith.constant 0 : index
    %c0_0 = arith.constant 0 : index
    %c0_1 = arith.constant 0 : index
    %0 = vector.load %arg1[%c0, %c0_0, %c0_1] : memref<1x16x64xf32, #tpu.memory_space<vmem>>, vector<1x16x64xf32>
    %1 = vector.shape_cast %0 : vector<1x16x64xf32> to vector<16x64xf32>
    %c0_2 = arith.constant 0 : index
    %c0_3 = arith.constant 0 : index
    %2 = vector.load %arg2[%c0_2, %c0_3] : memref<1x64xf32, #tpu.memory_space<vmem>>, vector<1x64xf32>
    %c0_4 = arith.constant 0 : index
    %c0_5 = arith.constant 0 : index
    %3 = vector.load %arg3[%c0_4, %c0_5] : memref<1x64xf32, #tpu.memory_space<vmem>>, vector<1x64xf32>
    %cst = arith.constant dense<0.000000e+00> : vector<16xf32>
    %4 = vector.multi_reduction <add>, %1, %cst [1] : vector<16x64xf32> to vector<16xf32>
    %5 = vector.shape_cast %4 : vector<16xf32> to vector<16x1xf32>
    %cst_6 = arith.constant 6.400000e+01 : f32
    %6 = vector.broadcast %cst_6 : f32 to vector<16x1xf32>
    %7 = arith.divf %5, %6 : vector<16x1xf32>
    %8 = vector.broadcast %7 : vector<16x1xf32> to vector<16x64xf32>
    %9 = arith.subf %1, %8 : vector<16x64xf32>
    %10 = arith.mulf %9, %9 : vector<16x64xf32>
    %cst_7 = arith.constant dense<0.000000e+00> : vector<16xf32>
    %11 = vector.multi_reduction <add>, %10, %cst_7 [1] : vector<16x64xf32> to vector<16xf32>
    %12 = vector.shape_cast %11 : vector<16xf32> to vector<16x1xf32>
    %cst_8 = arith.constant 6.400000e+01 : f32
    %13 = vector.broadcast %cst_8 : f32 to vector<16x1xf32>
    %14 = arith.divf %12, %13 : vector<16x1xf32>
    %15 = vector.broadcast %7 : vector<16x1xf32> to vector<16x64xf32>
    %16 = arith.subf %1, %15 : vector<16x64xf32>
    %cst_9 = arith.constant 9.99999974E-6 : f32
    %17 = vector.broadcast %cst_9 : f32 to vector<16x1xf32>
    %18 = arith.addf %14, %17 : vector<16x1xf32>
    %19 = math.rsqrt %18 : vector<16x1xf32>
    %20 = vector.broadcast %19 : vector<16x1xf32> to vector<16x64xf32>
    %21 = arith.mulf %16, %20 : vector<16x64xf32>
    %22 = vector.broadcast %2 : vector<1x64xf32> to vector<16x64xf32>
    %23 = arith.mulf %21, %22 : vector<16x64xf32>
    %24 = vector.broadcast %3 : vector<1x64xf32> to vector<16x64xf32>
    %25 = arith.addf %23, %24 : vector<16x64xf32>
    %c0_10 = arith.constant 0 : index
    %c0_11 = arith.constant 0 : index
    %26 = vector.load %arg4[%c0_10, %c0_11] : memref<64x192xf32, #tpu.memory_space<vmem>>, vector<64x192xf32>
    %cst_12 = arith.constant dense<0.000000e+00> : vector<16x192xf32>
    %27 = tpu.matmul %25, %26, %cst_12 {dimension_numbers = #tpu.dot_dimension_numbers<[1], [0], [0], [1], [0, 0, 1, 1], [], []>} : vector<16x64xf32>, vector<64x192xf32>, vector<16x192xf32> -> vector<16x192xf32>
    %c0_13 = arith.constant 0 : index
    %c0_14 = arith.constant 0 : index
    %28 = vector.load %arg5[%c0_13, %c0_14] : memref<1x192xf32, #tpu.memory_space<vmem>>, vector<1x192xf32>
    %29 = vector.broadcast %28 : vector<1x192xf32> to vector<16x192xf32>
    %30 = arith.addf %27, %29 : vector<16x192xf32>
    %31 = vector.extract_strided_slice %30 {offsets = [0, 0], sizes = [16, 16], strides = [1, 1]} : vector<16x192xf32> to vector<16x16xf32>
    %cst_15 = arith.constant 2.500000e-01 : f32
    %32 = vector.broadcast %cst_15 : f32 to vector<16x16xf32>
    %33 = arith.mulf %31, %32 : vector<16x16xf32>
    %c0_16 = arith.constant 0 : index
    %c0_17 = arith.constant 0 : index
    %c0_18 = arith.constant 0 : index
    %34 = vector.load %arg15[%c0_16, %c0_17, %c0_18] : memref<4x16x16xf32, #tpu.memory_space<vmem>>, vector<1x16x16xf32>
    %35 = vector.shape_cast %34 : vector<1x16x16xf32> to vector<16x16xf32>
    %36 = vector.shape_cast %33 : vector<16x16xf32> to vector<1x16x16xf32>
    tpu.vector_store %arg15[%c0_16, %c0_17, %c0_18], %36 {strides = array<i32>} : memref<4x16x16xf32, #tpu.memory_space<vmem>>, vector<1x16x16xf32>,
    %37 = vector.extract_strided_slice %30 {offsets = [0, 64], sizes = [16, 16], strides = [1, 1]} : vector<16x192xf32> to vector<16x16xf32>
    %c0_19 = arith.constant 0 : index
    %c0_20 = arith.constant 0 : index
    %c0_21 = arith.constant 0 : index
    %38 = vector.load %arg16[%c0_19, %c0_20, %c0_21] : memref<4x16x16xf32, #tpu.memory_space<vmem>>, vector<1x16x16xf32>
    %39 = vector.shape_cast %38 : vector<1x16x16xf32> to vector<16x16xf32>
    %40 = vector.shape_cast %37 : vector<16x16xf32> to vector<1x16x16xf32>
    tpu.vector_store %arg16[%c0_19, %c0_20, %c0_21], %40 {strides = array<i32>} : memref<4x16x16xf32, #tpu.memory_space<vmem>>, vector<1x16x16xf32>,
    %41 = vector.extract_strided_slice %30 {offsets = [0, 128], sizes = [16, 16], strides = [1, 1]} : vector<16x192xf32> to vector<16x16xf32>
    %c0_22 = arith.constant 0 : index
    %c0_23 = arith.constant 0 : index
    %c0_24 = arith.constant 0 : index
    %42 = vector.load %arg17[%c0_22, %c0_23, %c0_24] : memref<4x16x16xf32, #tpu.memory_space<vmem>>, vector<1x16x16xf32>
    %43 = vector.shape_cast %42 : vector<1x16x16xf32> to vector<16x16xf32>
    %44 = vector.shape_cast %41 : vector<16x16xf32> to vector<1x16x16xf32>
    tpu.vector_store %arg17[%c0_22, %c0_23, %c0_24], %44 {strides = array<i32>} : memref<4x16x16xf32, #tpu.memory_space<vmem>>, vector<1x16x16xf32>,
    %45 = vector.extract_strided_slice %30 {offsets = [0, 16], sizes = [16, 16], strides = [1, 1]} : vector<16x192xf32> to vector<16x16xf32>
    %cst_25 = arith.constant 2.500000e-01 : f32
    %46 = vector.broadcast %cst_25 : f32 to vector<16x16xf32>
    %47 = arith.mulf %45, %46 : vector<16x16xf32>
    %c1 = arith.constant 1 : index
    %c0_26 = arith.constant 0 : index
    %c0_27 = arith.constant 0 : index
    %48 = vector.load %arg15[%c1, %c0_26, %c0_27] : memref<4x16x16xf32, #tpu.memory_space<vmem>>, vector<1x16x16xf32>
    %49 = vector.shape_cast %48 : vector<1x16x16xf32> to vector<16x16xf32>
    %50 = vector.shape_cast %47 : vector<16x16xf32> to vector<1x16x16xf32>
    tpu.vector_store %arg15[%c1, %c0_26, %c0_27], %50 {strides = array<i32>} : memref<4x16x16xf32, #tpu.memory_space<vmem>>, vector<1x16x16xf32>,
    %51 = vector.extract_strided_slice %30 {offsets = [0, 80], sizes = [16, 16], strides = [1, 1]} : vector<16x192xf32> to vector<16x16xf32>
    %c1_28 = arith.constant 1 : index
    %c0_29 = arith.constant 0 : index
    %c0_30 = arith.constant 0 : index
    %52 = vector.load %arg16[%c1_28, %c0_29, %c0_30] : memref<4x16x16xf32, #tpu.memory_space<vmem>>, vector<1x16x16xf32>
    %53 = vector.shape_cast %52 : vector<1x16x16xf32> to vector<16x16xf32>
    %54 = vector.shape_cast %51 : vector<16x16xf32> to vector<1x16x16xf32>
    tpu.vector_store %arg16[%c1_28, %c0_29, %c0_30], %54 {strides = array<i32>} : memref<4x16x16xf32, #tpu.memory_space<vmem>>, vector<1x16x16xf32>,
    %55 = vector.extract_strided_slice %30 {offsets = [0, 144], sizes = [16, 16], strides = [1, 1]} : vector<16x192xf32> to vector<16x16xf32>
    %c1_31 = arith.constant 1 : index
    %c0_32 = arith.constant 0 : index
    %c0_33 = arith.constant 0 : index
    %56 = vector.load %arg17[%c1_31, %c0_32, %c0_33] : memref<4x16x16xf32, #tpu.memory_space<vmem>>, vector<1x16x16xf32>
    %57 = vector.shape_cast %56 : vector<1x16x16xf32> to vector<16x16xf32>
    %58 = vector.shape_cast %55 : vector<16x16xf32> to vector<1x16x16xf32>
    tpu.vector_store %arg17[%c1_31, %c0_32, %c0_33], %58 {strides = array<i32>} : memref<4x16x16xf32, #tpu.memory_space<vmem>>, vector<1x16x16xf32>,
    %59 = vector.extract_strided_slice %30 {offsets = [0, 32], sizes = [16, 16], strides = [1, 1]} : vector<16x192xf32> to vector<16x16xf32>
    %cst_34 = arith.constant 2.500000e-01 : f32
    %60 = vector.broadcast %cst_34 : f32 to vector<16x16xf32>
    %61 = arith.mulf %59, %60 : vector<16x16xf32>
    %c2 = arith.constant 2 : index
    %c0_35 = arith.constant 0 : index
    %c0_36 = arith.constant 0 : index
    %62 = vector.load %arg15[%c2, %c0_35, %c0_36] : memref<4x16x16xf32, #tpu.memory_space<vmem>>, vector<1x16x16xf32>
    %63 = vector.shape_cast %62 : vector<1x16x16xf32> to vector<16x16xf32>
    %64 = vector.shape_cast %61 : vector<16x16xf32> to vector<1x16x16xf32>
    tpu.vector_store %arg15[%c2, %c0_35, %c0_36], %64 {strides = array<i32>} : memref<4x16x16xf32, #tpu.memory_space<vmem>>, vector<1x16x16xf32>,
    %65 = vector.extract_strided_slice %30 {offsets = [0, 96], sizes = [16, 16], strides = [1, 1]} : vector<16x192xf32> to vector<16x16xf32>
    %c2_37 = arith.constant 2 : index
    %c0_38 = arith.constant 0 : index
    %c0_39 = arith.constant 0 : index
    %66 = vector.load %arg16[%c2_37, %c0_38, %c0_39] : memref<4x16x16xf32, #tpu.memory_space<vmem>>, vector<1x16x16xf32>
    %67 = vector.shape_cast %66 : vector<1x16x16xf32> to vector<16x16xf32>
    %68 = vector.shape_cast %65 : vector<16x16xf32> to vector<1x16x16xf32>
    tpu.vector_store %arg16[%c2_37, %c0_38, %c0_39], %68 {strides = array<i32>} : memref<4x16x16xf32, #tpu.memory_space<vmem>>, vector<1x16x16xf32>,
    %69 = vector.extract_strided_slice %30 {offsets = [0, 160], sizes = [16, 16], strides = [1, 1]} : vector<16x192xf32> to vector<16x16xf32>
    %c2_40 = arith.constant 2 : index
    %c0_41 = arith.constant 0 : index
    %c0_42 = arith.constant 0 : index
    %70 = vector.load %arg17[%c2_40, %c0_41, %c0_42] : memref<4x16x16xf32, #tpu.memory_space<vmem>>, vector<1x16x16xf32>
    %71 = vector.shape_cast %70 : vector<1x16x16xf32> to vector<16x16xf32>
    %72 = vector.shape_cast %69 : vector<16x16xf32> to vector<1x16x16xf32>
    tpu.vector_store %arg17[%c2_40, %c0_41, %c0_42], %72 {strides = array<i32>} : memref<4x16x16xf32, #tpu.memory_space<vmem>>, vector<1x16x16xf32>,
    %73 = vector.extract_strided_slice %30 {offsets = [0, 48], sizes = [16, 16], strides = [1, 1]} : vector<16x192xf32> to vector<16x16xf32>
    %cst_43 = arith.constant 2.500000e-01 : f32
    %74 = vector.broadcast %cst_43 : f32 to vector<16x16xf32>
    %75 = arith.mulf %73, %74 : vector<16x16xf32>
    %c3 = arith.constant 3 : index
    %c0_44 = arith.constant 0 : index
    %c0_45 = arith.constant 0 : index
    %76 = vector.load %arg15[%c3, %c0_44, %c0_45] : memref<4x16x16xf32, #tpu.memory_space<vmem>>, vector<1x16x16xf32>
    %77 = vector.shape_cast %76 : vector<1x16x16xf32> to vector<16x16xf32>
    %78 = vector.shape_cast %75 : vector<16x16xf32> to vector<1x16x16xf32>
    tpu.vector_store %arg15[%c3, %c0_44, %c0_45], %78 {strides = array<i32>} : memref<4x16x16xf32, #tpu.memory_space<vmem>>, vector<1x16x16xf32>,
    %79 = vector.extract_strided_slice %30 {offsets = [0, 112], sizes = [16, 16], strides = [1, 1]} : vector<16x192xf32> to vector<16x16xf32>
    %c3_46 = arith.constant 3 : index
    %c0_47 = arith.constant 0 : index
    %c0_48 = arith.constant 0 : index
    %80 = vector.load %arg16[%c3_46, %c0_47, %c0_48] : memref<4x16x16xf32, #tpu.memory_space<vmem>>, vector<1x16x16xf32>
    %81 = vector.shape_cast %80 : vector<1x16x16xf32> to vector<16x16xf32>
    %82 = vector.shape_cast %79 : vector<16x16xf32> to vector<1x16x16xf32>
    tpu.vector_store %arg16[%c3_46, %c0_47, %c0_48], %82 {strides = array<i32>} : memref<4x16x16xf32, #tpu.memory_space<vmem>>, vector<1x16x16xf32>,
    %83 = vector.extract_strided_slice %30 {offsets = [0, 176], sizes = [16, 16], strides = [1, 1]} : vector<16x192xf32> to vector<16x16xf32>
    %c3_49 = arith.constant 3 : index
    %c0_50 = arith.constant 0 : index
    %c0_51 = arith.constant 0 : index
    %84 = vector.load %arg17[%c3_49, %c0_50, %c0_51] : memref<4x16x16xf32, #tpu.memory_space<vmem>>, vector<1x16x16xf32>
    %85 = vector.shape_cast %84 : vector<1x16x16xf32> to vector<16x16xf32>
    %86 = vector.shape_cast %83 : vector<16x16xf32> to vector<1x16x16xf32>
    tpu.vector_store %arg17[%c3_49, %c0_50, %c0_51], %86 {strides = array<i32>} : memref<4x16x16xf32, #tpu.memory_space<vmem>>, vector<1x16x16xf32>,
    %87 = tpu.iota {dimensions = array<i32: 0>} : vector<8x8xi32>
    %88 = tpu.iota {dimensions = array<i32: 1>} : vector<8x8xi32>
    %89 = arith.cmpi sge, %87, %88 : vector<8x8xi32>
    %c0_52 = arith.constant 0 : index
    %c0_53 = arith.constant 0 : index
    %c0_54 = arith.constant 0 : index
    %90 = vector.load %arg6[%c0_52, %c0_53, %c0_54] : memref<4x16x64xf32, #tpu.memory_space<vmem>>, vector<4x16x64xf32>
    %c0_55 = arith.constant 0 : index
    %c0_56 = arith.constant 0 : index
    %91 = vector.load %arg7[%c0_55, %c0_56] : memref<1x64xf32, #tpu.memory_space<vmem>>, vector<1x64xf32>
    %c0_57 = arith.constant 0 : index
    %c0_58 = arith.constant 0 : index
    %c0_59 = arith.constant 0 : index
    %92 = vector.load %arg15[%c0_57, %c0_58, %c0_59] : memref<4x16x16xf32, #tpu.memory_space<vmem>>, vector<4x8x16xf32>
    %cst_60 = arith.constant -1.000000e+30 : f32
    %93 = vector.broadcast %cst_60 : f32 to vector<4x8x1xf32>
    %cst_61 = arith.constant 0.000000e+00 : f32
    %94 = vector.broadcast %cst_61 : f32 to vector<4x8x1xf32>
    %cst_62 = arith.constant 0.000000e+00 : f32
    %95 = vector.broadcast %cst_62 : f32 to vector<4x8x16xf32>
    %c0_63 = arith.constant 0 : index
    %c0_64 = arith.constant 0 : index
    %c0_65 = arith.constant 0 : index
    %96 = vector.load %arg16[%c0_63, %c0_64, %c0_65] : memref<4x16x16xf32, #tpu.memory_space<vmem>>, vector<4x8x16xf32>
    %c0_66 = arith.constant 0 : index
    %c0_67 = arith.constant 0 : index
    %c0_68 = arith.constant 0 : index
    %97 = vector.load %arg17[%c0_66, %c0_67, %c0_68] : memref<4x16x16xf32, #tpu.memory_space<vmem>>, vector<4x8x16xf32>
    "tpu.trace_start"() <{level = 10 : i32, message = "hqd,hkd->hqk"}> : () -> ()
    %cst_69 = arith.constant dense<0.000000e+00> : vector<4x8x8xf32>
    %98 = tpu.matmul %92, %96, %cst_69 {dimension_numbers = #tpu.dot_dimension_numbers<[2], [2], [1], [1], [0, 0, 0, 1, 1, 1], [0], [0]>} : vector<4x8x16xf32>, vector<4x8x16xf32>, vector<4x8x8xf32> -> vector<4x8x8xf32>
    %cst_70 = arith.constant -1.000000e+30 : f32
    "tpu.trace_stop"() : () -> ()
    %99 = vector.shape_cast %89 : vector<8x8xi1> to vector<1x8x8xi1>
    %100 = vector.broadcast %99 : vector<1x8x8xi1> to vector<4x8x8xi1>
    %101 = vector.broadcast %cst_70 : f32 to vector<4x8x8xf32>
    %102 = arith.select %100, %98, %101 : vector<4x8x8xi1>, vector<4x8x8xf32>
    %cst_71 = arith.constant dense<0xFF800000> : vector<4x8xf32>
    %103 = vector.multi_reduction <maximumf>, %102, %cst_71 [2] : vector<4x8x8xf32> to vector<4x8xf32>
    %104 = vector.shape_cast %103 : vector<4x8xf32> to vector<4x8x1xf32>
    %105 = arith.maximumf %93, %104 : vector<4x8x1xf32>
    %106 = arith.subf %93, %105 : vector<4x8x1xf32>
    %107 = math.exp %106 : vector<4x8x1xf32>
    %108 = vector.broadcast %105 : vector<4x8x1xf32> to vector<4x8x8xf32>
    %109 = arith.subf %102, %108 : vector<4x8x8xf32>
    %110 = math.exp %109 : vector<4x8x8xf32>
    %111 = arith.mulf %107, %94 : vector<4x8x1xf32>
    %cst_72 = arith.constant dense<0.000000e+00> : vector<4x8xf32>
    %112 = vector.multi_reduction <add>, %110, %cst_72 [2] : vector<4x8x8xf32> to vector<4x8xf32>
    %113 = vector.shape_cast %112 : vector<4x8xf32> to vector<4x8x1xf32>
    %114 = arith.addf %111, %113 : vector<4x8x1xf32>
    %115 = vector.broadcast %107 : vector<4x8x1xf32> to vector<4x8x16xf32>
    %116 = arith.mulf %115, %95 : vector<4x8x16xf32>
    "tpu.trace_start"() <{level = 10 : i32, message = "hqk,hkd->hqd"}> : () -> ()
    %cst_73 = arith.constant dense<0.000000e+00> : vector<4x8x16xf32>
    %117 = tpu.matmul %110, %97, %cst_73 {dimension_numbers = #tpu.dot_dimension_numbers<[2], [1], [1], [2], [0, 0, 0, 1, 1, 2], [0], [0]>} : vector<4x8x8xf32>, vector<4x8x16xf32>, vector<4x8x16xf32> -> vector<4x8x16xf32>
    "tpu.trace_stop"() : () -> ()
    %118 = arith.addf %116, %117 : vector<4x8x16xf32>
    %119 = tpu.reciprocal %114 : vector<4x8x1xf32> -> vector<4x8x1xf32>
    %120 = vector.broadcast %119 : vector<4x8x1xf32> to vector<4x8x16xf32>
    %121 = arith.mulf %118, %120 : vector<4x8x16xf32>
    "tpu.trace_start"() <{level = 10 : i32, message = "hqd,hdc->hqc"}> : () -> ()
    %cst_74 = arith.constant dense<0.000000e+00> : vector<4x8x64xf32>
    %122 = tpu.matmul %121, %90, %cst_74 {dimension_numbers = #tpu.dot_dimension_numbers<[2], [1], [1], [2], [0, 0, 0, 1, 1, 2], [0], [0]>} : vector<4x8x16xf32>, vector<4x16x64xf32>, vector<4x8x64xf32> -> vector<4x8x64xf32>
    "tpu.trace_stop"() : () -> ()
    %123 = vector.extract_strided_slice %122 {offsets = [0, 0, 0], sizes = [1, 8, 64], strides = [1, 1, 1]} : vector<4x8x64xf32> to vector<1x8x64xf32>
    %124 = vector.shape_cast %123 : vector<1x8x64xf32> to vector<8x64xf32>
    %125 = vector.broadcast %91 : vector<1x64xf32> to vector<8x64xf32>
    %126 = arith.addf %125, %124 : vector<8x64xf32>
    %127 = vector.extract_strided_slice %122 {offsets = [1, 0, 0], sizes = [1, 8, 64], strides = [1, 1, 1]} : vector<4x8x64xf32> to vector<1x8x64xf32>
    %128 = vector.shape_cast %127 : vector<1x8x64xf32> to vector<8x64xf32>
    %129 = arith.addf %126, %128 : vector<8x64xf32>
    %130 = vector.extract_strided_slice %122 {offsets = [2, 0, 0], sizes = [1, 8, 64], strides = [1, 1, 1]} : vector<4x8x64xf32> to vector<1x8x64xf32>
    %131 = vector.shape_cast %130 : vector<1x8x64xf32> to vector<8x64xf32>
    %132 = arith.addf %129, %131 : vector<8x64xf32>
    %133 = vector.extract_strided_slice %122 {offsets = [3, 0, 0], sizes = [1, 8, 64], strides = [1, 1, 1]} : vector<4x8x64xf32> to vector<1x8x64xf32>
    %134 = vector.shape_cast %133 : vector<1x8x64xf32> to vector<8x64xf32>
    %135 = arith.addf %132, %134 : vector<8x64xf32>
    %136 = vector.extract_strided_slice %1 {offsets = [0, 0], sizes = [8, 64], strides = [1, 1]} : vector<16x64xf32> to vector<8x64xf32>
    %137 = arith.addf %136, %135 : vector<8x64xf32>
    %c0_75 = arith.constant 0 : index
    %c0_76 = arith.constant 0 : index
    %138 = vector.load %arg18[%c0_75, %c0_76] : memref<16x64xf32, #tpu.memory_space<vmem>>, vector<8x64xf32>
    tpu.vector_store %arg18[%c0_75, %c0_76], %137 {strides = array<i32>} : memref<16x64xf32, #tpu.memory_space<vmem>>, vector<8x64xf32>,
    %c0_77 = arith.constant 0 : index
    %c8 = arith.constant 8 : index
    %c0_78 = arith.constant 0 : index
    %139 = vector.load %arg15[%c0_77, %c8, %c0_78] : memref<4x16x16xf32, #tpu.memory_space<vmem>>, vector<4x8x16xf32>
    %cst_79 = arith.constant -1.000000e+30 : f32
    %140 = vector.broadcast %cst_79 : f32 to vector<4x8x1xf32>
    %cst_80 = arith.constant 0.000000e+00 : f32
    %141 = vector.broadcast %cst_80 : f32 to vector<4x8x1xf32>
    %cst_81 = arith.constant 0.000000e+00 : f32
    %142 = vector.broadcast %cst_81 : f32 to vector<4x8x16xf32>
    %c0_82 = arith.constant 0 : index
    %c0_83 = arith.constant 0 : index
    %c0_84 = arith.constant 0 : index
    %143 = vector.load %arg16[%c0_82, %c0_83, %c0_84] : memref<4x16x16xf32, #tpu.memory_space<vmem>>, vector<4x8x16xf32>
    %c0_85 = arith.constant 0 : index
    %c0_86 = arith.constant 0 : index
    %c0_87 = arith.constant 0 : index
    %144 = vector.load %arg17[%c0_85, %c0_86, %c0_87] : memref<4x16x16xf32, #tpu.memory_space<vmem>>, vector<4x8x16xf32>
    "tpu.trace_start"() <{level = 10 : i32, message = "hqd,hkd->hqk"}> : () -> ()
    %cst_88 = arith.constant dense<0.000000e+00> : vector<4x8x8xf32>
    %145 = tpu.matmul %139, %143, %cst_88 {dimension_numbers = #tpu.dot_dimension_numbers<[2], [2], [1], [1], [0, 0, 0, 1, 1, 1], [0], [0]>} : vector<4x8x16xf32>, vector<4x8x16xf32>, vector<4x8x8xf32> -> vector<4x8x8xf32>
    "tpu.trace_stop"() : () -> ()
    %cst_89 = arith.constant dense<0xFF800000> : vector<4x8xf32>
    %146 = vector.multi_reduction <maximumf>, %145, %cst_89 [2] : vector<4x8x8xf32> to vector<4x8xf32>
    %147 = vector.shape_cast %146 : vector<4x8xf32> to vector<4x8x1xf32>
    %148 = arith.maximumf %140, %147 : vector<4x8x1xf32>
    %149 = arith.subf %140, %148 : vector<4x8x1xf32>
    %150 = math.exp %149 : vector<4x8x1xf32>
    %151 = vector.broadcast %148 : vector<4x8x1xf32> to vector<4x8x8xf32>
    %152 = arith.subf %145, %151 : vector<4x8x8xf32>
    %153 = math.exp %152 : vector<4x8x8xf32>
    %154 = arith.mulf %150, %141 : vector<4x8x1xf32>
    %cst_90 = arith.constant dense<0.000000e+00> : vector<4x8xf32>
    %155 = vector.multi_reduction <add>, %153, %cst_90 [2] : vector<4x8x8xf32> to vector<4x8xf32>
    %156 = vector.shape_cast %155 : vector<4x8xf32> to vector<4x8x1xf32>
    %157 = arith.addf %154, %156 : vector<4x8x1xf32>
    %158 = vector.broadcast %150 : vector<4x8x1xf32> to vector<4x8x16xf32>
    %159 = arith.mulf %158, %142 : vector<4x8x16xf32>
    "tpu.trace_start"() <{level = 10 : i32, message = "hqk,hkd->hqd"}> : () -> ()
    %cst_91 = arith.constant dense<0.000000e+00> : vector<4x8x16xf32>
    %160 = tpu.matmul %153, %144, %cst_91 {dimension_numbers = #tpu.dot_dimension_numbers<[2], [1], [1], [2], [0, 0, 0, 1, 1, 2], [0], [0]>} : vector<4x8x8xf32>, vector<4x8x16xf32>, vector<4x8x16xf32> -> vector<4x8x16xf32>
    "tpu.trace_stop"() : () -> ()
    %161 = arith.addf %159, %160 : vector<4x8x16xf32>
    %c0_92 = arith.constant 0 : index
    %c8_93 = arith.constant 8 : index
    %c0_94 = arith.constant 0 : index
    %162 = vector.load %arg16[%c0_92, %c8_93, %c0_94] : memref<4x16x16xf32, #tpu.memory_space<vmem>>, vector<4x8x16xf32>
    %c0_95 = arith.constant 0 : index
    %c8_96 = arith.constant 8 : index
    %c0_97 = arith.constant 0 : index
    %163 = vector.load %arg17[%c0_95, %c8_96, %c0_97] : memref<4x16x16xf32, #tpu.memory_space<vmem>>, vector<4x8x16xf32>
    "tpu.trace_start"() <{level = 10 : i32, message = "hqd,hkd->hqk"}> : () -> ()
    %cst_98 = arith.constant dense<0.000000e+00> : vector<4x8x8xf32>
    %164 = tpu.matmul %139, %162, %cst_98 {dimension_numbers = #tpu.dot_dimension_numbers<[2], [2], [1], [1], [0, 0, 0, 1, 1, 1], [0], [0]>} : vector<4x8x16xf32>, vector<4x8x16xf32>, vector<4x8x8xf32> -> vector<4x8x8xf32>
    %cst_99 = arith.constant -1.000000e+30 : f32
    "tpu.trace_stop"() : () -> ()
    %165 = vector.shape_cast %89 : vector<8x8xi1> to vector<1x8x8xi1>
    %166 = vector.broadcast %165 : vector<1x8x8xi1> to vector<4x8x8xi1>
    %167 = vector.broadcast %cst_99 : f32 to vector<4x8x8xf32>
    %168 = arith.select %166, %164, %167 : vector<4x8x8xi1>, vector<4x8x8xf32>
    %cst_100 = arith.constant dense<0xFF800000> : vector<4x8xf32>
    %169 = vector.multi_reduction <maximumf>, %168, %cst_100 [2] : vector<4x8x8xf32> to vector<4x8xf32>
    %170 = vector.shape_cast %169 : vector<4x8xf32> to vector<4x8x1xf32>
    %171 = arith.maximumf %148, %170 : vector<4x8x1xf32>
    %172 = arith.subf %148, %171 : vector<4x8x1xf32>
    %173 = math.exp %172 : vector<4x8x1xf32>
    %174 = vector.broadcast %171 : vector<4x8x1xf32> to vector<4x8x8xf32>
    %175 = arith.subf %168, %174 : vector<4x8x8xf32>
    %176 = math.exp %175 : vector<4x8x8xf32>
    %177 = arith.mulf %173, %157 : vector<4x8x1xf32>
    %cst_101 = arith.constant dense<0.000000e+00> : vector<4x8xf32>
    %178 = vector.multi_reduction <add>, %176, %cst_101 [2] : vector<4x8x8xf32> to vector<4x8xf32>
    %179 = vector.shape_cast %178 : vector<4x8xf32> to vector<4x8x1xf32>
    %180 = arith.addf %177, %179 : vector<4x8x1xf32>
    %181 = vector.broadcast %173 : vector<4x8x1xf32> to vector<4x8x16xf32>
    %182 = arith.mulf %181, %161 : vector<4x8x16xf32>
    "tpu.trace_start"() <{level = 10 : i32, message = "hqk,hkd->hqd"}> : () -> ()
    %cst_102 = arith.constant dense<0.000000e+00> : vector<4x8x16xf32>
    %183 = tpu.matmul %176, %163, %cst_102 {dimension_numbers = #tpu.dot_dimension_numbers<[2], [1], [1], [2], [0, 0, 0, 1, 1, 2], [0], [0]>} : vector<4x8x8xf32>, vector<4x8x16xf32>, vector<4x8x16xf32> -> vector<4x8x16xf32>
    "tpu.trace_stop"() : () -> ()
    %184 = arith.addf %182, %183 : vector<4x8x16xf32>
    %185 = tpu.reciprocal %180 : vector<4x8x1xf32> -> vector<4x8x1xf32>
    %186 = vector.broadcast %185 : vector<4x8x1xf32> to vector<4x8x16xf32>
    %187 = arith.mulf %184, %186 : vector<4x8x16xf32>
    "tpu.trace_start"() <{level = 10 : i32, message = "hqd,hdc->hqc"}> : () -> ()
    %cst_103 = arith.constant dense<0.000000e+00> : vector<4x8x64xf32>
    %188 = tpu.matmul %187, %90, %cst_103 {dimension_numbers = #tpu.dot_dimension_numbers<[2], [1], [1], [2], [0, 0, 0, 1, 1, 2], [0], [0]>} : vector<4x8x16xf32>, vector<4x16x64xf32>, vector<4x8x64xf32> -> vector<4x8x64xf32>
    "tpu.trace_stop"() : () -> ()
    %189 = vector.extract_strided_slice %188 {offsets = [0, 0, 0], sizes = [1, 8, 64], strides = [1, 1, 1]} : vector<4x8x64xf32> to vector<1x8x64xf32>
    %190 = vector.shape_cast %189 : vector<1x8x64xf32> to vector<8x64xf32>
    %191 = vector.broadcast %91 : vector<1x64xf32> to vector<8x64xf32>
    %192 = arith.addf %191, %190 : vector<8x64xf32>
    %193 = vector.extract_strided_slice %188 {offsets = [1, 0, 0], sizes = [1, 8, 64], strides = [1, 1, 1]} : vector<4x8x64xf32> to vector<1x8x64xf32>
    %194 = vector.shape_cast %193 : vector<1x8x64xf32> to vector<8x64xf32>
    %195 = arith.addf %192, %194 : vector<8x64xf32>
    %196 = vector.extract_strided_slice %188 {offsets = [2, 0, 0], sizes = [1, 8, 64], strides = [1, 1, 1]} : vector<4x8x64xf32> to vector<1x8x64xf32>
    %197 = vector.shape_cast %196 : vector<1x8x64xf32> to vector<8x64xf32>
    %198 = arith.addf %195, %197 : vector<8x64xf32>
    %199 = vector.extract_strided_slice %188 {offsets = [3, 0, 0], sizes = [1, 8, 64], strides = [1, 1, 1]} : vector<4x8x64xf32> to vector<1x8x64xf32>
    %200 = vector.shape_cast %199 : vector<1x8x64xf32> to vector<8x64xf32>
    %201 = arith.addf %198, %200 : vector<8x64xf32>
    %202 = vector.extract_strided_slice %1 {offsets = [8, 0], sizes = [8, 64], strides = [1, 1]} : vector<16x64xf32> to vector<8x64xf32>
    %203 = arith.addf %202, %201 : vector<8x64xf32>
    %c8_104 = arith.constant 8 : index
    %c0_105 = arith.constant 0 : index
    %204 = vector.load %arg18[%c8_104, %c0_105] : memref<16x64xf32, #tpu.memory_space<vmem>>, vector<8x64xf32>
    tpu.vector_store %arg18[%c8_104, %c0_105], %203 {strides = array<i32>} : memref<16x64xf32, #tpu.memory_space<vmem>>, vector<8x64xf32>,
    %c0_106 = arith.constant 0 : index
    %c0_107 = arith.constant 0 : index
    %205 = vector.load %arg18[%c0_106, %c0_107] : memref<16x64xf32, #tpu.memory_space<vmem>>, vector<16x64xf32>
    %c0_108 = arith.constant 0 : index
    %c0_109 = arith.constant 0 : index
    %206 = vector.load %arg8[%c0_108, %c0_109] : memref<1x64xf32, #tpu.memory_space<vmem>>, vector<1x64xf32>
    %c0_110 = arith.constant 0 : index
    %c0_111 = arith.constant 0 : index
    %207 = vector.load %arg9[%c0_110, %c0_111] : memref<1x64xf32, #tpu.memory_space<vmem>>, vector<1x64xf32>
    %cst_112 = arith.constant dense<0.000000e+00> : vector<16xf32>
    %208 = vector.multi_reduction <add>, %205, %cst_112 [1] : vector<16x64xf32> to vector<16xf32>
    %209 = vector.shape_cast %208 : vector<16xf32> to vector<16x1xf32>
    %cst_113 = arith.constant 6.400000e+01 : f32
    %210 = vector.broadcast %cst_113 : f32 to vector<16x1xf32>
    %211 = arith.divf %209, %210 : vector<16x1xf32>
    %212 = vector.broadcast %211 : vector<16x1xf32> to vector<16x64xf32>
    %213 = arith.subf %205, %212 : vector<16x64xf32>
    %214 = arith.mulf %213, %213 : vector<16x64xf32>
    %cst_114 = arith.constant dense<0.000000e+00> : vector<16xf32>
    %215 = vector.multi_reduction <add>, %214, %cst_114 [1] : vector<16x64xf32> to vector<16xf32>
    %216 = vector.shape_cast %215 : vector<16xf32> to vector<16x1xf32>
    %cst_115 = arith.constant 6.400000e+01 : f32
    %217 = vector.broadcast %cst_115 : f32 to vector<16x1xf32>
    %218 = arith.divf %216, %217 : vector<16x1xf32>
    %219 = vector.broadcast %211 : vector<16x1xf32> to vector<16x64xf32>
    %220 = arith.subf %205, %219 : vector<16x64xf32>
    %cst_116 = arith.constant 9.99999974E-6 : f32
    %221 = vector.broadcast %cst_116 : f32 to vector<16x1xf32>
    %222 = arith.addf %218, %221 : vector<16x1xf32>
    %223 = math.rsqrt %222 : vector<16x1xf32>
    %224 = vector.broadcast %223 : vector<16x1xf32> to vector<16x64xf32>
    %225 = arith.mulf %220, %224 : vector<16x64xf32>
    %226 = vector.broadcast %206 : vector<1x64xf32> to vector<16x64xf32>
    %227 = arith.mulf %225, %226 : vector<16x64xf32>
    %228 = vector.broadcast %207 : vector<1x64xf32> to vector<16x64xf32>
    %229 = arith.addf %227, %228 : vector<16x64xf32>
    %cst_117 = arith.constant 0.000000e+00 : f32
    %230 = vector.broadcast %cst_117 : f32 to vector<16x64xf32>
    %c0_118 = arith.constant 0 : index
    %c0_119 = arith.constant 0 : index
    %231 = vector.load %arg10[%c0_118, %c0_119] : memref<64x256xf32, #tpu.memory_space<vmem>>, vector<64x128xf32>
    %cst_120 = arith.constant dense<0.000000e+00> : vector<16x128xf32>
    %232 = tpu.matmul %229, %231, %cst_120 {dimension_numbers = #tpu.dot_dimension_numbers<[1], [0], [0], [1], [0, 0, 1, 1], [], []>} : vector<16x64xf32>, vector<64x128xf32>, vector<16x128xf32> -> vector<16x128xf32>
    %c0_121 = arith.constant 0 : index
    %c0_122 = arith.constant 0 : index
    %233 = vector.load %arg11[%c0_121, %c0_122] : memref<1x256xf32, #tpu.memory_space<vmem>>, vector<1x128xf32>
    %234 = vector.broadcast %233 : vector<1x128xf32> to vector<16x128xf32>
    %235 = arith.addf %232, %234 : vector<16x128xf32>
    %cst_123 = arith.constant 5.000000e-01 : f32
    %236 = vector.broadcast %cst_123 : f32 to vector<16x128xf32>
    %237 = arith.mulf %236, %235 : vector<16x128xf32>
    %cst_124 = arith.constant 0.707106769 : f32
    %238 = vector.broadcast %cst_124 : f32 to vector<16x128xf32>
    %239 = arith.mulf %235, %238 : vector<16x128xf32>
    %240 = math.erf %239 : vector<16x128xf32>
    %cst_125 = arith.constant 1.000000e+00 : f32
    %241 = vector.broadcast %cst_125 : f32 to vector<16x128xf32>
    %242 = arith.addf %241, %240 : vector<16x128xf32>
    %243 = arith.mulf %237, %242 : vector<16x128xf32>
    %c0_126 = arith.constant 0 : index
    %c0_127 = arith.constant 0 : index
    %244 = vector.load %arg12[%c0_126, %c0_127] : memref<256x64xf32, #tpu.memory_space<vmem>>, vector<128x64xf32>
    %cst_128 = arith.constant dense<0.000000e+00> : vector<16x64xf32>
    %245 = tpu.matmul %243, %244, %cst_128 {dimension_numbers = #tpu.dot_dimension_numbers<[1], [0], [0], [1], [0, 0, 1, 1], [], []>} : vector<16x128xf32>, vector<128x64xf32>, vector<16x64xf32> -> vector<16x64xf32>
    %246 = arith.addf %230, %245 : vector<16x64xf32>
    %c0_129 = arith.constant 0 : index
    %c128 = arith.constant 128 : index
    %247 = vector.load %arg10[%c0_129, %c128] : memref<64x256xf32, #tpu.memory_space<vmem>>, vector<64x128xf32>
    %cst_130 = arith.constant dense<0.000000e+00> : vector<16x128xf32>
    %248 = tpu.matmul %229, %247, %cst_130 {dimension_numbers = #tpu.dot_dimension_numbers<[1], [0], [0], [1], [0, 0, 1, 1], [], []>} : vector<16x64xf32>, vector<64x128xf32>, vector<16x128xf32> -> vector<16x128xf32>
    %c0_131 = arith.constant 0 : index
    %c128_132 = arith.constant 128 : index
    %249 = vector.load %arg11[%c0_131, %c128_132] : memref<1x256xf32, #tpu.memory_space<vmem>>, vector<1x128xf32>
    %250 = vector.broadcast %249 : vector<1x128xf32> to vector<16x128xf32>
    %251 = arith.addf %248, %250 : vector<16x128xf32>
    %cst_133 = arith.constant 5.000000e-01 : f32
    %252 = vector.broadcast %cst_133 : f32 to vector<16x128xf32>
    %253 = arith.mulf %252, %251 : vector<16x128xf32>
    %cst_134 = arith.constant 0.707106769 : f32
    %254 = vector.broadcast %cst_134 : f32 to vector<16x128xf32>
    %255 = arith.mulf %251, %254 : vector<16x128xf32>
    %256 = math.erf %255 : vector<16x128xf32>
    %cst_135 = arith.constant 1.000000e+00 : f32
    %257 = vector.broadcast %cst_135 : f32 to vector<16x128xf32>
    %258 = arith.addf %257, %256 : vector<16x128xf32>
    %259 = arith.mulf %253, %258 : vector<16x128xf32>
    %c128_136 = arith.constant 128 : index
    %c0_137 = arith.constant 0 : index
    %260 = vector.load %arg12[%c128_136, %c0_137] : memref<256x64xf32, #tpu.memory_space<vmem>>, vector<128x64xf32>
    %cst_138 = arith.constant dense<0.000000e+00> : vector<16x64xf32>
    %261 = tpu.matmul %259, %260, %cst_138 {dimension_numbers = #tpu.dot_dimension_numbers<[1], [0], [0], [1], [0, 0, 1, 1], [], []>} : vector<16x128xf32>, vector<128x64xf32>, vector<16x64xf32> -> vector<16x64xf32>
    %262 = arith.addf %246, %261 : vector<16x64xf32>
    %263 = arith.addf %205, %262 : vector<16x64xf32>
    %c0_139 = arith.constant 0 : index
    %c0_140 = arith.constant 0 : index
    %264 = vector.load %arg13[%c0_139, %c0_140] : memref<1x64xf32, #tpu.memory_space<vmem>>, vector<1x64xf32>
    %265 = vector.broadcast %264 : vector<1x64xf32> to vector<16x64xf32>
    %266 = arith.addf %263, %265 : vector<16x64xf32>
    %c0_141 = arith.constant 0 : index
    %c0_142 = arith.constant 0 : index
    %c0_143 = arith.constant 0 : index
    %267 = vector.load %arg14[%c0_141, %c0_142, %c0_143] : memref<1x16x64xf32, #tpu.memory_space<vmem>>, vector<1x16x64xf32>
    %268 = vector.shape_cast %267 : vector<1x16x64xf32> to vector<16x64xf32>
    %269 = vector.shape_cast %266 : vector<16x64xf32> to vector<1x16x64xf32>
    tpu.vector_store %arg14[%c0_141, %c0_142, %c0_143], %269 {strides = array<i32>} : memref<1x16x64xf32, #tpu.memory_space<vmem>>, vector<1x16x64xf32>,
    return
  }
  func.func @transform_0(%arg0: i32) -> (i32, i32, i32) {
    %c0_i32 = arith.constant 0 : i32
    %c0_i32_0 = arith.constant 0 : i32
    %c0_i32_1 = arith.constant 0 : i32
    return %arg0, %c0_i32, %c0_i32_0 : i32, i32, i32
  }
  func.func @transform_1(%arg0: i32) -> (i32, i32) {
    %c0_i32 = arith.constant 0 : i32
    %c0_i32_0 = arith.constant 0 : i32
    %c0_i32_1 = arith.constant 0 : i32
    return %c0_i32, %c0_i32_0 : i32, i32
  }
  func.func @transform_2(%arg0: i32) -> (i32, i32) {
    %c0_i32 = arith.constant 0 : i32
    %c0_i32_0 = arith.constant 0 : i32
    %c0_i32_1 = arith.constant 0 : i32
    return %c0_i32, %c0_i32_0 : i32, i32
  }
  func.func @transform_3(%arg0: i32) -> (i32, i32) {
    %c0_i32 = arith.constant 0 : i32
    %c0_i32_0 = arith.constant 0 : i32
    %c0_i32_1 = arith.constant 0 : i32
    return %c0_i32, %c0_i32_0 : i32, i32
  }
  func.func @transform_4(%arg0: i32) -> (i32, i32) {
    %c0_i32 = arith.constant 0 : i32
    %c0_i32_0 = arith.constant 0 : i32
    %c0_i32_1 = arith.constant 0 : i32
    return %c0_i32, %c0_i32_0 : i32, i32
  }
  func.func @transform_5(%arg0: i32) -> (i32, i32, i32) {
    %c0_i32 = arith.constant 0 : i32
    %c0_i32_0 = arith.constant 0 : i32
    %c0_i32_1 = arith.constant 0 : i32
    %c0_i32_2 = arith.constant 0 : i32
    return %c0_i32, %c0_i32_0, %c0_i32_1 : i32, i32, i32
  }
  func.func @transform_6(%arg0: i32) -> (i32, i32) {
    %c0_i32 = arith.constant 0 : i32
    %c0_i32_0 = arith.constant 0 : i32
    %c0_i32_1 = arith.constant 0 : i32
    return %c0_i32, %c0_i32_0 : i32, i32
  }
  func.func @transform_7(%arg0: i32) -> (i32, i32) {
    %c0_i32 = arith.constant 0 : i32
    %c0_i32_0 = arith.constant 0 : i32
    %c0_i32_1 = arith.constant 0 : i32
    return %c0_i32, %c0_i32_0 : i32, i32
  }
  func.func @transform_8(%arg0: i32) -> (i32, i32) {
    %c0_i32 = arith.constant 0 : i32
    %c0_i32_0 = arith.constant 0 : i32
    %c0_i32_1 = arith.constant 0 : i32
    return %c0_i32, %c0_i32_0 : i32, i32
  }
  func.func @transform_9(%arg0: i32) -> (i32, i32) {
    %c0_i32 = arith.constant 0 : i32
    %c0_i32_0 = arith.constant 0 : i32
    %c0_i32_1 = arith.constant 0 : i32
    return %c0_i32, %c0_i32_0 : i32, i32
  }
  func.func @transform_10(%arg0: i32) -> (i32, i32) {
    %c0_i32 = arith.constant 0 : i32
    %c0_i32_0 = arith.constant 0 : i32
    %c0_i32_1 = arith.constant 0 : i32
    return %c0_i32, %c0_i32_0 : i32, i32
  }
  func.func @transform_11(%arg0: i32) -> (i32, i32) {
    %c0_i32 = arith.constant 0 : i32
    %c0_i32_0 = arith.constant 0 : i32
    %c0_i32_1 = arith.constant 0 : i32
    return %c0_i32, %c0_i32_0 : i32, i32
  }
  func.func @transform_12(%arg0: i32) -> (i32, i32) {
    %c0_i32 = arith.constant 0 : i32
    %c0_i32_0 = arith.constant 0 : i32
    %c0_i32_1 = arith.constant 0 : i32
    return %c0_i32, %c0_i32_0 : i32, i32
  }
  func.func @transform_13(%arg0: i32) -> (i32, i32, i32) {
    %c0_i32 = arith.constant 0 : i32
    %c0_i32_0 = arith.constant 0 : i32
    %c0_i32_1 = arith.constant 0 : i32
    return %arg0, %c0_i32, %c0_i32_0 : i32, i32, i32
  }
}

</mosaic_0001>

<llo_original>
// kernel: tpu_custom_call.1
$region0: #{tpu_custom_call.1}
  #allocation0 [shape = 'u32[]', space=smem, size = 0x4, offset = 0x4, fixed_abs, tag = 'smem constant byte address 0x4 - core index']
  #allocation1 [shape = 'u32[144,128]{1,0:T(1,128)}', space=vmem, size = 0x12000, scoped, tag = 'internal scratch']
  #allocation2 [shape = 'f32[4,16,16]{2,1,0:T(8,128)}', space=vmem, size = 0x8000, scoped, tag = 'scratch operand']
  #allocation3 [shape = 'f32[4,16,16]{2,1,0:T(8,128)}', space=vmem, size = 0x8000, scoped, tag = 'scratch operand']
  #allocation4 [shape = 'f32[4,16,16]{2,1,0:T(8,128)}', space=vmem, size = 0x8000, scoped, tag = 'scratch operand']
  #allocation5 [shape = 'f32[16,64]{1,0:T(8,128)}', space=vmem, size = 0x2000, scoped, tag = 'scratch operand']
  %s0 = inlined_call_operand.vmem [shape: f32[2,16,64], index: 0, kind: input, shape index: {}]
  %s1 = inlined_call_operand.vmem [shape: f32[1,64], index: 1, kind: input, shape index: {}]
  %s2 = inlined_call_operand.vmem [shape: f32[1,64], index: 2, kind: input, shape index: {}]
  %s3 = inlined_call_operand.vmem [shape: f32[64,192], index: 3, kind: input, shape index: {}]
  %s4 = inlined_call_operand.vmem [shape: f32[1,192], index: 4, kind: input, shape index: {}]
  %s5 = inlined_call_operand.vmem [shape: f32[4,16,64], index: 5, kind: input, shape index: {}]
  %s6 = inlined_call_operand.vmem [shape: f32[1,64], index: 6, kind: input, shape index: {}]
  %s7 = inlined_call_operand.vmem [shape: f32[1,64], index: 7, kind: input, shape index: {}]
  %s8 = inlined_call_operand.vmem [shape: f32[1,64], index: 8, kind: input, shape index: {}]
  %s9 = inlined_call_operand.vmem [shape: f32[64,256], index: 9, kind: input, shape index: {}]
  %s10 = inlined_call_operand.vmem [shape: f32[1,256], index: 10, kind: input, shape index: {}]
  %s11 = inlined_call_operand.vmem [shape: f32[256,64], index: 11, kind: input, shape index: {}]
  %s12 = inlined_call_operand.vmem [shape: f32[1,64], index: 12, kind: input, shape index: {}]
  %s13 = inlined_call_operand.hbm [shape: f32[2,16,64], index: 13, kind: output, shape index: {}]
  %s14 = sld [smem:[#allocation0]]
  $region85: #{tpu_custom_call.1} parent=0
    _
  %s16 = ssub.s32 1, %s14
  %s17 = scalar_select 0, %s16, %s14
  $region1: #{tpu_custom_call.1} parent=0
    #allocation6 [shape = 'u8[16384]{0}', space=vmem, size = 0x4000, scoped, tag = 'output window, operand 0']
    #allocation7 [shape = 's32[2]{0}', space=sflag, size = 0x8, scoped, tag = 'scoped memory for tpu_custom_call.1']
    %18 = vsyncpa [#allocation7], 0
    %s19 = scalar_lea.sflag [#allocation7], 1
    %20 = vsyncpa %s19, 0
    loop: start=0, step=1, limit=4
    $region2: #{tpu_custom_call.1} parent=1 // loop_pre_header
      _
    $region3: #{tpu_custom_call.1} parent=1 // loop_header
      %s22 = sphi 0, %s26
      %p23 = scmp.ge.s32.totalorder %s22, 4
      %s32 = sphi 0, %s34
      %s35 = sphi 0, %s32
      %s36 = sphi 0, %s35
      %s52 = sphi 0, %s36
      %s56 = sphi 0, %s56
      %s58 = sphi 0, %s56
      %s59 = sphi 0, %s58
      %s73 = sphi 0, %s59
      %s77 = sphi 0, %s77
      %s79 = sphi 0, %s77
      %s80 = sphi 0, %s79
      %s94 = sphi 0, %s80
      %s98 = sphi 0, %s98
      %s100 = sphi 0, %s98
      %s101 = sphi 0, %s100
      %s115 = sphi 0, %s101
      %s119 = sphi 0, %s119
      %s121 = sphi 0, %s119
      %s122 = sphi 0, %s121
      %s136 = sphi 0, %s122
      %s140 = sphi 0, %s140
      %s142 = sphi 0, %s140
      %s143 = sphi 0, %s142
      %s157 = sphi 0, %s143
      %s161 = sphi 0, %s161
      %s163 = sphi 0, %s161
      %s164 = sphi 0, %s163
      %s178 = sphi 0, %s164
      %s182 = sphi 0, %s182
      %s184 = sphi 0, %s182
      %s185 = sphi 0, %s184
      %s199 = sphi 0, %s185
      %s203 = sphi 0, %s203
      %s205 = sphi 0, %s203
      %s206 = sphi 0, %s205
      %s220 = sphi 0, %s206
      %s224 = sphi 0, %s224
      %s226 = sphi 0, %s224
      %s227 = sphi 0, %s226
      %s241 = sphi 0, %s227
      %s245 = sphi 0, %s245
      %s247 = sphi 0, %s245
      %s248 = sphi 0, %s247
      %s262 = sphi 0, %s248
      %s266 = sphi 0, %s266
      %s268 = sphi 0, %s266
      %s269 = sphi 0, %s268
      %s283 = sphi 0, %s269
      %s287 = sphi 0, %s287
      %s289 = sphi 0, %s287
      %s290 = sphi 0, %s289
      %s304 = sphi 0, %s290
      %s310 = sphi 0, %s312
      %s313 = sphi 0, %s310
      %s314 = sphi 0, %s313
      %s330 = sphi 0, %s314
    $region4: #{tpu_custom_call.1} parent=1 // loop_header_branch
      %25 = sbr.rel (%p23) target = $region8
    $region5: #{tpu_custom_call.1} parent=1 // loop_body
      %s27 = ssub.s32 %s22, 1
      %s28 = ssub.s32 %s22, 2
      %s29 = sadd.s32 %s22, 1
      %s30 = ssub.s32 %s22, %s29
      %p31 = scmp.eq.s32.totalorder %s30, 0
      %s33 = sadd.s32 %s32, 1
      %s34 = scalar_select %p31, %s32, %s33
      %p37 = pneg %p31
      %p38 = scmp.eq.s32.totalorder %s22, 1
      %p39 = por %p37, %p38
      %p40 = scmp.ne.s32.totalorder %s32, %s35
      %p41 = scmp.eq.s32.totalorder %s22, 0
      %p42 = por %p40, %p41
      %p43 = scmp.ne.s32.totalorder %s32, %s35
      %p44 = scmp.eq.s32.totalorder %s27, 1
      %p45 = por %p43, %p44
      %p46 = scmp.ne.s32.totalorder %s35, %s36
      %p47 = scmp.eq.s32.totalorder %s27, 0
      %p48 = por %p46, %p47
      %p49 = scmp.ne.s32.totalorder %s35, %s36
      %p50 = scmp.eq.s32.totalorder %s28, 1
      %p51 = por %p49, %p50
      %p53 = scmp.ne.s32.totalorder %s36, %s52
      %p54 = scmp.eq.s32.totalorder %s28, 0
      %p55 = por %p53, %p54
      %s57 = sadd.s32 %s56, 1
      %p60 = scmp.eq.s32.totalorder %s22, 1
      %p61 = scmp.ne.s32.totalorder %s56, %s58
      %p62 = scmp.eq.s32.totalorder %s22, 0
      %p63 = por %p61, %p62
      %p64 = scmp.ne.s32.totalorder %s56, %s58
      %p65 = scmp.eq.s32.totalorder %s27, 1
      %p66 = por %p64, %p65
      %p67 = scmp.ne.s32.totalorder %s58, %s59
      %p68 = scmp.eq.s32.totalorder %s27, 0
      %p69 = por %p67, %p68
      %p70 = scmp.ne.s32.totalorder %s58, %s59
      %p71 = scmp.eq.s32.totalorder %s28, 1
      %p72 = por %p70, %p71
      %p74 = scmp.ne.s32.totalorder %s59, %s73
      %p75 = scmp.eq.s32.totalorder %s28, 0
      %p76 = por %p74, %p75
      %s78 = sadd.s32 %s77, 1
      %p81 = scmp.eq.s32.totalorder %s22, 1
      %p82 = scmp.ne.s32.totalorder %s77, %s79
      %p83 = scmp.eq.s32.totalorder %s22, 0
      %p84 = por %p82, %p83
      %p85 = scmp.ne.s32.totalorder %s77, %s79
      %p86 = scmp.eq.s32.totalorder %s27, 1
      %p87 = por %p85, %p86
      %p88 = scmp.ne.s32.totalorder %s79, %s80
      %p89 = scmp.eq.s32.totalorder %s27, 0
      %p90 = por %p88, %p89
      %p91 = scmp.ne.s32.totalorder %s79, %s80
      %p92 = scmp.eq.s32.totalorder %s28, 1
      %p93 = por %p91, %p92
      %p95 = scmp.ne.s32.totalorder %s80, %s94
      %p96 = scmp.eq.s32.totalorder %s28, 0
      %p97 = por %p95, %p96
      %s99 = sadd.s32 %s98, 1
      %p102 = scmp.eq.s32.totalorder %s22, 1
      %p103 = scmp.ne.s32.totalorder %s98, %s100
      %p104 = scmp.eq.s32.totalorder %s22, 0
      %p105 = por %p103, %p104
      %p106 = scmp.ne.s32.totalorder %s98, %s100
      %p107 = scmp.eq.s32.totalorder %s27, 1
      %p108 = por %p106, %p107
      %p109 = scmp.ne.s32.totalorder %s100, %s101
      %p110 = scmp.eq.s32.totalorder %s27, 0
      %p111 = por %p109, %p110
      %p112 = scmp.ne.s32.totalorder %s100, %s101
      %p113 = scmp.eq.s32.totalorder %s28, 1
      %p114 = por %p112, %p113
      %p116 = scmp.ne.s32.totalorder %s101, %s115
      %p117 = scmp.eq.s32.totalorder %s28, 0
      %p118 = por %p116, %p117
      %s120 = sadd.s32 %s119, 1
      %p123 = scmp.eq.s32.totalorder %s22, 1
      %p124 = scmp.ne.s32.totalorder %s119, %s121
      %p125 = scmp.eq.s32.totalorder %s22, 0
      %p126 = por %p124, %p125
      %p127 = scmp.ne.s32.totalorder %s119, %s121
      %p128 = scmp.eq.s32.totalorder %s27, 1
      %p129 = por %p127, %p128
      %p130 = scmp.ne.s32.totalorder %s121, %s122
      %p131 = scmp.eq.s32.totalorder %s27, 0
      %p132 = por %p130, %p131
      %p133 = scmp.ne.s32.totalorder %s121, %s122
      %p134 = scmp.eq.s32.totalorder %s28, 1
      %p135 = por %p133, %p134
      %p137 = scmp.ne.s32.totalorder %s122, %s136
      %p138 = scmp.eq.s32.totalorder %s28, 0
      %p139 = por %p137, %p138
      %s141 = sadd.s32 %s140, 1
      %p144 = scmp.eq.s32.totalorder %s22, 1
      %p145 = scmp.ne.s32.totalorder %s140, %s142
      %p146 = scmp.eq.s32.totalorder %s22, 0
      %p147 = por %p145, %p146
      %p148 = scmp.ne.s32.totalorder %s140, %s142
      %p149 = scmp.eq.s32.totalorder %s27, 1
      %p150 = por %p148, %p149
      %p151 = scmp.ne.s32.totalorder %s142, %s143
      %p152 = scmp.eq.s32.totalorder %s27, 0
      %p153 = por %p151, %p152
      %p154 = scmp.ne.s32.totalorder %s142, %s143
      %p155 = scmp.eq.s32.totalorder %s28, 1
      %p156 = por %p154, %p155
      %p158 = scmp.ne.s32.totalorder %s143, %s157
      %p159 = scmp.eq.s32.totalorder %s28, 0
      %p160 = por %p158, %p159
      %s162 = sadd.s32 %s161, 1
      %p165 = scmp.eq.s32.totalorder %s22, 1
      %p166 = scmp.ne.s32.totalorder %s161, %s163
      %p167 = scmp.eq.s32.totalorder %s22, 0
      %p168 = por %p166, %p167
      %p169 = scmp.ne.s32.totalorder %s161, %s163
      %p170 = scmp.eq.s32.totalorder %s27, 1
      %p171 = por %p169, %p170
      %p172 = scmp.ne.s32.totalorder %s163, %s164
      %p173 = scmp.eq.s32.totalorder %s27, 0
      %p174 = por %p172, %p173
      %p175 = scmp.ne.s32.totalorder %s163, %s164
      %p176 = scmp.eq.s32.totalorder %s28, 1
      %p177 = por %p175, %p176
      %p179 = scmp.ne.s32.totalorder %s164, %s178
      %p180 = scmp.eq.s32.totalorder %s28, 0
      %p181 = por %p179, %p180
      %s183 = sadd.s32 %s182, 1
      %p186 = scmp.eq.s32.totalorder %s22, 1
      %p187 = scmp.ne.s32.totalorder %s182, %s184
      %p188 = scmp.eq.s32.totalorder %s22, 0
      %p189 = por %p187, %p188
      %p190 = scmp.ne.s32.totalorder %s182, %s184
      %p191 = scmp.eq.s32.totalorder %s27, 1
      %p192 = por %p190, %p191
      %p193 = scmp.ne.s32.totalorder %s184, %s185
      %p194 = scmp.eq.s32.totalorder %s27, 0
      %p195 = por %p193, %p194
      %p196 = scmp.ne.s32.totalorder %s184, %s185
      %p197 = scmp.eq.s32.totalorder %s28, 1
      %p198 = por %p196, %p197
      %p200 = scmp.ne.s32.totalorder %s185, %s199
      %p201 = scmp.eq.s32.totalorder %s28, 0
      %p202 = por %p200, %p201
      %s204 = sadd.s32 %s203, 1
      %p207 = scmp.eq.s32.totalorder %s22, 1
      %p208 = scmp.ne.s32.totalorder %s203, %s205
      %p209 = scmp.eq.s32.totalorder %s22, 0
      %p210 = por %p208, %p209
      %p211 = scmp.ne.s32.totalorder %s203, %s205
      %p212 = scmp.eq.s32.totalorder %s27, 1
      %p213 = por %p211, %p212
      %p214 = scmp.ne.s32.totalorder %s205, %s206
      %p215 = scmp.eq.s32.totalorder %s27, 0
      %p216 = por %p214, %p215
      %p217 = scmp.ne.s32.totalorder %s205, %s206
      %p218 = scmp.eq.s32.totalorder %s28, 1
      %p219 = por %p217, %p218
      %p221 = scmp.ne.s32.totalorder %s206, %s220
      %p222 = scmp.eq.s32.totalorder %s28, 0
      %p223 = por %p221, %p222
      %s225 = sadd.s32 %s224, 1
      %p228 = scmp.eq.s32.totalorder %s22, 1
      %p229 = scmp.ne.s32.totalorder %s224, %s226
      %p230 = scmp.eq.s32.totalorder %s22, 0
      %p231 = por %p229, %p230
      %p232 = scmp.ne.s32.totalorder %s224, %s226
      %p233 = scmp.eq.s32.totalorder %s27, 1
      %p234 = por %p232, %p233
      %p235 = scmp.ne.s32.totalorder %s226, %s227
      %p236 = scmp.eq.s32.totalorder %s27, 0
      %p237 = por %p235, %p236
      %p238 = scmp.ne.s32.totalorder %s226, %s227
      %p239 = scmp.eq.s32.totalorder %s28, 1
      %p240 = por %p238, %p239
      %p242 = scmp.ne.s32.totalorder %s227, %s241
      %p243 = scmp.eq.s32.totalorder %s28, 0
      %p244 = por %p242, %p243
      %s246 = sadd.s32 %s245, 1
      %p249 = scmp.eq.s32.totalorder %s22, 1
      %p250 = scmp.ne.s32.totalorder %s245, %s247
      %p251 = scmp.eq.s32.totalorder %s22, 0
      %p252 = por %p250, %p251
      %p253 = scmp.ne.s32.totalorder %s245, %s247
      %p254 = scmp.eq.s32.totalorder %s27, 1
      %p255 = por %p253, %p254
      %p256 = scmp.ne.s32.totalorder %s247, %s248
      %p257 = scmp.eq.s32.totalorder %s27, 0
      %p258 = por %p256, %p257
      %p259 = scmp.ne.s32.totalorder %s247, %s248
      %p260 = scmp.eq.s32.totalorder %s28, 1
      %p261 = por %p259, %p260
      %p263 = scmp.ne.s32.totalorder %s248, %s262
      %p264 = scmp.eq.s32.totalorder %s28, 0
      %p265 = por %p263, %p264
      %s267 = sadd.s32 %s266, 1
      %p270 = scmp.eq.s32.totalorder %s22, 1
      %p271 = scmp.ne.s32.totalorder %s266, %s268
      %p272 = scmp.eq.s32.totalorder %s22, 0
      %p273 = por %p271, %p272
      %p274 = scmp.ne.s32.totalorder %s266, %s268
      %p275 = scmp.eq.s32.totalorder %s27, 1
      %p276 = por %p274, %p275
      %p277 = scmp.ne.s32.totalorder %s268, %s269
      %p278 = scmp.eq.s32.totalorder %s27, 0
      %p279 = por %p277, %p278
      %p280 = scmp.ne.s32.totalorder %s268, %s269
      %p281 = scmp.eq.s32.totalorder %s28, 1
      %p282 = por %p280, %p281
      %p284 = scmp.ne.s32.totalorder %s269, %s283
      %p285 = scmp.eq.s32.totalorder %s28, 0
      %p286 = por %p284, %p285
      %s288 = sadd.s32 %s287, 1
      %p291 = scmp.eq.s32.totalorder %s22, 1
      %p292 = scmp.ne.s32.totalorder %s287, %s289
      %p293 = scmp.eq.s32.totalorder %s22, 0
      %p294 = por %p292, %p293
      %p295 = scmp.ne.s32.totalorder %s287, %s289
      %p296 = scmp.eq.s32.totalorder %s27, 1
      %p297 = por %p295, %p296
      %p298 = scmp.ne.s32.totalorder %s289, %s290
      %p299 = scmp.eq.s32.totalorder %s27, 0
      %p300 = por %p298, %p299
      %p301 = scmp.ne.s32.totalorder %s289, %s290
      %p302 = scmp.eq.s32.totalorder %s28, 1
      %p303 = por %p301, %p302
      %p305 = scmp.ne.s32.totalorder %s290, %s304
      %p306 = scmp.eq.s32.totalorder %s28, 0
      %p307 = por %p305, %p306
      %s308 = ssub.s32 %s22, %s29
      %p309 = scmp.eq.s32.totalorder %s308, 0
      %s311 = sadd.s32 %s310, 1
      %s312 = scalar_select %p309, %s310, %s311
      %p315 = pneg %p309
      %p316 = scmp.eq.s32.totalorder %s22, 1
      %p317 = por %p315, %p316
      %p318 = scmp.ne.s32.totalorder %s310, %s313
      %p319 = scmp.eq.s32.totalorder %s22, 0
      %p320 = por %p318, %p319
      %p321 = scmp.ne.s32.totalorder %s310, %s313
      %p322 = scmp.eq.s32.totalorder %s27, 1
      %p323 = por %p321, %p322
      %p324 = scmp.ne.s32.totalorder %s313, %s314
      %p325 = scmp.eq.s32.totalorder %s27, 0
      %p326 = por %p324, %p325
      %p327 = scmp.ne.s32.totalorder %s313, %s314
      %p328 = scmp.eq.s32.totalorder %s28, 1
      %p329 = por %p327, %p328
      %p331 = scmp.ne.s32.totalorder %s314, %s330
      %p332 = scmp.eq.s32.totalorder %s28, 0
      %p333 = por %p331, %p332
      %p334 = scmp.le.s32.totalorder 1, %s22
      %p335 = scmp.lt.s32.totalorder %s22, 3
      %p336 = pnand %p334, %p335
      %p337 = pneg %p336
      // Predicated region
      $region9: #{tpu_custom_call.1} parent=5 // pred_check
        _
      $region10: #{tpu_custom_call.1} parent=5 // pred_check_branch
        %339 = sbr.rel (%p336) target = $region12
      $region11: #{tpu_custom_call.1} parent=5 // pred_region
        %s340 = ssub.s32 %s22, 1
        // Predicated region
        $region13: #{tpu_custom_call.1} parent=11 // pred_check
          %p341 = pneg %p69
        $region14: #{tpu_custom_call.1} parent=11 // pred_check_branch
          %343 = sbr.rel (%p341) target = $region16
        $region15: #{tpu_custom_call.1} parent=11 // pred_region
          _
        $region16: #{tpu_custom_call.1} parent=11 // pred_fallthru
          _
        // Predicated region
        $region17: #{tpu_custom_call.1} parent=11 // pred_check
          %p344 = pneg %p90
        $region18: #{tpu_custom_call.1} parent=11 // pred_check_branch
          %346 = sbr.rel (%p344) target = $region20
        $region19: #{tpu_custom_call.1} parent=11 // pred_region
          _
        $region20: #{tpu_custom_call.1} parent=11 // pred_fallthru
          _
        // Predicated region
        $region21: #{tpu_custom_call.1} parent=11 // pred_check
          %p347 = pneg %p111
        $region22: #{tpu_custom_call.1} parent=11 // pred_check_branch
          %349 = sbr.rel (%p347) target = $region24
        $region23: #{tpu_custom_call.1} parent=11 // pred_region
          _
        $region24: #{tpu_custom_call.1} parent=11 // pred_fallthru
          _
        // Predicated region
        $region25: #{tpu_custom_call.1} parent=11 // pred_check
          %p350 = pneg %p132
        $region26: #{tpu_custom_call.1} parent=11 // pred_check_branch
          %352 = sbr.rel (%p350) target = $region28
        $region27: #{tpu_custom_call.1} parent=11 // pred_region
          _
        $region28: #{tpu_custom_call.1} parent=11 // pred_fallthru
          _
        // Predicated region
        $region29: #{tpu_custom_call.1} parent=11 // pred_check
          %p353 = pneg %p153
        $region30: #{tpu_custom_call.1} parent=11 // pred_check_branch
          %355 = sbr.rel (%p353) target = $region32
        $region31: #{tpu_custom_call.1} parent=11 // pred_region
          _
        $region32: #{tpu_custom_call.1} parent=11 // pred_fallthru
          _
        // Predicated region
        $region33: #{tpu_custom_call.1} parent=11 // pred_check
          %p356 = pneg %p174
        $region34: #{tpu_custom_call.1} parent=11 // pred_check_branch
          %358 = sbr.rel (%p356) target = $region36
        $region35: #{tpu_custom_call.1} parent=11 // pred_region
          _
        $region36: #{tpu_custom_call.1} parent=11 // pred_fallthru
          _
        // Predicated region
        $region37: #{tpu_custom_call.1} parent=11 // pred_check
          %p359 = pneg %p195
        $region38: #{tpu_custom_call.1} parent=11 // pred_check_branch
          %361 = sbr.rel (%p359) target = $region40
        $region39: #{tpu_custom_call.1} parent=11 // pred_region
          _
        $region40: #{tpu_custom_call.1} parent=11 // pred_fallthru
          _
        // Predicated region
        $region41: #{tpu_custom_call.1} parent=11 // pred_check
          %p362 = pneg %p216
        $region42: #{tpu_custom_call.1} parent=11 // pred_check_branch
          %364 = sbr.rel (%p362) target = $region44
        $region43: #{tpu_custom_call.1} parent=11 // pred_region
          _
        $region44: #{tpu_custom_call.1} parent=11 // pred_fallthru
          _
        // Predicated region
        $region45: #{tpu_custom_call.1} parent=11 // pred_check
          %p365 = pneg %p237
        $region46: #{tpu_custom_call.1} parent=11 // pred_check_branch
          %367 = sbr.rel (%p365) target = $region48
        $region47: #{tpu_custom_call.1} parent=11 // pred_region
          _
        $region48: #{tpu_custom_call.1} parent=11 // pred_fallthru
          _
        // Predicated region
        $region49: #{tpu_custom_call.1} parent=11 // pred_check
          %p368 = pneg %p258
        $region50: #{tpu_custom_call.1} parent=11 // pred_check_branch
          %370 = sbr.rel (%p368) target = $region52
        $region51: #{tpu_custom_call.1} parent=11 // pred_region
          _
        $region52: #{tpu_custom_call.1} parent=11 // pred_fallthru
          _
        // Predicated region
        $region53: #{tpu_custom_call.1} parent=11 // pred_check
          %p371 = pneg %p279
        $region54: #{tpu_custom_call.1} parent=11 // pred_check_branch
          %373 = sbr.rel (%p371) target = $region56
        $region55: #{tpu_custom_call.1} parent=11 // pred_region
          _
        $region56: #{tpu_custom_call.1} parent=11 // pred_fallthru
          _
        // Predicated region
        $region57: #{tpu_custom_call.1} parent=11 // pred_check
          %p374 = pneg %p300
        $region58: #{tpu_custom_call.1} parent=11 // pred_check_branch
          %376 = sbr.rel (%p374) target = $region60
        $region59: #{tpu_custom_call.1} parent=11 // pred_region
          _
        $region60: #{tpu_custom_call.1} parent=11 // pred_fallthru
          _
      $region12: #{tpu_custom_call.1} parent=5 // pred_fallthru
        _
      %p377 = scmp.lt.s32.totalorder %s22, 2
      // Predicated region
      $region61: #{tpu_custom_call.1} parent=5 // pred_check
        %p378 = pneg %p377
      $region62: #{tpu_custom_call.1} parent=5 // pred_check_branch
        %380 = sbr.rel (%p378) target = $region64
      $region63: #{tpu_custom_call.1} parent=5 // pred_region
        // Predicated region
        $region65: #{tpu_custom_call.1} parent=63 // pred_check
          %p381 = pneg %p42
        $region66: #{tpu_custom_call.1} parent=63 // pred_check_branch
          %383 = sbr.rel (%p381) target = $region68
        $region67: #{tpu_custom_call.1} parent=63 // pred_region
          %p384 = scmp.lt.s32.totalorder %s22, 1
          %s385 = scalar_select %p384, %s22, 1
          %s386 = smul.addr %s385, 2
          %s387 = smul.addr %s386, 8
          %s388 = scalar_lea.vmem %s0, %s387
        $region68: #{tpu_custom_call.1} parent=63 // pred_fallthru
          _
      $region64: #{tpu_custom_call.1} parent=5 // pred_fallthru
        _
      %p389 = scmp.le.s32.totalorder 1, %s22
      %p390 = scmp.lt.s32.totalorder %s22, 3
      %p391 = pnand %p389, %p390
      %p392 = pneg %p391
      // Predicated region
      $region69: #{tpu_custom_call.1} parent=5 // pred_check
        _
      $region70: #{tpu_custom_call.1} parent=5 // pred_check_branch
        %394 = sbr.rel (%p391) target = $region72
      $region71: #{tpu_custom_call.1} parent=5 // pred_region
        %s395 = ssub.s32 %s22, 1
        %p396 = scmp.lt.s32.totalorder %s27, 1
        %s397 = scalar_select %p396, %s27, 1
        %s398 = smul.addr %s397, 2
        %s399 = smul.addr %s398, 8
        %s400 = scalar_lea.vmem %s0, %s399
        %p401 = pneg %p48
        %p402 = pneg %p45
        %p403 = pneg %p69
        %p404 = pneg %p66
        %p405 = pneg %p90
        %p406 = pneg %p87
        %p407 = pneg %p111
        %p408 = pneg %p108
        %p409 = pneg %p132
        %p410 = pneg %p129
        %p411 = pneg %p153
        %p412 = pneg %p150
        %p413 = pneg %p174
        %p414 = pneg %p171
        %p415 = pneg %p195
        %p416 = pneg %p192
        %p417 = pneg %p216
        %p418 = pneg %p213
        %p419 = pneg %p237
        %p420 = pneg %p234
        %p421 = pneg %p258
        %p422 = pneg %p255
        %p423 = pneg %p279
        %p424 = pneg %p276
        %p425 = pneg %p300
        %p426 = pneg %p297
        %p427 = pneg %p326
        %p428 = pneg %p323
        %s429 = sand.u32 %s313, 1
        %s430 = scalar_lea.sflag [#allocation7], %s429
        %s431 = sand.u32 %s313, 1
        %s432 = smul.addr %s431, 16
        %s433 = scalar_lea.vmem [#allocation6], %s432
        %p434 = scmp.lt.s32.totalorder %s27, 1
        %s435 = scalar_select %p434, %s27, 1
        %s436 = smul.addr %s435, 2
        %s437 = smul.addr %s436, 8
        %s438 = scalar_lea.vmem %s0, %s437
        %v439 = vld [vmem:[%s438] sm:$0xff]
        %v440 = vld [vmem:[%s438 + $0x8] sm:$0xff]
        %v441 = vld [vmem:[%s1] sm:$0x1]
        %v442 = vld [vmem:[%s2] sm:$0x1]
        %vm443 = vcmask 523264
        %v444 = vsel %vm443, %v439, 0.0
        %445 = vadd.xlane.f32.xlu0 %v444
        %v446 = vpop.xlane.xlu0 %445
        %v447 = vsel %vm443, %v440, 0.0
        %448 = vadd.xlane.f32.xlu0 %v447
        %v449 = vpop.xlane.xlu0 %448
        %v450 = vrcp.pop 64.0
        %v451 = vmul.f32 %v446, %v450
        %v452 = vmul.f32 %v449, %v450
        %v453 = vsub.f32 %v439, %v451
        %v454 = vsub.f32 %v440, %v452
        %v455 = vmul.f32 %v453, %v453
        %v456 = vmul.f32 %v454, %v454
        %v457 = vsel %vm443, %v455, 0.0
        %458 = vadd.xlane.f32.xlu0 %v457
        %v459 = vpop.xlane.xlu0 %458
        %v460 = vsel %vm443, %v456, 0.0
        %461 = vadd.xlane.f32.xlu0 %v460
        %v462 = vpop.xlane.xlu0 %461
        %v463 = vmul.f32 %v459, %v450
        %v464 = vmul.f32 %v462, %v450
        %v465 = vadd.f32 %v463, 1e-05
        %v466 = vadd.f32 %v464, 1e-05
        %v467 = vrsqrt.pop %v465
        %v468 = vrsqrt.pop %v466
        %v469 = vmul.f32 %v453, %v467
        %v470 = vmul.f32 %v454, %v468
        %v472 = vlaneseq
        %v473 = vshrl.u32 %v472, 7
        %v474 = vsub.s32 0, %v473
        %v475 = vrot.slane %v441, %v474
        %v477 = vmul.f32 %v469, %v475
        %v478 = vmul.f32 %v470, %v475
        %v480 = vlaneseq
        %v481 = vshrl.u32 %v480, 7
        %v482 = vsub.s32 0, %v481
        %v483 = vrot.slane %v442, %v482
        %v485 = vadd.f32 %v477, %v483
        %v486 = vadd.f32 %v478, %v483
        %v487 = vld [vmem:[%s3] sm:$0xff]
        %v488 = vld [vmem:[%s3 + $0x8] sm:$0xff]
        %v489 = vld [vmem:[%s3 + $0x10] sm:$0xff]
        %v490 = vld [vmem:[%s3 + $0x18] sm:$0xff]
        %v491 = vld [vmem:[%s3 + $0x20] sm:$0xff]
        %v492 = vld [vmem:[%s3 + $0x28] sm:$0xff]
        %v493 = vld [vmem:[%s3 + $0x30] sm:$0xff]
        %v494 = vld [vmem:[%s3 + $0x38] sm:$0xff]
        %v495 = vld [vmem:[%s3 + $0x40] sm:$0xff]
        %v496 = vld [vmem:[%s3 + $0x48] sm:$0xff]
        %v497 = vld [vmem:[%s3 + $0x50] sm:$0xff]
        %v498 = vld [vmem:[%s3 + $0x58] sm:$0xff]
        %v499 = vld [vmem:[%s3 + $0x60] sm:$0xff]
        %v500 = vld [vmem:[%s3 + $0x68] sm:$0xff]
        %v501 = vld [vmem:[%s3 + $0x70] sm:$0xff]
        %v502 = vld [vmem:[%s3 + $0x78] sm:$0xff]
        %v503 = vld [vmem:[%s4] sm:$0x3]
        %v505 = vlaneseq
        %v506 = vshrl.u32 %v505, 7
        %v507 = vsub.s32 0, %v506
        %v508 = vrot.slane %v503, %v507
        %v509 = vlaneseq
        %v510 = vshrl.u32 %v509, 7
        %v511 = vsub.s32 1, %v510
        %v512 = vrot.slane %v503, %v511
        %v516 = vsel %vm443, %v485, 0
        %v519 = vsel %vm443, %v486, 0
        %521 = vmatprep.subr.mxu0 0.0
        %522 = vmatpush1.msra.mxu0 0.0
        %523 = vmatprep.subr.mxu0 0.0
        %524 = vmatpush1.msra.mxu0 0.0
        %525 = vmatprep.subr.mxu0 0.0
        %526 = vmatpush1.msra.mxu0 0.0
        %527 = vmatprep.subr.mxu0 0.0
        %528 = vmatpush1.msra.mxu0 0.0
        %529 = vmatprep.subr.mxu0 0.0
        %530 = vmatpush1.msra.mxu0 0.0
        %531 = vmatprep.subr.mxu0 0.0
        %532 = vmatpush1.msra.mxu0 0.0
        %533 = vmatprep.subr.mxu0 0.0
        %534 = vmatpush1.msra.mxu0 0.0
        %535 = vmatprep.subr.mxu0 0.0
        %536 = vmatpush1.msra.mxu0 0.0
        %537 = vmatprep.subr.mxu0 %v502
        %538 = vmatpush1.msra.mxu0 %v501
        %539 = vmatprep.subr.mxu0 %v500
        %540 = vmatpush1.msra.mxu0 %v499
        %541 = vmatprep.subr.mxu0 %v498
        %542 = vmatpush1.msra.mxu0 %v497
        %543 = vmatprep.subr.mxu0 %v496
        %544 = vmatpush1.msra.mxu0 %v495
        %545 = vmatprep.subr.mxu0 %v494
        %546 = vmatpush1.msra.mxu0 %v493
        %547 = vmatprep.subr.mxu0 %v492
        %548 = vmatpush1.msra.mxu0 %v491
        %549 = vmatprep.subr.mxu0 %v490
        %550 = vmatpush1.msra.mxu0 %v489
        %551 = vmatprep.subr.mxu0 %v488
        %552 = vmatpush1.msra.mxu0 %v487
        %553 = vmatprep.subr.mxu0 0.0
        %554 = vmatpush2.msra.mxu0 0.0
        %555 = vmatprep.subr.mxu0 0.0
        %556 = vmatpush2.msra.mxu0 0.0
        %557 = vmatprep.subr.mxu0 0.0
        %558 = vmatpush2.msra.mxu0 0.0
        %559 = vmatprep.subr.mxu0 0.0
        %560 = vmatpush2.msra.mxu0 0.0
        %561 = vmatprep.subr.mxu0 0.0
        %562 = vmatpush2.msra.mxu0 0.0
        %563 = vmatprep.subr.mxu0 0.0
        %564 = vmatpush2.msra.mxu0 0.0
        %565 = vmatprep.subr.mxu0 0.0
        %566 = vmatpush2.msra.mxu0 0.0
        %567 = vmatprep.subr.mxu0 0.0
        %568 = vmatpush2.msra.mxu0 0.0
        %569 = vmatprep.subr.mxu0 0.0
        %570 = vmatpush2.msra.mxu0 0.0
        %571 = vmatprep.subr.mxu0 0.0
        %572 = vmatpush2.msra.mxu0 0.0
        %573 = vmatprep.subr.mxu0 0.0
        %574 = vmatpush2.msra.mxu0 0.0
        %575 = vmatprep.subr.mxu0 0.0
        %576 = vmatpush2.msra.mxu0 0.0
        %577 = vmatprep.subr.mxu0 0.0
        %578 = vmatpush2.msra.mxu0 0.0
        %579 = vmatprep.subr.mxu0 0.0
        %580 = vmatpush2.msra.mxu0 0.0
        %581 = vmatprep.subr.mxu0 0.0
        %582 = vmatpush2.msra.mxu0 0.0
        %583 = vmatprep.subr.mxu0 0.0
        %584 = vmatpush2.msra.mxu0 0.0
        %585 = vmatprep.mubr.f32.mxu0 0.0
        %586 = vmatmul.mubr.f32.gmra.mxu0 %v516
        %v587 = vpop.f32.mrf.mxu0
        %v588 = vadd.f32 %v508, %v587
        %v589 = vpop.f32.mrf.mxu0
        %v590 = vadd.f32 %v512, %v589
        %591 = vmatprep.mubr.f32.mxu0 0.0
        %592 = vmatmul.mubr.f32.gmra.mxu0 %v519
        %v593 = vpop.f32.mrf.mxu0
        %v594 = vadd.f32 %v508, %v593
        %v595 = vpop.f32.mrf.mxu0
        %v596 = vadd.f32 %v512, %v595
        %597 = vdwg.mxu0
        %v598 = vmul.f32 %v588, 0.25
        %v599 = vmul.f32 %v594, 0.25
        %vm600 = vcmask 130048
        %601 = vst.msk [vmem:[#allocation2] sm:$0xff] %vm600, %v598
        %602 = vst.msk [vmem:[#allocation2 + $0x8] sm:$0xff] %vm600, %v599
        %605 = vrot.lane.b32.xlu0 %v588, 64
        %v606 = vpop.permute.xlu0 %605
        %607 = vrot.lane.b32.xlu0 %v594, 64
        %v608 = vpop.permute.xlu0 %607
        %611 = vst.msk [vmem:[#allocation3] sm:$0xff] %vm600, %v606
        %612 = vst.msk [vmem:[#allocation3 + $0x8] sm:$0xff] %vm600, %v608
        %613 = vst.msk [vmem:[#allocation4] sm:$0xff] %vm600, %v590
        %614 = vst.msk [vmem:[#allocation4 + $0x8] sm:$0xff] %vm600, %v596
        %617 = vrot.lane.b32.xlu0 %v598, 112
        %v618 = vpop.permute.xlu0 %617
        %619 = vrot.lane.b32.xlu0 %v599, 112
        %v620 = vpop.permute.xlu0 %619
        %s623 = scalar_lea.vmem [#allocation2], 16
        %624 = vst.msk [vmem:[%s623] sm:$0xff] %vm600, %v618
        %625 = vst.msk [vmem:[%s623 + $0x8] sm:$0xff] %vm600, %v620
        %626 = vrot.lane.b32.xlu0 %v588, 48
        %v627 = vpop.permute.xlu0 %626
        %628 = vrot.lane.b32.xlu0 %v594, 48
        %v629 = vpop.permute.xlu0 %628
        %s632 = scalar_lea.vmem [#allocation3], 16
        %633 = vst.msk [vmem:[%s632] sm:$0xff] %vm600, %v627
        %634 = vst.msk [vmem:[%s632 + $0x8] sm:$0xff] %vm600, %v629
        %637 = vrot.lane.b32.xlu0 %v590, 112
        %v638 = vpop.permute.xlu0 %637
        %639 = vrot.lane.b32.xlu0 %v596, 112
        %v640 = vpop.permute.xlu0 %639
        %s643 = scalar_lea.vmem [#allocation4], 16
        %644 = vst.msk [vmem:[%s643] sm:$0xff] %vm600, %v638
        %645 = vst.msk [vmem:[%s643 + $0x8] sm:$0xff] %vm600, %v640
        %646 = vrot.lane.b32.xlu0 %v598, 96
        %v647 = vpop.permute.xlu0 %646
        %648 = vrot.lane.b32.xlu0 %v599, 96
        %v649 = vpop.permute.xlu0 %648
        %s652 = scalar_lea.vmem [#allocation2], 32
        %653 = vst.msk [vmem:[%s652] sm:$0xff] %vm600, %v647
        %654 = vst.msk [vmem:[%s652 + $0x8] sm:$0xff] %vm600, %v649
        %655 = vrot.lane.b32.xlu0 %v588, 32
        %v656 = vpop.permute.xlu0 %655
        %657 = vrot.lane.b32.xlu0 %v594, 32
        %v658 = vpop.permute.xlu0 %657
        %s661 = scalar_lea.vmem [#allocation3], 32
        %662 = vst.msk [vmem:[%s661] sm:$0xff] %vm600, %v656
        %663 = vst.msk [vmem:[%s661 + $0x8] sm:$0xff] %vm600, %v658
        %664 = vrot.lane.b32.xlu0 %v590, 96
        %v665 = vpop.permute.xlu0 %664
        %666 = vrot.lane.b32.xlu0 %v596, 96
        %v667 = vpop.permute.xlu0 %666
        %s670 = scalar_lea.vmem [#allocation4], 32
        %671 = vst.msk [vmem:[%s670] sm:$0xff] %vm600, %v665
        %672 = vst.msk [vmem:[%s670 + $0x8] sm:$0xff] %vm600, %v667
        %673 = vrot.lane.b32.xlu0 %v598, 80
        %v674 = vpop.permute.xlu0 %673
        %675 = vrot.lane.b32.xlu0 %v599, 80
        %v676 = vpop.permute.xlu0 %675
        %s679 = scalar_lea.vmem [#allocation2], 48
        %680 = vst.msk [vmem:[%s679] sm:$0xff] %vm600, %v674
        %681 = vst.msk [vmem:[%s679 + $0x8] sm:$0xff] %vm600, %v676
        %682 = vrot.lane.b32.xlu0 %v588, 16
        %v683 = vpop.permute.xlu0 %682
        %684 = vrot.lane.b32.xlu0 %v594, 16
        %v685 = vpop.permute.xlu0 %684
        %s688 = scalar_lea.vmem [#allocation3], 48
        %689 = vst.msk [vmem:[%s688] sm:$0xff] %vm600, %v683
        %690 = vst.msk [vmem:[%s688 + $0x8] sm:$0xff] %vm600, %v685
        %691 = vrot.lane.b32.xlu0 %v590, 80
        %v692 = vpop.permute.xlu0 %691
        %693 = vrot.lane.b32.xlu0 %v596, 80
        %v694 = vpop.permute.xlu0 %693
        %s697 = scalar_lea.vmem [#allocation4], 48
        %698 = vst.msk [vmem:[%s697] sm:$0xff] %vm600, %v692
        %699 = vst.msk [vmem:[%s697 + $0x8] sm:$0xff] %vm600, %v694
        %v700 = vlaneseq
        %v701 = vshrl.u32 %v700, 7
        %v702 = vlaneseq
        %v703 = vand.u32 %v702, 127
        %vm704 = vcmp.ge.s32.totalorder %v701, %v703
        %v705 = vld [vmem:[%s5] sm:$0xff]
        %v706 = vld [vmem:[%s5 + $0x8] sm:$0xff]
        %v707 = vld [vmem:[%s5 + $0x10] sm:$0xff]
        %v708 = vld [vmem:[%s5 + $0x18] sm:$0xff]
        %v709 = vld [vmem:[%s5 + $0x20] sm:$0xff]
        %v710 = vld [vmem:[%s5 + $0x28] sm:$0xff]
        %v711 = vld [vmem:[%s5 + $0x30] sm:$0xff]
        %v712 = vld [vmem:[%s5 + $0x38] sm:$0xff]
        %v713 = vld [vmem:[%s6] sm:$0x1]
        %v714 = vld [vmem:[#allocation2] sm:$0xff]
        %v715 = vld [vmem:[#allocation2 + $0x10] sm:$0xff]
        %v716 = vld [vmem:[#allocation2 + $0x20] sm:$0xff]
        %v717 = vld [vmem:[#allocation2 + $0x30] sm:$0xff]
        %v718 = vld [vmem:[#allocation3] sm:$0xff]
        %v719 = vld [vmem:[#allocation3 + $0x10] sm:$0xff]
        %v720 = vld [vmem:[#allocation3 + $0x20] sm:$0xff]
        %v721 = vld [vmem:[#allocation3 + $0x30] sm:$0xff]
        %v722 = vld [vmem:[#allocation4] sm:$0xff]
        %v723 = vld [vmem:[#allocation4 + $0x10] sm:$0xff]
        %v724 = vld [vmem:[#allocation4 + $0x20] sm:$0xff]
        %v725 = vld [vmem:[#allocation4 + $0x30] sm:$0xff]
        %v727 = vsel %vm600, %v714, 0
        %v730 = vsel %vm600, %v718, 0
        %732 = vmatprep.subr.mxu0 0.0
        %733 = vmatpush1.xpose.msra.mxu0 0.0
        %734 = vmatprep.subr.mxu0 0.0
        %735 = vmatpush1.xpose.msra.mxu0 0.0
        %736 = vmatprep.subr.mxu0 0.0
        %737 = vmatpush1.xpose.msra.mxu0 0.0
        %738 = vmatprep.subr.mxu0 0.0
        %739 = vmatpush1.xpose.msra.mxu0 0.0
        %740 = vmatprep.subr.mxu0 0.0
        %741 = vmatpush1.xpose.msra.mxu0 0.0
        %742 = vmatprep.subr.mxu0 0.0
        %743 = vmatpush1.xpose.msra.mxu0 0.0
        %744 = vmatprep.subr.mxu0 0.0
        %745 = vmatpush1.xpose.msra.mxu0 0.0
        %746 = vmatprep.subr.mxu0 0.0
        %747 = vmatpush1.xpose.msra.mxu0 0.0
        %748 = vmatprep.subr.mxu0 0.0
        %749 = vmatpush1.xpose.msra.mxu0 0.0
        %750 = vmatprep.subr.mxu0 0.0
        %751 = vmatpush1.xpose.msra.mxu0 0.0
        %752 = vmatprep.subr.mxu0 0.0
        %753 = vmatpush1.xpose.msra.mxu0 0.0
        %754 = vmatprep.subr.mxu0 0.0
        %755 = vmatpush1.xpose.msra.mxu0 0.0
        %756 = vmatprep.subr.mxu0 0.0
        %757 = vmatpush1.xpose.msra.mxu0 0.0
        %758 = vmatprep.subr.mxu0 0.0
        %759 = vmatpush1.xpose.msra.mxu0 0.0
        %760 = vmatprep.subr.mxu0 0.0
        %761 = vmatpush1.xpose.msra.mxu0 0.0
        %762 = vmatprep.subr.mxu0 0.0
        %763 = vmatpush1.xpose.msra.mxu0 %v730
        %764 = vmatprep.subr.mxu0 0.0
        %765 = vmatpush2.xpose.msra.mxu0 0.0
        %766 = vmatprep.subr.mxu0 0.0
        %767 = vmatpush2.xpose.msra.mxu0 0.0
        %768 = vmatprep.subr.mxu0 0.0
        %769 = vmatpush2.xpose.msra.mxu0 0.0
        %770 = vmatprep.subr.mxu0 0.0
        %771 = vmatpush2.xpose.msra.mxu0 0.0
        %772 = vmatprep.subr.mxu0 0.0
        %773 = vmatpush2.xpose.msra.mxu0 0.0
        %774 = vmatprep.subr.mxu0 0.0
        %775 = vmatpush2.xpose.msra.mxu0 0.0
        %776 = vmatprep.subr.mxu0 0.0
        %777 = vmatpush2.xpose.msra.mxu0 0.0
        %778 = vmatprep.subr.mxu0 0.0
        %779 = vmatpush2.xpose.msra.mxu0 0.0
        %780 = vmatprep.subr.mxu0 0.0
        %781 = vmatpush2.xpose.msra.mxu0 0.0
        %782 = vmatprep.subr.mxu0 0.0
        %783 = vmatpush2.xpose.msra.mxu0 0.0
        %784 = vmatprep.subr.mxu0 0.0
        %785 = vmatpush2.xpose.msra.mxu0 0.0
        %786 = vmatprep.subr.mxu0 0.0
        %787 = vmatpush2.xpose.msra.mxu0 0.0
        %788 = vmatprep.subr.mxu0 0.0
        %789 = vmatpush2.xpose.msra.mxu0 0.0
        %790 = vmatprep.subr.mxu0 0.0
        %791 = vmatpush2.xpose.msra.mxu0 0.0
        %792 = vmatprep.subr.mxu0 0.0
        %793 = vmatpush2.xpose.msra.mxu0 0.0
        %794 = vmatprep.subr.mxu0 0.0
        %795 = vmatpush2.xpose.msra.mxu0 0.0
        %796 = vmatprep.mubr.f32.mxu0 0.0
        %797 = vmatmul.mubr.f32.gmra.mxu0 %v727
        %v798 = vpop.f32.mrf.mxu0
        %v799 = vadd.f32 0.0, %v798
        %v800 = vpop.f32.mrf.mxu0
        %801 = vdwg.mxu0
        %v803 = vsel %vm600, %v715, 0
        %v806 = vsel %vm600, %v719, 0
        %808 = vmatprep.subr.mxu0 0.0
        %809 = vmatpush1.xpose.msra.mxu0 0.0
        %810 = vmatprep.subr.mxu0 0.0
        %811 = vmatpush1.xpose.msra.mxu0 0.0
        %812 = vmatprep.subr.mxu0 0.0
        %813 = vmatpush1.xpose.msra.mxu0 0.0
        %814 = vmatprep.subr.mxu0 0.0
        %815 = vmatpush1.xpose.msra.mxu0 0.0
        %816 = vmatprep.subr.mxu0 0.0
        %817 = vmatpush1.xpose.msra.mxu0 0.0
        %818 = vmatprep.subr.mxu0 0.0
        %819 = vmatpush1.xpose.msra.mxu0 0.0
        %820 = vmatprep.subr.mxu0 0.0
        %821 = vmatpush1.xpose.msra.mxu0 0.0
        %822 = vmatprep.subr.mxu0 0.0
        %823 = vmatpush1.xpose.msra.mxu0 0.0
        %824 = vmatprep.subr.mxu0 0.0
        %825 = vmatpush1.xpose.msra.mxu0 0.0
        %826 = vmatprep.subr.mxu0 0.0
        %827 = vmatpush1.xpose.msra.mxu0 0.0
        %828 = vmatprep.subr.mxu0 0.0
        %829 = vmatpush1.xpose.msra.mxu0 0.0
        %830 = vmatprep.subr.mxu0 0.0
        %831 = vmatpush1.xpose.msra.mxu0 0.0
        %832 = vmatprep.subr.mxu0 0.0
        %833 = vmatpush1.xpose.msra.mxu0 0.0
        %834 = vmatprep.subr.mxu0 0.0
        %835 = vmatpush1.xpose.msra.mxu0 0.0
        %836 = vmatprep.subr.mxu0 0.0
        %837 = vmatpush1.xpose.msra.mxu0 0.0
        %838 = vmatprep.subr.mxu0 0.0
        %839 = vmatpush1.xpose.msra.mxu0 %v806
        %840 = vmatprep.subr.mxu0 0.0
        %841 = vmatpush2.xpose.msra.mxu0 0.0
        %842 = vmatprep.subr.mxu0 0.0
        %843 = vmatpush2.xpose.msra.mxu0 0.0
        %844 = vmatprep.subr.mxu0 0.0
        %845 = vmatpush2.xpose.msra.mxu0 0.0
        %846 = vmatprep.subr.mxu0 0.0
        %847 = vmatpush2.xpose.msra.mxu0 0.0
        %848 = vmatprep.subr.mxu0 0.0
        %849 = vmatpush2.xpose.msra.mxu0 0.0
        %850 = vmatprep.subr.mxu0 0.0
        %851 = vmatpush2.xpose.msra.mxu0 0.0
        %852 = vmatprep.subr.mxu0 0.0
        %853 = vmatpush2.xpose.msra.mxu0 0.0
        %854 = vmatprep.subr.mxu0 0.0
        %855 = vmatpush2.xpose.msra.mxu0 0.0
        %856 = vmatprep.subr.mxu0 0.0
        %857 = vmatpush2.xpose.msra.mxu0 0.0
        %858 = vmatprep.subr.mxu0 0.0
        %859 = vmatpush2.xpose.msra.mxu0 0.0
        %860 = vmatprep.subr.mxu0 0.0
        %861 = vmatpush2.xpose.msra.mxu0 0.0
        %862 = vmatprep.subr.mxu0 0.0
        %863 = vmatpush2.xpose.msra.mxu0 0.0
        %864 = vmatprep.subr.mxu0 0.0
        %865 = vmatpush2.xpose.msra.mxu0 0.0
        %866 = vmatprep.subr.mxu0 0.0
        %867 = vmatpush2.xpose.msra.mxu0 0.0
        %868 = vmatprep.subr.mxu0 0.0
        %869 = vmatpush2.xpose.msra.mxu0 0.0
        %870 = vmatprep.subr.mxu0 0.0
        %871 = vmatpush2.xpose.msra.mxu0 0.0
        %872 = vmatprep.mubr.f32.mxu0 0.0
        %873 = vmatmul.mubr.f32.gmra.mxu0 %v803
        %v874 = vpop.f32.mrf.mxu0
        %v875 = vadd.f32 0.0, %v874
        %v876 = vpop.f32.mrf.mxu0
        %877 = vdwg.mxu0
        %v879 = vsel %vm600, %v716, 0
        %v882 = vsel %vm600, %v720, 0
        %884 = vmatprep.subr.mxu0 0.0
        %885 = vmatpush1.xpose.msra.mxu0 0.0
        %886 = vmatprep.subr.mxu0 0.0
        %887 = vmatpush1.xpose.msra.mxu0 0.0
        %888 = vmatprep.subr.mxu0 0.0
        %889 = vmatpush1.xpose.msra.mxu0 0.0
        %890 = vmatprep.subr.mxu0 0.0
        %891 = vmatpush1.xpose.msra.mxu0 0.0
        %892 = vmatprep.subr.mxu0 0.0
        %893 = vmatpush1.xpose.msra.mxu0 0.0
        %894 = vmatprep.subr.mxu0 0.0
        %895 = vmatpush1.xpose.msra.mxu0 0.0
        %896 = vmatprep.subr.mxu0 0.0
        %897 = vmatpush1.xpose.msra.mxu0 0.0
        %898 = vmatprep.subr.mxu0 0.0
        %899 = vmatpush1.xpose.msra.mxu0 0.0
        %900 = vmatprep.subr.mxu0 0.0
        %901 = vmatpush1.xpose.msra.mxu0 0.0
        %902 = vmatprep.subr.mxu0 0.0
        %903 = vmatpush1.xpose.msra.mxu0 0.0
        %904 = vmatprep.subr.mxu0 0.0
        %905 = vmatpush1.xpose.msra.mxu0 0.0
        %906 = vmatprep.subr.mxu0 0.0
        %907 = vmatpush1.xpose.msra.mxu0 0.0
        %908 = vmatprep.subr.mxu0 0.0
        %909 = vmatpush1.xpose.msra.mxu0 0.0
        %910 = vmatprep.subr.mxu0 0.0
        %911 = vmatpush1.xpose.msra.mxu0 0.0
        %912 = vmatprep.subr.mxu0 0.0
        %913 = vmatpush1.xpose.msra.mxu0 0.0
        %914 = vmatprep.subr.mxu0 0.0
        %915 = vmatpush1.xpose.msra.mxu0 %v882
        %916 = vmatprep.subr.mxu0 0.0
        %917 = vmatpush2.xpose.msra.mxu0 0.0
        %918 = vmatprep.subr.mxu0 0.0
        %919 = vmatpush2.xpose.msra.mxu0 0.0
        %920 = vmatprep.subr.mxu0 0.0
        %921 = vmatpush2.xpose.msra.mxu0 0.0
        %922 = vmatprep.subr.mxu0 0.0
        %923 = vmatpush2.xpose.msra.mxu0 0.0
        %924 = vmatprep.subr.mxu0 0.0
        %925 = vmatpush2.xpose.msra.mxu0 0.0
        %926 = vmatprep.subr.mxu0 0.0
        %927 = vmatpush2.xpose.msra.mxu0 0.0
        %928 = vmatprep.subr.mxu0 0.0
        %929 = vmatpush2.xpose.msra.mxu0 0.0
        %930 = vmatprep.subr.mxu0 0.0
        %931 = vmatpush2.xpose.msra.mxu0 0.0
        %932 = vmatprep.subr.mxu0 0.0
        %933 = vmatpush2.xpose.msra.mxu0 0.0
        %934 = vmatprep.subr.mxu0 0.0
        %935 = vmatpush2.xpose.msra.mxu0 0.0
        %936 = vmatprep.subr.mxu0 0.0
        %937 = vmatpush2.xpose.msra.mxu0 0.0
        %938 = vmatprep.subr.mxu0 0.0
        %939 = vmatpush2.xpose.msra.mxu0 0.0
        %940 = vmatprep.subr.mxu0 0.0
        %941 = vmatpush2.xpose.msra.mxu0 0.0
        %942 = vmatprep.subr.mxu0 0.0
        %943 = vmatpush2.xpose.msra.mxu0 0.0
        %944 = vmatprep.subr.mxu0 0.0
        %945 = vmatpush2.xpose.msra.mxu0 0.0
        %946 = vmatprep.subr.mxu0 0.0
        %947 = vmatpush2.xpose.msra.mxu0 0.0
        %948 = vmatprep.mubr.f32.mxu0 0.0
        %949 = vmatmul.mubr.f32.gmra.mxu0 %v879
        %v950 = vpop.f32.mrf.mxu0
        %v951 = vadd.f32 0.0, %v950
        %v952 = vpop.f32.mrf.mxu0
        %953 = vdwg.mxu0
        %v955 = vsel %vm600, %v717, 0
        %v958 = vsel %vm600, %v721, 0
        %960 = vmatprep.subr.mxu0 0.0
        %961 = vmatpush1.xpose.msra.mxu0 0.0
        %962 = vmatprep.subr.mxu0 0.0
        %963 = vmatpush1.xpose.msra.mxu0 0.0
        %964 = vmatprep.subr.mxu0 0.0
        %965 = vmatpush1.xpose.msra.mxu0 0.0
        %966 = vmatprep.subr.mxu0 0.0
        %967 = vmatpush1.xpose.msra.mxu0 0.0
        %968 = vmatprep.subr.mxu0 0.0
        %969 = vmatpush1.xpose.msra.mxu0 0.0
        %970 = vmatprep.subr.mxu0 0.0
        %971 = vmatpush1.xpose.msra.mxu0 0.0
        %972 = vmatprep.subr.mxu0 0.0
        %973 = vmatpush1.xpose.msra.mxu0 0.0
        %974 = vmatprep.subr.mxu0 0.0
        %975 = vmatpush1.xpose.msra.mxu0 0.0
        %976 = vmatprep.subr.mxu0 0.0
        %977 = vmatpush1.xpose.msra.mxu0 0.0
        %978 = vmatprep.subr.mxu0 0.0
        %979 = vmatpush1.xpose.msra.mxu0 0.0
        %980 = vmatprep.subr.mxu0 0.0
        %981 = vmatpush1.xpose.msra.mxu0 0.0
        %982 = vmatprep.subr.mxu0 0.0
        %983 = vmatpush1.xpose.msra.mxu0 0.0
        %984 = vmatprep.subr.mxu0 0.0
        %985 = vmatpush1.xpose.msra.mxu0 0.0
        %986 = vmatprep.subr.mxu0 0.0
        %987 = vmatpush1.xpose.msra.mxu0 0.0
        %988 = vmatprep.subr.mxu0 0.0
        %989 = vmatpush1.xpose.msra.mxu0 0.0
        %990 = vmatprep.subr.mxu0 0.0
        %991 = vmatpush1.xpose.msra.mxu0 %v958
        %992 = vmatprep.subr.mxu0 0.0
        %993 = vmatpush2.xpose.msra.mxu0 0.0
        %994 = vmatprep.subr.mxu0 0.0
        %995 = vmatpush2.xpose.msra.mxu0 0.0
        %996 = vmatprep.subr.mxu0 0.0
        %997 = vmatpush2.xpose.msra.mxu0 0.0
        %998 = vmatprep.subr.mxu0 0.0
        %999 = vmatpush2.xpose.msra.mxu0 0.0
        %1000 = vmatprep.subr.mxu0 0.0
        %1001 = vmatpush2.xpose.msra.mxu0 0.0
        %1002 = vmatprep.subr.mxu0 0.0
        %1003 = vmatpush2.xpose.msra.mxu0 0.0
        %1004 = vmatprep.subr.mxu0 0.0
        %1005 = vmatpush2.xpose.msra.mxu0 0.0
        %1006 = vmatprep.subr.mxu0 0.0
        %1007 = vmatpush2.xpose.msra.mxu0 0.0
        %1008 = vmatprep.subr.mxu0 0.0
        %1009 = vmatpush2.xpose.msra.mxu0 0.0
        %1010 = vmatprep.subr.mxu0 0.0
        %1011 = vmatpush2.xpose.msra.mxu0 0.0
        %1012 = vmatprep.subr.mxu0 0.0
        %1013 = vmatpush2.xpose.msra.mxu0 0.0
        %1014 = vmatprep.subr.mxu0 0.0
        %1015 = vmatpush2.xpose.msra.mxu0 0.0
        %1016 = vmatprep.subr.mxu0 0.0
        %1017 = vmatpush2.xpose.msra.mxu0 0.0
        %1018 = vmatprep.subr.mxu0 0.0
        %1019 = vmatpush2.xpose.msra.mxu0 0.0
        %1020 = vmatprep.subr.mxu0 0.0
        %1021 = vmatpush2.xpose.msra.mxu0 0.0
        %1022 = vmatprep.subr.mxu0 0.0
        %1023 = vmatpush2.xpose.msra.mxu0 0.0
        %1024 = vmatprep.mubr.f32.mxu0 0.0
        %1025 = vmatmul.mubr.f32.gmra.mxu0 %v955
        %v1026 = vpop.f32.mrf.mxu0
        %v1027 = vadd.f32 0.0, %v1026
        %v1028 = vpop.f32.mrf.mxu0
        %1029 = vdwg.mxu0
        %v1030 = vsel %vm704, 1, 0
        %vm1031 = vcmp.eq.s32.totalorder %v1030, 1
        %v1032 = vsel %vm1031, %v799, -1e+30
        %v1033 = vsel %vm1031, %v875, -1e+30
        %v1034 = vsel %vm1031, %v951, -1e+30
        %v1035 = vsel %vm1031, %v1027, -1e+30
        %vm1036 = vcmask 64512
        %v1037 = vsel %vm1036, %v1032, -inf
        %1038 = vmax.xlane.f32.xlu0 %v1037
        %v1039 = vpop.xlane.xlu0 %1038
        %v1040 = vsel %vm1036, %v1033, -inf
        %1041 = vmax.xlane.f32.xlu0 %v1040
        %v1042 = vpop.xlane.xlu0 %1041
        %v1043 = vsel %vm1036, %v1034, -inf
        %1044 = vmax.xlane.f32.xlu0 %v1043
        %v1045 = vpop.xlane.xlu0 %1044
        %v1046 = vsel %vm1036, %v1035, -inf
        %1047 = vmax.xlane.f32.xlu0 %v1046
        %v1048 = vpop.xlane.xlu0 %1047
        %v1049 = vmax.f32 %v1039, -1e+30
        %v1050 = vmax.f32 %v1042, -1e+30
        %v1051 = vmax.f32 %v1045, -1e+30
        %v1052 = vmax.f32 %v1048, -1e+30
        %v1053 = vsub.f32 -1e+30, %v1049
        %v1054 = vsub.f32 -1e+30, %v1050
        %v1055 = vsub.f32 -1e+30, %v1051
        %v1056 = vsub.f32 -1e+30, %v1052
        %v1057 = vmul.f32 %v1053, 1.442695
        %v1058 = vpow.pop %v1057
        %v1059 = vmul.f32 %v1054, 1.442695
        %v1060 = vpow.pop %v1059
        %v1061 = vmul.f32 %v1055, 1.442695
        %v1062 = vpow.pop %v1061
        %v1063 = vmul.f32 %v1056, 1.442695
        %v1064 = vpow.pop %v1063
        %v1065 = vsub.f32 %v1032, %v1049
        %v1066 = vsub.f32 %v1033, %v1050
        %v1067 = vsub.f32 %v1034, %v1051
        %v1068 = vsub.f32 %v1035, %v1052
        %v1069 = vmul.f32 %v1065, 1.442695
        %v1070 = vpow.pop %v1069
        %v1071 = vmul.f32 %v1066, 1.442695
        %v1072 = vpow.pop %v1071
        %v1073 = vmul.f32 %v1067, 1.442695
        %v1074 = vpow.pop %v1073
        %v1075 = vmul.f32 %v1068, 1.442695
        %v1076 = vpow.pop %v1075
        %v1077 = vmul.f32 %v1058, 0.0
        %v1078 = vmul.f32 %v1060, 0.0
        %v1079 = vmul.f32 %v1062, 0.0
        %v1080 = vmul.f32 %v1064, 0.0
        %v1081 = vsel %vm1036, %v1070, 0.0
        %1082 = vadd.xlane.f32.xlu0 %v1081
        %v1083 = vpop.xlane.xlu0 %1082
        %v1084 = vsel %vm1036, %v1072, 0.0
        %1085 = vadd.xlane.f32.xlu0 %v1084
        %v1086 = vpop.xlane.xlu0 %1085
        %v1087 = vsel %vm1036, %v1074, 0.0
        %1088 = vadd.xlane.f32.xlu0 %v1087
        %v1089 = vpop.xlane.xlu0 %1088
        %v1090 = vsel %vm1036, %v1076, 0.0
        %1091 = vadd.xlane.f32.xlu0 %v1090
        %v1092 = vpop.xlane.xlu0 %1091
        %v1093 = vadd.f32 %v1077, %v1083
        %v1094 = vadd.f32 %v1078, %v1086
        %v1095 = vadd.f32 %v1079, %v1089
        %v1096 = vadd.f32 %v1080, %v1092
        %v1098 = vsel %vm1036, %v1070, 0
        %1100 = vmatprep.subr.mxu0 0.0
        %1101 = vmatpush1.msra.mxu0 0.0
        %1102 = vmatprep.subr.mxu0 0.0
        %1103 = vmatpush1.msra.mxu0 0.0
        %1104 = vmatprep.subr.mxu0 0.0
        %1105 = vmatpush1.msra.mxu0 0.0
        %1106 = vmatprep.subr.mxu0 0.0
        %1107 = vmatpush1.msra.mxu0 0.0
        %1108 = vmatprep.subr.mxu0 0.0
        %1109 = vmatpush1.msra.mxu0 0.0
        %1110 = vmatprep.subr.mxu0 0.0
        %1111 = vmatpush1.msra.mxu0 0.0
        %1112 = vmatprep.subr.mxu0 0.0
        %1113 = vmatpush1.msra.mxu0 0.0
        %1114 = vmatprep.subr.mxu0 0.0
        %1115 = vmatpush1.msra.mxu0 0.0
        %1116 = vmatprep.subr.mxu0 0.0
        %1117 = vmatpush1.msra.mxu0 0.0
        %1118 = vmatprep.subr.mxu0 0.0
        %1119 = vmatpush1.msra.mxu0 0.0
        %1120 = vmatprep.subr.mxu0 0.0
        %1121 = vmatpush1.msra.mxu0 0.0
        %1122 = vmatprep.subr.mxu0 0.0
        %1123 = vmatpush1.msra.mxu0 0.0
        %1124 = vmatprep.subr.mxu0 0.0
        %1125 = vmatpush1.msra.mxu0 0.0
        %1126 = vmatprep.subr.mxu0 0.0
        %1127 = vmatpush1.msra.mxu0 0.0
        %1128 = vmatprep.subr.mxu0 0.0
        %1129 = vmatpush1.msra.mxu0 0.0
        %1130 = vmatprep.subr.mxu0 0.0
        %1131 = vmatpush1.msra.mxu0 %v722
        %1132 = vmatprep.subr.mxu0 0.0
        %1133 = vmatpush2.msra.mxu0 0.0
        %1134 = vmatprep.subr.mxu0 0.0
        %1135 = vmatpush2.msra.mxu0 0.0
        %1136 = vmatprep.subr.mxu0 0.0
        %1137 = vmatpush2.msra.mxu0 0.0
        %1138 = vmatprep.subr.mxu0 0.0
        %1139 = vmatpush2.msra.mxu0 0.0
        %1140 = vmatprep.subr.mxu0 0.0
        %1141 = vmatpush2.msra.mxu0 0.0
        %1142 = vmatprep.subr.mxu0 0.0
        %1143 = vmatpush2.msra.mxu0 0.0
        %1144 = vmatprep.subr.mxu0 0.0
        %1145 = vmatpush2.msra.mxu0 0.0
        %1146 = vmatprep.subr.mxu0 0.0
        %1147 = vmatpush2.msra.mxu0 0.0
        %1148 = vmatprep.subr.mxu0 0.0
        %1149 = vmatpush2.msra.mxu0 0.0
        %1150 = vmatprep.subr.mxu0 0.0
        %1151 = vmatpush2.msra.mxu0 0.0
        %1152 = vmatprep.subr.mxu0 0.0
        %1153 = vmatpush2.msra.mxu0 0.0
        %1154 = vmatprep.subr.mxu0 0.0
        %1155 = vmatpush2.msra.mxu0 0.0
        %1156 = vmatprep.subr.mxu0 0.0
        %1157 = vmatpush2.msra.mxu0 0.0
        %1158 = vmatprep.subr.mxu0 0.0
        %1159 = vmatpush2.msra.mxu0 0.0
        %1160 = vmatprep.subr.mxu0 0.0
        %1161 = vmatpush2.msra.mxu0 0.0
        %1162 = vmatprep.subr.mxu0 0.0
        %1163 = vmatpush2.msra.mxu0 0.0
        %1164 = vmatprep.mubr.f32.mxu0 0.0
        %1165 = vmatmul.mubr.f32.gmra.mxu0 %v1098
        %v1166 = vpop.f32.mrf.mxu0
        %v1167 = vadd.f32 0.0, %v1166
        %v1168 = vpop.f32.mrf.mxu0
        %1169 = vdwg.mxu0
        %v1171 = vsel %vm1036, %v1072, 0
        %1173 = vmatprep.subr.mxu0 0.0
        %1174 = vmatpush1.msra.mxu0 0.0
        %1175 = vmatprep.subr.mxu0 0.0
        %1176 = vmatpush1.msra.mxu0 0.0
        %1177 = vmatprep.subr.mxu0 0.0
        %1178 = vmatpush1.msra.mxu0 0.0
        %1179 = vmatprep.subr.mxu0 0.0
        %1180 = vmatpush1.msra.mxu0 0.0
        %1181 = vmatprep.subr.mxu0 0.0
        %1182 = vmatpush1.msra.mxu0 0.0
        %1183 = vmatprep.subr.mxu0 0.0
        %1184 = vmatpush1.msra.mxu0 0.0
        %1185 = vmatprep.subr.mxu0 0.0
        %1186 = vmatpush1.msra.mxu0 0.0
        %1187 = vmatprep.subr.mxu0 0.0
        %1188 = vmatpush1.msra.mxu0 0.0
        %1189 = vmatprep.subr.mxu0 0.0
        %1190 = vmatpush1.msra.mxu0 0.0
        %1191 = vmatprep.subr.mxu0 0.0
        %1192 = vmatpush1.msra.mxu0 0.0
        %1193 = vmatprep.subr.mxu0 0.0
        %1194 = vmatpush1.msra.mxu0 0.0
        %1195 = vmatprep.subr.mxu0 0.0
        %1196 = vmatpush1.msra.mxu0 0.0
        %1197 = vmatprep.subr.mxu0 0.0
        %1198 = vmatpush1.msra.mxu0 0.0
        %1199 = vmatprep.subr.mxu0 0.0
        %1200 = vmatpush1.msra.mxu0 0.0
        %1201 = vmatprep.subr.mxu0 0.0
        %1202 = vmatpush1.msra.mxu0 0.0
        %1203 = vmatprep.subr.mxu0 0.0
        %1204 = vmatpush1.msra.mxu0 %v723
        %1205 = vmatprep.subr.mxu0 0.0
        %1206 = vmatpush2.msra.mxu0 0.0
        %1207 = vmatprep.subr.mxu0 0.0
        %1208 = vmatpush2.msra.mxu0 0.0
        %1209 = vmatprep.subr.mxu0 0.0
        %1210 = vmatpush2.msra.mxu0 0.0
        %1211 = vmatprep.subr.mxu0 0.0
        %1212 = vmatpush2.msra.mxu0 0.0
        %1213 = vmatprep.subr.mxu0 0.0
        %1214 = vmatpush2.msra.mxu0 0.0
        %1215 = vmatprep.subr.mxu0 0.0
        %1216 = vmatpush2.msra.mxu0 0.0
        %1217 = vmatprep.subr.mxu0 0.0
        %1218 = vmatpush2.msra.mxu0 0.0
        %1219 = vmatprep.subr.mxu0 0.0
        %1220 = vmatpush2.msra.mxu0 0.0
        %1221 = vmatprep.subr.mxu0 0.0
        %1222 = vmatpush2.msra.mxu0 0.0
        %1223 = vmatprep.subr.mxu0 0.0
        %1224 = vmatpush2.msra.mxu0 0.0
        %1225 = vmatprep.subr.mxu0 0.0
        %1226 = vmatpush2.msra.mxu0 0.0
        %1227 = vmatprep.subr.mxu0 0.0
        %1228 = vmatpush2.msra.mxu0 0.0
        %1229 = vmatprep.subr.mxu0 0.0
        %1230 = vmatpush2.msra.mxu0 0.0
        %1231 = vmatprep.subr.mxu0 0.0
        %1232 = vmatpush2.msra.mxu0 0.0
        %1233 = vmatprep.subr.mxu0 0.0
        %1234 = vmatpush2.msra.mxu0 0.0
        %1235 = vmatprep.subr.mxu0 0.0
        %1236 = vmatpush2.msra.mxu0 0.0
        %1237 = vmatprep.mubr.f32.mxu0 0.0
        %1238 = vmatmul.mubr.f32.gmra.mxu0 %v1171
        %v1239 = vpop.f32.mrf.mxu0
        %v1240 = vadd.f32 0.0, %v1239
        %v1241 = vpop.f32.mrf.mxu0
        %1242 = vdwg.mxu0
        %v1244 = vsel %vm1036, %v1074, 0
        %1246 = vmatprep.subr.mxu0 0.0
        %1247 = vmatpush1.msra.mxu0 0.0
        %1248 = vmatprep.subr.mxu0 0.0
        %1249 = vmatpush1.msra.mxu0 0.0
        %1250 = vmatprep.subr.mxu0 0.0
        %1251 = vmatpush1.msra.mxu0 0.0
        %1252 = vmatprep.subr.mxu0 0.0
        %1253 = vmatpush1.msra.mxu0 0.0
        %1254 = vmatprep.subr.mxu0 0.0
        %1255 = vmatpush1.msra.mxu0 0.0
        %1256 = vmatprep.subr.mxu0 0.0
        %1257 = vmatpush1.msra.mxu0 0.0
        %1258 = vmatprep.subr.mxu0 0.0
        %1259 = vmatpush1.msra.mxu0 0.0
        %1260 = vmatprep.subr.mxu0 0.0
        %1261 = vmatpush1.msra.mxu0 0.0
        %1262 = vmatprep.subr.mxu0 0.0
        %1263 = vmatpush1.msra.mxu0 0.0
        %1264 = vmatprep.subr.mxu0 0.0
        %1265 = vmatpush1.msra.mxu0 0.0
        %1266 = vmatprep.subr.mxu0 0.0
        %1267 = vmatpush1.msra.mxu0 0.0
        %1268 = vmatprep.subr.mxu0 0.0
        %1269 = vmatpush1.msra.mxu0 0.0
        %1270 = vmatprep.subr.mxu0 0.0
        %1271 = vmatpush1.msra.mxu0 0.0
        %1272 = vmatprep.subr.mxu0 0.0
        %1273 = vmatpush1.msra.mxu0 0.0
        %1274 = vmatprep.subr.mxu0 0.0
        %1275 = vmatpush1.msra.mxu0 0.0
        %1276 = vmatprep.subr.mxu0 0.0
        %1277 = vmatpush1.msra.mxu0 %v724
        %1278 = vmatprep.subr.mxu0 0.0
        %1279 = vmatpush2.msra.mxu0 0.0
        %1280 = vmatprep.subr.mxu0 0.0
        %1281 = vmatpush2.msra.mxu0 0.0
        %1282 = vmatprep.subr.mxu0 0.0
        %1283 = vmatpush2.msra.mxu0 0.0
        %1284 = vmatprep.subr.mxu0 0.0
        %1285 = vmatpush2.msra.mxu0 0.0
        %1286 = vmatprep.subr.mxu0 0.0
        %1287 = vmatpush2.msra.mxu0 0.0
        %1288 = vmatprep.subr.mxu0 0.0
        %1289 = vmatpush2.msra.mxu0 0.0
        %1290 = vmatprep.subr.mxu0 0.0
        %1291 = vmatpush2.msra.mxu0 0.0
        %1292 = vmatprep.subr.mxu0 0.0
        %1293 = vmatpush2.msra.mxu0 0.0
        %1294 = vmatprep.subr.mxu0 0.0
        %1295 = vmatpush2.msra.mxu0 0.0
        %1296 = vmatprep.subr.mxu0 0.0
        %1297 = vmatpush2.msra.mxu0 0.0
        %1298 = vmatprep.subr.mxu0 0.0
        %1299 = vmatpush2.msra.mxu0 0.0
        %1300 = vmatprep.subr.mxu0 0.0
        %1301 = vmatpush2.msra.mxu0 0.0
        %1302 = vmatprep.subr.mxu0 0.0
        %1303 = vmatpush2.msra.mxu0 0.0
        %1304 = vmatprep.subr.mxu0 0.0
        %1305 = vmatpush2.msra.mxu0 0.0
        %1306 = vmatprep.subr.mxu0 0.0
        %1307 = vmatpush2.msra.mxu0 0.0
        %1308 = vmatprep.subr.mxu0 0.0
        %1309 = vmatpush2.msra.mxu0 0.0
        %1310 = vmatprep.mubr.f32.mxu0 0.0
        %1311 = vmatmul.mubr.f32.gmra.mxu0 %v1244
        %v1312 = vpop.f32.mrf.mxu0
        %v1313 = vadd.f32 0.0, %v1312
        %v1314 = vpop.f32.mrf.mxu0
        %1315 = vdwg.mxu0
        %v1317 = vsel %vm1036, %v1076, 0
        %1319 = vmatprep.subr.mxu0 0.0
        %1320 = vmatpush1.msra.mxu0 0.0
        %1321 = vmatprep.subr.mxu0 0.0
        %1322 = vmatpush1.msra.mxu0 0.0
        %1323 = vmatprep.subr.mxu0 0.0
        %1324 = vmatpush1.msra.mxu0 0.0
        %1325 = vmatprep.subr.mxu0 0.0
        %1326 = vmatpush1.msra.mxu0 0.0
        %1327 = vmatprep.subr.mxu0 0.0
        %1328 = vmatpush1.msra.mxu0 0.0
        %1329 = vmatprep.subr.mxu0 0.0
        %1330 = vmatpush1.msra.mxu0 0.0
        %1331 = vmatprep.subr.mxu0 0.0
        %1332 = vmatpush1.msra.mxu0 0.0
        %1333 = vmatprep.subr.mxu0 0.0
        %1334 = vmatpush1.msra.mxu0 0.0
        %1335 = vmatprep.subr.mxu0 0.0
        %1336 = vmatpush1.msra.mxu0 0.0
        %1337 = vmatprep.subr.mxu0 0.0
        %1338 = vmatpush1.msra.mxu0 0.0
        %1339 = vmatprep.subr.mxu0 0.0
        %1340 = vmatpush1.msra.mxu0 0.0
        %1341 = vmatprep.subr.mxu0 0.0
        %1342 = vmatpush1.msra.mxu0 0.0
        %1343 = vmatprep.subr.mxu0 0.0
        %1344 = vmatpush1.msra.mxu0 0.0
        %1345 = vmatprep.subr.mxu0 0.0
        %1346 = vmatpush1.msra.mxu0 0.0
        %1347 = vmatprep.subr.mxu0 0.0
        %1348 = vmatpush1.msra.mxu0 0.0
        %1349 = vmatprep.subr.mxu0 0.0
        %1350 = vmatpush1.msra.mxu0 %v725
        %1351 = vmatprep.subr.mxu0 0.0
        %1352 = vmatpush2.msra.mxu0 0.0
        %1353 = vmatprep.subr.mxu0 0.0
        %1354 = vmatpush2.msra.mxu0 0.0
        %1355 = vmatprep.subr.mxu0 0.0
        %1356 = vmatpush2.msra.mxu0 0.0
        %1357 = vmatprep.subr.mxu0 0.0
        %1358 = vmatpush2.msra.mxu0 0.0
        %1359 = vmatprep.subr.mxu0 0.0
        %1360 = vmatpush2.msra.mxu0 0.0
        %1361 = vmatprep.subr.mxu0 0.0
        %1362 = vmatpush2.msra.mxu0 0.0
        %1363 = vmatprep.subr.mxu0 0.0
        %1364 = vmatpush2.msra.mxu0 0.0
        %1365 = vmatprep.subr.mxu0 0.0
        %1366 = vmatpush2.msra.mxu0 0.0
        %1367 = vmatprep.subr.mxu0 0.0
        %1368 = vmatpush2.msra.mxu0 0.0
        %1369 = vmatprep.subr.mxu0 0.0
        %1370 = vmatpush2.msra.mxu0 0.0
        %1371 = vmatprep.subr.mxu0 0.0
        %1372 = vmatpush2.msra.mxu0 0.0
        %1373 = vmatprep.subr.mxu0 0.0
        %1374 = vmatpush2.msra.mxu0 0.0
        %1375 = vmatprep.subr.mxu0 0.0
        %1376 = vmatpush2.msra.mxu0 0.0
        %1377 = vmatprep.subr.mxu0 0.0
        %1378 = vmatpush2.msra.mxu0 0.0
        %1379 = vmatprep.subr.mxu0 0.0
        %1380 = vmatpush2.msra.mxu0 0.0
        %1381 = vmatprep.subr.mxu0 0.0
        %1382 = vmatpush2.msra.mxu0 0.0
        %1383 = vmatprep.mubr.f32.mxu0 0.0
        %1384 = vmatmul.mubr.f32.gmra.mxu0 %v1317
        %v1385 = vpop.f32.mrf.mxu0
        %v1386 = vadd.f32 0.0, %v1385
        %v1387 = vpop.f32.mrf.mxu0
        %1388 = vdwg.mxu0
        %v1389 = vadd.f32 %v1077, %v1167
        %v1390 = vadd.f32 %v1078, %v1240
        %v1391 = vadd.f32 %v1079, %v1313
        %v1392 = vadd.f32 %v1080, %v1386
        %v1393 = vrcp.pop %v1093
        %v1394 = vrcp.pop %v1094
        %v1395 = vrcp.pop %v1095
        %v1396 = vrcp.pop %v1096
        %v1397 = vmul.f32 %v1389, %v1393
        %v1398 = vmul.f32 %v1390, %v1394
        %v1399 = vmul.f32 %v1391, %v1395
        %v1400 = vmul.f32 %v1392, %v1396
        %v1402 = vsel %vm600, %v1397, 0
        %1404 = vmatprep.subr.mxu0 0.0
        %1405 = vmatpush1.msra.mxu0 0.0
        %1406 = vmatprep.subr.mxu0 0.0
        %1407 = vmatpush1.msra.mxu0 0.0
        %1408 = vmatprep.subr.mxu0 0.0
        %1409 = vmatpush1.msra.mxu0 0.0
        %1410 = vmatprep.subr.mxu0 0.0
        %1411 = vmatpush1.msra.mxu0 0.0
        %1412 = vmatprep.subr.mxu0 0.0
        %1413 = vmatpush1.msra.mxu0 0.0
        %1414 = vmatprep.subr.mxu0 0.0
        %1415 = vmatpush1.msra.mxu0 0.0
        %1416 = vmatprep.subr.mxu0 0.0
        %1417 = vmatpush1.msra.mxu0 0.0
        %1418 = vmatprep.subr.mxu0 0.0
        %1419 = vmatpush1.msra.mxu0 0.0
        %1420 = vmatprep.subr.mxu0 0.0
        %1421 = vmatpush1.msra.mxu0 0.0
        %1422 = vmatprep.subr.mxu0 0.0
        %1423 = vmatpush1.msra.mxu0 0.0
        %1424 = vmatprep.subr.mxu0 0.0
        %1425 = vmatpush1.msra.mxu0 0.0
        %1426 = vmatprep.subr.mxu0 0.0
        %1427 = vmatpush1.msra.mxu0 0.0
        %1428 = vmatprep.subr.mxu0 0.0
        %1429 = vmatpush1.msra.mxu0 0.0
        %1430 = vmatprep.subr.mxu0 0.0
        %1431 = vmatpush1.msra.mxu0 0.0
        %1432 = vmatprep.subr.mxu0 0.0
        %1433 = vmatpush1.msra.mxu0 %v706
        %1434 = vmatprep.subr.mxu0 0.0
        %1435 = vmatpush1.msra.mxu0 %v705
        %1436 = vmatprep.subr.mxu0 0.0
        %1437 = vmatpush2.msra.mxu0 0.0
        %1438 = vmatprep.subr.mxu0 0.0
        %1439 = vmatpush2.msra.mxu0 0.0
        %1440 = vmatprep.subr.mxu0 0.0
        %1441 = vmatpush2.msra.mxu0 0.0
        %1442 = vmatprep.subr.mxu0 0.0
        %1443 = vmatpush2.msra.mxu0 0.0
        %1444 = vmatprep.subr.mxu0 0.0
        %1445 = vmatpush2.msra.mxu0 0.0
        %1446 = vmatprep.subr.mxu0 0.0
        %1447 = vmatpush2.msra.mxu0 0.0
        %1448 = vmatprep.subr.mxu0 0.0
        %1449 = vmatpush2.msra.mxu0 0.0
        %1450 = vmatprep.subr.mxu0 0.0
        %1451 = vmatpush2.msra.mxu0 0.0
        %1452 = vmatprep.subr.mxu0 0.0
        %1453 = vmatpush2.msra.mxu0 0.0
        %1454 = vmatprep.subr.mxu0 0.0
        %1455 = vmatpush2.msra.mxu0 0.0
        %1456 = vmatprep.subr.mxu0 0.0
        %1457 = vmatpush2.msra.mxu0 0.0
        %1458 = vmatprep.subr.mxu0 0.0
        %1459 = vmatpush2.msra.mxu0 0.0
        %1460 = vmatprep.subr.mxu0 0.0
        %1461 = vmatpush2.msra.mxu0 0.0
        %1462 = vmatprep.subr.mxu0 0.0
        %1463 = vmatpush2.msra.mxu0 0.0
        %1464 = vmatprep.subr.mxu0 0.0
        %1465 = vmatpush2.msra.mxu0 0.0
        %1466 = vmatprep.subr.mxu0 0.0
        %1467 = vmatpush2.msra.mxu0 0.0
        %1468 = vmatprep.mubr.f32.mxu0 0.0
        %1469 = vmatmul.mubr.f32.gmra.mxu0 %v1402
        %v1470 = vpop.f32.mrf.mxu0
        %v1471 = vadd.f32 0.0, %v1470
        %v1472 = vpop.f32.mrf.mxu0
        %1473 = vdwg.mxu0
        %v1475 = vsel %vm600, %v1398, 0
        %1477 = vmatprep.subr.mxu0 0.0
        %1478 = vmatpush1.msra.mxu0 0.0
        %1479 = vmatprep.subr.mxu0 0.0
        %1480 = vmatpush1.msra.mxu0 0.0
        %1481 = vmatprep.subr.mxu0 0.0
        %1482 = vmatpush1.msra.mxu0 0.0
        %1483 = vmatprep.subr.mxu0 0.0
        %1484 = vmatpush1.msra.mxu0 0.0
        %1485 = vmatprep.subr.mxu0 0.0
        %1486 = vmatpush1.msra.mxu0 0.0
        %1487 = vmatprep.subr.mxu0 0.0
        %1488 = vmatpush1.msra.mxu0 0.0
        %1489 = vmatprep.subr.mxu0 0.0
        %1490 = vmatpush1.msra.mxu0 0.0
        %1491 = vmatprep.subr.mxu0 0.0
        %1492 = vmatpush1.msra.mxu0 0.0
        %1493 = vmatprep.subr.mxu0 0.0
        %1494 = vmatpush1.msra.mxu0 0.0
        %1495 = vmatprep.subr.mxu0 0.0
        %1496 = vmatpush1.msra.mxu0 0.0
        %1497 = vmatprep.subr.mxu0 0.0
        %1498 = vmatpush1.msra.mxu0 0.0
        %1499 = vmatprep.subr.mxu0 0.0
        %1500 = vmatpush1.msra.mxu0 0.0
        %1501 = vmatprep.subr.mxu0 0.0
        %1502 = vmatpush1.msra.mxu0 0.0
        %1503 = vmatprep.subr.mxu0 0.0
        %1504 = vmatpush1.msra.mxu0 0.0
        %1505 = vmatprep.subr.mxu0 0.0
        %1506 = vmatpush1.msra.mxu0 %v708
        %1507 = vmatprep.subr.mxu0 0.0
        %1508 = vmatpush1.msra.mxu0 %v707
        %1509 = vmatprep.subr.mxu0 0.0
        %1510 = vmatpush2.msra.mxu0 0.0
        %1511 = vmatprep.subr.mxu0 0.0
        %1512 = vmatpush2.msra.mxu0 0.0
        %1513 = vmatprep.subr.mxu0 0.0
        %1514 = vmatpush2.msra.mxu0 0.0
        %1515 = vmatprep.subr.mxu0 0.0
        %1516 = vmatpush2.msra.mxu0 0.0
        %1517 = vmatprep.subr.mxu0 0.0
        %1518 = vmatpush2.msra.mxu0 0.0
        %1519 = vmatprep.subr.mxu0 0.0
        %1520 = vmatpush2.msra.mxu0 0.0
        %1521 = vmatprep.subr.mxu0 0.0
        %1522 = vmatpush2.msra.mxu0 0.0
        %1523 = vmatprep.subr.mxu0 0.0
        %1524 = vmatpush2.msra.mxu0 0.0
        %1525 = vmatprep.subr.mxu0 0.0
        %1526 = vmatpush2.msra.mxu0 0.0
        %1527 = vmatprep.subr.mxu0 0.0
        %1528 = vmatpush2.msra.mxu0 0.0
        %1529 = vmatprep.subr.mxu0 0.0
        %1530 = vmatpush2.msra.mxu0 0.0
        %1531 = vmatprep.subr.mxu0 0.0
        %1532 = vmatpush2.msra.mxu0 0.0
        %1533 = vmatprep.subr.mxu0 0.0
        %1534 = vmatpush2.msra.mxu0 0.0
        %1535 = vmatprep.subr.mxu0 0.0
        %1536 = vmatpush2.msra.mxu0 0.0
        %1537 = vmatprep.subr.mxu0 0.0
        %1538 = vmatpush2.msra.mxu0 0.0
        %1539 = vmatprep.subr.mxu0 0.0
        %1540 = vmatpush2.msra.mxu0 0.0
        %1541 = vmatprep.mubr.f32.mxu0 0.0
        %1542 = vmatmul.mubr.f32.gmra.mxu0 %v1475
        %v1543 = vpop.f32.mrf.mxu0
        %v1544 = vadd.f32 0.0, %v1543
        %v1545 = vpop.f32.mrf.mxu0
        %1546 = vdwg.mxu0
        %v1548 = vsel %vm600, %v1399, 0
        %1550 = vmatprep.subr.mxu0 0.0
        %1551 = vmatpush1.msra.mxu0 0.0
        %1552 = vmatprep.subr.mxu0 0.0
        %1553 = vmatpush1.msra.mxu0 0.0
        %1554 = vmatprep.subr.mxu0 0.0
        %1555 = vmatpush1.msra.mxu0 0.0
        %1556 = vmatprep.subr.mxu0 0.0
        %1557 = vmatpush1.msra.mxu0 0.0
        %1558 = vmatprep.subr.mxu0 0.0
        %1559 = vmatpush1.msra.mxu0 0.0
        %1560 = vmatprep.subr.mxu0 0.0
        %1561 = vmatpush1.msra.mxu0 0.0
        %1562 = vmatprep.subr.mxu0 0.0
        %1563 = vmatpush1.msra.mxu0 0.0
        %1564 = vmatprep.subr.mxu0 0.0
        %1565 = vmatpush1.msra.mxu0 0.0
        %1566 = vmatprep.subr.mxu0 0.0
        %1567 = vmatpush1.msra.mxu0 0.0
        %1568 = vmatprep.subr.mxu0 0.0
        %1569 = vmatpush1.msra.mxu0 0.0
        %1570 = vmatprep.subr.mxu0 0.0
        %1571 = vmatpush1.msra.mxu0 0.0
        %1572 = vmatprep.subr.mxu0 0.0
        %1573 = vmatpush1.msra.mxu0 0.0
        %1574 = vmatprep.subr.mxu0 0.0
        %1575 = vmatpush1.msra.mxu0 0.0
        %1576 = vmatprep.subr.mxu0 0.0
        %1577 = vmatpush1.msra.mxu0 0.0
        %1578 = vmatprep.subr.mxu0 0.0
        %1579 = vmatpush1.msra.mxu0 %v710
        %1580 = vmatprep.subr.mxu0 0.0
        %1581 = vmatpush1.msra.mxu0 %v709
        %1582 = vmatprep.subr.mxu0 0.0
        %1583 = vmatpush2.msra.mxu0 0.0
        %1584 = vmatprep.subr.mxu0 0.0
        %1585 = vmatpush2.msra.mxu0 0.0
        %1586 = vmatprep.subr.mxu0 0.0
        %1587 = vmatpush2.msra.mxu0 0.0
        %1588 = vmatprep.subr.mxu0 0.0
        %1589 = vmatpush2.msra.mxu0 0.0
        %1590 = vmatprep.subr.mxu0 0.0
        %1591 = vmatpush2.msra.mxu0 0.0
        %1592 = vmatprep.subr.mxu0 0.0
        %1593 = vmatpush2.msra.mxu0 0.0
        %1594 = vmatprep.subr.mxu0 0.0
        %1595 = vmatpush2.msra.mxu0 0.0
        %1596 = vmatprep.subr.mxu0 0.0
        %1597 = vmatpush2.msra.mxu0 0.0
        %1598 = vmatprep.subr.mxu0 0.0
        %1599 = vmatpush2.msra.mxu0 0.0
        %1600 = vmatprep.subr.mxu0 0.0
        %1601 = vmatpush2.msra.mxu0 0.0
        %1602 = vmatprep.subr.mxu0 0.0
        %1603 = vmatpush2.msra.mxu0 0.0
        %1604 = vmatprep.subr.mxu0 0.0
        %1605 = vmatpush2.msra.mxu0 0.0
        %1606 = vmatprep.subr.mxu0 0.0
        %1607 = vmatpush2.msra.mxu0 0.0
        %1608 = vmatprep.subr.mxu0 0.0
        %1609 = vmatpush2.msra.mxu0 0.0
        %1610 = vmatprep.subr.mxu0 0.0
        %1611 = vmatpush2.msra.mxu0 0.0
        %1612 = vmatprep.subr.mxu0 0.0
        %1613 = vmatpush2.msra.mxu0 0.0
        %1614 = vmatprep.mubr.f32.mxu0 0.0
        %1615 = vmatmul.mubr.f32.gmra.mxu0 %v1548
        %v1616 = vpop.f32.mrf.mxu0
        %v1617 = vadd.f32 0.0, %v1616
        %v1618 = vpop.f32.mrf.mxu0
        %1619 = vdwg.mxu0
        %v1621 = vsel %vm600, %v1400, 0
        %1623 = vmatprep.subr.mxu0 0.0
        %1624 = vmatpush1.msra.mxu0 0.0
        %1625 = vmatprep.subr.mxu0 0.0
        %1626 = vmatpush1.msra.mxu0 0.0
        %1627 = vmatprep.subr.mxu0 0.0
        %1628 = vmatpush1.msra.mxu0 0.0
        %1629 = vmatprep.subr.mxu0 0.0
        %1630 = vmatpush1.msra.mxu0 0.0
        %1631 = vmatprep.subr.mxu0 0.0
        %1632 = vmatpush1.msra.mxu0 0.0
        %1633 = vmatprep.subr.mxu0 0.0
        %1634 = vmatpush1.msra.mxu0 0.0
        %1635 = vmatprep.subr.mxu0 0.0
        %1636 = vmatpush1.msra.mxu0 0.0
        %1637 = vmatprep.subr.mxu0 0.0
        %1638 = vmatpush1.msra.mxu0 0.0
        %1639 = vmatprep.subr.mxu0 0.0
        %1640 = vmatpush1.msra.mxu0 0.0
        %1641 = vmatprep.subr.mxu0 0.0
        %1642 = vmatpush1.msra.mxu0 0.0
        %1643 = vmatprep.subr.mxu0 0.0
        %1644 = vmatpush1.msra.mxu0 0.0
        %1645 = vmatprep.subr.mxu0 0.0
        %1646 = vmatpush1.msra.mxu0 0.0
        %1647 = vmatprep.subr.mxu0 0.0
        %1648 = vmatpush1.msra.mxu0 0.0
        %1649 = vmatprep.subr.mxu0 0.0
        %1650 = vmatpush1.msra.mxu0 0.0
        %1651 = vmatprep.subr.mxu0 0.0
        %1652 = vmatpush1.msra.mxu0 %v712
        %1653 = vmatprep.subr.mxu0 0.0
        %1654 = vmatpush1.msra.mxu0 %v711
        %1655 = vmatprep.subr.mxu0 0.0
        %1656 = vmatpush2.msra.mxu0 0.0
        %1657 = vmatprep.subr.mxu0 0.0
        %1658 = vmatpush2.msra.mxu0 0.0
        %1659 = vmatprep.subr.mxu0 0.0
        %1660 = vmatpush2.msra.mxu0 0.0
        %1661 = vmatprep.subr.mxu0 0.0
        %1662 = vmatpush2.msra.mxu0 0.0
        %1663 = vmatprep.subr.mxu0 0.0
        %1664 = vmatpush2.msra.mxu0 0.0
        %1665 = vmatprep.subr.mxu0 0.0
        %1666 = vmatpush2.msra.mxu0 0.0
        %1667 = vmatprep.subr.mxu0 0.0
        %1668 = vmatpush2.msra.mxu0 0.0
        %1669 = vmatprep.subr.mxu0 0.0
        %1670 = vmatpush2.msra.mxu0 0.0
        %1671 = vmatprep.subr.mxu0 0.0
        %1672 = vmatpush2.msra.mxu0 0.0
        %1673 = vmatprep.subr.mxu0 0.0
        %1674 = vmatpush2.msra.mxu0 0.0
        %1675 = vmatprep.subr.mxu0 0.0
        %1676 = vmatpush2.msra.mxu0 0.0
        %1677 = vmatprep.subr.mxu0 0.0
        %1678 = vmatpush2.msra.mxu0 0.0
        %1679 = vmatprep.subr.mxu0 0.0
        %1680 = vmatpush2.msra.mxu0 0.0
        %1681 = vmatprep.subr.mxu0 0.0
        %1682 = vmatpush2.msra.mxu0 0.0
        %1683 = vmatprep.subr.mxu0 0.0
        %1684 = vmatpush2.msra.mxu0 0.0
        %1685 = vmatprep.subr.mxu0 0.0
        %1686 = vmatpush2.msra.mxu0 0.0
        %1687 = vmatprep.mubr.f32.mxu0 0.0
        %1688 = vmatmul.mubr.f32.gmra.mxu0 %v1621
        %v1689 = vpop.f32.mrf.mxu0
        %v1690 = vadd.f32 0.0, %v1689
        %v1691 = vpop.f32.mrf.mxu0
        %1692 = vdwg.mxu0
        %v1694 = vlaneseq
        %v1695 = vshrl.u32 %v1694, 7
        %v1696 = vsub.s32 0, %v1695
        %v1697 = vrot.slane %v713, %v1696
        %v1699 = vadd.f32 %v1697, %v1471
        %v1700 = vadd.f32 %v1699, %v1544
        %v1701 = vadd.f32 %v1700, %v1617
        %v1702 = vadd.f32 %v1701, %v1690
        %v1703 = vadd.f32 %v439, %v1702
        %1704 = vst.msk [vmem:[#allocation5] sm:$0xff] %vm443, %v1703
        %v1705 = vld [vmem:[#allocation2 + $0x8] sm:$0xff]
        %v1706 = vld [vmem:[#allocation2 + $0x18] sm:$0xff]
        %v1707 = vld [vmem:[#allocation2 + $0x28] sm:$0xff]
        %v1708 = vld [vmem:[#allocation2 + $0x38] sm:$0xff]
        %v1709 = vld [vmem:[#allocation3] sm:$0xff]
        %v1710 = vld [vmem:[#allocation3 + $0x10] sm:$0xff]
        %v1711 = vld [vmem:[#allocation3 + $0x20] sm:$0xff]
        %v1712 = vld [vmem:[#allocation3 + $0x30] sm:$0xff]
        %v1713 = vld [vmem:[#allocation4] sm:$0xff]
        %v1714 = vld [vmem:[#allocation4 + $0x10] sm:$0xff]
        %v1715 = vld [vmem:[#allocation4 + $0x20] sm:$0xff]
        %v1716 = vld [vmem:[#allocation4 + $0x30] sm:$0xff]
        %v1718 = vsel %vm600, %v1705, 0
        %v1721 = vsel %vm600, %v1709, 0
        %1723 = vmatprep.subr.mxu0 0.0
        %1724 = vmatpush1.xpose.msra.mxu0 0.0
        %1725 = vmatprep.subr.mxu0 0.0
        %1726 = vmatpush1.xpose.msra.mxu0 0.0
        %1727 = vmatprep.subr.mxu0 0.0
        %1728 = vmatpush1.xpose.msra.mxu0 0.0
        %1729 = vmatprep.subr.mxu0 0.0
        %1730 = vmatpush1.xpose.msra.mxu0 0.0
        %1731 = vmatprep.subr.mxu0 0.0
        %1732 = vmatpush1.xpose.msra.mxu0 0.0
        %1733 = vmatprep.subr.mxu0 0.0
        %1734 = vmatpush1.xpose.msra.mxu0 0.0
        %1735 = vmatprep.subr.mxu0 0.0
        %1736 = vmatpush1.xpose.msra.mxu0 0.0
        %1737 = vmatprep.subr.mxu0 0.0
        %1738 = vmatpush1.xpose.msra.mxu0 0.0
        %1739 = vmatprep.subr.mxu0 0.0
        %1740 = vmatpush1.xpose.msra.mxu0 0.0
        %1741 = vmatprep.subr.mxu0 0.0
        %1742 = vmatpush1.xpose.msra.mxu0 0.0
        %1743 = vmatprep.subr.mxu0 0.0
        %1744 = vmatpush1.xpose.msra.mxu0 0.0
        %1745 = vmatprep.subr.mxu0 0.0
        %1746 = vmatpush1.xpose.msra.mxu0 0.0
        %1747 = vmatprep.subr.mxu0 0.0
        %1748 = vmatpush1.xpose.msra.mxu0 0.0
        %1749 = vmatprep.subr.mxu0 0.0
        %1750 = vmatpush1.xpose.msra.mxu0 0.0
        %1751 = vmatprep.subr.mxu0 0.0
        %1752 = vmatpush1.xpose.msra.mxu0 0.0
        %1753 = vmatprep.subr.mxu0 0.0
        %1754 = vmatpush1.xpose.msra.mxu0 %v1721
        %1755 = vmatprep.subr.mxu0 0.0
        %1756 = vmatpush2.xpose.msra.mxu0 0.0
        %1757 = vmatprep.subr.mxu0 0.0
        %1758 = vmatpush2.xpose.msra.mxu0 0.0
        %1759 = vmatprep.subr.mxu0 0.0
        %1760 = vmatpush2.xpose.msra.mxu0 0.0
        %1761 = vmatprep.subr.mxu0 0.0
        %1762 = vmatpush2.xpose.msra.mxu0 0.0
        %1763 = vmatprep.subr.mxu0 0.0
        %1764 = vmatpush2.xpose.msra.mxu0 0.0
        %1765 = vmatprep.subr.mxu0 0.0
        %1766 = vmatpush2.xpose.msra.mxu0 0.0
        %1767 = vmatprep.subr.mxu0 0.0
        %1768 = vmatpush2.xpose.msra.mxu0 0.0
        %1769 = vmatprep.subr.mxu0 0.0
        %1770 = vmatpush2.xpose.msra.mxu0 0.0
        %1771 = vmatprep.subr.mxu0 0.0
        %1772 = vmatpush2.xpose.msra.mxu0 0.0
        %1773 = vmatprep.subr.mxu0 0.0
        %1774 = vmatpush2.xpose.msra.mxu0 0.0
        %1775 = vmatprep.subr.mxu0 0.0
        %1776 = vmatpush2.xpose.msra.mxu0 0.0
        %1777 = vmatprep.subr.mxu0 0.0
        %1778 = vmatpush2.xpose.msra.mxu0 0.0
        %1779 = vmatprep.subr.mxu0 0.0
        %1780 = vmatpush2.xpose.msra.mxu0 0.0
        %1781 = vmatprep.subr.mxu0 0.0
        %1782 = vmatpush2.xpose.msra.mxu0 0.0
        %1783 = vmatprep.subr.mxu0 0.0
        %1784 = vmatpush2.xpose.msra.mxu0 0.0
        %1785 = vmatprep.subr.mxu0 0.0
        %1786 = vmatpush2.xpose.msra.mxu0 0.0
        %1787 = vmatprep.mubr.f32.mxu0 0.0
        %1788 = vmatmul.mubr.f32.gmra.mxu0 %v1718
        %v1789 = vpop.f32.mrf.mxu0
        %v1790 = vadd.f32 0.0, %v1789
        %v1791 = vpop.f32.mrf.mxu0
        %1792 = vdwg.mxu0
        %v1794 = vsel %vm600, %v1706, 0
        %v1797 = vsel %vm600, %v1710, 0
        %1799 = vmatprep.subr.mxu0 0.0
        %1800 = vmatpush1.xpose.msra.mxu0 0.0
        %1801 = vmatprep.subr.mxu0 0.0
        %1802 = vmatpush1.xpose.msra.mxu0 0.0
        %1803 = vmatprep.subr.mxu0 0.0
        %1804 = vmatpush1.xpose.msra.mxu0 0.0
        %1805 = vmatprep.subr.mxu0 0.0
        %1806 = vmatpush1.xpose.msra.mxu0 0.0
        %1807 = vmatprep.subr.mxu0 0.0
        %1808 = vmatpush1.xpose.msra.mxu0 0.0
        %1809 = vmatprep.subr.mxu0 0.0
        %1810 = vmatpush1.xpose.msra.mxu0 0.0
        %1811 = vmatprep.subr.mxu0 0.0
        %1812 = vmatpush1.xpose.msra.mxu0 0.0
        %1813 = vmatprep.subr.mxu0 0.0
        %1814 = vmatpush1.xpose.msra.mxu0 0.0
        %1815 = vmatprep.subr.mxu0 0.0
        %1816 = vmatpush1.xpose.msra.mxu0 0.0
        %1817 = vmatprep.subr.mxu0 0.0
        %1818 = vmatpush1.xpose.msra.mxu0 0.0
        %1819 = vmatprep.subr.mxu0 0.0
        %1820 = vmatpush1.xpose.msra.mxu0 0.0
        %1821 = vmatprep.subr.mxu0 0.0
        %1822 = vmatpush1.xpose.msra.mxu0 0.0
        %1823 = vmatprep.subr.mxu0 0.0
        %1824 = vmatpush1.xpose.msra.mxu0 0.0
        %1825 = vmatprep.subr.mxu0 0.0
        %1826 = vmatpush1.xpose.msra.mxu0 0.0
        %1827 = vmatprep.subr.mxu0 0.0
        %1828 = vmatpush1.xpose.msra.mxu0 0.0
        %1829 = vmatprep.subr.mxu0 0.0
        %1830 = vmatpush1.xpose.msra.mxu0 %v1797
        %1831 = vmatprep.subr.mxu0 0.0
        %1832 = vmatpush2.xpose.msra.mxu0 0.0
        %1833 = vmatprep.subr.mxu0 0.0
        %1834 = vmatpush2.xpose.msra.mxu0 0.0
        %1835 = vmatprep.subr.mxu0 0.0
        %1836 = vmatpush2.xpose.msra.mxu0 0.0
        %1837 = vmatprep.subr.mxu0 0.0
        %1838 = vmatpush2.xpose.msra.mxu0 0.0
        %1839 = vmatprep.subr.mxu0 0.0
        %1840 = vmatpush2.xpose.msra.mxu0 0.0
        %1841 = vmatprep.subr.mxu0 0.0
        %1842 = vmatpush2.xpose.msra.mxu0 0.0
        %1843 = vmatprep.subr.mxu0 0.0
        %1844 = vmatpush2.xpose.msra.mxu0 0.0
        %1845 = vmatprep.subr.mxu0 0.0
        %1846 = vmatpush2.xpose.msra.mxu0 0.0
        %1847 = vmatprep.subr.mxu0 0.0
        %1848 = vmatpush2.xpose.msra.mxu0 0.0
        %1849 = vmatprep.subr.mxu0 0.0
        %1850 = vmatpush2.xpose.msra.mxu0 0.0
        %1851 = vmatprep.subr.mxu0 0.0
        %1852 = vmatpush2.xpose.msra.mxu0 0.0
        %1853 = vmatprep.subr.mxu0 0.0
        %1854 = vmatpush2.xpose.msra.mxu0 0.0
        %1855 = vmatprep.subr.mxu0 0.0
        %1856 = vmatpush2.xpose.msra.mxu0 0.0
        %1857 = vmatprep.subr.mxu0 0.0
        %1858 = vmatpush2.xpose.msra.mxu0 0.0
        %1859 = vmatprep.subr.mxu0 0.0
        %1860 = vmatpush2.xpose.msra.mxu0 0.0
        %1861 = vmatprep.subr.mxu0 0.0
        %1862 = vmatpush2.xpose.msra.mxu0 0.0
        %1863 = vmatprep.mubr.f32.mxu0 0.0
        %1864 = vmatmul.mubr.f32.gmra.mxu0 %v1794
        %v1865 = vpop.f32.mrf.mxu0
        %v1866 = vadd.f32 0.0, %v1865
        %v1867 = vpop.f32.mrf.mxu0
        %1868 = vdwg.mxu0
        %v1870 = vsel %vm600, %v1707, 0
        %v1873 = vsel %vm600, %v1711, 0
        %1875 = vmatprep.subr.mxu0 0.0
        %1876 = vmatpush1.xpose.msra.mxu0 0.0
        %1877 = vmatprep.subr.mxu0 0.0
        %1878 = vmatpush1.xpose.msra.mxu0 0.0
        %1879 = vmatprep.subr.mxu0 0.0
        %1880 = vmatpush1.xpose.msra.mxu0 0.0
        %1881 = vmatprep.subr.mxu0 0.0
        %1882 = vmatpush1.xpose.msra.mxu0 0.0
        %1883 = vmatprep.subr.mxu0 0.0
        %1884 = vmatpush1.xpose.msra.mxu0 0.0
        %1885 = vmatprep.subr.mxu0 0.0
        %1886 = vmatpush1.xpose.msra.mxu0 0.0
        %1887 = vmatprep.subr.mxu0 0.0
        %1888 = vmatpush1.xpose.msra.mxu0 0.0
        %1889 = vmatprep.subr.mxu0 0.0
        %1890 = vmatpush1.xpose.msra.mxu0 0.0
        %1891 = vmatprep.subr.mxu0 0.0
        %1892 = vmatpush1.xpose.msra.mxu0 0.0
        %1893 = vmatprep.subr.mxu0 0.0
        %1894 = vmatpush1.xpose.msra.mxu0 0.0
        %1895 = vmatprep.subr.mxu0 0.0
        %1896 = vmatpush1.xpose.msra.mxu0 0.0
        %1897 = vmatprep.subr.mxu0 0.0
        %1898 = vmatpush1.xpose.msra.mxu0 0.0
        %1899 = vmatprep.subr.mxu0 0.0
        %1900 = vmatpush1.xpose.msra.mxu0 0.0
        %1901 = vmatprep.subr.mxu0 0.0
        %1902 = vmatpush1.xpose.msra.mxu0 0.0
        %1903 = vmatprep.subr.mxu0 0.0
        %1904 = vmatpush1.xpose.msra.mxu0 0.0
        %1905 = vmatprep.subr.mxu0 0.0
        %1906 = vmatpush1.xpose.msra.mxu0 %v1873
        %1907 = vmatprep.subr.mxu0 0.0
        %1908 = vmatpush2.xpose.msra.mxu0 0.0
        %1909 = vmatprep.subr.mxu0 0.0
        %1910 = vmatpush2.xpose.msra.mxu0 0.0
        %1911 = vmatprep.subr.mxu0 0.0
        %1912 = vmatpush2.xpose.msra.mxu0 0.0
        %1913 = vmatprep.subr.mxu0 0.0
        %1914 = vmatpush2.xpose.msra.mxu0 0.0
        %1915 = vmatprep.subr.mxu0 0.0
        %1916 = vmatpush2.xpose.msra.mxu0 0.0
        %1917 = vmatprep.subr.mxu0 0.0
        %1918 = vmatpush2.xpose.msra.mxu0 0.0
        %1919 = vmatprep.subr.mxu0 0.0
        %1920 = vmatpush2.xpose.msra.mxu0 0.0
        %1921 = vmatprep.subr.mxu0 0.0
        %1922 = vmatpush2.xpose.msra.mxu0 0.0
        %1923 = vmatprep.subr.mxu0 0.0
        %1924 = vmatpush2.xpose.msra.mxu0 0.0
        %1925 = vmatprep.subr.mxu0 0.0
        %1926 = vmatpush2.xpose.msra.mxu0 0.0
        %1927 = vmatprep.subr.mxu0 0.0
        %1928 = vmatpush2.xpose.msra.mxu0 0.0
        %1929 = vmatprep.subr.mxu0 0.0
        %1930 = vmatpush2.xpose.msra.mxu0 0.0
        %1931 = vmatprep.subr.mxu0 0.0
        %1932 = vmatpush2.xpose.msra.mxu0 0.0
        %1933 = vmatprep.subr.mxu0 0.0
        %1934 = vmatpush2.xpose.msra.mxu0 0.0
        %1935 = vmatprep.subr.mxu0 0.0
        %1936 = vmatpush2.xpose.msra.mxu0 0.0
        %1937 = vmatprep.subr.mxu0 0.0
        %1938 = vmatpush2.xpose.msra.mxu0 0.0
        %1939 = vmatprep.mubr.f32.mxu0 0.0
        %1940 = vmatmul.mubr.f32.gmra.mxu0 %v1870
        %v1941 = vpop.f32.mrf.mxu0
        %v1942 = vadd.f32 0.0, %v1941
        %v1943 = vpop.f32.mrf.mxu0
        %1944 = vdwg.mxu0
        %v1946 = vsel %vm600, %v1708, 0
        %v1949 = vsel %vm600, %v1712, 0
        %1951 = vmatprep.subr.mxu0 0.0
        %1952 = vmatpush1.xpose.msra.mxu0 0.0
        %1953 = vmatprep.subr.mxu0 0.0
        %1954 = vmatpush1.xpose.msra.mxu0 0.0
        %1955 = vmatprep.subr.mxu0 0.0
        %1956 = vmatpush1.xpose.msra.mxu0 0.0
        %1957 = vmatprep.subr.mxu0 0.0
        %1958 = vmatpush1.xpose.msra.mxu0 0.0
        %1959 = vmatprep.subr.mxu0 0.0
        %1960 = vmatpush1.xpose.msra.mxu0 0.0
        %1961 = vmatprep.subr.mxu0 0.0
        %1962 = vmatpush1.xpose.msra.mxu0 0.0
        %1963 = vmatprep.subr.mxu0 0.0
        %1964 = vmatpush1.xpose.msra.mxu0 0.0
        %1965 = vmatprep.subr.mxu0 0.0
        %1966 = vmatpush1.xpose.msra.mxu0 0.0
        %1967 = vmatprep.subr.mxu0 0.0
        %1968 = vmatpush1.xpose.msra.mxu0 0.0
        %1969 = vmatprep.subr.mxu0 0.0
        %1970 = vmatpush1.xpose.msra.mxu0 0.0
        %1971 = vmatprep.subr.mxu0 0.0
        %1972 = vmatpush1.xpose.msra.mxu0 0.0
        %1973 = vmatprep.subr.mxu0 0.0
        %1974 = vmatpush1.xpose.msra.mxu0 0.0
        %1975 = vmatprep.subr.mxu0 0.0
        %1976 = vmatpush1.xpose.msra.mxu0 0.0
        %1977 = vmatprep.subr.mxu0 0.0
        %1978 = vmatpush1.xpose.msra.mxu0 0.0
        %1979 = vmatprep.subr.mxu0 0.0
        %1980 = vmatpush1.xpose.msra.mxu0 0.0
        %1981 = vmatprep.subr.mxu0 0.0
        %1982 = vmatpush1.xpose.msra.mxu0 %v1949
        %1983 = vmatprep.subr.mxu0 0.0
        %1984 = vmatpush2.xpose.msra.mxu0 0.0
        %1985 = vmatprep.subr.mxu0 0.0
        %1986 = vmatpush2.xpose.msra.mxu0 0.0
        %1987 = vmatprep.subr.mxu0 0.0
        %1988 = vmatpush2.xpose.msra.mxu0 0.0
        %1989 = vmatprep.subr.mxu0 0.0
        %1990 = vmatpush2.xpose.msra.mxu0 0.0
        %1991 = vmatprep.subr.mxu0 0.0
        %1992 = vmatpush2.xpose.msra.mxu0 0.0
        %1993 = vmatprep.subr.mxu0 0.0
        %1994 = vmatpush2.xpose.msra.mxu0 0.0
        %1995 = vmatprep.subr.mxu0 0.0
        %1996 = vmatpush2.xpose.msra.mxu0 0.0
        %1997 = vmatprep.subr.mxu0 0.0
        %1998 = vmatpush2.xpose.msra.mxu0 0.0
        %1999 = vmatprep.subr.mxu0 0.0
        %2000 = vmatpush2.xpose.msra.mxu0 0.0
        %2001 = vmatprep.subr.mxu0 0.0
        %2002 = vmatpush2.xpose.msra.mxu0 0.0
        %2003 = vmatprep.subr.mxu0 0.0
        %2004 = vmatpush2.xpose.msra.mxu0 0.0
        %2005 = vmatprep.subr.mxu0 0.0
        %2006 = vmatpush2.xpose.msra.mxu0 0.0
        %2007 = vmatprep.subr.mxu0 0.0
        %2008 = vmatpush2.xpose.msra.mxu0 0.0
        %2009 = vmatprep.subr.mxu0 0.0
        %2010 = vmatpush2.xpose.msra.mxu0 0.0
        %2011 = vmatprep.subr.mxu0 0.0
        %2012 = vmatpush2.xpose.msra.mxu0 0.0
        %2013 = vmatprep.subr.mxu0 0.0
        %2014 = vmatpush2.xpose.msra.mxu0 0.0
        %2015 = vmatprep.mubr.f32.mxu0 0.0
        %2016 = vmatmul.mubr.f32.gmra.mxu0 %v1946
        %v2017 = vpop.f32.mrf.mxu0
        %v2018 = vadd.f32 0.0, %v2017
        %v2019 = vpop.f32.mrf.mxu0
        %2020 = vdwg.mxu0
        %v2021 = vsel %vm1036, %v1790, -inf
        %2022 = vmax.xlane.f32.xlu0 %v2021
        %v2023 = vpop.xlane.xlu0 %2022
        %v2024 = vsel %vm1036, %v1866, -inf
        %2025 = vmax.xlane.f32.xlu0 %v2024
        %v2026 = vpop.xlane.xlu0 %2025
        %v2027 = vsel %vm1036, %v1942, -inf
        %2028 = vmax.xlane.f32.xlu0 %v2027
        %v2029 = vpop.xlane.xlu0 %2028
        %v2030 = vsel %vm1036, %v2018, -inf
        %2031 = vmax.xlane.f32.xlu0 %v2030
        %v2032 = vpop.xlane.xlu0 %2031
        %v2033 = vmax.f32 %v2023, -1e+30
        %v2034 = vmax.f32 %v2026, -1e+30
        %v2035 = vmax.f32 %v2029, -1e+30
        %v2036 = vmax.f32 %v2032, -1e+30
        %v2037 = vsub.f32 -1e+30, %v2033
        %v2038 = vsub.f32 -1e+30, %v2034
        %v2039 = vsub.f32 -1e+30, %v2035
        %v2040 = vsub.f32 -1e+30, %v2036
        %v2041 = vmul.f32 %v2037, 1.442695
        %v2042 = vpow.pop %v2041
        %v2043 = vmul.f32 %v2038, 1.442695
        %v2044 = vpow.pop %v2043
        %v2045 = vmul.f32 %v2039, 1.442695
        %v2046 = vpow.pop %v2045
        %v2047 = vmul.f32 %v2040, 1.442695
        %v2048 = vpow.pop %v2047
        %v2049 = vsub.f32 %v1790, %v2033
        %v2050 = vsub.f32 %v1866, %v2034
        %v2051 = vsub.f32 %v1942, %v2035
        %v2052 = vsub.f32 %v2018, %v2036
        %v2053 = vmul.f32 %v2049, 1.442695
        %v2054 = vpow.pop %v2053
        %v2055 = vmul.f32 %v2050, 1.442695
        %v2056 = vpow.pop %v2055
        %v2057 = vmul.f32 %v2051, 1.442695
        %v2058 = vpow.pop %v2057
        %v2059 = vmul.f32 %v2052, 1.442695
        %v2060 = vpow.pop %v2059
        %v2061 = vmul.f32 %v2042, 0.0
        %v2062 = vmul.f32 %v2044, 0.0
        %v2063 = vmul.f32 %v2046, 0.0
        %v2064 = vmul.f32 %v2048, 0.0
        %v2065 = vsel %vm1036, %v2054, 0.0
        %2066 = vadd.xlane.f32.xlu0 %v2065
        %v2067 = vpop.xlane.xlu0 %2066
        %v2068 = vsel %vm1036, %v2056, 0.0
        %2069 = vadd.xlane.f32.xlu0 %v2068
        %v2070 = vpop.xlane.xlu0 %2069
        %v2071 = vsel %vm1036, %v2058, 0.0
        %2072 = vadd.xlane.f32.xlu0 %v2071
        %v2073 = vpop.xlane.xlu0 %2072
        %v2074 = vsel %vm1036, %v2060, 0.0
        %2075 = vadd.xlane.f32.xlu0 %v2074
        %v2076 = vpop.xlane.xlu0 %2075
        %v2077 = vadd.f32 %v2061, %v2067
        %v2078 = vadd.f32 %v2062, %v2070
        %v2079 = vadd.f32 %v2063, %v2073
        %v2080 = vadd.f32 %v2064, %v2076
        %v2082 = vsel %vm1036, %v2054, 0
        %2084 = vmatprep.subr.mxu0 0.0
        %2085 = vmatpush1.msra.mxu0 0.0
        %2086 = vmatprep.subr.mxu0 0.0
        %2087 = vmatpush1.msra.mxu0 0.0
        %2088 = vmatprep.subr.mxu0 0.0
        %2089 = vmatpush1.msra.mxu0 0.0
        %2090 = vmatprep.subr.mxu0 0.0
        %2091 = vmatpush1.msra.mxu0 0.0
        %2092 = vmatprep.subr.mxu0 0.0
        %2093 = vmatpush1.msra.mxu0 0.0
        %2094 = vmatprep.subr.mxu0 0.0
        %2095 = vmatpush1.msra.mxu0 0.0
        %2096 = vmatprep.subr.mxu0 0.0
        %2097 = vmatpush1.msra.mxu0 0.0
        %2098 = vmatprep.subr.mxu0 0.0
        %2099 = vmatpush1.msra.mxu0 0.0
        %2100 = vmatprep.subr.mxu0 0.0
        %2101 = vmatpush1.msra.mxu0 0.0
        %2102 = vmatprep.subr.mxu0 0.0
        %2103 = vmatpush1.msra.mxu0 0.0
        %2104 = vmatprep.subr.mxu0 0.0
        %2105 = vmatpush1.msra.mxu0 0.0
        %2106 = vmatprep.subr.mxu0 0.0
        %2107 = vmatpush1.msra.mxu0 0.0
        %2108 = vmatprep.subr.mxu0 0.0
        %2109 = vmatpush1.msra.mxu0 0.0
        %2110 = vmatprep.subr.mxu0 0.0
        %2111 = vmatpush1.msra.mxu0 0.0
        %2112 = vmatprep.subr.mxu0 0.0
        %2113 = vmatpush1.msra.mxu0 0.0
        %2114 = vmatprep.subr.mxu0 0.0
        %2115 = vmatpush1.msra.mxu0 %v1713
        %2116 = vmatprep.subr.mxu0 0.0
        %2117 = vmatpush2.msra.mxu0 0.0
        %2118 = vmatprep.subr.mxu0 0.0
        %2119 = vmatpush2.msra.mxu0 0.0
        %2120 = vmatprep.subr.mxu0 0.0
        %2121 = vmatpush2.msra.mxu0 0.0
        %2122 = vmatprep.subr.mxu0 0.0
        %2123 = vmatpush2.msra.mxu0 0.0
        %2124 = vmatprep.subr.mxu0 0.0
        %2125 = vmatpush2.msra.mxu0 0.0
        %2126 = vmatprep.subr.mxu0 0.0
        %2127 = vmatpush2.msra.mxu0 0.0
        %2128 = vmatprep.subr.mxu0 0.0
        %2129 = vmatpush2.msra.mxu0 0.0
        %2130 = vmatprep.subr.mxu0 0.0
        %2131 = vmatpush2.msra.mxu0 0.0
        %2132 = vmatprep.subr.mxu0 0.0
        %2133 = vmatpush2.msra.mxu0 0.0
        %2134 = vmatprep.subr.mxu0 0.0
        %2135 = vmatpush2.msra.mxu0 0.0
        %2136 = vmatprep.subr.mxu0 0.0
        %2137 = vmatpush2.msra.mxu0 0.0
        %2138 = vmatprep.subr.mxu0 0.0
        %2139 = vmatpush2.msra.mxu0 0.0
        %2140 = vmatprep.subr.mxu0 0.0
        %2141 = vmatpush2.msra.mxu0 0.0
        %2142 = vmatprep.subr.mxu0 0.0
        %2143 = vmatpush2.msra.mxu0 0.0
        %2144 = vmatprep.subr.mxu0 0.0
        %2145 = vmatpush2.msra.mxu0 0.0
        %2146 = vmatprep.subr.mxu0 0.0
        %2147 = vmatpush2.msra.mxu0 0.0
        %2148 = vmatprep.mubr.f32.mxu0 0.0
        %2149 = vmatmul.mubr.f32.gmra.mxu0 %v2082
        %v2150 = vpop.f32.mrf.mxu0
        %v2151 = vadd.f32 0.0, %v2150
        %v2152 = vpop.f32.mrf.mxu0
        %2153 = vdwg.mxu0
        %v2155 = vsel %vm1036, %v2056, 0
        %2157 = vmatprep.subr.mxu0 0.0
        %2158 = vmatpush1.msra.mxu0 0.0
        %2159 = vmatprep.subr.mxu0 0.0
        %2160 = vmatpush1.msra.mxu0 0.0
        %2161 = vmatprep.subr.mxu0 0.0
        %2162 = vmatpush1.msra.mxu0 0.0
        %2163 = vmatprep.subr.mxu0 0.0
        %2164 = vmatpush1.msra.mxu0 0.0
        %2165 = vmatprep.subr.mxu0 0.0
        %2166 = vmatpush1.msra.mxu0 0.0
        %2167 = vmatprep.subr.mxu0 0.0
        %2168 = vmatpush1.msra.mxu0 0.0
        %2169 = vmatprep.subr.mxu0 0.0
        %2170 = vmatpush1.msra.mxu0 0.0
        %2171 = vmatprep.subr.mxu0 0.0
        %2172 = vmatpush1.msra.mxu0 0.0
        %2173 = vmatprep.subr.mxu0 0.0
        %2174 = vmatpush1.msra.mxu0 0.0
        %2175 = vmatprep.subr.mxu0 0.0
        %2176 = vmatpush1.msra.mxu0 0.0
        %2177 = vmatprep.subr.mxu0 0.0
        %2178 = vmatpush1.msra.mxu0 0.0
        %2179 = vmatprep.subr.mxu0 0.0
        %2180 = vmatpush1.msra.mxu0 0.0
        %2181 = vmatprep.subr.mxu0 0.0
        %2182 = vmatpush1.msra.mxu0 0.0
        %2183 = vmatprep.subr.mxu0 0.0
        %2184 = vmatpush1.msra.mxu0 0.0
        %2185 = vmatprep.subr.mxu0 0.0
        %2186 = vmatpush1.msra.mxu0 0.0
        %2187 = vmatprep.subr.mxu0 0.0
        %2188 = vmatpush1.msra.mxu0 %v1714
        %2189 = vmatprep.subr.mxu0 0.0
        %2190 = vmatpush2.msra.mxu0 0.0
        %2191 = vmatprep.subr.mxu0 0.0
        %2192 = vmatpush2.msra.mxu0 0.0
        %2193 = vmatprep.subr.mxu0 0.0
        %2194 = vmatpush2.msra.mxu0 0.0
        %2195 = vmatprep.subr.mxu0 0.0
        %2196 = vmatpush2.msra.mxu0 0.0
        %2197 = vmatprep.subr.mxu0 0.0
        %2198 = vmatpush2.msra.mxu0 0.0
        %2199 = vmatprep.subr.mxu0 0.0
        %2200 = vmatpush2.msra.mxu0 0.0
        %2201 = vmatprep.subr.mxu0 0.0
        %2202 = vmatpush2.msra.mxu0 0.0
        %2203 = vmatprep.subr.mxu0 0.0
        %2204 = vmatpush2.msra.mxu0 0.0
        %2205 = vmatprep.subr.mxu0 0.0
        %2206 = vmatpush2.msra.mxu0 0.0
        %2207 = vmatprep.subr.mxu0 0.0
        %2208 = vmatpush2.msra.mxu0 0.0
        %2209 = vmatprep.subr.mxu0 0.0
        %2210 = vmatpush2.msra.mxu0 0.0
        %2211 = vmatprep.subr.mxu0 0.0
        %2212 = vmatpush2.msra.mxu0 0.0
        %2213 = vmatprep.subr.mxu0 0.0
        %2214 = vmatpush2.msra.mxu0 0.0
        %2215 = vmatprep.subr.mxu0 0.0
        %2216 = vmatpush2.msra.mxu0 0.0
        %2217 = vmatprep.subr.mxu0 0.0
        %2218 = vmatpush2.msra.mxu0 0.0
        %2219 = vmatprep.subr.mxu0 0.0
        %2220 = vmatpush2.msra.mxu0 0.0
        %2221 = vmatprep.mubr.f32.mxu0 0.0
        %2222 = vmatmul.mubr.f32.gmra.mxu0 %v2155
        %v2223 = vpop.f32.mrf.mxu0
        %v2224 = vadd.f32 0.0, %v2223
        %v2225 = vpop.f32.mrf.mxu0
        %2226 = vdwg.mxu0
        %v2228 = vsel %vm1036, %v2058, 0
        %2230 = vmatprep.subr.mxu0 0.0
        %2231 = vmatpush1.msra.mxu0 0.0
        %2232 = vmatprep.subr.mxu0 0.0
        %2233 = vmatpush1.msra.mxu0 0.0
        %2234 = vmatprep.subr.mxu0 0.0
        %2235 = vmatpush1.msra.mxu0 0.0
        %2236 = vmatprep.subr.mxu0 0.0
        %2237 = vmatpush1.msra.mxu0 0.0
        %2238 = vmatprep.subr.mxu0 0.0
        %2239 = vmatpush1.msra.mxu0 0.0
        %2240 = vmatprep.subr.mxu0 0.0
        %2241 = vmatpush1.msra.mxu0 0.0
        %2242 = vmatprep.subr.mxu0 0.0
        %2243 = vmatpush1.msra.mxu0 0.0
        %2244 = vmatprep.subr.mxu0 0.0
        %2245 = vmatpush1.msra.mxu0 0.0
        %2246 = vmatprep.subr.mxu0 0.0
        %2247 = vmatpush1.msra.mxu0 0.0
        %2248 = vmatprep.subr.mxu0 0.0
        %2249 = vmatpush1.msra.mxu0 0.0
        %2250 = vmatprep.subr.mxu0 0.0
        %2251 = vmatpush1.msra.mxu0 0.0
        %2252 = vmatprep.subr.mxu0 0.0
        %2253 = vmatpush1.msra.mxu0 0.0
        %2254 = vmatprep.subr.mxu0 0.0
        %2255 = vmatpush1.msra.mxu0 0.0
        %2256 = vmatprep.subr.mxu0 0.0
        %2257 = vmatpush1.msra.mxu0 0.0
        %2258 = vmatprep.subr.mxu0 0.0
        %2259 = vmatpush1.msra.mxu0 0.0
        %2260 = vmatprep.subr.mxu0 0.0
        %2261 = vmatpush1.msra.mxu0 %v1715
        %2262 = vmatprep.subr.mxu0 0.0
        %2263 = vmatpush2.msra.mxu0 0.0
        %2264 = vmatprep.subr.mxu0 0.0
        %2265 = vmatpush2.msra.mxu0 0.0
        %2266 = vmatprep.subr.mxu0 0.0
        %2267 = vmatpush2.msra.mxu0 0.0
        %2268 = vmatprep.subr.mxu0 0.0
        %2269 = vmatpush2.msra.mxu0 0.0
        %2270 = vmatprep.subr.mxu0 0.0
        %2271 = vmatpush2.msra.mxu0 0.0
        %2272 = vmatprep.subr.mxu0 0.0
        %2273 = vmatpush2.msra.mxu0 0.0
        %2274 = vmatprep.subr.mxu0 0.0
        %2275 = vmatpush2.msra.mxu0 0.0
        %2276 = vmatprep.subr.mxu0 0.0
        %2277 = vmatpush2.msra.mxu0 0.0
        %2278 = vmatprep.subr.mxu0 0.0
        %2279 = vmatpush2.msra.mxu0 0.0
        %2280 = vmatprep.subr.mxu0 0.0
        %2281 = vmatpush2.msra.mxu0 0.0
        %2282 = vmatprep.subr.mxu0 0.0
        %2283 = vmatpush2.msra.mxu0 0.0
        %2284 = vmatprep.subr.mxu0 0.0
        %2285 = vmatpush2.msra.mxu0 0.0
        %2286 = vmatprep.subr.mxu0 0.0
        %2287 = vmatpush2.msra.mxu0 0.0
        %2288 = vmatprep.subr.mxu0 0.0
        %2289 = vmatpush2.msra.mxu0 0.0
        %2290 = vmatprep.subr.mxu0 0.0
        %2291 = vmatpush2.msra.mxu0 0.0
        %2292 = vmatprep.subr.mxu0 0.0
        %2293 = vmatpush2.msra.mxu0 0.0
        %2294 = vmatprep.mubr.f32.mxu0 0.0
        %2295 = vmatmul.mubr.f32.gmra.mxu0 %v2228
        %v2296 = vpop.f32.mrf.mxu0
        %v2297 = vadd.f32 0.0, %v2296
        %v2298 = vpop.f32.mrf.mxu0
        %2299 = vdwg.mxu0
        %v2301 = vsel %vm1036, %v2060, 0
        %2303 = vmatprep.subr.mxu0 0.0
        %2304 = vmatpush1.msra.mxu0 0.0
        %2305 = vmatprep.subr.mxu0 0.0
        %2306 = vmatpush1.msra.mxu0 0.0
        %2307 = vmatprep.subr.mxu0 0.0
        %2308 = vmatpush1.msra.mxu0 0.0
        %2309 = vmatprep.subr.mxu0 0.0
        %2310 = vmatpush1.msra.mxu0 0.0
        %2311 = vmatprep.subr.mxu0 0.0
        %2312 = vmatpush1.msra.mxu0 0.0
        %2313 = vmatprep.subr.mxu0 0.0
        %2314 = vmatpush1.msra.mxu0 0.0
        %2315 = vmatprep.subr.mxu0 0.0
        %2316 = vmatpush1.msra.mxu0 0.0
        %2317 = vmatprep.subr.mxu0 0.0
        %2318 = vmatpush1.msra.mxu0 0.0
        %2319 = vmatprep.subr.mxu0 0.0
        %2320 = vmatpush1.msra.mxu0 0.0
        %2321 = vmatprep.subr.mxu0 0.0
        %2322 = vmatpush1.msra.mxu0 0.0
        %2323 = vmatprep.subr.mxu0 0.0
        %2324 = vmatpush1.msra.mxu0 0.0
        %2325 = vmatprep.subr.mxu0 0.0
        %2326 = vmatpush1.msra.mxu0 0.0
        %2327 = vmatprep.subr.mxu0 0.0
        %2328 = vmatpush1.msra.mxu0 0.0
        %2329 = vmatprep.subr.mxu0 0.0
        %2330 = vmatpush1.msra.mxu0 0.0
        %2331 = vmatprep.subr.mxu0 0.0
        %2332 = vmatpush1.msra.mxu0 0.0
        %2333 = vmatprep.subr.mxu0 0.0
        %2334 = vmatpush1.msra.mxu0 %v1716
        %2335 = vmatprep.subr.mxu0 0.0
        %2336 = vmatpush2.msra.mxu0 0.0
        %2337 = vmatprep.subr.mxu0 0.0
        %2338 = vmatpush2.msra.mxu0 0.0
        %2339 = vmatprep.subr.mxu0 0.0
        %2340 = vmatpush2.msra.mxu0 0.0
        %2341 = vmatprep.subr.mxu0 0.0
        %2342 = vmatpush2.msra.mxu0 0.0
        %2343 = vmatprep.subr.mxu0 0.0
        %2344 = vmatpush2.msra.mxu0 0.0
        %2345 = vmatprep.subr.mxu0 0.0
        %2346 = vmatpush2.msra.mxu0 0.0
        %2347 = vmatprep.subr.mxu0 0.0
        %2348 = vmatpush2.msra.mxu0 0.0
        %2349 = vmatprep.subr.mxu0 0.0
        %2350 = vmatpush2.msra.mxu0 0.0
        %2351 = vmatprep.subr.mxu0 0.0
        %2352 = vmatpush2.msra.mxu0 0.0
        %2353 = vmatprep.subr.mxu0 0.0
        %2354 = vmatpush2.msra.mxu0 0.0
        %2355 = vmatprep.subr.mxu0 0.0
        %2356 = vmatpush2.msra.mxu0 0.0
        %2357 = vmatprep.subr.mxu0 0.0
        %2358 = vmatpush2.msra.mxu0 0.0
        %2359 = vmatprep.subr.mxu0 0.0
        %2360 = vmatpush2.msra.mxu0 0.0
        %2361 = vmatprep.subr.mxu0 0.0
        %2362 = vmatpush2.msra.mxu0 0.0
        %2363 = vmatprep.subr.mxu0 0.0
        %2364 = vmatpush2.msra.mxu0 0.0
        %2365 = vmatprep.subr.mxu0 0.0
        %2366 = vmatpush2.msra.mxu0 0.0
        %2367 = vmatprep.mubr.f32.mxu0 0.0
        %2368 = vmatmul.mubr.f32.gmra.mxu0 %v2301
        %v2369 = vpop.f32.mrf.mxu0
        %v2370 = vadd.f32 0.0, %v2369
        %v2371 = vpop.f32.mrf.mxu0
        %2372 = vdwg.mxu0
        %v2373 = vadd.f32 %v2061, %v2151
        %v2374 = vadd.f32 %v2062, %v2224
        %v2375 = vadd.f32 %v2063, %v2297
        %v2376 = vadd.f32 %v2064, %v2370
        %v2377 = vld [vmem:[#allocation3 + $0x8] sm:$0xff]
        %v2378 = vld [vmem:[#allocation3 + $0x18] sm:$0xff]
        %v2379 = vld [vmem:[#allocation3 + $0x28] sm:$0xff]
        %v2380 = vld [vmem:[#allocation3 + $0x38] sm:$0xff]
        %v2381 = vld [vmem:[#allocation4 + $0x8] sm:$0xff]
        %v2382 = vld [vmem:[#allocation4 + $0x18] sm:$0xff]
        %v2383 = vld [vmem:[#allocation4 + $0x28] sm:$0xff]
        %v2384 = vld [vmem:[#allocation4 + $0x38] sm:$0xff]
        %v2386 = vsel %vm600, %v2377, 0
        %2388 = vmatprep.subr.mxu0 0.0
        %2389 = vmatpush1.xpose.msra.mxu0 0.0
        %2390 = vmatprep.subr.mxu0 0.0
        %2391 = vmatpush1.xpose.msra.mxu0 0.0
        %2392 = vmatprep.subr.mxu0 0.0
        %2393 = vmatpush1.xpose.msra.mxu0 0.0
        %2394 = vmatprep.subr.mxu0 0.0
        %2395 = vmatpush1.xpose.msra.mxu0 0.0
        %2396 = vmatprep.subr.mxu0 0.0
        %2397 = vmatpush1.xpose.msra.mxu0 0.0
        %2398 = vmatprep.subr.mxu0 0.0
        %2399 = vmatpush1.xpose.msra.mxu0 0.0
        %2400 = vmatprep.subr.mxu0 0.0
        %2401 = vmatpush1.xpose.msra.mxu0 0.0
        %2402 = vmatprep.subr.mxu0 0.0
        %2403 = vmatpush1.xpose.msra.mxu0 0.0
        %2404 = vmatprep.subr.mxu0 0.0
        %2405 = vmatpush1.xpose.msra.mxu0 0.0
        %2406 = vmatprep.subr.mxu0 0.0
        %2407 = vmatpush1.xpose.msra.mxu0 0.0
        %2408 = vmatprep.subr.mxu0 0.0
        %2409 = vmatpush1.xpose.msra.mxu0 0.0
        %2410 = vmatprep.subr.mxu0 0.0
        %2411 = vmatpush1.xpose.msra.mxu0 0.0
        %2412 = vmatprep.subr.mxu0 0.0
        %2413 = vmatpush1.xpose.msra.mxu0 0.0
        %2414 = vmatprep.subr.mxu0 0.0
        %2415 = vmatpush1.xpose.msra.mxu0 0.0
        %2416 = vmatprep.subr.mxu0 0.0
        %2417 = vmatpush1.xpose.msra.mxu0 0.0
        %2418 = vmatprep.subr.mxu0 0.0
        %2419 = vmatpush1.xpose.msra.mxu0 %v2386
        %2420 = vmatprep.subr.mxu0 0.0
        %2421 = vmatpush2.xpose.msra.mxu0 0.0
        %2422 = vmatprep.subr.mxu0 0.0
        %2423 = vmatpush2.xpose.msra.mxu0 0.0
        %2424 = vmatprep.subr.mxu0 0.0
        %2425 = vmatpush2.xpose.msra.mxu0 0.0
        %2426 = vmatprep.subr.mxu0 0.0
        %2427 = vmatpush2.xpose.msra.mxu0 0.0
        %2428 = vmatprep.subr.mxu0 0.0
        %2429 = vmatpush2.xpose.msra.mxu0 0.0
        %2430 = vmatprep.subr.mxu0 0.0
        %2431 = vmatpush2.xpose.msra.mxu0 0.0
        %2432 = vmatprep.subr.mxu0 0.0
        %2433 = vmatpush2.xpose.msra.mxu0 0.0
        %2434 = vmatprep.subr.mxu0 0.0
        %2435 = vmatpush2.xpose.msra.mxu0 0.0
        %2436 = vmatprep.subr.mxu0 0.0
        %2437 = vmatpush2.xpose.msra.mxu0 0.0
        %2438 = vmatprep.subr.mxu0 0.0
        %2439 = vmatpush2.xpose.msra.mxu0 0.0
        %2440 = vmatprep.subr.mxu0 0.0
        %2441 = vmatpush2.xpose.msra.mxu0 0.0
        %2442 = vmatprep.subr.mxu0 0.0
        %2443 = vmatpush2.xpose.msra.mxu0 0.0
        %2444 = vmatprep.subr.mxu0 0.0
        %2445 = vmatpush2.xpose.msra.mxu0 0.0
        %2446 = vmatprep.subr.mxu0 0.0
        %2447 = vmatpush2.xpose.msra.mxu0 0.0
        %2448 = vmatprep.subr.mxu0 0.0
        %2449 = vmatpush2.xpose.msra.mxu0 0.0
        %2450 = vmatprep.subr.mxu0 0.0
        %2451 = vmatpush2.xpose.msra.mxu0 0.0
        %2452 = vmatprep.mubr.f32.mxu0 0.0
        %2453 = vmatmul.mubr.f32.gmra.mxu0 %v1718
        %v2454 = vpop.f32.mrf.mxu0
        %v2455 = vadd.f32 0.0, %v2454
        %v2456 = vpop.f32.mrf.mxu0
        %2457 = vdwg.mxu0
        %v2459 = vsel %vm600, %v2378, 0
        %2461 = vmatprep.subr.mxu0 0.0
        %2462 = vmatpush1.xpose.msra.mxu0 0.0
        %2463 = vmatprep.subr.mxu0 0.0
        %2464 = vmatpush1.xpose.msra.mxu0 0.0
        %2465 = vmatprep.subr.mxu0 0.0
        %2466 = vmatpush1.xpose.msra.mxu0 0.0
        %2467 = vmatprep.subr.mxu0 0.0
        %2468 = vmatpush1.xpose.msra.mxu0 0.0
        %2469 = vmatprep.subr.mxu0 0.0
        %2470 = vmatpush1.xpose.msra.mxu0 0.0
        %2471 = vmatprep.subr.mxu0 0.0
        %2472 = vmatpush1.xpose.msra.mxu0 0.0
        %2473 = vmatprep.subr.mxu0 0.0
        %2474 = vmatpush1.xpose.msra.mxu0 0.0
        %2475 = vmatprep.subr.mxu0 0.0
        %2476 = vmatpush1.xpose.msra.mxu0 0.0
        %2477 = vmatprep.subr.mxu0 0.0
        %2478 = vmatpush1.xpose.msra.mxu0 0.0
        %2479 = vmatprep.subr.mxu0 0.0
        %2480 = vmatpush1.xpose.msra.mxu0 0.0
        %2481 = vmatprep.subr.mxu0 0.0
        %2482 = vmatpush1.xpose.msra.mxu0 0.0
        %2483 = vmatprep.subr.mxu0 0.0
        %2484 = vmatpush1.xpose.msra.mxu0 0.0
        %2485 = vmatprep.subr.mxu0 0.0
        %2486 = vmatpush1.xpose.msra.mxu0 0.0
        %2487 = vmatprep.subr.mxu0 0.0
        %2488 = vmatpush1.xpose.msra.mxu0 0.0
        %2489 = vmatprep.subr.mxu0 0.0
        %2490 = vmatpush1.xpose.msra.mxu0 0.0
        %2491 = vmatprep.subr.mxu0 0.0
        %2492 = vmatpush1.xpose.msra.mxu0 %v2459
        %2493 = vmatprep.subr.mxu0 0.0
        %2494 = vmatpush2.xpose.msra.mxu0 0.0
        %2495 = vmatprep.subr.mxu0 0.0
        %2496 = vmatpush2.xpose.msra.mxu0 0.0
        %2497 = vmatprep.subr.mxu0 0.0
        %2498 = vmatpush2.xpose.msra.mxu0 0.0
        %2499 = vmatprep.subr.mxu0 0.0
        %2500 = vmatpush2.xpose.msra.mxu0 0.0
        %2501 = vmatprep.subr.mxu0 0.0
        %2502 = vmatpush2.xpose.msra.mxu0 0.0
        %2503 = vmatprep.subr.mxu0 0.0
        %2504 = vmatpush2.xpose.msra.mxu0 0.0
        %2505 = vmatprep.subr.mxu0 0.0
        %2506 = vmatpush2.xpose.msra.mxu0 0.0
        %2507 = vmatprep.subr.mxu0 0.0
        %2508 = vmatpush2.xpose.msra.mxu0 0.0
        %2509 = vmatprep.subr.mxu0 0.0
        %2510 = vmatpush2.xpose.msra.mxu0 0.0
        %2511 = vmatprep.subr.mxu0 0.0
        %2512 = vmatpush2.xpose.msra.mxu0 0.0
        %2513 = vmatprep.subr.mxu0 0.0
        %2514 = vmatpush2.xpose.msra.mxu0 0.0
        %2515 = vmatprep.subr.mxu0 0.0
        %2516 = vmatpush2.xpose.msra.mxu0 0.0
        %2517 = vmatprep.subr.mxu0 0.0
        %2518 = vmatpush2.xpose.msra.mxu0 0.0
        %2519 = vmatprep.subr.mxu0 0.0
        %2520 = vmatpush2.xpose.msra.mxu0 0.0
        %2521 = vmatprep.subr.mxu0 0.0
        %2522 = vmatpush2.xpose.msra.mxu0 0.0
        %2523 = vmatprep.subr.mxu0 0.0
        %2524 = vmatpush2.xpose.msra.mxu0 0.0
        %2525 = vmatprep.mubr.f32.mxu0 0.0
        %2526 = vmatmul.mubr.f32.gmra.mxu0 %v1794
        %v2527 = vpop.f32.mrf.mxu0
        %v2528 = vadd.f32 0.0, %v2527
        %v2529 = vpop.f32.mrf.mxu0
        %2530 = vdwg.mxu0
        %v2532 = vsel %vm600, %v2379, 0
        %2534 = vmatprep.subr.mxu0 0.0
        %2535 = vmatpush1.xpose.msra.mxu0 0.0
        %2536 = vmatprep.subr.mxu0 0.0
        %2537 = vmatpush1.xpose.msra.mxu0 0.0
        %2538 = vmatprep.subr.mxu0 0.0
        %2539 = vmatpush1.xpose.msra.mxu0 0.0
        %2540 = vmatprep.subr.mxu0 0.0
        %2541 = vmatpush1.xpose.msra.mxu0 0.0
        %2542 = vmatprep.subr.mxu0 0.0
        %2543 = vmatpush1.xpose.msra.mxu0 0.0
        %2544 = vmatprep.subr.mxu0 0.0
        %2545 = vmatpush1.xpose.msra.mxu0 0.0
        %2546 = vmatprep.subr.mxu0 0.0
        %2547 = vmatpush1.xpose.msra.mxu0 0.0
        %2548 = vmatprep.subr.mxu0 0.0
        %2549 = vmatpush1.xpose.msra.mxu0 0.0
        %2550 = vmatprep.subr.mxu0 0.0
        %2551 = vmatpush1.xpose.msra.mxu0 0.0
        %2552 = vmatprep.subr.mxu0 0.0
        %2553 = vmatpush1.xpose.msra.mxu0 0.0
        %2554 = vmatprep.subr.mxu0 0.0
        %2555 = vmatpush1.xpose.msra.mxu0 0.0
        %2556 = vmatprep.subr.mxu0 0.0
        %2557 = vmatpush1.xpose.msra.mxu0 0.0
        %2558 = vmatprep.subr.mxu0 0.0
        %2559 = vmatpush1.xpose.msra.mxu0 0.0
        %2560 = vmatprep.subr.mxu0 0.0
        %2561 = vmatpush1.xpose.msra.mxu0 0.0
        %2562 = vmatprep.subr.mxu0 0.0
        %2563 = vmatpush1.xpose.msra.mxu0 0.0
        %2564 = vmatprep.subr.mxu0 0.0
        %2565 = vmatpush1.xpose.msra.mxu0 %v2532
        %2566 = vmatprep.subr.mxu0 0.0
        %2567 = vmatpush2.xpose.msra.mxu0 0.0
        %2568 = vmatprep.subr.mxu0 0.0
        %2569 = vmatpush2.xpose.msra.mxu0 0.0
        %2570 = vmatprep.subr.mxu0 0.0
        %2571 = vmatpush2.xpose.msra.mxu0 0.0
        %2572 = vmatprep.subr.mxu0 0.0
        %2573 = vmatpush2.xpose.msra.mxu0 0.0
        %2574 = vmatprep.subr.mxu0 0.0
        %2575 = vmatpush2.xpose.msra.mxu0 0.0
        %2576 = vmatprep.subr.mxu0 0.0
        %2577 = vmatpush2.xpose.msra.mxu0 0.0
        %2578 = vmatprep.subr.mxu0 0.0
        %2579 = vmatpush2.xpose.msra.mxu0 0.0
        %2580 = vmatprep.subr.mxu0 0.0
        %2581 = vmatpush2.xpose.msra.mxu0 0.0
        %2582 = vmatprep.subr.mxu0 0.0
        %2583 = vmatpush2.xpose.msra.mxu0 0.0
        %2584 = vmatprep.subr.mxu0 0.0
        %2585 = vmatpush2.xpose.msra.mxu0 0.0
        %2586 = vmatprep.subr.mxu0 0.0
        %2587 = vmatpush2.xpose.msra.mxu0 0.0
        %2588 = vmatprep.subr.mxu0 0.0
        %2589 = vmatpush2.xpose.msra.mxu0 0.0
        %2590 = vmatprep.subr.mxu0 0.0
        %2591 = vmatpush2.xpose.msra.mxu0 0.0
        %2592 = vmatprep.subr.mxu0 0.0
        %2593 = vmatpush2.xpose.msra.mxu0 0.0
        %2594 = vmatprep.subr.mxu0 0.0
        %2595 = vmatpush2.xpose.msra.mxu0 0.0
        %2596 = vmatprep.subr.mxu0 0.0
        %2597 = vmatpush2.xpose.msra.mxu0 0.0
        %2598 = vmatprep.mubr.f32.mxu0 0.0
        %2599 = vmatmul.mubr.f32.gmra.mxu0 %v1870
        %v2600 = vpop.f32.mrf.mxu0
        %v2601 = vadd.f32 0.0, %v2600
        %v2602 = vpop.f32.mrf.mxu0
        %2603 = vdwg.mxu0
        %v2605 = vsel %vm600, %v2380, 0
        %2607 = vmatprep.subr.mxu0 0.0
        %2608 = vmatpush1.xpose.msra.mxu0 0.0
        %2609 = vmatprep.subr.mxu0 0.0
        %2610 = vmatpush1.xpose.msra.mxu0 0.0
        %2611 = vmatprep.subr.mxu0 0.0
        %2612 = vmatpush1.xpose.msra.mxu0 0.0
        %2613 = vmatprep.subr.mxu0 0.0
        %2614 = vmatpush1.xpose.msra.mxu0 0.0
        %2615 = vmatprep.subr.mxu0 0.0
        %2616 = vmatpush1.xpose.msra.mxu0 0.0
        %2617 = vmatprep.subr.mxu0 0.0
        %2618 = vmatpush1.xpose.msra.mxu0 0.0
        %2619 = vmatprep.subr.mxu0 0.0
        %2620 = vmatpush1.xpose.msra.mxu0 0.0
        %2621 = vmatprep.subr.mxu0 0.0
        %2622 = vmatpush1.xpose.msra.mxu0 0.0
        %2623 = vmatprep.subr.mxu0 0.0
        %2624 = vmatpush1.xpose.msra.mxu0 0.0
        %2625 = vmatprep.subr.mxu0 0.0
        %2626 = vmatpush1.xpose.msra.mxu0 0.0
        %2627 = vmatprep.subr.mxu0 0.0
        %2628 = vmatpush1.xpose.msra.mxu0 0.0
        %2629 = vmatprep.subr.mxu0 0.0
        %2630 = vmatpush1.xpose.msra.mxu0 0.0
        %2631 = vmatprep.subr.mxu0 0.0
        %2632 = vmatpush1.xpose.msra.mxu0 0.0
        %2633 = vmatprep.subr.mxu0 0.0
        %2634 = vmatpush1.xpose.msra.mxu0 0.0
        %2635 = vmatprep.subr.mxu0 0.0
        %2636 = vmatpush1.xpose.msra.mxu0 0.0
        %2637 = vmatprep.subr.mxu0 0.0
        %2638 = vmatpush1.xpose.msra.mxu0 %v2605
        %2639 = vmatprep.subr.mxu0 0.0
        %2640 = vmatpush2.xpose.msra.mxu0 0.0
        %2641 = vmatprep.subr.mxu0 0.0
        %2642 = vmatpush2.xpose.msra.mxu0 0.0
        %2643 = vmatprep.subr.mxu0 0.0
        %2644 = vmatpush2.xpose.msra.mxu0 0.0
        %2645 = vmatprep.subr.mxu0 0.0
        %2646 = vmatpush2.xpose.msra.mxu0 0.0
        %2647 = vmatprep.subr.mxu0 0.0
        %2648 = vmatpush2.xpose.msra.mxu0 0.0
        %2649 = vmatprep.subr.mxu0 0.0
        %2650 = vmatpush2.xpose.msra.mxu0 0.0
        %2651 = vmatprep.subr.mxu0 0.0
        %2652 = vmatpush2.xpose.msra.mxu0 0.0
        %2653 = vmatprep.subr.mxu0 0.0
        %2654 = vmatpush2.xpose.msra.mxu0 0.0
        %2655 = vmatprep.subr.mxu0 0.0
        %2656 = vmatpush2.xpose.msra.mxu0 0.0
        %2657 = vmatprep.subr.mxu0 0.0
        %2658 = vmatpush2.xpose.msra.mxu0 0.0
        %2659 = vmatprep.subr.mxu0 0.0
        %2660 = vmatpush2.xpose.msra.mxu0 0.0
        %2661 = vmatprep.subr.mxu0 0.0
        %2662 = vmatpush2.xpose.msra.mxu0 0.0
        %2663 = vmatprep.subr.mxu0 0.0
        %2664 = vmatpush2.xpose.msra.mxu0 0.0
        %2665 = vmatprep.subr.mxu0 0.0
        %2666 = vmatpush2.xpose.msra.mxu0 0.0
        %2667 = vmatprep.subr.mxu0 0.0
        %2668 = vmatpush2.xpose.msra.mxu0 0.0
        %2669 = vmatprep.subr.mxu0 0.0
        %2670 = vmatpush2.xpose.msra.mxu0 0.0
        %2671 = vmatprep.mubr.f32.mxu0 0.0
        %2672 = vmatmul.mubr.f32.gmra.mxu0 %v1946
        %v2673 = vpop.f32.mrf.mxu0
        %v2674 = vadd.f32 0.0, %v2673
        %v2675 = vpop.f32.mrf.mxu0
        %2676 = vdwg.mxu0
        %v2677 = vsel %vm1031, %v2455, -1e+30
        %v2678 = vsel %vm1031, %v2528, -1e+30
        %v2679 = vsel %vm1031, %v2601, -1e+30
        %v2680 = vsel %vm1031, %v2674, -1e+30
        %v2681 = vsel %vm1036, %v2677, -inf
        %2682 = vmax.xlane.f32.xlu0 %v2681
        %v2683 = vpop.xlane.xlu0 %2682
        %v2684 = vsel %vm1036, %v2678, -inf
        %2685 = vmax.xlane.f32.xlu0 %v2684
        %v2686 = vpop.xlane.xlu0 %2685
        %v2687 = vsel %vm1036, %v2679, -inf
        %2688 = vmax.xlane.f32.xlu0 %v2687
        %v2689 = vpop.xlane.xlu0 %2688
        %v2690 = vsel %vm1036, %v2680, -inf
        %2691 = vmax.xlane.f32.xlu0 %v2690
        %v2692 = vpop.xlane.xlu0 %2691
        %v2693 = vmax.f32 %v2033, %v2683
        %v2694 = vmax.f32 %v2034, %v2686
        %v2695 = vmax.f32 %v2035, %v2689
        %v2696 = vmax.f32 %v2036, %v2692
        %v2697 = vsub.f32 %v2033, %v2693
        %v2698 = vsub.f32 %v2034, %v2694
        %v2699 = vsub.f32 %v2035, %v2695
        %v2700 = vsub.f32 %v2036, %v2696
        %v2701 = vmul.f32 %v2697, 1.442695
        %v2702 = vpow.pop %v2701
        %v2703 = vmul.f32 %v2698, 1.442695
        %v2704 = vpow.pop %v2703
        %v2705 = vmul.f32 %v2699, 1.442695
        %v2706 = vpow.pop %v2705
        %v2707 = vmul.f32 %v2700, 1.442695
        %v2708 = vpow.pop %v2707
        %v2709 = vsub.f32 %v2677, %v2693
        %v2710 = vsub.f32 %v2678, %v2694
        %v2711 = vsub.f32 %v2679, %v2695
        %v2712 = vsub.f32 %v2680, %v2696
        %v2713 = vmul.f32 %v2709, 1.442695
        %v2714 = vpow.pop %v2713
        %v2715 = vmul.f32 %v2710, 1.442695
        %v2716 = vpow.pop %v2715
        %v2717 = vmul.f32 %v2711, 1.442695
        %v2718 = vpow.pop %v2717
        %v2719 = vmul.f32 %v2712, 1.442695
        %v2720 = vpow.pop %v2719
        %v2721 = vmul.f32 %v2702, %v2077
        %v2722 = vmul.f32 %v2704, %v2078
        %v2723 = vmul.f32 %v2706, %v2079
        %v2724 = vmul.f32 %v2708, %v2080
        %v2725 = vsel %vm1036, %v2714, 0.0
        %2726 = vadd.xlane.f32.xlu0 %v2725
        %v2727 = vpop.xlane.xlu0 %2726
        %v2728 = vsel %vm1036, %v2716, 0.0
        %2729 = vadd.xlane.f32.xlu0 %v2728
        %v2730 = vpop.xlane.xlu0 %2729
        %v2731 = vsel %vm1036, %v2718, 0.0
        %2732 = vadd.xlane.f32.xlu0 %v2731
        %v2733 = vpop.xlane.xlu0 %2732
        %v2734 = vsel %vm1036, %v2720, 0.0
        %2735 = vadd.xlane.f32.xlu0 %v2734
        %v2736 = vpop.xlane.xlu0 %2735
        %v2737 = vadd.f32 %v2721, %v2727
        %v2738 = vadd.f32 %v2722, %v2730
        %v2739 = vadd.f32 %v2723, %v2733
        %v2740 = vadd.f32 %v2724, %v2736
        %v2741 = vmul.f32 %v2702, %v2373
        %v2742 = vmul.f32 %v2704, %v2374
        %v2743 = vmul.f32 %v2706, %v2375
        %v2744 = vmul.f32 %v2708, %v2376
        %v2746 = vsel %vm1036, %v2714, 0
        %2748 = vmatprep.subr.mxu0 0.0
        %2749 = vmatpush1.msra.mxu0 0.0
        %2750 = vmatprep.subr.mxu0 0.0
        %2751 = vmatpush1.msra.mxu0 0.0
        %2752 = vmatprep.subr.mxu0 0.0
        %2753 = vmatpush1.msra.mxu0 0.0
        %2754 = vmatprep.subr.mxu0 0.0
        %2755 = vmatpush1.msra.mxu0 0.0
        %2756 = vmatprep.subr.mxu0 0.0
        %2757 = vmatpush1.msra.mxu0 0.0
        %2758 = vmatprep.subr.mxu0 0.0
        %2759 = vmatpush1.msra.mxu0 0.0
        %2760 = vmatprep.subr.mxu0 0.0
        %2761 = vmatpush1.msra.mxu0 0.0
        %2762 = vmatprep.subr.mxu0 0.0
        %2763 = vmatpush1.msra.mxu0 0.0
        %2764 = vmatprep.subr.mxu0 0.0
        %2765 = vmatpush1.msra.mxu0 0.0
        %2766 = vmatprep.subr.mxu0 0.0
        %2767 = vmatpush1.msra.mxu0 0.0
        %2768 = vmatprep.subr.mxu0 0.0
        %2769 = vmatpush1.msra.mxu0 0.0
        %2770 = vmatprep.subr.mxu0 0.0
        %2771 = vmatpush1.msra.mxu0 0.0
        %2772 = vmatprep.subr.mxu0 0.0
        %2773 = vmatpush1.msra.mxu0 0.0
        %2774 = vmatprep.subr.mxu0 0.0
        %2775 = vmatpush1.msra.mxu0 0.0
        %2776 = vmatprep.subr.mxu0 0.0
        %2777 = vmatpush1.msra.mxu0 0.0
        %2778 = vmatprep.subr.mxu0 0.0
        %2779 = vmatpush1.msra.mxu0 %v2381
        %2780 = vmatprep.subr.mxu0 0.0
        %2781 = vmatpush2.msra.mxu0 0.0
        %2782 = vmatprep.subr.mxu0 0.0
        %2783 = vmatpush2.msra.mxu0 0.0
        %2784 = vmatprep.subr.mxu0 0.0
        %2785 = vmatpush2.msra.mxu0 0.0
        %2786 = vmatprep.subr.mxu0 0.0
        %2787 = vmatpush2.msra.mxu0 0.0
        %2788 = vmatprep.subr.mxu0 0.0
        %2789 = vmatpush2.msra.mxu0 0.0
        %2790 = vmatprep.subr.mxu0 0.0
        %2791 = vmatpush2.msra.mxu0 0.0
        %2792 = vmatprep.subr.mxu0 0.0
        %2793 = vmatpush2.msra.mxu0 0.0
        %2794 = vmatprep.subr.mxu0 0.0
        %2795 = vmatpush2.msra.mxu0 0.0
        %2796 = vmatprep.subr.mxu0 0.0
        %2797 = vmatpush2.msra.mxu0 0.0
        %2798 = vmatprep.subr.mxu0 0.0
        %2799 = vmatpush2.msra.mxu0 0.0
        %2800 = vmatprep.subr.mxu0 0.0
        %2801 = vmatpush2.msra.mxu0 0.0
        %2802 = vmatprep.subr.mxu0 0.0
        %2803 = vmatpush2.msra.mxu0 0.0
        %2804 = vmatprep.subr.mxu0 0.0
        %2805 = vmatpush2.msra.mxu0 0.0
        %2806 = vmatprep.subr.mxu0 0.0
        %2807 = vmatpush2.msra.mxu0 0.0
        %2808 = vmatprep.subr.mxu0 0.0
        %2809 = vmatpush2.msra.mxu0 0.0
        %2810 = vmatprep.subr.mxu0 0.0
        %2811 = vmatpush2.msra.mxu0 0.0
        %2812 = vmatprep.mubr.f32.mxu0 0.0
        %2813 = vmatmul.mubr.f32.gmra.mxu0 %v2746
        %v2814 = vpop.f32.mrf.mxu0
        %v2815 = vadd.f32 0.0, %v2814
        %v2816 = vpop.f32.mrf.mxu0
        %2817 = vdwg.mxu0
        %v2819 = vsel %vm1036, %v2716, 0
        %2821 = vmatprep.subr.mxu0 0.0
        %2822 = vmatpush1.msra.mxu0 0.0
        %2823 = vmatprep.subr.mxu0 0.0
        %2824 = vmatpush1.msra.mxu0 0.0
        %2825 = vmatprep.subr.mxu0 0.0
        %2826 = vmatpush1.msra.mxu0 0.0
        %2827 = vmatprep.subr.mxu0 0.0
        %2828 = vmatpush1.msra.mxu0 0.0
        %2829 = vmatprep.subr.mxu0 0.0
        %2830 = vmatpush1.msra.mxu0 0.0
        %2831 = vmatprep.subr.mxu0 0.0
        %2832 = vmatpush1.msra.mxu0 0.0
        %2833 = vmatprep.subr.mxu0 0.0
        %2834 = vmatpush1.msra.mxu0 0.0
        %2835 = vmatprep.subr.mxu0 0.0
        %2836 = vmatpush1.msra.mxu0 0.0
        %2837 = vmatprep.subr.mxu0 0.0
        %2838 = vmatpush1.msra.mxu0 0.0
        %2839 = vmatprep.subr.mxu0 0.0
        %2840 = vmatpush1.msra.mxu0 0.0
        %2841 = vmatprep.subr.mxu0 0.0
        %2842 = vmatpush1.msra.mxu0 0.0
        %2843 = vmatprep.subr.mxu0 0.0
        %2844 = vmatpush1.msra.mxu0 0.0
        %2845 = vmatprep.subr.mxu0 0.0
        %2846 = vmatpush1.msra.mxu0 0.0
        %2847 = vmatprep.subr.mxu0 0.0
        %2848 = vmatpush1.msra.mxu0 0.0
        %2849 = vmatprep.subr.mxu0 0.0
        %2850 = vmatpush1.msra.mxu0 0.0
        %2851 = vmatprep.subr.mxu0 0.0
        %2852 = vmatpush1.msra.mxu0 %v2382
        %2853 = vmatprep.subr.mxu0 0.0
        %2854 = vmatpush2.msra.mxu0 0.0
        %2855 = vmatprep.subr.mxu0 0.0
        %2856 = vmatpush2.msra.mxu0 0.0
        %2857 = vmatprep.subr.mxu0 0.0
        %2858 = vmatpush2.msra.mxu0 0.0
        %2859 = vmatprep.subr.mxu0 0.0
        %2860 = vmatpush2.msra.mxu0 0.0
        %2861 = vmatprep.subr.mxu0 0.0
        %2862 = vmatpush2.msra.mxu0 0.0
        %2863 = vmatprep.subr.mxu0 0.0
        %2864 = vmatpush2.msra.mxu0 0.0
        %2865 = vmatprep.subr.mxu0 0.0
        %2866 = vmatpush2.msra.mxu0 0.0
        %2867 = vmatprep.subr.mxu0 0.0
        %2868 = vmatpush2.msra.mxu0 0.0
        %2869 = vmatprep.subr.mxu0 0.0
        %2870 = vmatpush2.msra.mxu0 0.0
        %2871 = vmatprep.subr.mxu0 0.0
        %2872 = vmatpush2.msra.mxu0 0.0
        %2873 = vmatprep.subr.mxu0 0.0
        %2874 = vmatpush2.msra.mxu0 0.0
        %2875 = vmatprep.subr.mxu0 0.0
        %2876 = vmatpush2.msra.mxu0 0.0
        %2877 = vmatprep.subr.mxu0 0.0
        %2878 = vmatpush2.msra.mxu0 0.0
        %2879 = vmatprep.subr.mxu0 0.0
        %2880 = vmatpush2.msra.mxu0 0.0
        %2881 = vmatprep.subr.mxu0 0.0
        %2882 = vmatpush2.msra.mxu0 0.0
        %2883 = vmatprep.subr.mxu0 0.0
        %2884 = vmatpush2.msra.mxu0 0.0
        %2885 = vmatprep.mubr.f32.mxu0 0.0
        %2886 = vmatmul.mubr.f32.gmra.mxu0 %v2819
        %v2887 = vpop.f32.mrf.mxu0
        %v2888 = vadd.f32 0.0, %v2887
        %v2889 = vpop.f32.mrf.mxu0
        %2890 = vdwg.mxu0
        %v2892 = vsel %vm1036, %v2718, 0
        %2894 = vmatprep.subr.mxu0 0.0
        %2895 = vmatpush1.msra.mxu0 0.0
        %2896 = vmatprep.subr.mxu0 0.0
        %2897 = vmatpush1.msra.mxu0 0.0
        %2898 = vmatprep.subr.mxu0 0.0
        %2899 = vmatpush1.msra.mxu0 0.0
        %2900 = vmatprep.subr.mxu0 0.0
        %2901 = vmatpush1.msra.mxu0 0.0
        %2902 = vmatprep.subr.mxu0 0.0
        %2903 = vmatpush1.msra.mxu0 0.0
        %2904 = vmatprep.subr.mxu0 0.0
        %2905 = vmatpush1.msra.mxu0 0.0
        %2906 = vmatprep.subr.mxu0 0.0
        %2907 = vmatpush1.msra.mxu0 0.0
        %2908 = vmatprep.subr.mxu0 0.0
        %2909 = vmatpush1.msra.mxu0 0.0
        %2910 = vmatprep.subr.mxu0 0.0
        %2911 = vmatpush1.msra.mxu0 0.0
        %2912 = vmatprep.subr.mxu0 0.0
        %2913 = vmatpush1.msra.mxu0 0.0
        %2914 = vmatprep.subr.mxu0 0.0
        %2915 = vmatpush1.msra.mxu0 0.0
        %2916 = vmatprep.subr.mxu0 0.0
        %2917 = vmatpush1.msra.mxu0 0.0
        %2918 = vmatprep.subr.mxu0 0.0
        %2919 = vmatpush1.msra.mxu0 0.0
        %2920 = vmatprep.subr.mxu0 0.0
        %2921 = vmatpush1.msra.mxu0 0.0
        %2922 = vmatprep.subr.mxu0 0.0
        %2923 = vmatpush1.msra.mxu0 0.0
        %2924 = vmatprep.subr.mxu0 0.0
        %2925 = vmatpush1.msra.mxu0 %v2383
        %2926 = vmatprep.subr.mxu0 0.0
        %2927 = vmatpush2.msra.mxu0 0.0
        %2928 = vmatprep.subr.mxu0 0.0
        %2929 = vmatpush2.msra.mxu0 0.0
        %2930 = vmatprep.subr.mxu0 0.0
        %2931 = vmatpush2.msra.mxu0 0.0
        %2932 = vmatprep.subr.mxu0 0.0
        %2933 = vmatpush2.msra.mxu0 0.0
        %2934 = vmatprep.subr.mxu0 0.0
        %2935 = vmatpush2.msra.mxu0 0.0
        %2936 = vmatprep.subr.mxu0 0.0
        %2937 = vmatpush2.msra.mxu0 0.0
        %2938 = vmatprep.subr.mxu0 0.0
        %2939 = vmatpush2.msra.mxu0 0.0
        %2940 = vmatprep.subr.mxu0 0.0
        %2941 = vmatpush2.msra.mxu0 0.0
        %2942 = vmatprep.subr.mxu0 0.0
        %2943 = vmatpush2.msra.mxu0 0.0
        %2944 = vmatprep.subr.mxu0 0.0
        %2945 = vmatpush2.msra.mxu0 0.0
        %2946 = vmatprep.subr.mxu0 0.0
        %2947 = vmatpush2.msra.mxu0 0.0
        %2948 = vmatprep.subr.mxu0 0.0
        %2949 = vmatpush2.msra.mxu0 0.0
        %2950 = vmatprep.subr.mxu0 0.0
        %2951 = vmatpush2.msra.mxu0 0.0
        %2952 = vmatprep.subr.mxu0 0.0
        %2953 = vmatpush2.msra.mxu0 0.0
        %2954 = vmatprep.subr.mxu0 0.0
        %2955 = vmatpush2.msra.mxu0 0.0
        %2956 = vmatprep.subr.mxu0 0.0
        %2957 = vmatpush2.msra.mxu0 0.0
        %2958 = vmatprep.mubr.f32.mxu0 0.0
        %2959 = vmatmul.mubr.f32.gmra.mxu0 %v2892
        %v2960 = vpop.f32.mrf.mxu0
        %v2961 = vadd.f32 0.0, %v2960
        %v2962 = vpop.f32.mrf.mxu0
        %2963 = vdwg.mxu0
        %v2965 = vsel %vm1036, %v2720, 0
        %2967 = vmatprep.subr.mxu0 0.0
        %2968 = vmatpush1.msra.mxu0 0.0
        %2969 = vmatprep.subr.mxu0 0.0
        %2970 = vmatpush1.msra.mxu0 0.0
        %2971 = vmatprep.subr.mxu0 0.0
        %2972 = vmatpush1.msra.mxu0 0.0
        %2973 = vmatprep.subr.mxu0 0.0
        %2974 = vmatpush1.msra.mxu0 0.0
        %2975 = vmatprep.subr.mxu0 0.0
        %2976 = vmatpush1.msra.mxu0 0.0
        %2977 = vmatprep.subr.mxu0 0.0
        %2978 = vmatpush1.msra.mxu0 0.0
        %2979 = vmatprep.subr.mxu0 0.0
        %2980 = vmatpush1.msra.mxu0 0.0
        %2981 = vmatprep.subr.mxu0 0.0
        %2982 = vmatpush1.msra.mxu0 0.0
        %2983 = vmatprep.subr.mxu0 0.0
        %2984 = vmatpush1.msra.mxu0 0.0
        %2985 = vmatprep.subr.mxu0 0.0
        %2986 = vmatpush1.msra.mxu0 0.0
        %2987 = vmatprep.subr.mxu0 0.0
        %2988 = vmatpush1.msra.mxu0 0.0
        %2989 = vmatprep.subr.mxu0 0.0
        %2990 = vmatpush1.msra.mxu0 0.0
        %2991 = vmatprep.subr.mxu0 0.0
        %2992 = vmatpush1.msra.mxu0 0.0
        %2993 = vmatprep.subr.mxu0 0.0
        %2994 = vmatpush1.msra.mxu0 0.0
        %2995 = vmatprep.subr.mxu0 0.0
        %2996 = vmatpush1.msra.mxu0 0.0
        %2997 = vmatprep.subr.mxu0 0.0
        %2998 = vmatpush1.msra.mxu0 %v2384
        %2999 = vmatprep.subr.mxu0 0.0
        %3000 = vmatpush2.msra.mxu0 0.0
        %3001 = vmatprep.subr.mxu0 0.0
        %3002 = vmatpush2.msra.mxu0 0.0
        %3003 = vmatprep.subr.mxu0 0.0
        %3004 = vmatpush2.msra.mxu0 0.0
        %3005 = vmatprep.subr.mxu0 0.0
        %3006 = vmatpush2.msra.mxu0 0.0
        %3007 = vmatprep.subr.mxu0 0.0
        %3008 = vmatpush2.msra.mxu0 0.0
        %3009 = vmatprep.subr.mxu0 0.0
        %3010 = vmatpush2.msra.mxu0 0.0
        %3011 = vmatprep.subr.mxu0 0.0
        %3012 = vmatpush2.msra.mxu0 0.0
        %3013 = vmatprep.subr.mxu0 0.0
        %3014 = vmatpush2.msra.mxu0 0.0
        %3015 = vmatprep.subr.mxu0 0.0
        %3016 = vmatpush2.msra.mxu0 0.0
        %3017 = vmatprep.subr.mxu0 0.0
        %3018 = vmatpush2.msra.mxu0 0.0
        %3019 = vmatprep.subr.mxu0 0.0
        %3020 = vmatpush2.msra.mxu0 0.0
        %3021 = vmatprep.subr.mxu0 0.0
        %3022 = vmatpush2.msra.mxu0 0.0
        %3023 = vmatprep.subr.mxu0 0.0
        %3024 = vmatpush2.msra.mxu0 0.0
        %3025 = vmatprep.subr.mxu0 0.0
        %3026 = vmatpush2.msra.mxu0 0.0
        %3027 = vmatprep.subr.mxu0 0.0
        %3028 = vmatpush2.msra.mxu0 0.0
        %3029 = vmatprep.subr.mxu0 0.0
        %3030 = vmatpush2.msra.mxu0 0.0
        %3031 = vmatprep.mubr.f32.mxu0 0.0
        %3032 = vmatmul.mubr.f32.gmra.mxu0 %v2965
        %v3033 = vpop.f32.mrf.mxu0
        %v3034 = vadd.f32 0.0, %v3033
        %v3035 = vpop.f32.mrf.mxu0
        %3036 = vdwg.mxu0
        %v3037 = vadd.f32 %v2741, %v2815
        %v3038 = vadd.f32 %v2742, %v2888
        %v3039 = vadd.f32 %v2743, %v2961
        %v3040 = vadd.f32 %v2744, %v3034
        %v3041 = vrcp.pop %v2737
        %v3042 = vrcp.pop %v2738
        %v3043 = vrcp.pop %v2739
        %v3044 = vrcp.pop %v2740
        %v3045 = vmul.f32 %v3037, %v3041
        %v3046 = vmul.f32 %v3038, %v3042
        %v3047 = vmul.f32 %v3039, %v3043
        %v3048 = vmul.f32 %v3040, %v3044
        %v3050 = vsel %vm600, %v3045, 0
        %3052 = vmatprep.subr.mxu0 0.0
        %3053 = vmatpush1.msra.mxu0 0.0
        %3054 = vmatprep.subr.mxu0 0.0
        %3055 = vmatpush1.msra.mxu0 0.0
        %3056 = vmatprep.subr.mxu0 0.0
        %3057 = vmatpush1.msra.mxu0 0.0
        %3058 = vmatprep.subr.mxu0 0.0
        %3059 = vmatpush1.msra.mxu0 0.0
        %3060 = vmatprep.subr.mxu0 0.0
        %3061 = vmatpush1.msra.mxu0 0.0
        %3062 = vmatprep.subr.mxu0 0.0
        %3063 = vmatpush1.msra.mxu0 0.0
        %3064 = vmatprep.subr.mxu0 0.0
        %3065 = vmatpush1.msra.mxu0 0.0
        %3066 = vmatprep.subr.mxu0 0.0
        %3067 = vmatpush1.msra.mxu0 0.0
        %3068 = vmatprep.subr.mxu0 0.0
        %3069 = vmatpush1.msra.mxu0 0.0
        %3070 = vmatprep.subr.mxu0 0.0
        %3071 = vmatpush1.msra.mxu0 0.0
        %3072 = vmatprep.subr.mxu0 0.0
        %3073 = vmatpush1.msra.mxu0 0.0
        %3074 = vmatprep.subr.mxu0 0.0
        %3075 = vmatpush1.msra.mxu0 0.0
        %3076 = vmatprep.subr.mxu0 0.0
        %3077 = vmatpush1.msra.mxu0 0.0
        %3078 = vmatprep.subr.mxu0 0.0
        %3079 = vmatpush1.msra.mxu0 0.0
        %3080 = vmatprep.subr.mxu0 0.0
        %3081 = vmatpush1.msra.mxu0 %v706
        %3082 = vmatprep.subr.mxu0 0.0
        %3083 = vmatpush1.msra.mxu0 %v705
        %3084 = vmatprep.subr.mxu0 0.0
        %3085 = vmatpush2.msra.mxu0 0.0
        %3086 = vmatprep.subr.mxu0 0.0
        %3087 = vmatpush2.msra.mxu0 0.0
        %3088 = vmatprep.subr.mxu0 0.0
        %3089 = vmatpush2.msra.mxu0 0.0
        %3090 = vmatprep.subr.mxu0 0.0
        %3091 = vmatpush2.msra.mxu0 0.0
        %3092 = vmatprep.subr.mxu0 0.0
        %3093 = vmatpush2.msra.mxu0 0.0
        %3094 = vmatprep.subr.mxu0 0.0
        %3095 = vmatpush2.msra.mxu0 0.0
        %3096 = vmatprep.subr.mxu0 0.0
        %3097 = vmatpush2.msra.mxu0 0.0
        %3098 = vmatprep.subr.mxu0 0.0
        %3099 = vmatpush2.msra.mxu0 0.0
        %3100 = vmatprep.subr.mxu0 0.0
        %3101 = vmatpush2.msra.mxu0 0.0
        %3102 = vmatprep.subr.mxu0 0.0
        %3103 = vmatpush2.msra.mxu0 0.0
        %3104 = vmatprep.subr.mxu0 0.0
        %3105 = vmatpush2.msra.mxu0 0.0
        %3106 = vmatprep.subr.mxu0 0.0
        %3107 = vmatpush2.msra.mxu0 0.0
        %3108 = vmatprep.subr.mxu0 0.0
        %3109 = vmatpush2.msra.mxu0 0.0
        %3110 = vmatprep.subr.mxu0 0.0
        %3111 = vmatpush2.msra.mxu0 0.0
        %3112 = vmatprep.subr.mxu0 0.0
        %3113 = vmatpush2.msra.mxu0 0.0
        %3114 = vmatprep.subr.mxu0 0.0
        %3115 = vmatpush2.msra.mxu0 0.0
        %3116 = vmatprep.mubr.f32.mxu0 0.0
        %3117 = vmatmul.mubr.f32.gmra.mxu0 %v3050
        %v3118 = vpop.f32.mrf.mxu0
        %v3119 = vadd.f32 0.0, %v3118
        %v3120 = vpop.f32.mrf.mxu0
        %3121 = vdwg.mxu0
        %v3123 = vsel %vm600, %v3046, 0
        %3125 = vmatprep.subr.mxu0 0.0
        %3126 = vmatpush1.msra.mxu0 0.0
        %3127 = vmatprep.subr.mxu0 0.0
        %3128 = vmatpush1.msra.mxu0 0.0
        %3129 = vmatprep.subr.mxu0 0.0
        %3130 = vmatpush1.msra.mxu0 0.0
        %3131 = vmatprep.subr.mxu0 0.0
        %3132 = vmatpush1.msra.mxu0 0.0
        %3133 = vmatprep.subr.mxu0 0.0
        %3134 = vmatpush1.msra.mxu0 0.0
        %3135 = vmatprep.subr.mxu0 0.0
        %3136 = vmatpush1.msra.mxu0 0.0
        %3137 = vmatprep.subr.mxu0 0.0
        %3138 = vmatpush1.msra.mxu0 0.0
        %3139 = vmatprep.subr.mxu0 0.0
        %3140 = vmatpush1.msra.mxu0 0.0
        %3141 = vmatprep.subr.mxu0 0.0
        %3142 = vmatpush1.msra.mxu0 0.0
        %3143 = vmatprep.subr.mxu0 0.0
        %3144 = vmatpush1.msra.mxu0 0.0
        %3145 = vmatprep.subr.mxu0 0.0
        %3146 = vmatpush1.msra.mxu0 0.0
        %3147 = vmatprep.subr.mxu0 0.0
        %3148 = vmatpush1.msra.mxu0 0.0
        %3149 = vmatprep.subr.mxu0 0.0
        %3150 = vmatpush1.msra.mxu0 0.0
        %3151 = vmatprep.subr.mxu0 0.0
        %3152 = vmatpush1.msra.mxu0 0.0
        %3153 = vmatprep.subr.mxu0 0.0
        %3154 = vmatpush1.msra.mxu0 %v708
        %3155 = vmatprep.subr.mxu0 0.0
        %3156 = vmatpush1.msra.mxu0 %v707
        %3157 = vmatprep.subr.mxu0 0.0
        %3158 = vmatpush2.msra.mxu0 0.0
        %3159 = vmatprep.subr.mxu0 0.0
        %3160 = vmatpush2.msra.mxu0 0.0
        %3161 = vmatprep.subr.mxu0 0.0
        %3162 = vmatpush2.msra.mxu0 0.0
        %3163 = vmatprep.subr.mxu0 0.0
        %3164 = vmatpush2.msra.mxu0 0.0
        %3165 = vmatprep.subr.mxu0 0.0
        %3166 = vmatpush2.msra.mxu0 0.0
        %3167 = vmatprep.subr.mxu0 0.0
        %3168 = vmatpush2.msra.mxu0 0.0
        %3169 = vmatprep.subr.mxu0 0.0
        %3170 = vmatpush2.msra.mxu0 0.0
        %3171 = vmatprep.subr.mxu0 0.0
        %3172 = vmatpush2.msra.mxu0 0.0
        %3173 = vmatprep.subr.mxu0 0.0
        %3174 = vmatpush2.msra.mxu0 0.0
        %3175 = vmatprep.subr.mxu0 0.0
        %3176 = vmatpush2.msra.mxu0 0.0
        %3177 = vmatprep.subr.mxu0 0.0
        %3178 = vmatpush2.msra.mxu0 0.0
        %3179 = vmatprep.subr.mxu0 0.0
        %3180 = vmatpush2.msra.mxu0 0.0
        %3181 = vmatprep.subr.mxu0 0.0
        %3182 = vmatpush2.msra.mxu0 0.0
        %3183 = vmatprep.subr.mxu0 0.0
        %3184 = vmatpush2.msra.mxu0 0.0
        %3185 = vmatprep.subr.mxu0 0.0
        %3186 = vmatpush2.msra.mxu0 0.0
        %3187 = vmatprep.subr.mxu0 0.0
        %3188 = vmatpush2.msra.mxu0 0.0
        %3189 = vmatprep.mubr.f32.mxu0 0.0
        %3190 = vmatmul.mubr.f32.gmra.mxu0 %v3123
        %v3191 = vpop.f32.mrf.mxu0
        %v3192 = vadd.f32 0.0, %v3191
        %v3193 = vpop.f32.mrf.mxu0
        %3194 = vdwg.mxu0
        %v3196 = vsel %vm600, %v3047, 0
        %3198 = vmatprep.subr.mxu0 0.0
        %3199 = vmatpush1.msra.mxu0 0.0
        %3200 = vmatprep.subr.mxu0 0.0
        %3201 = vmatpush1.msra.mxu0 0.0
        %3202 = vmatprep.subr.mxu0 0.0
        %3203 = vmatpush1.msra.mxu0 0.0
        %3204 = vmatprep.subr.mxu0 0.0
        %3205 = vmatpush1.msra.mxu0 0.0
        %3206 = vmatprep.subr.mxu0 0.0
        %3207 = vmatpush1.msra.mxu0 0.0
        %3208 = vmatprep.subr.mxu0 0.0
        %3209 = vmatpush1.msra.mxu0 0.0
        %3210 = vmatprep.subr.mxu0 0.0
        %3211 = vmatpush1.msra.mxu0 0.0
        %3212 = vmatprep.subr.mxu0 0.0
        %3213 = vmatpush1.msra.mxu0 0.0
        %3214 = vmatprep.subr.mxu0 0.0
        %3215 = vmatpush1.msra.mxu0 0.0
        %3216 = vmatprep.subr.mxu0 0.0
        %3217 = vmatpush1.msra.mxu0 0.0
        %3218 = vmatprep.subr.mxu0 0.0
        %3219 = vmatpush1.msra.mxu0 0.0
        %3220 = vmatprep.subr.mxu0 0.0
        %3221 = vmatpush1.msra.mxu0 0.0
        %3222 = vmatprep.subr.mxu0 0.0
        %3223 = vmatpush1.msra.mxu0 0.0
        %3224 = vmatprep.subr.mxu0 0.0
        %3225 = vmatpush1.msra.mxu0 0.0
        %3226 = vmatprep.subr.mxu0 0.0
        %3227 = vmatpush1.msra.mxu0 %v710
        %3228 = vmatprep.subr.mxu0 0.0
        %3229 = vmatpush1.msra.mxu0 %v709
        %3230 = vmatprep.subr.mxu0 0.0
        %3231 = vmatpush2.msra.mxu0 0.0
        %3232 = vmatprep.subr.mxu0 0.0
        %3233 = vmatpush2.msra.mxu0 0.0
        %3234 = vmatprep.subr.mxu0 0.0
        %3235 = vmatpush2.msra.mxu0 0.0
        %3236 = vmatprep.subr.mxu0 0.0
        %3237 = vmatpush2.msra.mxu0 0.0
        %3238 = vmatprep.subr.mxu0 0.0
        %3239 = vmatpush2.msra.mxu0 0.0
        %3240 = vmatprep.subr.mxu0 0.0
        %3241 = vmatpush2.msra.mxu0 0.0
        %3242 = vmatprep.subr.mxu0 0.0
        %3243 = vmatpush2.msra.mxu0 0.0
        %3244 = vmatprep.subr.mxu0 0.0
        %3245 = vmatpush2.msra.mxu0 0.0
        %3246 = vmatprep.subr.mxu0 0.0
        %3247 = vmatpush2.msra.mxu0 0.0
        %3248 = vmatprep.subr.mxu0 0.0
        %3249 = vmatpush2.msra.mxu0 0.0
        %3250 = vmatprep.subr.mxu0 0.0
        %3251 = vmatpush2.msra.mxu0 0.0
        %3252 = vmatprep.subr.mxu0 0.0
        %3253 = vmatpush2.msra.mxu0 0.0
        %3254 = vmatprep.subr.mxu0 0.0
        %3255 = vmatpush2.msra.mxu0 0.0
        %3256 = vmatprep.subr.mxu0 0.0
        %3257 = vmatpush2.msra.mxu0 0.0
        %3258 = vmatprep.subr.mxu0 0.0
        %3259 = vmatpush2.msra.mxu0 0.0
        %3260 = vmatprep.subr.mxu0 0.0
        %3261 = vmatpush2.msra.mxu0 0.0
        %3262 = vmatprep.mubr.f32.mxu0 0.0
        %3263 = vmatmul.mubr.f32.gmra.mxu0 %v3196
        %v3264 = vpop.f32.mrf.mxu0
        %v3265 = vadd.f32 0.0, %v3264
        %v3266 = vpop.f32.mrf.mxu0
        %3267 = vdwg.mxu0
        %v3269 = vsel %vm600, %v3048, 0
        %3271 = vmatprep.subr.mxu0 0.0
        %3272 = vmatpush1.msra.mxu0 0.0
        %3273 = vmatprep.subr.mxu0 0.0
        %3274 = vmatpush1.msra.mxu0 0.0
        %3275 = vmatprep.subr.mxu0 0.0
        %3276 = vmatpush1.msra.mxu0 0.0
        %3277 = vmatprep.subr.mxu0 0.0
        %3278 = vmatpush1.msra.mxu0 0.0
        %3279 = vmatprep.subr.mxu0 0.0
        %3280 = vmatpush1.msra.mxu0 0.0
        %3281 = vmatprep.subr.mxu0 0.0
        %3282 = vmatpush1.msra.mxu0 0.0
        %3283 = vmatprep.subr.mxu0 0.0
        %3284 = vmatpush1.msra.mxu0 0.0
        %3285 = vmatprep.subr.mxu0 0.0
        %3286 = vmatpush1.msra.mxu0 0.0
        %3287 = vmatprep.subr.mxu0 0.0
        %3288 = vmatpush1.msra.mxu0 0.0
        %3289 = vmatprep.subr.mxu0 0.0
        %3290 = vmatpush1.msra.mxu0 0.0
        %3291 = vmatprep.subr.mxu0 0.0
        %3292 = vmatpush1.msra.mxu0 0.0
        %3293 = vmatprep.subr.mxu0 0.0
        %3294 = vmatpush1.msra.mxu0 0.0
        %3295 = vmatprep.subr.mxu0 0.0
        %3296 = vmatpush1.msra.mxu0 0.0
        %3297 = vmatprep.subr.mxu0 0.0
        %3298 = vmatpush1.msra.mxu0 0.0
        %3299 = vmatprep.subr.mxu0 0.0
        %3300 = vmatpush1.msra.mxu0 %v712
        %3301 = vmatprep.subr.mxu0 0.0
        %3302 = vmatpush1.msra.mxu0 %v711
        %3303 = vmatprep.subr.mxu0 0.0
        %3304 = vmatpush2.msra.mxu0 0.0
        %3305 = vmatprep.subr.mxu0 0.0
        %3306 = vmatpush2.msra.mxu0 0.0
        %3307 = vmatprep.subr.mxu0 0.0
        %3308 = vmatpush2.msra.mxu0 0.0
        %3309 = vmatprep.subr.mxu0 0.0
        %3310 = vmatpush2.msra.mxu0 0.0
        %3311 = vmatprep.subr.mxu0 0.0
        %3312 = vmatpush2.msra.mxu0 0.0
        %3313 = vmatprep.subr.mxu0 0.0
        %3314 = vmatpush2.msra.mxu0 0.0
        %3315 = vmatprep.subr.mxu0 0.0
        %3316 = vmatpush2.msra.mxu0 0.0
        %3317 = vmatprep.subr.mxu0 0.0
        %3318 = vmatpush2.msra.mxu0 0.0
        %3319 = vmatprep.subr.mxu0 0.0
        %3320 = vmatpush2.msra.mxu0 0.0
        %3321 = vmatprep.subr.mxu0 0.0
        %3322 = vmatpush2.msra.mxu0 0.0
        %3323 = vmatprep.subr.mxu0 0.0
        %3324 = vmatpush2.msra.mxu0 0.0
        %3325 = vmatprep.subr.mxu0 0.0
        %3326 = vmatpush2.msra.mxu0 0.0
        %3327 = vmatprep.subr.mxu0 0.0
        %3328 = vmatpush2.msra.mxu0 0.0
        %3329 = vmatprep.subr.mxu0 0.0
        %3330 = vmatpush2.msra.mxu0 0.0
        %3331 = vmatprep.subr.mxu0 0.0
        %3332 = vmatpush2.msra.mxu0 0.0
        %3333 = vmatprep.subr.mxu0 0.0
        %3334 = vmatpush2.msra.mxu0 0.0
        %3335 = vmatprep.mubr.f32.mxu0 0.0
        %3336 = vmatmul.mubr.f32.gmra.mxu0 %v3269
        %v3337 = vpop.f32.mrf.mxu0
        %v3338 = vadd.f32 0.0, %v3337
        %v3339 = vpop.f32.mrf.mxu0
        %3340 = vdwg.mxu0
        %v3341 = vadd.f32 %v1697, %v3119
        %v3342 = vadd.f32 %v3341, %v3192
        %v3343 = vadd.f32 %v3342, %v3265
        %v3344 = vadd.f32 %v3343, %v3338
        %v3345 = vadd.f32 %v440, %v3344
        %3346 = vst.msk [vmem:[#allocation5 + $0x8] sm:$0xff] %vm443, %v3345
        %v3347 = vld [vmem:[#allocation5] sm:$0xff]
        %v3348 = vld [vmem:[#allocation5 + $0x8] sm:$0xff]
        %v3349 = vld [vmem:[%s7] sm:$0x1]
        %v3350 = vld [vmem:[%s8] sm:$0x1]
        %v3351 = vsel %vm443, %v3347, 0.0
        %3352 = vadd.xlane.f32.xlu0 %v3351
        %v3353 = vpop.xlane.xlu0 %3352
        %v3354 = vsel %vm443, %v3348, 0.0
        %3355 = vadd.xlane.f32.xlu0 %v3354
        %v3356 = vpop.xlane.xlu0 %3355
        %v3357 = vmul.f32 %v3353, %v450
        %v3358 = vmul.f32 %v3356, %v450
        %v3359 = vsub.f32 %v3347, %v3357
        %v3360 = vsub.f32 %v3348, %v3358
        %v3361 = vmul.f32 %v3359, %v3359
        %v3362 = vmul.f32 %v3360, %v3360
        %v3363 = vsel %vm443, %v3361, 0.0
        %3364 = vadd.xlane.f32.xlu0 %v3363
        %v3365 = vpop.xlane.xlu0 %3364
        %v3366 = vsel %vm443, %v3362, 0.0
        %3367 = vadd.xlane.f32.xlu0 %v3366
        %v3368 = vpop.xlane.xlu0 %3367
        %v3369 = vmul.f32 %v3365, %v450
        %v3370 = vmul.f32 %v3368, %v450
        %v3371 = vadd.f32 %v3369, 1e-05
        %v3372 = vadd.f32 %v3370, 1e-05
        %v3373 = vrsqrt.pop %v3371
        %v3374 = vrsqrt.pop %v3372
        %v3375 = vmul.f32 %v3359, %v3373
        %v3376 = vmul.f32 %v3360, %v3374
        %v3378 = vlaneseq
        %v3379 = vshrl.u32 %v3378, 7
        %v3380 = vsub.s32 0, %v3379
        %v3381 = vrot.slane %v3349, %v3380
        %v3383 = vmul.f32 %v3375, %v3381
        %v3384 = vmul.f32 %v3376, %v3381
        %v3386 = vlaneseq
        %v3387 = vshrl.u32 %v3386, 7
        %v3388 = vsub.s32 0, %v3387
        %v3389 = vrot.slane %v3350, %v3388
        %v3391 = vadd.f32 %v3383, %v3389
        %v3392 = vadd.f32 %v3384, %v3389
        %v3393 = vld [vmem:[%s9] sm:$0xff]
        %v3394 = vld [vmem:[%s9 + $0x10] sm:$0xff]
        %v3395 = vld [vmem:[%s9 + $0x20] sm:$0xff]
        %v3396 = vld [vmem:[%s9 + $0x30] sm:$0xff]
        %v3397 = vld [vmem:[%s9 + $0x40] sm:$0xff]
        %v3398 = vld [vmem:[%s9 + $0x50] sm:$0xff]
        %v3399 = vld [vmem:[%s9 + $0x60] sm:$0xff]
        %v3400 = vld [vmem:[%s9 + $0x70] sm:$0xff]
        %v3401 = vld [vmem:[%s10] sm:$0x1]
        %v3403 = vlaneseq
        %v3404 = vshrl.u32 %v3403, 7
        %v3405 = vsub.s32 0, %v3404
        %v3406 = vrot.slane %v3401, %v3405
        %v3409 = vsel %vm443, %v3391, 0
        %v3412 = vsel %vm443, %v3392, 0
        %3414 = vmatprep.subr.mxu0 0.0
        %3415 = vmatpush1.msra.mxu0 0.0
        %3416 = vmatprep.subr.mxu0 0.0
        %3417 = vmatpush1.msra.mxu0 0.0
        %3418 = vmatprep.subr.mxu0 0.0
        %3419 = vmatpush1.msra.mxu0 0.0
        %3420 = vmatprep.subr.mxu0 0.0
        %3421 = vmatpush1.msra.mxu0 0.0
        %3422 = vmatprep.subr.mxu0 0.0
        %3423 = vmatpush1.msra.mxu0 0.0
        %3424 = vmatprep.subr.mxu0 0.0
        %3425 = vmatpush1.msra.mxu0 0.0
        %3426 = vmatprep.subr.mxu0 0.0
        %3427 = vmatpush1.msra.mxu0 0.0
        %3428 = vmatprep.subr.mxu0 0.0
        %3429 = vmatpush1.msra.mxu0 0.0
        %3430 = vmatprep.subr.mxu0 0.0
        %3431 = vmatpush1.msra.mxu0 %v3400
        %3432 = vmatprep.subr.mxu0 0.0
        %3433 = vmatpush1.msra.mxu0 %v3399
        %3434 = vmatprep.subr.mxu0 0.0
        %3435 = vmatpush1.msra.mxu0 %v3398
        %3436 = vmatprep.subr.mxu0 0.0
        %3437 = vmatpush1.msra.mxu0 %v3397
        %3438 = vmatprep.subr.mxu0 0.0
        %3439 = vmatpush1.msra.mxu0 %v3396
        %3440 = vmatprep.subr.mxu0 0.0
        %3441 = vmatpush1.msra.mxu0 %v3395
        %3442 = vmatprep.subr.mxu0 0.0
        %3443 = vmatpush1.msra.mxu0 %v3394
        %3444 = vmatprep.subr.mxu0 0.0
        %3445 = vmatpush1.msra.mxu0 %v3393
        %3446 = vmatprep.subr.mxu0 0.0
        %3447 = vmatpush2.msra.mxu0 0.0
        %3448 = vmatprep.subr.mxu0 0.0
        %3449 = vmatpush2.msra.mxu0 0.0
        %3450 = vmatprep.subr.mxu0 0.0
        %3451 = vmatpush2.msra.mxu0 0.0
        %3452 = vmatprep.subr.mxu0 0.0
        %3453 = vmatpush2.msra.mxu0 0.0
        %3454 = vmatprep.subr.mxu0 0.0
        %3455 = vmatpush2.msra.mxu0 0.0
        %3456 = vmatprep.subr.mxu0 0.0
        %3457 = vmatpush2.msra.mxu0 0.0
        %3458 = vmatprep.subr.mxu0 0.0
        %3459 = vmatpush2.msra.mxu0 0.0
        %3460 = vmatprep.subr.mxu0 0.0
        %3461 = vmatpush2.msra.mxu0 0.0
        %3462 = vmatprep.subr.mxu0 0.0
        %3463 = vmatpush2.msra.mxu0 0.0
        %3464 = vmatprep.subr.mxu0 0.0
        %3465 = vmatpush2.msra.mxu0 0.0
        %3466 = vmatprep.subr.mxu0 0.0
        %3467 = vmatpush2.msra.mxu0 0.0
        %3468 = vmatprep.subr.mxu0 0.0
        %3469 = vmatpush2.msra.mxu0 0.0
        %3470 = vmatprep.subr.mxu0 0.0
        %3471 = vmatpush2.msra.mxu0 0.0
        %3472 = vmatprep.subr.mxu0 0.0
        %3473 = vmatpush2.msra.mxu0 0.0
        %3474 = vmatprep.subr.mxu0 0.0
        %3475 = vmatpush2.msra.mxu0 0.0
        %3476 = vmatprep.subr.mxu0 0.0
        %3477 = vmatpush2.msra.mxu0 0.0
        %3478 = vmatprep.mubr.f32.mxu0 0.0
        %3479 = vmatmul.mubr.f32.gmra.mxu0 %v3409
        %v3480 = vpop.f32.mrf.mxu0
        %v3481 = vadd.f32 %v3406, %v3480
        %v3482 = vpop.f32.mrf.mxu0
        %3483 = vmatprep.mubr.f32.mxu0 0.0
        %3484 = vmatmul.mubr.f32.gmra.mxu0 %v3412
        %v3485 = vpop.f32.mrf.mxu0
        %v3486 = vadd.f32 %v3406, %v3485
        %v3487 = vpop.f32.mrf.mxu0
        %3488 = vdwg.mxu0
        %v3489 = vmul.f32 %v3481, 0.5
        %v3490 = vmul.f32 %v3486, 0.5
        %v3491 = vmul.f32 %v3481, 0.70710677
        %v3492 = vmul.f32 %v3486, 0.70710677
        %v3493 = verf.f32.pop %v3491
        %v3494 = verf.f32.pop %v3492
        %v3495 = vadd.f32 %v3493, 1.0
        %v3496 = vadd.f32 %v3494, 1.0
        %v3497 = vmul.f32 %v3489, %v3495
        %v3498 = vmul.f32 %v3490, %v3496
        %v3499 = vld [vmem:[%s11] sm:$0xff]
        %v3500 = vld [vmem:[%s11 + $0x8] sm:$0xff]
        %v3501 = vld [vmem:[%s11 + $0x10] sm:$0xff]
        %v3502 = vld [vmem:[%s11 + $0x18] sm:$0xff]
        %v3503 = vld [vmem:[%s11 + $0x20] sm:$0xff]
        %v3504 = vld [vmem:[%s11 + $0x28] sm:$0xff]
        %v3505 = vld [vmem:[%s11 + $0x30] sm:$0xff]
        %v3506 = vld [vmem:[%s11 + $0x38] sm:$0xff]
        %v3507 = vld [vmem:[%s11 + $0x40] sm:$0xff]
        %v3508 = vld [vmem:[%s11 + $0x48] sm:$0xff]
        %v3509 = vld [vmem:[%s11 + $0x50] sm:$0xff]
        %v3510 = vld [vmem:[%s11 + $0x58] sm:$0xff]
        %v3511 = vld [vmem:[%s11 + $0x60] sm:$0xff]
        %v3512 = vld [vmem:[%s11 + $0x68] sm:$0xff]
        %v3513 = vld [vmem:[%s11 + $0x70] sm:$0xff]
        %v3514 = vld [vmem:[%s11 + $0x78] sm:$0xff]
        %v3515 = vld [vmem:[%s9 + $0x8] sm:$0xff]
        %v3516 = vld [vmem:[%s9 + $0x18] sm:$0xff]
        %v3517 = vld [vmem:[%s9 + $0x28] sm:$0xff]
        %v3518 = vld [vmem:[%s9 + $0x38] sm:$0xff]
        %v3519 = vld [vmem:[%s9 + $0x48] sm:$0xff]
        %v3520 = vld [vmem:[%s9 + $0x58] sm:$0xff]
        %v3521 = vld [vmem:[%s9 + $0x68] sm:$0xff]
        %v3522 = vld [vmem:[%s9 + $0x78] sm:$0xff]
        %v3523 = vld [vmem:[%s10 + $0x1] sm:$0x1]
        %v3525 = vlaneseq
        %v3526 = vshrl.u32 %v3525, 7
        %v3527 = vsub.s32 0, %v3526
        %v3528 = vrot.slane %v3523, %v3527
        %3530 = vmatprep.subr.mxu0 0.0
        %3531 = vmatpush1.msra.mxu0 0.0
        %3532 = vmatprep.subr.mxu0 0.0
        %3533 = vmatpush1.msra.mxu0 0.0
        %3534 = vmatprep.subr.mxu0 0.0
        %3535 = vmatpush1.msra.mxu0 0.0
        %3536 = vmatprep.subr.mxu0 0.0
        %3537 = vmatpush1.msra.mxu0 0.0
        %3538 = vmatprep.subr.mxu0 0.0
        %3539 = vmatpush1.msra.mxu0 0.0
        %3540 = vmatprep.subr.mxu0 0.0
        %3541 = vmatpush1.msra.mxu0 0.0
        %3542 = vmatprep.subr.mxu0 0.0
        %3543 = vmatpush1.msra.mxu0 0.0
        %3544 = vmatprep.subr.mxu0 0.0
        %3545 = vmatpush1.msra.mxu0 0.0
        %3546 = vmatprep.subr.mxu0 0.0
        %3547 = vmatpush1.msra.mxu0 %v3522
        %3548 = vmatprep.subr.mxu0 0.0
        %3549 = vmatpush1.msra.mxu0 %v3521
        %3550 = vmatprep.subr.mxu0 0.0
        %3551 = vmatpush1.msra.mxu0 %v3520
        %3552 = vmatprep.subr.mxu0 0.0
        %3553 = vmatpush1.msra.mxu0 %v3519
        %3554 = vmatprep.subr.mxu0 0.0
        %3555 = vmatpush1.msra.mxu0 %v3518
        %3556 = vmatprep.subr.mxu0 0.0
        %3557 = vmatpush1.msra.mxu0 %v3517
        %3558 = vmatprep.subr.mxu0 0.0
        %3559 = vmatpush1.msra.mxu0 %v3516
        %3560 = vmatprep.subr.mxu0 0.0
        %3561 = vmatpush1.msra.mxu0 %v3515
        %3562 = vmatprep.subr.mxu0 0.0
        %3563 = vmatpush2.msra.mxu0 0.0
        %3564 = vmatprep.subr.mxu0 0.0
        %3565 = vmatpush2.msra.mxu0 0.0
        %3566 = vmatprep.subr.mxu0 0.0
        %3567 = vmatpush2.msra.mxu0 0.0
        %3568 = vmatprep.subr.mxu0 0.0
        %3569 = vmatpush2.msra.mxu0 0.0
        %3570 = vmatprep.subr.mxu0 0.0
        %3571 = vmatpush2.msra.mxu0 0.0
        %3572 = vmatprep.subr.mxu0 0.0
        %3573 = vmatpush2.msra.mxu0 0.0
        %3574 = vmatprep.subr.mxu0 0.0
        %3575 = vmatpush2.msra.mxu0 0.0
        %3576 = vmatprep.subr.mxu0 0.0
        %3577 = vmatpush2.msra.mxu0 0.0
        %3578 = vmatprep.subr.mxu0 0.0
        %3579 = vmatpush2.msra.mxu0 0.0
        %3580 = vmatprep.subr.mxu0 0.0
        %3581 = vmatpush2.msra.mxu0 0.0
        %3582 = vmatprep.subr.mxu0 0.0
        %3583 = vmatpush2.msra.mxu0 0.0
        %3584 = vmatprep.subr.mxu0 0.0
        %3585 = vmatpush2.msra.mxu0 0.0
        %3586 = vmatprep.subr.mxu0 0.0
        %3587 = vmatpush2.msra.mxu0 0.0
        %3588 = vmatprep.subr.mxu0 0.0
        %3589 = vmatpush2.msra.mxu0 0.0
        %3590 = vmatprep.subr.mxu0 0.0
        %3591 = vmatpush2.msra.mxu0 0.0
        %3592 = vmatprep.subr.mxu0 0.0
        %3593 = vmatpush2.msra.mxu0 0.0
        %3594 = vmatprep.mubr.f32.mxu0 0.0
        %3595 = vmatmul.mubr.f32.gmra.mxu0 %v3409
        %v3596 = vpop.f32.mrf.mxu0
        %v3597 = vadd.f32 %v3528, %v3596
        %v3598 = vpop.f32.mrf.mxu0
        %3599 = vmatprep.mubr.f32.mxu0 0.0
        %3600 = vmatmul.mubr.f32.gmra.mxu0 %v3412
        %v3601 = vpop.f32.mrf.mxu0
        %v3602 = vadd.f32 %v3528, %v3601
        %v3603 = vpop.f32.mrf.mxu0
        %3604 = vdwg.mxu0
        %v3605 = vmul.f32 %v3597, 0.5
        %v3606 = vmul.f32 %v3602, 0.5
        %v3607 = vmul.f32 %v3597, 0.70710677
        %v3608 = vmul.f32 %v3602, 0.70710677
        %v3609 = verf.f32.pop %v3607
        %v3610 = verf.f32.pop %v3608
        %v3611 = vadd.f32 %v3609, 1.0
        %v3612 = vadd.f32 %v3610, 1.0
        %v3613 = vmul.f32 %v3605, %v3611
        %v3614 = vmul.f32 %v3606, %v3612
        %v3615 = vld [vmem:[%s11 + $0x80] sm:$0xff]
        %v3616 = vld [vmem:[%s11 + $0x88] sm:$0xff]
        %v3617 = vld [vmem:[%s11 + $0x90] sm:$0xff]
        %v3618 = vld [vmem:[%s11 + $0x98] sm:$0xff]
        %v3619 = vld [vmem:[%s11 + $0xa0] sm:$0xff]
        %v3620 = vld [vmem:[%s11 + $0xa8] sm:$0xff]
        %v3621 = vld [vmem:[%s11 + $0xb0] sm:$0xff]
        %v3622 = vld [vmem:[%s11 + $0xb8] sm:$0xff]
        %v3623 = vld [vmem:[%s11 + $0xc0] sm:$0xff]
        %v3624 = vld [vmem:[%s11 + $0xc8] sm:$0xff]
        %v3625 = vld [vmem:[%s11 + $0xd0] sm:$0xff]
        %v3626 = vld [vmem:[%s11 + $0xd8] sm:$0xff]
        %v3627 = vld [vmem:[%s11 + $0xe0] sm:$0xff]
        %v3628 = vld [vmem:[%s11 + $0xe8] sm:$0xff]
        %v3629 = vld [vmem:[%s11 + $0xf0] sm:$0xff]
        %v3630 = vld [vmem:[%s11 + $0xf8] sm:$0xff]
        %3631 = vmatprep.subr.mxu0 0.0
        %3632 = vmatpush1.msra.mxu0 %v3630
        %3633 = vmatprep.subr.mxu0 0.0
        %3634 = vmatpush1.msra.mxu0 %v3629
        %3635 = vmatprep.subr.mxu0 0.0
        %3636 = vmatpush1.msra.mxu0 %v3628
        %3637 = vmatprep.subr.mxu0 0.0
        %3638 = vmatpush1.msra.mxu0 %v3627
        %3639 = vmatprep.subr.mxu0 0.0
        %3640 = vmatpush1.msra.mxu0 %v3626
        %3641 = vmatprep.subr.mxu0 0.0
        %3642 = vmatpush1.msra.mxu0 %v3625
        %3643 = vmatprep.subr.mxu0 0.0
        %3644 = vmatpush1.msra.mxu0 %v3624
        %3645 = vmatprep.subr.mxu0 0.0
        %3646 = vmatpush1.msra.mxu0 %v3623
        %3647 = vmatprep.subr.mxu0 0.0
        %3648 = vmatpush1.msra.mxu0 %v3622
        %3649 = vmatprep.subr.mxu0 0.0
        %3650 = vmatpush1.msra.mxu0 %v3621
        %3651 = vmatprep.subr.mxu0 0.0
        %3652 = vmatpush1.msra.mxu0 %v3620
        %3653 = vmatprep.subr.mxu0 0.0
        %3654 = vmatpush1.msra.mxu0 %v3619
        %3655 = vmatprep.subr.mxu0 0.0
        %3656 = vmatpush1.msra.mxu0 %v3618
        %3657 = vmatprep.subr.mxu0 0.0
        %3658 = vmatpush1.msra.mxu0 %v3617
        %3659 = vmatprep.subr.mxu0 0.0
        %3660 = vmatpush1.msra.mxu0 %v3616
        %3661 = vmatprep.subr.mxu0 0.0
        %3662 = vmatpush1.msra.mxu0 %v3615
        %3663 = vmatprep.subr.mxu0 0.0
        %3664 = vmatpush2.msra.mxu0 0.0
        %3665 = vmatprep.subr.mxu0 0.0
        %3666 = vmatpush2.msra.mxu0 0.0
        %3667 = vmatprep.subr.mxu0 0.0
        %3668 = vmatpush2.msra.mxu0 0.0
        %3669 = vmatprep.subr.mxu0 0.0
        %3670 = vmatpush2.msra.mxu0 0.0
        %3671 = vmatprep.subr.mxu0 0.0
        %3672 = vmatpush2.msra.mxu0 0.0
        %3673 = vmatprep.subr.mxu0 0.0
        %3674 = vmatpush2.msra.mxu0 0.0
        %3675 = vmatprep.subr.mxu0 0.0
        %3676 = vmatpush2.msra.mxu0 0.0
        %3677 = vmatprep.subr.mxu0 0.0
        %3678 = vmatpush2.msra.mxu0 0.0
        %3679 = vmatprep.subr.mxu0 0.0
        %3680 = vmatpush2.msra.mxu0 0.0
        %3681 = vmatprep.subr.mxu0 0.0
        %3682 = vmatpush2.msra.mxu0 0.0
        %3683 = vmatprep.subr.mxu0 0.0
        %3684 = vmatpush2.msra.mxu0 0.0
        %3685 = vmatprep.subr.mxu0 0.0
        %3686 = vmatpush2.msra.mxu0 0.0
        %3687 = vmatprep.subr.mxu0 0.0
        %3688 = vmatpush2.msra.mxu0 0.0
        %3689 = vmatprep.subr.mxu0 0.0
        %3690 = vmatpush2.msra.mxu0 0.0
        %3691 = vmatprep.subr.mxu0 0.0
        %3692 = vmatpush2.msra.mxu0 0.0
        %3693 = vmatprep.subr.mxu0 0.0
        %3694 = vmatpush2.msra.mxu0 0.0
        %3695 = vmatprep.mubr.f32.mxu0 0.0
        %3696 = vmatmul.mubr.f32.gmra.mxu0 %v3613
        %v3697 = vpop.f32.mrf.mxu0
        %v3698 = vadd.f32 0.0, %v3697
        %v3699 = vpop.f32.mrf.mxu0
        %3700 = vmatprep.mubr.f32.mxu0 0.0
        %3701 = vmatmul.mubr.f32.gmra.mxu0 %v3614
        %v3702 = vpop.f32.mrf.mxu0
        %v3703 = vadd.f32 0.0, %v3702
        %v3704 = vpop.f32.mrf.mxu0
        %3705 = vdwg.mxu0
        %3706 = vmatprep.subr.mxu0 0.0
        %3707 = vmatpush1.msra.mxu0 %v3514
        %3708 = vmatprep.subr.mxu0 0.0
        %3709 = vmatpush1.msra.mxu0 %v3513
        %3710 = vmatprep.subr.mxu0 0.0
        %3711 = vmatpush1.msra.mxu0 %v3512
        %3712 = vmatprep.subr.mxu0 0.0
        %3713 = vmatpush1.msra.mxu0 %v3511
        %3714 = vmatprep.subr.mxu0 0.0
        %3715 = vmatpush1.msra.mxu0 %v3510
        %3716 = vmatprep.subr.mxu0 0.0
        %3717 = vmatpush1.msra.mxu0 %v3509
        %3718 = vmatprep.subr.mxu0 0.0
        %3719 = vmatpush1.msra.mxu0 %v3508
        %3720 = vmatprep.subr.mxu0 0.0
        %3721 = vmatpush1.msra.mxu0 %v3507
        %3722 = vmatprep.subr.mxu0 0.0
        %3723 = vmatpush1.msra.mxu0 %v3506
        %3724 = vmatprep.subr.mxu0 0.0
        %3725 = vmatpush1.msra.mxu0 %v3505
        %3726 = vmatprep.subr.mxu0 0.0
        %3727 = vmatpush1.msra.mxu0 %v3504
        %3728 = vmatprep.subr.mxu0 0.0
        %3729 = vmatpush1.msra.mxu0 %v3503
        %3730 = vmatprep.subr.mxu0 0.0
        %3731 = vmatpush1.msra.mxu0 %v3502
        %3732 = vmatprep.subr.mxu0 0.0
        %3733 = vmatpush1.msra.mxu0 %v3501
        %3734 = vmatprep.subr.mxu0 0.0
        %3735 = vmatpush1.msra.mxu0 %v3500
        %3736 = vmatprep.subr.mxu0 0.0
        %3737 = vmatpush1.msra.mxu0 %v3499
        %3738 = vmatprep.subr.mxu0 0.0
        %3739 = vmatpush2.msra.mxu0 0.0
        %3740 = vmatprep.subr.mxu0 0.0
        %3741 = vmatpush2.msra.mxu0 0.0
        %3742 = vmatprep.subr.mxu0 0.0
        %3743 = vmatpush2.msra.mxu0 0.0
        %3744 = vmatprep.subr.mxu0 0.0
        %3745 = vmatpush2.msra.mxu0 0.0
        %3746 = vmatprep.subr.mxu0 0.0
        %3747 = vmatpush2.msra.mxu0 0.0
        %3748 = vmatprep.subr.mxu0 0.0
        %3749 = vmatpush2.msra.mxu0 0.0
        %3750 = vmatprep.subr.mxu0 0.0
        %3751 = vmatpush2.msra.mxu0 0.0
        %3752 = vmatprep.subr.mxu0 0.0
        %3753 = vmatpush2.msra.mxu0 0.0
        %3754 = vmatprep.subr.mxu0 0.0
        %3755 = vmatpush2.msra.mxu0 0.0
        %3756 = vmatprep.subr.mxu0 0.0
        %3757 = vmatpush2.msra.mxu0 0.0
        %3758 = vmatprep.subr.mxu0 0.0
        %3759 = vmatpush2.msra.mxu0 0.0
        %3760 = vmatprep.subr.mxu0 0.0
        %3761 = vmatpush2.msra.mxu0 0.0
        %3762 = vmatprep.subr.mxu0 0.0
        %3763 = vmatpush2.msra.mxu0 0.0
        %3764 = vmatprep.subr.mxu0 0.0
        %3765 = vmatpush2.msra.mxu0 0.0
        %3766 = vmatprep.subr.mxu0 0.0
        %3767 = vmatpush2.msra.mxu0 0.0
        %3768 = vmatprep.subr.mxu0 0.0
        %3769 = vmatpush2.msra.mxu0 0.0
        %3770 = vmatprep.mubr.f32.mxu0 0.0
        %3771 = vmatmul.mubr.f32.gmra.mxu0 %v3497
        %v3772 = vpop.f32.mrf.mxu0
        %v3773 = vadd.f32 %v3698, %v3772
        %v3774 = vpop.f32.mrf.mxu0
        %3775 = vmatprep.mubr.f32.mxu0 0.0
        %3776 = vmatmul.mubr.f32.gmra.mxu0 %v3498
        %v3777 = vpop.f32.mrf.mxu0
        %v3778 = vadd.f32 %v3703, %v3777
        %v3779 = vpop.f32.mrf.mxu0
        %3780 = vdwg.mxu0
        %v3781 = vadd.f32 %v3347, %v3773
        %v3782 = vadd.f32 %v3348, %v3778
        %v3783 = vld [vmem:[%s12] sm:$0x1]
        %v3785 = vlaneseq
        %v3786 = vshrl.u32 %v3785, 7
        %v3787 = vsub.s32 0, %v3786
        %v3788 = vrot.slane %v3783, %v3787
        %v3790 = vadd.f32 %v3781, %v3788
        %v3791 = vadd.f32 %v3782, %v3788
        %3792 = vst.msk [vmem:[%s433] sm:$0xff] %vm443, %v3790
        %3793 = vst.msk [vmem:[%s433 + $0x8] sm:$0xff] %vm443, %v3791
        %s3794 = sand.u32 %s313, 1
        %s3795 = scalar_lea.sflag [#allocation7], %s3794
        %s3796 = sand.u32 %s313, 1
        %s3797 = smul.addr %s3796, 16
        %s3798 = scalar_lea.vmem [#allocation6], %s3797
        // Predicated region
        $region73: #{tpu_custom_call.1} parent=71 // pred_check
          %p3799 = pneg %p323
        $region74: #{tpu_custom_call.1} parent=71 // pred_check_branch
          %3801 = sbr.rel (%p3799) target = $region76
        $region75: #{tpu_custom_call.1} parent=71 // pred_region
          %s3803 = ssub.s32 256, 256
          %3804 = vsyncadd %s3795, %s3803
          %s3805 = smul.addr %s27, 2
          %s3806 = smul.addr %s3805, 128
          %s3807 = scalar_lea.hbm %s13, %s3806
          %s3808 = sshll.u32 %s3798, 4
          %s3809 = int_to_ptr.vmem [resolvable:$true] %s3808
          %3814 = dma.vmem_to_hbm [thread:$0]  %s3809, 256, %s3807, %s3795, 128, 128, 8
        $region76: #{tpu_custom_call.1} parent=71 // pred_fallthru
          _
      $region72: #{tpu_custom_call.1} parent=5 // pred_fallthru
        _
      %p3815 = scmp.le.s32.totalorder 2, %s22
      // Predicated region
      $region77: #{tpu_custom_call.1} parent=5 // pred_check
        %p3816 = pneg %p3815
      $region78: #{tpu_custom_call.1} parent=5 // pred_check_branch
        %3818 = sbr.rel (%p3816) target = $region80
      $region79: #{tpu_custom_call.1} parent=5 // pred_region
        %s3819 = ssub.s32 %s22, 2
        // Predicated region
        $region81: #{tpu_custom_call.1} parent=79 // pred_check
          %p3820 = pneg %p329
        $region82: #{tpu_custom_call.1} parent=79 // pred_check_branch
          %3822 = sbr.rel (%p3820) target = $region84
        $region83: #{tpu_custom_call.1} parent=79 // pred_region
          %s3823 = sand.u32 %s314, 1
          %s3824 = scalar_lea.sflag [#allocation7], %s3823
          %s3825 = sand.u32 %s314, 1
          %s3826 = smul.addr %s3825, 16
          %s3827 = scalar_lea.vmem [#allocation6], %s3826
          %3828 = dma.done %s3824, 256
        $region84: #{tpu_custom_call.1} parent=79 // pred_fallthru
          _
      $region80: #{tpu_custom_call.1} parent=5 // pred_fallthru
        _
    $region6: #{tpu_custom_call.1} parent=1 // loop_footer
      %s26 = sadd.s32 1, %s22
    $region7: #{tpu_custom_call.1} parent=1 // loop_footer_branch
      %21 = sbr.rel target = $region3
    $region8: #{tpu_custom_call.1} parent=1 // loop_exit
      _
    %3829 = vsyncpa [#allocation7], 1
    %s3830 = scalar_lea.sflag [#allocation7], 1
    %3831 = vsyncpa %s3830, 1

// kernel: tpu_custom_call.1
$region0: #{tpu_custom_call.1}
  #allocation0 [shape = 'u32[]', space=smem, size = 0x4, offset = 0x4, fixed_abs, tag = 'smem constant byte address 0x4 - core index']
  #allocation1 [shape = 'u32[144,128]{1,0:T(1,128)}', space=vmem, size = 0x12000, scoped, tag = 'internal scratch']
  #allocation2 [shape = 'f32[4,16,16]{2,1,0:T(8,128)}', space=vmem, size = 0x8000, scoped, tag = 'scratch operand']
  #allocation3 [shape = 'f32[4,16,16]{2,1,0:T(8,128)}', space=vmem, size = 0x8000, scoped, tag = 'scratch operand']
  #allocation4 [shape = 'f32[4,16,16]{2,1,0:T(8,128)}', space=vmem, size = 0x8000, scoped, tag = 'scratch operand']
  #allocation5 [shape = 'f32[16,64]{1,0:T(8,128)}', space=vmem, size = 0x2000, scoped, tag = 'scratch operand']
  %s0 = inlined_call_operand.vmem [shape: f32[2,16,64], index: 0, kind: input, shape index: {}]
  %s1 = inlined_call_operand.vmem [shape: f32[1,64], index: 1, kind: input, shape index: {}]
  %s2 = inlined_call_operand.vmem [shape: f32[1,64], index: 2, kind: input, shape index: {}]
  %s3 = inlined_call_operand.vmem [shape: f32[64,192], index: 3, kind: input, shape index: {}]
  %s4 = inlined_call_operand.vmem [shape: f32[1,192], index: 4, kind: input, shape index: {}]
  %s5 = inlined_call_operand.vmem [shape: f32[4,16,64], index: 5, kind: input, shape index: {}]
  %s6 = inlined_call_operand.vmem [shape: f32[1,64], index: 6, kind: input, shape index: {}]
  %s7 = inlined_call_operand.vmem [shape: f32[1,64], index: 7, kind: input, shape index: {}]
  %s8 = inlined_call_operand.vmem [shape: f32[1,64], index: 8, kind: input, shape index: {}]
  %s9 = inlined_call_operand.vmem [shape: f32[64,256], index: 9, kind: input, shape index: {}]
  %s10 = inlined_call_operand.vmem [shape: f32[1,256], index: 10, kind: input, shape index: {}]
  %s11 = inlined_call_operand.vmem [shape: f32[256,64], index: 11, kind: input, shape index: {}]
  %s12 = inlined_call_operand.vmem [shape: f32[1,64], index: 12, kind: input, shape index: {}]
  %s13 = inlined_call_operand.hbm [shape: f32[2,16,64], index: 13, kind: output, shape index: {}]
  %s14 = sld [smem:[#allocation0]]
  $region85: #{tpu_custom_call.1} parent=0
    _
  %s16 = ssub.s32 1, %s14
  %s17 = scalar_select 0, %s16, %s14
  $region1: #{tpu_custom_call.1} parent=0
    #allocation6 [shape = 'u8[16384]{0}', space=vmem, size = 0x4000, scoped, tag = 'output window, operand 0']
    #allocation7 [shape = 's32[2]{0}', space=sflag, size = 0x8, scoped, tag = 'scoped memory for tpu_custom_call.1']
    %18 = vsyncpa [#allocation7], 0
    %s19 = scalar_lea.sflag [#allocation7], 1
    %20 = vsyncpa %s19, 0
    loop: start=0, step=1, limit=4
    $region2: #{tpu_custom_call.1} parent=1 // loop_pre_header
      _
    $region3: #{tpu_custom_call.1} parent=1 // loop_header
      %s22 = sphi 0, %s26
      %p23 = scmp.ge.s32.totalorder %s22, 4
      %s32 = sphi 0, %s34
      %s35 = sphi 0, %s32
      %s36 = sphi 0, %s35
      %s52 = sphi 0, %s36
      %s56 = sphi 0, %s56
      %s58 = sphi 0, %s56
      %s59 = sphi 0, %s58
      %s73 = sphi 0, %s59
      %s77 = sphi 0, %s77
      %s79 = sphi 0, %s77
      %s80 = sphi 0, %s79
      %s94 = sphi 0, %s80
      %s98 = sphi 0, %s98
      %s100 = sphi 0, %s98
      %s101 = sphi 0, %s100
      %s115 = sphi 0, %s101
      %s119 = sphi 0, %s119
      %s121 = sphi 0, %s119
      %s122 = sphi 0, %s121
      %s136 = sphi 0, %s122
      %s140 = sphi 0, %s140
      %s142 = sphi 0, %s140
      %s143 = sphi 0, %s142
      %s157 = sphi 0, %s143
      %s161 = sphi 0, %s161
      %s163 = sphi 0, %s161
      %s164 = sphi 0, %s163
      %s178 = sphi 0, %s164
      %s182 = sphi 0, %s182
      %s184 = sphi 0, %s182
      %s185 = sphi 0, %s184
      %s199 = sphi 0, %s185
      %s203 = sphi 0, %s203
      %s205 = sphi 0, %s203
      %s206 = sphi 0, %s205
      %s220 = sphi 0, %s206
      %s224 = sphi 0, %s224
      %s226 = sphi 0, %s224
      %s227 = sphi 0, %s226
      %s241 = sphi 0, %s227
      %s245 = sphi 0, %s245
      %s247 = sphi 0, %s245
      %s248 = sphi 0, %s247
      %s262 = sphi 0, %s248
      %s266 = sphi 0, %s266
      %s268 = sphi 0, %s266
      %s269 = sphi 0, %s268
      %s283 = sphi 0, %s269
      %s287 = sphi 0, %s287
      %s289 = sphi 0, %s287
      %s290 = sphi 0, %s289
      %s304 = sphi 0, %s290
      %s310 = sphi 0, %s312
      %s313 = sphi 0, %s310
      %s314 = sphi 0, %s313
      %s330 = sphi 0, %s314
    $region4: #{tpu_custom_call.1} parent=1 // loop_header_branch
      %25 = sbr.rel (%p23) target = $region8
    $region5: #{tpu_custom_call.1} parent=1 // loop_body
      %s27 = ssub.s32 %s22, 1
      %s28 = ssub.s32 %s22, 2
      %s29 = sadd.s32 %s22, 1
      %s30 = ssub.s32 %s22, %s29
      %p31 = scmp.eq.s32.totalorder %s30, 0
      %s33 = sadd.s32 %s32, 1
      %s34 = scalar_select %p31, %s32, %s33
      %p37 = pneg %p31
      %p38 = scmp.eq.s32.totalorder %s22, 1
      %p39 = por %p37, %p38
      %p40 = scmp.ne.s32.totalorder %s32, %s35
      %p41 = scmp.eq.s32.totalorder %s22, 0
      %p42 = por %p40, %p41
      %p43 = scmp.ne.s32.totalorder %s32, %s35
      %p44 = scmp.eq.s32.totalorder %s27, 1
      %p45 = por %p43, %p44
      %p46 = scmp.ne.s32.totalorder %s35, %s36
      %p47 = scmp.eq.s32.totalorder %s27, 0
      %p48 = por %p46, %p47
      %p49 = scmp.ne.s32.totalorder %s35, %s36
      %p50 = scmp.eq.s32.totalorder %s28, 1
      %p51 = por %p49, %p50
      %p53 = scmp.ne.s32.totalorder %s36, %s52
      %p54 = scmp.eq.s32.totalorder %s28, 0
      %p55 = por %p53, %p54
      %s57 = sadd.s32 %s56, 1
      %p60 = scmp.eq.s32.totalorder %s22, 1
      %p61 = scmp.ne.s32.totalorder %s56, %s58
      %p62 = scmp.eq.s32.totalorder %s22, 0
      %p63 = por %p61, %p62
      %p64 = scmp.ne.s32.totalorder %s56, %s58
      %p65 = scmp.eq.s32.totalorder %s27, 1
      %p66 = por %p64, %p65
      %p67 = scmp.ne.s32.totalorder %s58, %s59
      %p68 = scmp.eq.s32.totalorder %s27, 0
      %p69 = por %p67, %p68
      %p70 = scmp.ne.s32.totalorder %s58, %s59
      %p71 = scmp.eq.s32.totalorder %s28, 1
      %p72 = por %p70, %p71
      %p74 = scmp.ne.s32.totalorder %s59, %s73
      %p75 = scmp.eq.s32.totalorder %s28, 0
      %p76 = por %p74, %p75
      %s78 = sadd.s32 %s77, 1
      %p81 = scmp.eq.s32.totalorder %s22, 1
      %p82 = scmp.ne.s32.totalorder %s77, %s79
      %p83 = scmp.eq.s32.totalorder %s22, 0
      %p84 = por %p82, %p83
      %p85 = scmp.ne.s32.totalorder %s77, %s79
      %p86 = scmp.eq.s32.totalorder %s27, 1
      %p87 = por %p85, %p86
      %p88 = scmp.ne.s32.totalorder %s79, %s80
      %p89 = scmp.eq.s32.totalorder %s27, 0
      %p90 = por %p88, %p89
      %p91 = scmp.ne.s32.totalorder %s79, %s80
      %p92 = scmp.eq.s32.totalorder %s28, 1
      %p93 = por %p91, %p92
      %p95 = scmp.ne.s32.totalorder %s80, %s94
      %p96 = scmp.eq.s32.totalorder %s28, 0
      %p97 = por %p95, %p96
      %s99 = sadd.s32 %s98, 1
      %p102 = scmp.eq.s32.totalorder %s22, 1
      %p103 = scmp.ne.s32.totalorder %s98, %s100
      %p104 = scmp.eq.s32.totalorder %s22, 0
      %p105 = por %p103, %p104
      %p106 = scmp.ne.s32.totalorder %s98, %s100
      %p107 = scmp.eq.s32.totalorder %s27, 1
      %p108 = por %p106, %p107
      %p109 = scmp.ne.s32.totalorder %s100, %s101
      %p110 = scmp.eq.s32.totalorder %s27, 0
      %p111 = por %p109, %p110
      %p112 = scmp.ne.s32.totalorder %s100, %s101
      %p113 = scmp.eq.s32.totalorder %s28, 1
      %p114 = por %p112, %p113
      %p116 = scmp.ne.s32.totalorder %s101, %s115
      %p117 = scmp.eq.s32.totalorder %s28, 0
      %p118 = por %p116, %p117
      %s120 = sadd.s32 %s119, 1
      %p123 = scmp.eq.s32.totalorder %s22, 1
      %p124 = scmp.ne.s32.totalorder %s119, %s121
      %p125 = scmp.eq.s32.totalorder %s22, 0
      %p126 = por %p124, %p125
      %p127 = scmp.ne.s32.totalorder %s119, %s121
      %p128 = scmp.eq.s32.totalorder %s27, 1
      %p129 = por %p127, %p128
      %p130 = scmp.ne.s32.totalorder %s121, %s122
      %p131 = scmp.eq.s32.totalorder %s27, 0
      %p132 = por %p130, %p131
      %p133 = scmp.ne.s32.totalorder %s121, %s122
      %p134 = scmp.eq.s32.totalorder %s28, 1
      %p135 = por %p133, %p134
      %p137 = scmp.ne.s32.totalorder %s122, %s136
      %p138 = scmp.eq.s32.totalorder %s28, 0
      %p139 = por %p137, %p138
      %s141 = sadd.s32 %s140, 1
      %p144 = scmp.eq.s32.totalorder %s22, 1
      %p145 = scmp.ne.s32.totalorder %s140, %s142
      %p146 = scmp.eq.s32.totalorder %s22, 0
      %p147 = por %p145, %p146
      %p148 = scmp.ne.s32.totalorder %s140, %s142
      %p149 = scmp.eq.s32.totalorder %s27, 1
      %p150 = por %p148, %p149
      %p151 = scmp.ne.s32.totalorder %s142, %s143
      %p152 = scmp.eq.s32.totalorder %s27, 0
      %p153 = por %p151, %p152
      %p154 = scmp.ne.s32.totalorder %s142, %s143
      %p155 = scmp.eq.s32.totalorder %s28, 1
      %p156 = por %p154, %p155
      %p158 = scmp.ne.s32.totalorder %s143, %s157
      %p159 = scmp.eq.s32.totalorder %s28, 0
      %p160 = por %p158, %p159
      %s162 = sadd.s32 %s161, 1
      %p165 = scmp.eq.s32.totalorder %s22, 1
      %p166 = scmp.ne.s32.totalorder %s161, %s163
      %p167 = scmp.eq.s32.totalorder %s22, 0
      %p168 = por %p166, %p167
      %p169 = scmp.ne.s32.totalorder %s161, %s163
      %p170 = scmp.eq.s32.totalorder %s27, 1
      %p171 = por %p169, %p170
      %p172 = scmp.ne.s32.totalorder %s163, %s164
      %p173 = scmp.eq.s32.totalorder %s27, 0
      %p174 = por %p172, %p173
      %p175 = scmp.ne.s32.totalorder %s163, %s164
      %p176 = scmp.eq.s32.totalorder %s28, 1
      %p177 = por %p175, %p176
      %p179 = scmp.ne.s32.totalorder %s164, %s178
      %p180 = scmp.eq.s32.totalorder %s28, 0
      %p181 = por %p179, %p180
      %s183 = sadd.s32 %s182, 1
      %p186 = scmp.eq.s32.totalorder %s22, 1
      %p187 = scmp.ne.s32.totalorder %s182, %s184
      %p188 = scmp.eq.s32.totalorder %s22, 0
      %p189 = por %p187, %p188
      %p190 = scmp.ne.s32.totalorder %s182, %s184
      %p191 = scmp.eq.s32.totalorder %s27, 1
      %p192 = por %p190, %p191
      %p193 = scmp.ne.s32.totalorder %s184, %s185
      %p194 = scmp.eq.s32.totalorder %s27, 0
      %p195 = por %p193, %p194
      %p196 = scmp.ne.s32.totalorder %s184, %s185
      %p197 = scmp.eq.s32.totalorder %s28, 1
      %p198 = por %p196, %p197
      %p200 = scmp.ne.s32.totalorder %s185, %s199
      %p201 = scmp.eq.s32.totalorder %s28, 0
      %p202 = por %p200, %p201
      %s204 = sadd.s32 %s203, 1
      %p207 = scmp.eq.s32.totalorder %s22, 1
      %p208 = scmp.ne.s32.totalorder %s203, %s205
      %p209 = scmp.eq.s32.totalorder %s22, 0
      %p210 = por %p208, %p209
      %p211 = scmp.ne.s32.totalorder %s203, %s205
      %p212 = scmp.eq.s32.totalorder %s27, 1
      %p213 = por %p211, %p212
      %p214 = scmp.ne.s32.totalorder %s205, %s206
      %p215 = scmp.eq.s32.totalorder %s27, 0
      %p216 = por %p214, %p215
      %p217 = scmp.ne.s32.totalorder %s205, %s206
      %p218 = scmp.eq.s32.totalorder %s28, 1
      %p219 = por %p217, %p218
      %p221 = scmp.ne.s32.totalorder %s206, %s220
      %p222 = scmp.eq.s32.totalorder %s28, 0
      %p223 = por %p221, %p222
      %s225 = sadd.s32 %s224, 1
      %p228 = scmp.eq.s32.totalorder %s22, 1
      %p229 = scmp.ne.s32.totalorder %s224, %s226
      %p230 = scmp.eq.s32.totalorder %s22, 0
      %p231 = por %p229, %p230
      %p232 = scmp.ne.s32.totalorder %s224, %s226
      %p233 = scmp.eq.s32.totalorder %s27, 1
      %p234 = por %p232, %p233
      %p235 = scmp.ne.s32.totalorder %s226, %s227
      %p236 = scmp.eq.s32.totalorder %s27, 0
      %p237 = por %p235, %p236
      %p238 = scmp.ne.s32.totalorder %s226, %s227
      %p239 = scmp.eq.s32.totalorder %s28, 1
      %p240 = por %p238, %p239
      %p242 = scmp.ne.s32.totalorder %s227, %s241
      %p243 = scmp.eq.s32.totalorder %s28, 0
      %p244 = por %p242, %p243
      %s246 = sadd.s32 %s245, 1
      %p249 = scmp.eq.s32.totalorder %s22, 1
      %p250 = scmp.ne.s32.totalorder %s245, %s247
      %p251 = scmp.eq.s32.totalorder %s22, 0
      %p252 = por %p250, %p251
      %p253 = scmp.ne.s32.totalorder %s245, %s247
      %p254 = scmp.eq.s32.totalorder %s27, 1
      %p255 = por %p253, %p254
      %p256 = scmp.ne.s32.totalorder %s247, %s248
      %p257 = scmp.eq.s32.totalorder %s27, 0
      %p258 = por %p256, %p257
      %p259 = scmp.ne.s32.totalorder %s247, %s248
      %p260 = scmp.eq.s32.totalorder %s28, 1
      %p261 = por %p259, %p260
      %p263 = scmp.ne.s32.totalorder %s248, %s262
      %p264 = scmp.eq.s32.totalorder %s28, 0
      %p265 = por %p263, %p264
      %s267 = sadd.s32 %s266, 1
      %p270 = scmp.eq.s32.totalorder %s22, 1
      %p271 = scmp.ne.s32.totalorder %s266, %s268
      %p272 = scmp.eq.s32.totalorder %s22, 0
      %p273 = por %p271, %p272
      %p274 = scmp.ne.s32.totalorder %s266, %s268
      %p275 = scmp.eq.s32.totalorder %s27, 1
      %p276 = por %p274, %p275
      %p277 = scmp.ne.s32.totalorder %s268, %s269
      %p278 = scmp.eq.s32.totalorder %s27, 0
      %p279 = por %p277, %p278
      %p280 = scmp.ne.s32.totalorder %s268, %s269
      %p281 = scmp.eq.s32.totalorder %s28, 1
      %p282 = por %p280, %p281
      %p284 = scmp.ne.s32.totalorder %s269, %s283
      %p285 = scmp.eq.s32.totalorder %s28, 0
      %p286 = por %p284, %p285
      %s288 = sadd.s32 %s287, 1
      %p291 = scmp.eq.s32.totalorder %s22, 1
      %p292 = scmp.ne.s32.totalorder %s287, %s289
      %p293 = scmp.eq.s32.totalorder %s22, 0
      %p294 = por %p292, %p293
      %p295 = scmp.ne.s32.totalorder %s287, %s289
      %p296 = scmp.eq.s32.totalorder %s27, 1
      %p297 = por %p295, %p296
      %p298 = scmp.ne.s32.totalorder %s289, %s290
      %p299 = scmp.eq.s32.totalorder %s27, 0
      %p300 = por %p298, %p299
      %p301 = scmp.ne.s32.totalorder %s289, %s290
      %p302 = scmp.eq.s32.totalorder %s28, 1
      %p303 = por %p301, %p302
      %p305 = scmp.ne.s32.totalorder %s290, %s304
      %p306 = scmp.eq.s32.totalorder %s28, 0
      %p307 = por %p305, %p306
      %s308 = ssub.s32 %s22, %s29
      %p309 = scmp.eq.s32.totalorder %s308, 0
      %s311 = sadd.s32 %s310, 1
      %s312 = scalar_select %p309, %s310, %s311
      %p315 = pneg %p309
      %p316 = scmp.eq.s32.totalorder %s22, 1
      %p317 = por %p315, %p316
      %p318 = scmp.ne.s32.totalorder %s310, %s313
      %p319 = scmp.eq.s32.totalorder %s22, 0
      %p320 = por %p318, %p319
      %p321 = scmp.ne.s32.totalorder %s310, %s313
      %p322 = scmp.eq.s32.totalorder %s27, 1
      %p323 = por %p321, %p322
      %p324 = scmp.ne.s32.totalorder %s313, %s314
      %p325 = scmp.eq.s32.totalorder %s27, 0
      %p326 = por %p324, %p325
      %p327 = scmp.ne.s32.totalorder %s313, %s314
      %p328 = scmp.eq.s32.totalorder %s28, 1
      %p329 = por %p327, %p328
      %p331 = scmp.ne.s32.totalorder %s314, %s330
      %p332 = scmp.eq.s32.totalorder %s28, 0
      %p333 = por %p331, %p332
      %p334 = scmp.le.s32.totalorder 1, %s22
      %p335 = scmp.lt.s32.totalorder %s22, 3
      %p336 = pnand %p334, %p335
      %p337 = pneg %p336
      // Predicated region
      $region9: #{tpu_custom_call.1} parent=5 // pred_check
        _
      $region10: #{tpu_custom_call.1} parent=5 // pred_check_branch
        %339 = sbr.rel (%p336) target = $region12
      $region11: #{tpu_custom_call.1} parent=5 // pred_region
        %s340 = ssub.s32 %s22, 1
        // Predicated region
        $region13: #{tpu_custom_call.1} parent=11 // pred_check
          %p341 = pneg %p69
        $region14: #{tpu_custom_call.1} parent=11 // pred_check_branch
          %343 = sbr.rel (%p341) target = $region16
        $region15: #{tpu_custom_call.1} parent=11 // pred_region
          _
        $region16: #{tpu_custom_call.1} parent=11 // pred_fallthru
          _
        // Predicated region
        $region17: #{tpu_custom_call.1} parent=11 // pred_check
          %p344 = pneg %p90
        $region18: #{tpu_custom_call.1} parent=11 // pred_check_branch
          %346 = sbr.rel (%p344) target = $region20
        $region19: #{tpu_custom_call.1} parent=11 // pred_region
          _
        $region20: #{tpu_custom_call.1} parent=11 // pred_fallthru
          _
        // Predicated region
        $region21: #{tpu_custom_call.1} parent=11 // pred_check
          %p347 = pneg %p111
        $region22: #{tpu_custom_call.1} parent=11 // pred_check_branch
          %349 = sbr.rel (%p347) target = $region24
        $region23: #{tpu_custom_call.1} parent=11 // pred_region
          _
        $region24: #{tpu_custom_call.1} parent=11 // pred_fallthru
          _
        // Predicated region
        $region25: #{tpu_custom_call.1} parent=11 // pred_check
          %p350 = pneg %p132
        $region26: #{tpu_custom_call.1} parent=11 // pred_check_branch
          %352 = sbr.rel (%p350) target = $region28
        $region27: #{tpu_custom_call.1} parent=11 // pred_region
          _
        $region28: #{tpu_custom_call.1} parent=11 // pred_fallthru
          _
        // Predicated region
        $region29: #{tpu_custom_call.1} parent=11 // pred_check
          %p353 = pneg %p153
        $region30: #{tpu_custom_call.1} parent=11 // pred_check_branch
          %355 = sbr.rel (%p353) target = $region32
        $region31: #{tpu_custom_call.1} parent=11 // pred_region
          _
        $region32: #{tpu_custom_call.1} parent=11 // pred_fallthru
          _
        // Predicated region
        $region33: #{tpu_custom_call.1} parent=11 // pred_check
          %p356 = pneg %p174
        $region34: #{tpu_custom_call.1} parent=11 // pred_check_branch
          %358 = sbr.rel (%p356) target = $region36
        $region35: #{tpu_custom_call.1} parent=11 // pred_region
          _
        $region36: #{tpu_custom_call.1} parent=11 // pred_fallthru
          _
        // Predicated region
        $region37: #{tpu_custom_call.1} parent=11 // pred_check
          %p359 = pneg %p195
        $region38: #{tpu_custom_call.1} parent=11 // pred_check_branch
          %361 = sbr.rel (%p359) target = $region40
        $region39: #{tpu_custom_call.1} parent=11 // pred_region
          _
        $region40: #{tpu_custom_call.1} parent=11 // pred_fallthru
          _
        // Predicated region
        $region41: #{tpu_custom_call.1} parent=11 // pred_check
          %p362 = pneg %p216
        $region42: #{tpu_custom_call.1} parent=11 // pred_check_branch
          %364 = sbr.rel (%p362) target = $region44
        $region43: #{tpu_custom_call.1} parent=11 // pred_region
          _
        $region44: #{tpu_custom_call.1} parent=11 // pred_fallthru
          _
        // Predicated region
        $region45: #{tpu_custom_call.1} parent=11 // pred_check
          %p365 = pneg %p237
        $region46: #{tpu_custom_call.1} parent=11 // pred_check_branch
          %367 = sbr.rel (%p365) target = $region48
        $region47: #{tpu_custom_call.1} parent=11 // pred_region
          _
        $region48: #{tpu_custom_call.1} parent=11 // pred_fallthru
          _
        // Predicated region
        $region49: #{tpu_custom_call.1} parent=11 // pred_check
          %p368 = pneg %p258
        $region50: #{tpu_custom_call.1} parent=11 // pred_check_branch
          %370 = sbr.rel (%p368) target = $region52
        $region51: #{tpu_custom_call.1} parent=11 // pred_region
          _
        $region52: #{tpu_custom_call.1} parent=11 // pred_fallthru
          _
        // Predicated region
        $region53: #{tpu_custom_call.1} parent=11 // pred_check
          %p371 = pneg %p279
        $region54: #{tpu_custom_call.1} parent=11 // pred_check_branch
          %373 = sbr.rel (%p371) target = $region56
        $region55: #{tpu_custom_call.1} parent=11 // pred_region
          _
        $region56: #{tpu_custom_call.1} parent=11 // pred_fallthru
          _
        // Predicated region
        $region57: #{tpu_custom_call.1} parent=11 // pred_check
          %p374 = pneg %p300
        $region58: #{tpu_custom_call.1} parent=11 // pred_check_branch
          %376 = sbr.rel (%p374) target = $region60
        $region59: #{tpu_custom_call.1} parent=11 // pred_region
          _
        $region60: #{tpu_custom_call.1} parent=11 // pred_fallthru
          _
      $region12: #{tpu_custom_call.1} parent=5 // pred_fallthru
        _
      %p377 = scmp.lt.s32.totalorder %s22, 2
      // Predicated region
      $region61: #{tpu_custom_call.1} parent=5 // pred_check
        %p378 = pneg %p377
      $region62: #{tpu_custom_call.1} parent=5 // pred_check_branch
        %380 = sbr.rel (%p378) target = $region64
      $region63: #{tpu_custom_call.1} parent=5 // pred_region
        // Predicated region
        $region65: #{tpu_custom_call.1} parent=63 // pred_check
          %p381 = pneg %p42
        $region66: #{tpu_custom_call.1} parent=63 // pred_check_branch
          %383 = sbr.rel (%p381) target = $region68
        $region67: #{tpu_custom_call.1} parent=63 // pred_region
          %p384 = scmp.lt.s32.totalorder %s22, 1
          %s385 = scalar_select %p384, %s22, 1
          %s386 = smul.addr %s385, 2
          %s387 = smul.addr %s386, 8
          %s388 = scalar_lea.vmem %s0, %s387
        $region68: #{tpu_custom_call.1} parent=63 // pred_fallthru
          _
      $region64: #{tpu_custom_call.1} parent=5 // pred_fallthru
        _
      %p389 = scmp.le.s32.totalorder 1, %s22
      %p390 = scmp.lt.s32.totalorder %s22, 3
      %p391 = pnand %p389, %p390
      %p392 = pneg %p391
      // Predicated region
      $region69: #{tpu_custom_call.1} parent=5 // pred_check
        _
      $region70: #{tpu_custom_call.1} parent=5 // pred_check_branch
        %394 = sbr.rel (%p391) target = $region72
      $region71: #{tpu_custom_call.1} parent=5 // pred_region
        %s395 = ssub.s32 %s22, 1
        %p396 = scmp.lt.s32.totalorder %s27, 1
        %s397 = scalar_select %p396, %s27, 1
        %s398 = smul.addr %s397, 2
        %s399 = smul.addr %s398, 8
        %s400 = scalar_lea.vmem %s0, %s399
        %p401 = pneg %p48
        %p402 = pneg %p45
        %p403 = pneg %p69
        %p404 = pneg %p66
        %p405 = pneg %p90
        %p406 = pneg %p87
        %p407 = pneg %p111
        %p408 = pneg %p108
        %p409 = pneg %p132
        %p410 = pneg %p129
        %p411 = pneg %p153
        %p412 = pneg %p150
        %p413 = pneg %p174
        %p414 = pneg %p171
        %p415 = pneg %p195
        %p416 = pneg %p192
        %p417 = pneg %p216
        %p418 = pneg %p213
        %p419 = pneg %p237
        %p420 = pneg %p234
        %p421 = pneg %p258
        %p422 = pneg %p255
        %p423 = pneg %p279
        %p424 = pneg %p276
        %p425 = pneg %p300
        %p426 = pneg %p297
        %p427 = pneg %p326
        %p428 = pneg %p323
        %s429 = sand.u32 %s313, 1
        %s430 = scalar_lea.sflag [#allocation7], %s429
        %s431 = sand.u32 %s313, 1
        %s432 = smul.addr %s431, 16
        %s433 = scalar_lea.vmem [#allocation6], %s432
        %p434 = scmp.lt.s32.totalorder %s27, 1
        %s435 = scalar_select %p434, %s27, 1
        %s436 = smul.addr %s435, 2
        %s437 = smul.addr %s436, 8
        %s438 = scalar_lea.vmem %s0, %s437
        %v439 = vld [vmem:[%s438] sm:$0xff]
        %v440 = vld [vmem:[%s438 + $0x8] sm:$0xff]
        %v441 = vld [vmem:[%s1] sm:$0x1]
        %v442 = vld [vmem:[%s2] sm:$0x1]
        %vm443 = vcmask 523264
        %v444 = vsel %vm443, %v439, 0.0
        %445 = vadd.xlane.f32.xlu0 %v444
        %v446 = vpop.xlane.xlu0 %445
        %v447 = vsel %vm443, %v440, 0.0
        %448 = vadd.xlane.f32.xlu0 %v447
        %v449 = vpop.xlane.xlu0 %448
        %v450 = vrcp.pop 64.0
        %v451 = vmul.f32 %v446, %v450
        %v452 = vmul.f32 %v449, %v450
        %v453 = vsub.f32 %v439, %v451
        %v454 = vsub.f32 %v440, %v452
        %v455 = vmul.f32 %v453, %v453
        %v456 = vmul.f32 %v454, %v454
        %v457 = vsel %vm443, %v455, 0.0
        %458 = vadd.xlane.f32.xlu0 %v457
        %v459 = vpop.xlane.xlu0 %458
        %v460 = vsel %vm443, %v456, 0.0
        %461 = vadd.xlane.f32.xlu0 %v460
        %v462 = vpop.xlane.xlu0 %461
        %v463 = vmul.f32 %v459, %v450
        %v464 = vmul.f32 %v462, %v450
        %v465 = vadd.f32 %v463, 1e-05
        %v466 = vadd.f32 %v464, 1e-05
        %v467 = vrsqrt.pop %v465
        %v468 = vrsqrt.pop %v466
        %v469 = vmul.f32 %v453, %v467
        %v470 = vmul.f32 %v454, %v468
        %v472 = vlaneseq
        %v473 = vshrl.u32 %v472, 7
        %v474 = vsub.s32 0, %v473
        %v475 = vrot.slane %v441, %v474
        %v477 = vmul.f32 %v469, %v475
        %v478 = vmul.f32 %v470, %v475
        %v480 = vlaneseq
        %v481 = vshrl.u32 %v480, 7
        %v482 = vsub.s32 0, %v481
        %v483 = vrot.slane %v442, %v482
        %v485 = vadd.f32 %v477, %v483
        %v486 = vadd.f32 %v478, %v483
        %v487 = vld [vmem:[%s3] sm:$0xff]
        %v488 = vld [vmem:[%s3 + $0x8] sm:$0xff]
        %v489 = vld [vmem:[%s3 + $0x10] sm:$0xff]
        %v490 = vld [vmem:[%s3 + $0x18] sm:$0xff]
        %v491 = vld [vmem:[%s3 + $0x20] sm:$0xff]
        %v492 = vld [vmem:[%s3 + $0x28] sm:$0xff]
        %v493 = vld [vmem:[%s3 + $0x30] sm:$0xff]
        %v494 = vld [vmem:[%s3 + $0x38] sm:$0xff]
        %v495 = vld [vmem:[%s3 + $0x40] sm:$0xff]
        %v496 = vld [vmem:[%s3 + $0x48] sm:$0xff]
        %v497 = vld [vmem:[%s3 + $0x50] sm:$0xff]
        %v498 = vld [vmem:[%s3 + $0x58] sm:$0xff]
        %v499 = vld [vmem:[%s3 + $0x60] sm:$0xff]
        %v500 = vld [vmem:[%s3 + $0x68] sm:$0xff]
        %v501 = vld [vmem:[%s3 + $0x70] sm:$0xff]
        %v502 = vld [vmem:[%s3 + $0x78] sm:$0xff]
        %v503 = vld [vmem:[%s4] sm:$0x3]
        %v505 = vlaneseq
        %v506 = vshrl.u32 %v505, 7
        %v507 = vsub.s32 0, %v506
        %v508 = vrot.slane %v503, %v507
        %v509 = vlaneseq
        %v510 = vshrl.u32 %v509, 7
        %v511 = vsub.s32 1, %v510
        %v512 = vrot.slane %v503, %v511
        %v516 = vsel %vm443, %v485, 0
        %v519 = vsel %vm443, %v486, 0
        %521 = vmatprep.subr.mxu0 0.0
        %522 = vmatpush1.msra.mxu0 0.0
        %523 = vmatprep.subr.mxu0 0.0
        %524 = vmatpush1.msra.mxu0 0.0
        %525 = vmatprep.subr.mxu0 0.0
        %526 = vmatpush1.msra.mxu0 0.0
        %527 = vmatprep.subr.mxu0 0.0
        %528 = vmatpush1.msra.mxu0 0.0
        %529 = vmatprep.subr.mxu0 0.0
        %530 = vmatpush1.msra.mxu0 0.0
        %531 = vmatprep.subr.mxu0 0.0
        %532 = vmatpush1.msra.mxu0 0.0
        %533 = vmatprep.subr.mxu0 0.0
        %534 = vmatpush1.msra.mxu0 0.0
        %535 = vmatprep.subr.mxu0 0.0
        %536 = vmatpush1.msra.mxu0 0.0
        %537 = vmatprep.subr.mxu0 %v502
        %538 = vmatpush1.msra.mxu0 %v501
        %539 = vmatprep.subr.mxu0 %v500
        %540 = vmatpush1.msra.mxu0 %v499
        %541 = vmatprep.subr.mxu0 %v498
        %542 = vmatpush1.msra.mxu0 %v497
        %543 = vmatprep.subr.mxu0 %v496
        %544 = vmatpush1.msra.mxu0 %v495
        %545 = vmatprep.subr.mxu0 %v494
        %546 = vmatpush1.msra.mxu0 %v493
        %547 = vmatprep.subr.mxu0 %v492
        %548 = vmatpush1.msra.mxu0 %v491
        %549 = vmatprep.subr.mxu0 %v490
        %550 = vmatpush1.msra.mxu0 %v489
        %551 = vmatprep.subr.mxu0 %v488
        %552 = vmatpush1.msra.mxu0 %v487
        %553 = vmatprep.subr.mxu0 0.0
        %554 = vmatpush2.msra.mxu0 0.0
        %555 = vmatprep.subr.mxu0 0.0
        %556 = vmatpush2.msra.mxu0 0.0
        %557 = vmatprep.subr.mxu0 0.0
        %558 = vmatpush2.msra.mxu0 0.0
        %559 = vmatprep.subr.mxu0 0.0
        %560 = vmatpush2.msra.mxu0 0.0
        %561 = vmatprep.subr.mxu0 0.0
        %562 = vmatpush2.msra.mxu0 0.0
        %563 = vmatprep.subr.mxu0 0.0
        %564 = vmatpush2.msra.mxu0 0.0
        %565 = vmatprep.subr.mxu0 0.0
        %566 = vmatpush2.msra.mxu0 0.0
        %567 = vmatprep.subr.mxu0 0.0
        %568 = vmatpush2.msra.mxu0 0.0
        %569 = vmatprep.subr.mxu0 0.0
        %570 = vmatpush2.msra.mxu0 0.0
        %571 = vmatprep.subr.mxu0 0.0
        %572 = vmatpush2.msra.mxu0 0.0
        %573 = vmatprep.subr.mxu0 0.0
        %574 = vmatpush2.msra.mxu0 0.0
        %575 = vmatprep.subr.mxu0 0.0
        %576 = vmatpush2.msra.mxu0 0.0
        %577 = vmatprep.subr.mxu0 0.0
        %578 = vmatpush2.msra.mxu0 0.0
        %579 = vmatprep.subr.mxu0 0.0
        %580 = vmatpush2.msra.mxu0 0.0
        %581 = vmatprep.subr.mxu0 0.0
        %582 = vmatpush2.msra.mxu0 0.0
        %583 = vmatprep.subr.mxu0 0.0
        %584 = vmatpush2.msra.mxu0 0.0
        %585 = vmatprep.mubr.f32.mxu0 0.0
        %586 = vmatmul.mubr.f32.gmra.mxu0 %v516
        %v587 = vpop.f32.mrf.mxu0
        %v588 = vadd.f32 %v508, %v587
        %v589 = vpop.f32.mrf.mxu0
        %v590 = vadd.f32 %v512, %v589
        %591 = vmatprep.mubr.f32.mxu0 0.0
        %592 = vmatmul.mubr.f32.gmra.mxu0 %v519
        %v593 = vpop.f32.mrf.mxu0
        %v594 = vadd.f32 %v508, %v593
        %v595 = vpop.f32.mrf.mxu0
        %v596 = vadd.f32 %v512, %v595
        %597 = vdwg.mxu0
        %v598 = vmul.f32 %v588, 0.25
        %v599 = vmul.f32 %v594, 0.25
        %vm600 = vcmask 130048
        %601 = vst.msk [vmem:[#allocation2] sm:$0xff] %vm600, %v598
        %602 = vst.msk [vmem:[#allocation2 + $0x8] sm:$0xff] %vm600, %v599
        %605 = vrot.lane.b32.xlu0 %v588, 64
        %v606 = vpop.permute.xlu0 %605
        %607 = vrot.lane.b32.xlu0 %v594, 64
        %v608 = vpop.permute.xlu0 %607
        %611 = vst.msk [vmem:[#allocation3] sm:$0xff] %vm600, %v606
        %612 = vst.msk [vmem:[#allocation3 + $0x8] sm:$0xff] %vm600, %v608
        %613 = vst.msk [vmem:[#allocation4] sm:$0xff] %vm600, %v590
        %614 = vst.msk [vmem:[#allocation4 + $0x8] sm:$0xff] %vm600, %v596
        %617 = vrot.lane.b32.xlu0 %v598, 112
        %v618 = vpop.permute.xlu0 %617
        %619 = vrot.lane.b32.xlu0 %v599, 112
        %v620 = vpop.permute.xlu0 %619
        %s623 = scalar_lea.vmem [#allocation2], 16
        %624 = vst.msk [vmem:[%s623] sm:$0xff] %vm600, %v618
        %625 = vst.msk [vmem:[%s623 + $0x8] sm:$0xff] %vm600, %v620
        %626 = vrot.lane.b32.xlu0 %v588, 48
        %v627 = vpop.permute.xlu0 %626
        %628 = vrot.lane.b32.xlu0 %v594, 48
        %v629 = vpop.permute.xlu0 %628
        %s632 = scalar_lea.vmem [#allocation3], 16
        %633 = vst.msk [vmem:[%s632] sm:$0xff] %vm600, %v627
        %634 = vst.msk [vmem:[%s632 + $0x8] sm:$0xff] %vm600, %v629
        %637 = vrot.lane.b32.xlu0 %v590, 112
        %v638 = vpop.permute.xlu0 %637
        %639 = vrot.lane.b32.xlu0 %v596, 112
        %v640 = vpop.permute.xlu0 %639
        %s643 = scalar_lea.vmem [#allocation4], 16
        %644 = vst.msk [vmem:[%s643] sm:$0xff] %vm600, %v638
        %645 = vst.msk [vmem:[%s643 + $0x8] sm:$0xff] %vm600, %v640
        %646 = vrot.lane.b32.xlu0 %v598, 96
        %v647 = vpop.permute.xlu0 %646
        %648 = vrot.lane.b32.xlu0 %v599, 96
        %v649 = vpop.permute.xlu0 %648
        %s652 = scalar_lea.vmem [#allocation2], 32
        %653 = vst.msk [vmem:[%s652] sm:$0xff] %vm600, %v647
        %654 = vst.msk [vmem:[%s652 + $0x8] sm:$0xff] %vm600, %v649
        %655 = vrot.lane.b32.xlu0 %v588, 32
        %v656 = vpop.permute.xlu0 %655
        %657 = vrot.lane.b32.xlu0 %v594, 32
        %v658 = vpop.permute.xlu0 %657
        %s661 = scalar_lea.vmem [#allocation3], 32
        %662 = vst.msk [vmem:[%s661] sm:$0xff] %vm600, %v656
        %663 = vst.msk [vmem:[%s661 + $0x8] sm:$0xff] %vm600, %v658
        %664 = vrot.lane.b32.xlu0 %v590, 96
        %v665 = vpop.permute.xlu0 %664
        %666 = vrot.lane.b32.xlu0 %v596, 96
        %v667 = vpop.permute.xlu0 %666
        %s670 = scalar_lea.vmem [#allocation4], 32
        %671 = vst.msk [vmem:[%s670] sm:$0xff] %vm600, %v665
        %672 = vst.msk [vmem:[%s670 + $0x8] sm:$0xff] %vm600, %v667
        %673 = vrot.lane.b32.xlu0 %v598, 80
        %v674 = vpop.permute.xlu0 %673
        %675 = vrot.lane.b32.xlu0 %v599, 80
        %v676 = vpop.permute.xlu0 %675
        %s679 = scalar_lea.vmem [#allocation2], 48
        %680 = vst.msk [vmem:[%s679] sm:$0xff] %vm600, %v674
        %681 = vst.msk [vmem:[%s679 + $0x8] sm:$0xff] %vm600, %v676
        %682 = vrot.lane.b32.xlu0 %v588, 16
        %v683 = vpop.permute.xlu0 %682
        %684 = vrot.lane.b32.xlu0 %v594, 16
        %v685 = vpop.permute.xlu0 %684
        %s688 = scalar_lea.vmem [#allocation3], 48
        %689 = vst.msk [vmem:[%s688] sm:$0xff] %vm600, %v683
        %690 = vst.msk [vmem:[%s688 + $0x8] sm:$0xff] %vm600, %v685
        %691 = vrot.lane.b32.xlu0 %v590, 80
        %v692 = vpop.permute.xlu0 %691
        %693 = vrot.lane.b32.xlu0 %v596, 80
        %v694 = vpop.permute.xlu0 %693
        %s697 = scalar_lea.vmem [#allocation4], 48
        %698 = vst.msk [vmem:[%s697] sm:$0xff] %vm600, %v692
        %699 = vst.msk [vmem:[%s697 + $0x8] sm:$0xff] %vm600, %v694
        %v700 = vlaneseq
        %v701 = vshrl.u32 %v700, 7
        %v702 = vlaneseq
        %v703 = vand.u32 %v702, 127
        %vm704 = vcmp.ge.s32.totalorder %v701, %v703
        %v705 = vld [vmem:[%s5] sm:$0xff]
        %v706 = vld [vmem:[%s5 + $0x8] sm:$0xff]
        %v707 = vld [vmem:[%s5 + $0x10] sm:$0xff]
        %v708 = vld [vmem:[%s5 + $0x18] sm:$0xff]
        %v709 = vld [vmem:[%s5 + $0x20] sm:$0xff]
        %v710 = vld [vmem:[%s5 + $0x28] sm:$0xff]
        %v711 = vld [vmem:[%s5 + $0x30] sm:$0xff]
        %v712 = vld [vmem:[%s5 + $0x38] sm:$0xff]
        %v713 = vld [vmem:[%s6] sm:$0x1]
        %v714 = vld [vmem:[#allocation2] sm:$0xff]
        %v715 = vld [vmem:[#allocation2 + $0x10] sm:$0xff]
        %v716 = vld [vmem:[#allocation2 + $0x20] sm:$0xff]
        %v717 = vld [vmem:[#allocation2 + $0x30] sm:$0xff]
        %v718 = vld [vmem:[#allocation3] sm:$0xff]
        %v719 = vld [vmem:[#allocation3 + $0x10] sm:$0xff]
        %v720 = vld [vmem:[#allocation3 + $0x20] sm:$0xff]
        %v721 = vld [vmem:[#allocation3 + $0x30] sm:$0xff]
        %v722 = vld [vmem:[#allocation4] sm:$0xff]
        %v723 = vld [vmem:[#allocation4 + $0x10] sm:$0xff]
        %v724 = vld [vmem:[#allocation4 + $0x20] sm:$0xff]
        %v725 = vld [vmem:[#allocation4 + $0x30] sm:$0xff]
        %v727 = vsel %vm600, %v714, 0
        %v730 = vsel %vm600, %v718, 0
        %732 = vmatprep.subr.mxu0 0.0
        %733 = vmatpush1.xpose.msra.mxu0 0.0
        %734 = vmatprep.subr.mxu0 0.0
        %735 = vmatpush1.xpose.msra.mxu0 0.0
        %736 = vmatprep.subr.mxu0 0.0
        %737 = vmatpush1.xpose.msra.mxu0 0.0
        %738 = vmatprep.subr.mxu0 0.0
        %739 = vmatpush1.xpose.msra.mxu0 0.0
        %740 = vmatprep.subr.mxu0 0.0
        %741 = vmatpush1.xpose.msra.mxu0 0.0
        %742 = vmatprep.subr.mxu0 0.0
        %743 = vmatpush1.xpose.msra.mxu0 0.0
        %744 = vmatprep.subr.mxu0 0.0
        %745 = vmatpush1.xpose.msra.mxu0 0.0
        %746 = vmatprep.subr.mxu0 0.0
        %747 = vmatpush1.xpose.msra.mxu0 0.0
        %748 = vmatprep.subr.mxu0 0.0
        %749 = vmatpush1.xpose.msra.mxu0 0.0
        %750 = vmatprep.subr.mxu0 0.0
        %751 = vmatpush1.xpose.msra.mxu0 0.0
        %752 = vmatprep.subr.mxu0 0.0
        %753 = vmatpush1.xpose.msra.mxu0 0.0
        %754 = vmatprep.subr.mxu0 0.0
        %755 = vmatpush1.xpose.msra.mxu0 0.0
        %756 = vmatprep.subr.mxu0 0.0
        %757 = vmatpush1.xpose.msra.mxu0 0.0
        %758 = vmatprep.subr.mxu0 0.0
        %759 = vmatpush1.xpose.msra.mxu0 0.0
        %760 = vmatprep.subr.mxu0 0.0
        %761 = vmatpush1.xpose.msra.mxu0 0.0
        %762 = vmatprep.subr.mxu0 0.0
        %763 = vmatpush1.xpose.msra.mxu0 %v730
        %764 = vmatprep.subr.mxu0 0.0
        %765 = vmatpush2.xpose.msra.mxu0 0.0
        %766 = vmatprep.subr.mxu0 0.0
        %767 = vmatpush2.xpose.msra.mxu0 0.0
        %768 = vmatprep.subr.mxu0 0.0
        %769 = vmatpush2.xpose.msra.mxu0 0.0
        %770 = vmatprep.subr.mxu0 0.0
        %771 = vmatpush2.xpose.msra.mxu0 0.0
        %772 = vmatprep.subr.mxu0 0.0
        %773 = vmatpush2.xpose.msra.mxu0 0.0
        %774 = vmatprep.subr.mxu0 0.0
        %775 = vmatpush2.xpose.msra.mxu0 0.0
        %776 = vmatprep.subr.mxu0 0.0
        %777 = vmatpush2.xpose.msra.mxu0 0.0
        %778 = vmatprep.subr.mxu0 0.0
        %779 = vmatpush2.xpose.msra.mxu0 0.0
        %780 = vmatprep.subr.mxu0 0.0
        %781 = vmatpush2.xpose.msra.mxu0 0.0
        %782 = vmatprep.subr.mxu0 0.0
        %783 = vmatpush2.xpose.msra.mxu0 0.0
        %784 = vmatprep.subr.mxu0 0.0
        %785 = vmatpush2.xpose.msra.mxu0 0.0
        %786 = vmatprep.subr.mxu0 0.0
        %787 = vmatpush2.xpose.msra.mxu0 0.0
        %788 = vmatprep.subr.mxu0 0.0
        %789 = vmatpush2.xpose.msra.mxu0 0.0
        %790 = vmatprep.subr.mxu0 0.0
        %791 = vmatpush2.xpose.msra.mxu0 0.0
        %792 = vmatprep.subr.mxu0 0.0
        %793 = vmatpush2.xpose.msra.mxu0 0.0
        %794 = vmatprep.subr.mxu0 0.0
        %795 = vmatpush2.xpose.msra.mxu0 0.0
        %796 = vmatprep.mubr.f32.mxu0 0.0
        %797 = vmatmul.mubr.f32.gmra.mxu0 %v727
        %v798 = vpop.f32.mrf.mxu0
        %v799 = vadd.f32 0.0, %v798
        %v800 = vpop.f32.mrf.mxu0
        %801 = vdwg.mxu0
        %v803 = vsel %vm600, %v715, 0
        %v806 = vsel %vm600, %v719, 0
        %808 = vmatprep.subr.mxu0 0.0
        %809 = vmatpush1.xpose.msra.mxu0 0.0
        %810 = vmatprep.subr.mxu0 0.0
        %811 = vmatpush1.xpose.msra.mxu0 0.0
        %812 = vmatprep.subr.mxu0 0.0
        %813 = vmatpush1.xpose.msra.mxu0 0.0
        %814 = vmatprep.subr.mxu0 0.0
        %815 = vmatpush1.xpose.msra.mxu0 0.0
        %816 = vmatprep.subr.mxu0 0.0
        %817 = vmatpush1.xpose.msra.mxu0 0.0
        %818 = vmatprep.subr.mxu0 0.0
        %819 = vmatpush1.xpose.msra.mxu0 0.0
        %820 = vmatprep.subr.mxu0 0.0
        %821 = vmatpush1.xpose.msra.mxu0 0.0
        %822 = vmatprep.subr.mxu0 0.0
        %823 = vmatpush1.xpose.msra.mxu0 0.0
        %824 = vmatprep.subr.mxu0 0.0
        %825 = vmatpush1.xpose.msra.mxu0 0.0
        %826 = vmatprep.subr.mxu0 0.0
        %827 = vmatpush1.xpose.msra.mxu0 0.0
        %828 = vmatprep.subr.mxu0 0.0
        %829 = vmatpush1.xpose.msra.mxu0 0.0
        %830 = vmatprep.subr.mxu0 0.0
        %831 = vmatpush1.xpose.msra.mxu0 0.0
        %832 = vmatprep.subr.mxu0 0.0
        %833 = vmatpush1.xpose.msra.mxu0 0.0
        %834 = vmatprep.subr.mxu0 0.0
        %835 = vmatpush1.xpose.msra.mxu0 0.0
        %836 = vmatprep.subr.mxu0 0.0
        %837 = vmatpush1.xpose.msra.mxu0 0.0
        %838 = vmatprep.subr.mxu0 0.0
        %839 = vmatpush1.xpose.msra.mxu0 %v806
        %840 = vmatprep.subr.mxu0 0.0
        %841 = vmatpush2.xpose.msra.mxu0 0.0
        %842 = vmatprep.subr.mxu0 0.0
        %843 = vmatpush2.xpose.msra.mxu0 0.0
        %844 = vmatprep.subr.mxu0 0.0
        %845 = vmatpush2.xpose.msra.mxu0 0.0
        %846 = vmatprep.subr.mxu0 0.0
        %847 = vmatpush2.xpose.msra.mxu0 0.0
        %848 = vmatprep.subr.mxu0 0.0
        %849 = vmatpush2.xpose.msra.mxu0 0.0
        %850 = vmatprep.subr.mxu0 0.0
        %851 = vmatpush2.xpose.msra.mxu0 0.0
        %852 = vmatprep.subr.mxu0 0.0
        %853 = vmatpush2.xpose.msra.mxu0 0.0
        %854 = vmatprep.subr.mxu0 0.0
        %855 = vmatpush2.xpose.msra.mxu0 0.0
        %856 = vmatprep.subr.mxu0 0.0
        %857 = vmatpush2.xpose.msra.mxu0 0.0
        %858 = vmatprep.subr.mxu0 0.0
        %859 = vmatpush2.xpose.msra.mxu0 0.0
        %860 = vmatprep.subr.mxu0 0.0
        %861 = vmatpush2.xpose.msra.mxu0 0.0
        %862 = vmatprep.subr.mxu0 0.0
        %863 = vmatpush2.xpose.msra.mxu0 0.0
        %864 = vmatprep.subr.mxu0 0.0
        %865 = vmatpush2.xpose.msra.mxu0 0.0
        %866 = vmatprep.subr.mxu0 0.0
        %867 = vmatpush2.xpose.msra.mxu0 0.0
        %868 = vmatprep.subr.mxu0 0.0
        %869 = vmatpush2.xpose.msra.mxu0 0.0
        %870 = vmatprep.subr.mxu0 0.0
        %871 = vmatpush2.xpose.msra.mxu0 0.0
        %872 = vmatprep.mubr.f32.mxu0 0.0
        %873 = vmatmul.mubr.f32.gmra.mxu0 %v803
        %v874 = vpop.f32.mrf.mxu0
        %v875 = vadd.f32 0.0, %v874
        %v876 = vpop.f32.mrf.mxu0
        %877 = vdwg.mxu0
        %v879 = vsel %vm600, %v716, 0
        %v882 = vsel %vm600, %v720, 0
        %884 = vmatprep.subr.mxu0 0.0
        %885 = vmatpush1.xpose.msra.mxu0 0.0
        %886 = vmatprep.subr.mxu0 0.0
        %887 = vmatpush1.xpose.msra.mxu0 0.0
        %888 = vmatprep.subr.mxu0 0.0
        %889 = vmatpush1.xpose.msra.mxu0 0.0
        %890 = vmatprep.subr.mxu0 0.0
        %891 = vmatpush1.xpose.msra.mxu0 0.0
        %892 = vmatprep.subr.mxu0 0.0
        %893 = vmatpush1.xpose.msra.mxu0 0.0
        %894 = vmatprep.subr.mxu0 0.0
        %895 = vmatpush1.xpose.msra.mxu0 0.0
        %896 = vmatprep.subr.mxu0 0.0
        %897 = vmatpush1.xpose.msra.mxu0 0.0
        %898 = vmatprep.subr.mxu0 0.0
        %899 = vmatpush1.xpose.msra.mxu0 0.0
        %900 = vmatprep.subr.mxu0 0.0
        %901 = vmatpush1.xpose.msra.mxu0 0.0
        %902 = vmatprep.subr.mxu0 0.0
        %903 = vmatpush1.xpose.msra.mxu0 0.0
        %904 = vmatprep.subr.mxu0 0.0
        %905 = vmatpush1.xpose.msra.mxu0 0.0
        %906 = vmatprep.subr.mxu0 0.0
        %907 = vmatpush1.xpose.msra.mxu0 0.0
        %908 = vmatprep.subr.mxu0 0.0
        %909 = vmatpush1.xpose.msra.mxu0 0.0
        %910 = vmatprep.subr.mxu0 0.0
        %911 = vmatpush1.xpose.msra.mxu0 0.0
        %912 = vmatprep.subr.mxu0 0.0
        %913 = vmatpush1.xpose.msra.mxu0 0.0
        %914 = vmatprep.subr.mxu0 0.0
        %915 = vmatpush1.xpose.msra.mxu0 %v882
        %916 = vmatprep.subr.mxu0 0.0
        %917 = vmatpush2.xpose.msra.mxu0 0.0
        %918 = vmatprep.subr.mxu0 0.0
        %919 = vmatpush2.xpose.msra.mxu0 0.0
        %920 = vmatprep.subr.mxu0 0.0
        %921 = vmatpush2.xpose.msra.mxu0 0.0
        %922 = vmatprep.subr.mxu0 0.0
        %923 = vmatpush2.xpose.msra.mxu0 0.0
        %924 = vmatprep.subr.mxu0 0.0
        %925 = vmatpush2.xpose.msra.mxu0 0.0
        %926 = vmatprep.subr.mxu0 0.0
        %927 = vmatpush2.xpose.msra.mxu0 0.0
        %928 = vmatprep.subr.mxu0 0.0
        %929 = vmatpush2.xpose.msra.mxu0 0.0
        %930 = vmatprep.subr.mxu0 0.0
        %931 = vmatpush2.xpose.msra.mxu0 0.0
        %932 = vmatprep.subr.mxu0 0.0
        %933 = vmatpush2.xpose.msra.mxu0 0.0
        %934 = vmatprep.subr.mxu0 0.0
        %935 = vmatpush2.xpose.msra.mxu0 0.0
        %936 = vmatprep.subr.mxu0 0.0
        %937 = vmatpush2.xpose.msra.mxu0 0.0
        %938 = vmatprep.subr.mxu0 0.0
        %939 = vmatpush2.xpose.msra.mxu0 0.0
        %940 = vmatprep.subr.mxu0 0.0
        %941 = vmatpush2.xpose.msra.mxu0 0.0
        %942 = vmatprep.subr.mxu0 0.0
        %943 = vmatpush2.xpose.msra.mxu0 0.0
        %944 = vmatprep.subr.mxu0 0.0
        %945 = vmatpush2.xpose.msra.mxu0 0.0
        %946 = vmatprep.subr.mxu0 0.0
        %947 = vmatpush2.xpose.msra.mxu0 0.0
        %948 = vmatprep.mubr.f32.mxu0 0.0
        %949 = vmatmul.mubr.f32.gmra.mxu0 %v879
        %v950 = vpop.f32.mrf.mxu0
        %v951 = vadd.f32 0.0, %v950
        %v952 = vpop.f32.mrf.mxu0
        %953 = vdwg.mxu0
        %v955 = vsel %vm600, %v717, 0
        %v958 = vsel %vm600, %v721, 0
        %960 = vmatprep.subr.mxu0 0.0
        %961 = vmatpush1.xpose.msra.mxu0 0.0
        %962 = vmatprep.subr.mxu0 0.0
        %963 = vmatpush1.xpose.msra.mxu0 0.0
        %964 = vmatprep.subr.mxu0 0.0
        %965 = vmatpush1.xpose.msra.mxu0 0.0
        %966 = vmatprep.subr.mxu0 0.0
        %967 = vmatpush1.xpose.msra.mxu0 0.0
        %968 = vmatprep.subr.mxu0 0.0
        %969 = vmatpush1.xpose.msra.mxu0 0.0
        %970 = vmatprep.subr.mxu0 0.0
        %971 = vmatpush1.xpose.msra.mxu0 0.0
        %972 = vmatprep.subr.mxu0 0.0
        %973 = vmatpush1.xpose.msra.mxu0 0.0
        %974 = vmatprep.subr.mxu0 0.0
        %975 = vmatpush1.xpose.msra.mxu0 0.0
        %976 = vmatprep.subr.mxu0 0.0
        %977 = vmatpush1.xpose.msra.mxu0 0.0
        %978 = vmatprep.subr.mxu0 0.0
        %979 = vmatpush1.xpose.msra.mxu0 0.0
        %980 = vmatprep.subr.mxu0 0.0
        %981 = vmatpush1.xpose.msra.mxu0 0.0
        %982 = vmatprep.subr.mxu0 0.0
        %983 = vmatpush1.xpose.msra.mxu0 0.0
        %984 = vmatprep.subr.mxu0 0.0
        %985 = vmatpush1.xpose.msra.mxu0 0.0
        %986 = vmatprep.subr.mxu0 0.0
        %987 = vmatpush1.xpose.msra.mxu0 0.0
        %988 = vmatprep.subr.mxu0 0.0
        %989 = vmatpush1.xpose.msra.mxu0 0.0
        %990 = vmatprep.subr.mxu0 0.0
        %991 = vmatpush1.xpose.msra.mxu0 %v958
        %992 = vmatprep.subr.mxu0 0.0
        %993 = vmatpush2.xpose.msra.mxu0 0.0
        %994 = vmatprep.subr.mxu0 0.0
        %995 = vmatpush2.xpose.msra.mxu0 0.0
        %996 = vmatprep.subr.mxu0 0.0
        %997 = vmatpush2.xpose.msra.mxu0 0.0
        %998 = vmatprep.subr.mxu0 0.0
        %999 = vmatpush2.xpose.msra.mxu0 0.0
        %1000 = vmatprep.subr.mxu0 0.0
        %1001 = vmatpush2.xpose.msra.mxu0 0.0
        %1002 = vmatprep.subr.mxu0 0.0
        %1003 = vmatpush2.xpose.msra.mxu0 0.0
        %1004 = vmatprep.subr.mxu0 0.0
        %1005 = vmatpush2.xpose.msra.mxu0 0.0
        %1006 = vmatprep.subr.mxu0 0.0
        %1007 = vmatpush2.xpose.msra.mxu0 0.0
        %1008 = vmatprep.subr.mxu0 0.0
        %1009 = vmatpush2.xpose.msra.mxu0 0.0
        %1010 = vmatprep.subr.mxu0 0.0
        %1011 = vmatpush2.xpose.msra.mxu0 0.0
        %1012 = vmatprep.subr.mxu0 0.0
        %1013 = vmatpush2.xpose.msra.mxu0 0.0
        %1014 = vmatprep.subr.mxu0 0.0
        %1015 = vmatpush2.xpose.msra.mxu0 0.0
        %1016 = vmatprep.subr.mxu0 0.0
        %1017 = vmatpush2.xpose.msra.mxu0 0.0
        %1018 = vmatprep.subr.mxu0 0.0
        %1019 = vmatpush2.xpose.msra.mxu0 0.0
        %1020 = vmatprep.subr.mxu0 0.0
        %1021 = vmatpush2.xpose.msra.mxu0 0.0
        %1022 = vmatprep.subr.mxu0 0.0
        %1023 = vmatpush2.xpose.msra.mxu0 0.0
        %1024 = vmatprep.mubr.f32.mxu0 0.0
        %1025 = vmatmul.mubr.f32.gmra.mxu0 %v955
        %v1026 = vpop.f32.mrf.mxu0
        %v1027 = vadd.f32 0.0, %v1026
        %v1028 = vpop.f32.mrf.mxu0
        %1029 = vdwg.mxu0
        %v1030 = vsel %vm704, 1, 0
        %vm1031 = vcmp.eq.s32.totalorder %v1030, 1
        %v1032 = vsel %vm1031, %v799, -1e+30
        %v1033 = vsel %vm1031, %v875, -1e+30
        %v1034 = vsel %vm1031, %v951, -1e+30
        %v1035 = vsel %vm1031, %v1027, -1e+30
        %vm1036 = vcmask 64512
        %v1037 = vsel %vm1036, %v1032, -inf
        %1038 = vmax.xlane.f32.xlu0 %v1037
        %v1039 = vpop.xlane.xlu0 %1038
        %v1040 = vsel %vm1036, %v1033, -inf
        %1041 = vmax.xlane.f32.xlu0 %v1040
        %v1042 = vpop.xlane.xlu0 %1041
        %v1043 = vsel %vm1036, %v1034, -inf
        %1044 = vmax.xlane.f32.xlu0 %v1043
        %v1045 = vpop.xlane.xlu0 %1044
        %v1046 = vsel %vm1036, %v1035, -inf
        %1047 = vmax.xlane.f32.xlu0 %v1046
        %v1048 = vpop.xlane.xlu0 %1047
        %v1049 = vmax.f32 %v1039, -1e+30
        %v1050 = vmax.f32 %v1042, -1e+30
        %v1051 = vmax.f32 %v1045, -1e+30
        %v1052 = vmax.f32 %v1048, -1e+30
        %v1053 = vsub.f32 -1e+30, %v1049
        %v1054 = vsub.f32 -1e+30, %v1050
        %v1055 = vsub.f32 -1e+30, %v1051
        %v1056 = vsub.f32 -1e+30, %v1052
        %v1057 = vmul.f32 %v1053, 1.442695
        %v1058 = vpow.pop %v1057
        %v1059 = vmul.f32 %v1054, 1.442695
        %v1060 = vpow.pop %v1059
        %v1061 = vmul.f32 %v1055, 1.442695
        %v1062 = vpow.pop %v1061
        %v1063 = vmul.f32 %v1056, 1.442695
        %v1064 = vpow.pop %v1063
        %v1065 = vsub.f32 %v1032, %v1049
        %v1066 = vsub.f32 %v1033, %v1050
        %v1067 = vsub.f32 %v1034, %v1051
        %v1068 = vsub.f32 %v1035, %v1052
        %v1069 = vmul.f32 %v1065, 1.442695
        %v1070 = vpow.pop %v1069
        %v1071 = vmul.f32 %v1066, 1.442695
        %v1072 = vpow.pop %v1071
        %v1073 = vmul.f32 %v1067, 1.442695
        %v1074 = vpow.pop %v1073
        %v1075 = vmul.f32 %v1068, 1.442695
        %v1076 = vpow.pop %v1075
        %v1077 = vmul.f32 %v1058, 0.0
        %v1078 = vmul.f32 %v1060, 0.0
        %v1079 = vmul.f32 %v1062, 0.0
        %v1080 = vmul.f32 %v1064, 0.0
        %v1081 = vsel %vm1036, %v1070, 0.0
        %1082 = vadd.xlane.f32.xlu0 %v1081
        %v1083 = vpop.xlane.xlu0 %1082
        %v1084 = vsel %vm1036, %v1072, 0.0
        %1085 = vadd.xlane.f32.xlu0 %v1084
        %v1086 = vpop.xlane.xlu0 %1085
        %v1087 = vsel %vm1036, %v1074, 0.0
        %1088 = vadd.xlane.f32.xlu0 %v1087
        %v1089 = vpop.xlane.xlu0 %1088
        %v1090 = vsel %vm1036, %v1076, 0.0
        %1091 = vadd.xlane.f32.xlu0 %v1090
        %v1092 = vpop.xlane.xlu0 %1091
        %v1093 = vadd.f32 %v1077, %v1083
        %v1094 = vadd.f32 %v1078, %v1086
        %v1095 = vadd.f32 %v1079, %v1089
        %v1096 = vadd.f32 %v1080, %v1092
        %v1098 = vsel %vm1036, %v1070, 0
        %1100 = vmatprep.subr.mxu0 0.0
        %1101 = vmatpush1.msra.mxu0 0.0
        %1102 = vmatprep.subr.mxu0 0.0
        %1103 = vmatpush1.msra.mxu0 0.0
        %1104 = vmatprep.subr.mxu0 0.0
        %1105 = vmatpush1.msra.mxu0 0.0
        %1106 = vmatprep.subr.mxu0 0.0
        %1107 = vmatpush1.msra.mxu0 0.0
        %1108 = vmatprep.subr.mxu0 0.0
        %1109 = vmatpush1.msra.mxu0 0.0
        %1110 = vmatprep.subr.mxu0 0.0
        %1111 = vmatpush1.msra.mxu0 0.0
        %1112 = vmatprep.subr.mxu0 0.0
        %1113 = vmatpush1.msra.mxu0 0.0
        %1114 = vmatprep.subr.mxu0 0.0
        %1115 = vmatpush1.msra.mxu0 0.0
        %1116 = vmatprep.subr.mxu0 0.0
        %1117 = vmatpush1.msra.mxu0 0.0
        %1118 = vmatprep.subr.mxu0 0.0
        %1119 = vmatpush1.msra.mxu0 0.0
        %1120 = vmatprep.subr.mxu0 0.0
        %1121 = vmatpush1.msra.mxu0 0.0
        %1122 = vmatprep.subr.mxu0 0.0
        %1123 = vmatpush1.msra.mxu0 0.0
        %1124 = vmatprep.subr.mxu0 0.0
        %1125 = vmatpush1.msra.mxu0 0.0
        %1126 = vmatprep.subr.mxu0 0.0
        %1127 = vmatpush1.msra.mxu0 0.0
        %1128 = vmatprep.subr.mxu0 0.0
        %1129 = vmatpush1.msra.mxu0 0.0
        %1130 = vmatprep.subr.mxu0 0.0
        %1131 = vmatpush1.msra.mxu0 %v722
        %1132 = vmatprep.subr.mxu0 0.0
        %1133 = vmatpush2.msra.mxu0 0.0
        %1134 = vmatprep.subr.mxu0 0.0
        %1135 = vmatpush2.msra.mxu0 0.0
        %1136 = vmatprep.subr.mxu0 0.0
        %1137 = vmatpush2.msra.mxu0 0.0
        %1138 = vmatprep.subr.mxu0 0.0
        %1139 = vmatpush2.msra.mxu0 0.0
        %1140 = vmatprep.subr.mxu0 0.0
        %1141 = vmatpush2.msra.mxu0 0.0
        %1142 = vmatprep.subr.mxu0 0.0
        %1143 = vmatpush2.msra.mxu0 0.0
        %1144 = vmatprep.subr.mxu0 0.0
        %1145 = vmatpush2.msra.mxu0 0.0
        %1146 = vmatprep.subr.mxu0 0.0
        %1147 = vmatpush2.msra.mxu0 0.0
        %1148 = vmatprep.subr.mxu0 0.0
        %1149 = vmatpush2.msra.mxu0 0.0
        %1150 = vmatprep.subr.mxu0 0.0
        %1151 = vmatpush2.msra.mxu0 0.0
        %1152 = vmatprep.subr.mxu0 0.0
        %1153 = vmatpush2.msra.mxu0 0.0
        %1154 = vmatprep.subr.mxu0 0.0
        %1155 = vmatpush2.msra.mxu0 0.0
        %1156 = vmatprep.subr.mxu0 0.0
        %1157 = vmatpush2.msra.mxu0 0.0
        %1158 = vmatprep.subr.mxu0 0.0
        %1159 = vmatpush2.msra.mxu0 0.0
        %1160 = vmatprep.subr.mxu0 0.0
        %1161 = vmatpush2.msra.mxu0 0.0
        %1162 = vmatprep.subr.mxu0 0.0
        %1163 = vmatpush2.msra.mxu0 0.0
        %1164 = vmatprep.mubr.f32.mxu0 0.0
        %1165 = vmatmul.mubr.f32.gmra.mxu0 %v1098
        %v1166 = vpop.f32.mrf.mxu0
        %v1167 = vadd.f32 0.0, %v1166
        %v1168 = vpop.f32.mrf.mxu0
        %1169 = vdwg.mxu0
        %v1171 = vsel %vm1036, %v1072, 0
        %1173 = vmatprep.subr.mxu0 0.0
        %1174 = vmatpush1.msra.mxu0 0.0
        %1175 = vmatprep.subr.mxu0 0.0
        %1176 = vmatpush1.msra.mxu0 0.0
        %1177 = vmatprep.subr.mxu0 0.0
        %1178 = vmatpush1.msra.mxu0 0.0
        %1179 = vmatprep.subr.mxu0 0.0
        %1180 = vmatpush1.msra.mxu0 0.0
        %1181 = vmatprep.subr.mxu0 0.0
        %1182 = vmatpush1.msra.mxu0 0.0
        %1183 = vmatprep.subr.mxu0 0.0
        %1184 = vmatpush1.msra.mxu0 0.0
        %1185 = vmatprep.subr.mxu0 0.0
        %1186 = vmatpush1.msra.mxu0 0.0
        %1187 = vmatprep.subr.mxu0 0.0
        %1188 = vmatpush1.msra.mxu0 0.0
        %1189 = vmatprep.subr.mxu0 0.0
        %1190 = vmatpush1.msra.mxu0 0.0
        %1191 = vmatprep.subr.mxu0 0.0
        %1192 = vmatpush1.msra.mxu0 0.0
        %1193 = vmatprep.subr.mxu0 0.0
        %1194 = vmatpush1.msra.mxu0 0.0
        %1195 = vmatprep.subr.mxu0 0.0
        %1196 = vmatpush1.msra.mxu0 0.0
        %1197 = vmatprep.subr.mxu0 0.0
        %1198 = vmatpush1.msra.mxu0 0.0
        %1199 = vmatprep.subr.mxu0 0.0
        %1200 = vmatpush1.msra.mxu0 0.0
        %1201 = vmatprep.subr.mxu0 0.0
        %1202 = vmatpush1.msra.mxu0 0.0
        %1203 = vmatprep.subr.mxu0 0.0
        %1204 = vmatpush1.msra.mxu0 %v723
        %1205 = vmatprep.subr.mxu0 0.0
        %1206 = vmatpush2.msra.mxu0 0.0
        %1207 = vmatprep.subr.mxu0 0.0
        %1208 = vmatpush2.msra.mxu0 0.0
        %1209 = vmatprep.subr.mxu0 0.0
        %1210 = vmatpush2.msra.mxu0 0.0
        %1211 = vmatprep.subr.mxu0 0.0
        %1212 = vmatpush2.msra.mxu0 0.0
        %1213 = vmatprep.subr.mxu0 0.0
        %1214 = vmatpush2.msra.mxu0 0.0
        %1215 = vmatprep.subr.mxu0 0.0
        %1216 = vmatpush2.msra.mxu0 0.0
        %1217 = vmatprep.subr.mxu0 0.0
        %1218 = vmatpush2.msra.mxu0 0.0
        %1219 = vmatprep.subr.mxu0 0.0
        %1220 = vmatpush2.msra.mxu0 0.0
        %1221 = vmatprep.subr.mxu0 0.0
        %1222 = vmatpush2.msra.mxu0 0.0
        %1223 = vmatprep.subr.mxu0 0.0
        %1224 = vmatpush2.msra.mxu0 0.0
        %1225 = vmatprep.subr.mxu0 0.0
        %1226 = vmatpush2.msra.mxu0 0.0
        %1227 = vmatprep.subr.mxu0 0.0
        %1228 = vmatpush2.msra.mxu0 0.0
        %1229 = vmatprep.subr.mxu0 0.0
        %1230 = vmatpush2.msra.mxu0 0.0
        %1231 = vmatprep.subr.mxu0 0.0
        %1232 = vmatpush2.msra.mxu0 0.0
        %1233 = vmatprep.subr.mxu0 0.0
        %1234 = vmatpush2.msra.mxu0 0.0
        %1235 = vmatprep.subr.mxu0 0.0
        %1236 = vmatpush2.msra.mxu0 0.0
        %1237 = vmatprep.mubr.f32.mxu0 0.0
        %1238 = vmatmul.mubr.f32.gmra.mxu0 %v1171
        %v1239 = vpop.f32.mrf.mxu0
        %v1240 = vadd.f32 0.0, %v1239
        %v1241 = vpop.f32.mrf.mxu0
        %1242 = vdwg.mxu0
        %v1244 = vsel %vm1036, %v1074, 0
        %1246 = vmatprep.subr.mxu0 0.0
        %1247 = vmatpush1.msra.mxu0 0.0
        %1248 = vmatprep.subr.mxu0 0.0
        %1249 = vmatpush1.msra.mxu0 0.0
        %1250 = vmatprep.subr.mxu0 0.0
        %1251 = vmatpush1.msra.mxu0 0.0
        %1252 = vmatprep.subr.mxu0 0.0
        %1253 = vmatpush1.msra.mxu0 0.0
        %1254 = vmatprep.subr.mxu0 0.0
        %1255 = vmatpush1.msra.mxu0 0.0
        %1256 = vmatprep.subr.mxu0 0.0
        %1257 = vmatpush1.msra.mxu0 0.0
        %1258 = vmatprep.subr.mxu0 0.0
        %1259 = vmatpush1.msra.mxu0 0.0
        %1260 = vmatprep.subr.mxu0 0.0
        %1261 = vmatpush1.msra.mxu0 0.0
        %1262 = vmatprep.subr.mxu0 0.0
        %1263 = vmatpush1.msra.mxu0 0.0
        %1264 = vmatprep.subr.mxu0 0.0
        %1265 = vmatpush1.msra.mxu0 0.0
        %1266 = vmatprep.subr.mxu0 0.0
        %1267 = vmatpush1.msra.mxu0 0.0
        %1268 = vmatprep.subr.mxu0 0.0
        %1269 = vmatpush1.msra.mxu0 0.0
        %1270 = vmatprep.subr.mxu0 0.0
        %1271 = vmatpush1.msra.mxu0 0.0
        %1272 = vmatprep.subr.mxu0 0.0
        %1273 = vmatpush1.msra.mxu0 0.0
        %1274 = vmatprep.subr.mxu0 0.0
        %1275 = vmatpush1.msra.mxu0 0.0
        %1276 = vmatprep.subr.mxu0 0.0
        %1277 = vmatpush1.msra.mxu0 %v724
        %1278 = vmatprep.subr.mxu0 0.0
        %1279 = vmatpush2.msra.mxu0 0.0
        %1280 = vmatprep.subr.mxu0 0.0
        %1281 = vmatpush2.msra.mxu0 0.0
        %1282 = vmatprep.subr.mxu0 0.0
        %1283 = vmatpush2.msra.mxu0 0.0
        %1284 = vmatprep.subr.mxu0 0.0
        %1285 = vmatpush2.msra.mxu0 0.0
        %1286 = vmatprep.subr.mxu0 0.0
        %1287 = vmatpush2.msra.mxu0 0.0
        %1288 = vmatprep.subr.mxu0 0.0
        %1289 = vmatpush2.msra.mxu0 0.0
        %1290 = vmatprep.subr.mxu0 0.0
        %1291 = vmatpush2.msra.mxu0 0.0
        %1292 = vmatprep.subr.mxu0 0.0
        %1293 = vmatpush2.msra.mxu0 0.0
        %1294 = vmatprep.subr.mxu0 0.0
        %1295 = vmatpush2.msra.mxu0 0.0
        %1296 = vmatprep.subr.mxu0 0.0
        %1297 = vmatpush2.msra.mxu0 0.0
        %1298 = vmatprep.subr.mxu0 0.0
        %1299 = vmatpush2.msra.mxu0 0.0
        %1300 = vmatprep.subr.mxu0 0.0
        %1301 = vmatpush2.msra.mxu0 0.0
        %1302 = vmatprep.subr.mxu0 0.0
        %1303 = vmatpush2.msra.mxu0 0.0
        %1304 = vmatprep.subr.mxu0 0.0
        %1305 = vmatpush2.msra.mxu0 0.0
        %1306 = vmatprep.subr.mxu0 0.0
        %1307 = vmatpush2.msra.mxu0 0.0
        %1308 = vmatprep.subr.mxu0 0.0
        %1309 = vmatpush2.msra.mxu0 0.0
        %1310 = vmatprep.mubr.f32.mxu0 0.0
        %1311 = vmatmul.mubr.f32.gmra.mxu0 %v1244
        %v1312 = vpop.f32.mrf.mxu0
        %v1313 = vadd.f32 0.0, %v1312
        %v1314 = vpop.f32.mrf.mxu0
        %1315 = vdwg.mxu0
        %v1317 = vsel %vm1036, %v1076, 0
        %1319 = vmatprep.subr.mxu0 0.0
        %1320 = vmatpush1.msra.mxu0 0.0
        %1321 = vmatprep.subr.mxu0 0.0
        %1322 = vmatpush1.msra.mxu0 0.0
        %1323 = vmatprep.subr.mxu0 0.0
        %1324 = vmatpush1.msra.mxu0 0.0
        %1325 = vmatprep.subr.mxu0 0.0
        %1326 = vmatpush1.msra.mxu0 0.0
        %1327 = vmatprep.subr.mxu0 0.0
        %1328 = vmatpush1.msra.mxu0 0.0
        %1329 = vmatprep.subr.mxu0 0.0
        %1330 = vmatpush1.msra.mxu0 0.0
        %1331 = vmatprep.subr.mxu0 0.0
        %1332 = vmatpush1.msra.mxu0 0.0
        %1333 = vmatprep.subr.mxu0 0.0
        %1334 = vmatpush1.msra.mxu0 0.0
        %1335 = vmatprep.subr.mxu0 0.0
        %1336 = vmatpush1.msra.mxu0 0.0
        %1337 = vmatprep.subr.mxu0 0.0
        %1338 = vmatpush1.msra.mxu0 0.0
        %1339 = vmatprep.subr.mxu0 0.0
        %1340 = vmatpush1.msra.mxu0 0.0
        %1341 = vmatprep.subr.mxu0 0.0
        %1342 = vmatpush1.msra.mxu0 0.0
        %1343 = vmatprep.subr.mxu0 0.0
        %1344 = vmatpush1.msra.mxu0 0.0
        %1345 = vmatprep.subr.mxu0 0.0
        %1346 = vmatpush1.msra.mxu0 0.0
        %1347 = vmatprep.subr.mxu0 0.0
        %1348 = vmatpush1.msra.mxu0 0.0
        %1349 = vmatprep.subr.mxu0 0.0
        %1350 = vmatpush1.msra.mxu0 %v725
        %1351 = vmatprep.subr.mxu0 0.0
        %1352 = vmatpush2.msra.mxu0 0.0
        %1353 = vmatprep.subr.mxu0 0.0
        %1354 = vmatpush2.msra.mxu0 0.0
        %1355 = vmatprep.subr.mxu0 0.0
        %1356 = vmatpush2.msra.mxu0 0.0
        %1357 = vmatprep.subr.mxu0 0.0
        %1358 = vmatpush2.msra.mxu0 0.0
        %1359 = vmatprep.subr.mxu0 0.0
        %1360 = vmatpush2.msra.mxu0 0.0
        %1361 = vmatprep.subr.mxu0 0.0
        %1362 = vmatpush2.msra.mxu0 0.0
        %1363 = vmatprep.subr.mxu0 0.0
        %1364 = vmatpush2.msra.mxu0 0.0
        %1365 = vmatprep.subr.mxu0 0.0
        %1366 = vmatpush2.msra.mxu0 0.0
        %1367 = vmatprep.subr.mxu0 0.0
        %1368 = vmatpush2.msra.mxu0 0.0
        %1369 = vmatprep.subr.mxu0 0.0
        %1370 = vmatpush2.msra.mxu0 0.0
        %1371 = vmatprep.subr.mxu0 0.0
        %1372 = vmatpush2.msra.mxu0 0.0
        %1373 = vmatprep.subr.mxu0 0.0
        %1374 = vmatpush2.msra.mxu0 0.0
        %1375 = vmatprep.subr.mxu0 0.0
        %1376 = vmatpush2.msra.mxu0 0.0
        %1377 = vmatprep.subr.mxu0 0.0
        %1378 = vmatpush2.msra.mxu0 0.0
        %1379 = vmatprep.subr.mxu0 0.0
        %1380 = vmatpush2.msra.mxu0 0.0
        %1381 = vmatprep.subr.mxu0 0.0
        %1382 = vmatpush2.msra.mxu0 0.0
        %1383 = vmatprep.mubr.f32.mxu0 0.0
        %1384 = vmatmul.mubr.f32.gmra.mxu0 %v1317
        %v1385 = vpop.f32.mrf.mxu0
        %v1386 = vadd.f32 0.0, %v1385
        %v1387 = vpop.f32.mrf.mxu0
        %1388 = vdwg.mxu0
        %v1389 = vadd.f32 %v1077, %v1167
        %v1390 = vadd.f32 %v1078, %v1240
        %v1391 = vadd.f32 %v1079, %v1313
        %v1392 = vadd.f32 %v1080, %v1386
        %v1393 = vrcp.pop %v1093
        %v1394 = vrcp.pop %v1094
        %v1395 = vrcp.pop %v1095
        %v1396 = vrcp.pop %v1096
        %v1397 = vmul.f32 %v1389, %v1393
        %v1398 = vmul.f32 %v1390, %v1394
        %v1399 = vmul.f32 %v1391, %v1395
        %v1400 = vmul.f32 %v1392, %v1396
        %v1402 = vsel %vm600, %v1397, 0
        %1404 = vmatprep.subr.mxu0 0.0
        %1405 = vmatpush1.msra.mxu0 0.0
        %1406 = vmatprep.subr.mxu0 0.0
        %1407 = vmatpush1.msra.mxu0 0.0
        %1408 = vmatprep.subr.mxu0 0.0
        %1409 = vmatpush1.msra.mxu0 0.0
        %1410 = vmatprep.subr.mxu0 0.0
        %1411 = vmatpush1.msra.mxu0 0.0
        %1412 = vmatprep.subr.mxu0 0.0
        %1413 = vmatpush1.msra.mxu0 0.0
        %1414 = vmatprep.subr.mxu0 0.0
        %1415 = vmatpush1.msra.mxu0 0.0
        %1416 = vmatprep.subr.mxu0 0.0
        %1417 = vmatpush1.msra.mxu0 0.0
        %1418 = vmatprep.subr.mxu0 0.0
        %1419 = vmatpush1.msra.mxu0 0.0
        %1420 = vmatprep.subr.mxu0 0.0
        %1421 = vmatpush1.msra.mxu0 0.0
        %1422 = vmatprep.subr.mxu0 0.0
        %1423 = vmatpush1.msra.mxu0 0.0
        %1424 = vmatprep.subr.mxu0 0.0
        %1425 = vmatpush1.msra.mxu0 0.0
        %1426 = vmatprep.subr.mxu0 0.0
        %1427 = vmatpush1.msra.mxu0 0.0
        %1428 = vmatprep.subr.mxu0 0.0
        %1429 = vmatpush1.msra.mxu0 0.0
        %1430 = vmatprep.subr.mxu0 0.0
        %1431 = vmatpush1.msra.mxu0 0.0
        %1432 = vmatprep.subr.mxu0 0.0
        %1433 = vmatpush1.msra.mxu0 %v706
        %1434 = vmatprep.subr.mxu0 0.0
        %1435 = vmatpush1.msra.mxu0 %v705
        %1436 = vmatprep.subr.mxu0 0.0
        %1437 = vmatpush2.msra.mxu0 0.0
        %1438 = vmatprep.subr.mxu0 0.0
        %1439 = vmatpush2.msra.mxu0 0.0
        %1440 = vmatprep.subr.mxu0 0.0
        %1441 = vmatpush2.msra.mxu0 0.0
        %1442 = vmatprep.subr.mxu0 0.0
        %1443 = vmatpush2.msra.mxu0 0.0
        %1444 = vmatprep.subr.mxu0 0.0
        %1445 = vmatpush2.msra.mxu0 0.0
        %1446 = vmatprep.subr.mxu0 0.0
        %1447 = vmatpush2.msra.mxu0 0.0
        %1448 = vmatprep.subr.mxu0 0.0
        %1449 = vmatpush2.msra.mxu0 0.0
        %1450 = vmatprep.subr.mxu0 0.0
        %1451 = vmatpush2.msra.mxu0 0.0
        %1452 = vmatprep.subr.mxu0 0.0
        %1453 = vmatpush2.msra.mxu0 0.0
        %1454 = vmatprep.subr.mxu0 0.0
        %1455 = vmatpush2.msra.mxu0 0.0
        %1456 = vmatprep.subr.mxu0 0.0
        %1457 = vmatpush2.msra.mxu0 0.0
        %1458 = vmatprep.subr.mxu0 0.0
        %1459 = vmatpush2.msra.mxu0 0.0
        %1460 = vmatprep.subr.mxu0 0.0
        %1461 = vmatpush2.msra.mxu0 0.0
        %1462 = vmatprep.subr.mxu0 0.0
        %1463 = vmatpush2.msra.mxu0 0.0
        %1464 = vmatprep.subr.mxu0 0.0
        %1465 = vmatpush2.msra.mxu0 0.0
        %1466 = vmatprep.subr.mxu0 0.0
        %1467 = vmatpush2.msra.mxu0 0.0
        %1468 = vmatprep.mubr.f32.mxu0 0.0
        %1469 = vmatmul.mubr.f32.gmra.mxu0 %v1402
        %v1470 = vpop.f32.mrf.mxu0
        %v1471 = vadd.f32 0.0, %v1470
        %v1472 = vpop.f32.mrf.mxu0
        %1473 = vdwg.mxu0
        %v1475 = vsel %vm600, %v1398, 0
        %1477 = vmatprep.subr.mxu0 0.0
        %1478 = vmatpush1.msra.mxu0 0.0
        %1479 = vmatprep.subr.mxu0 0.0
        %1480 = vmatpush1.msra.mxu0 0.0
        %1481 = vmatprep.subr.mxu0 0.0
        %1482 = vmatpush1.msra.mxu0 0.0
        %1483 = vmatprep.subr.mxu0 0.0
        %1484 = vmatpush1.msra.mxu0 0.0
        %1485 = vmatprep.subr.mxu0 0.0
        %1486 = vmatpush1.msra.mxu0 0.0
        %1487 = vmatprep.subr.mxu0 0.0
        %1488 = vmatpush1.msra.mxu0 0.0
        %1489 = vmatprep.subr.mxu0 0.0
        %1490 = vmatpush1.msra.mxu0 0.0
        %1491 = vmatprep.subr.mxu0 0.0
        %1492 = vmatpush1.msra.mxu0 0.0
        %1493 = vmatprep.subr.mxu0 0.0
        %1494 = vmatpush1.msra.mxu0 0.0
        %1495 = vmatprep.subr.mxu0 0.0
        %1496 = vmatpush1.msra.mxu0 0.0
        %1497 = vmatprep.subr.mxu0 0.0
        %1498 = vmatpush1.msra.mxu0 0.0
        %1499 = vmatprep.subr.mxu0 0.0
        %1500 = vmatpush1.msra.mxu0 0.0
        %1501 = vmatprep.subr.mxu0 0.0
        %1502 = vmatpush1.msra.mxu0 0.0
        %1503 = vmatprep.subr.mxu0 0.0
        %1504 = vmatpush1.msra.mxu0 0.0
        %1505 = vmatprep.subr.mxu0 0.0
        %1506 = vmatpush1.msra.mxu0 %v708
        %1507 = vmatprep.subr.mxu0 0.0
        %1508 = vmatpush1.msra.mxu0 %v707
        %1509 = vmatprep.subr.mxu0 0.0
        %1510 = vmatpush2.msra.mxu0 0.0
        %1511 = vmatprep.subr.mxu0 0.0
        %1512 = vmatpush2.msra.mxu0 0.0
        %1513 = vmatprep.subr.mxu0 0.0
        %1514 = vmatpush2.msra.mxu0 0.0
        %1515 = vmatprep.subr.mxu0 0.0
        %1516 = vmatpush2.msra.mxu0 0.0
        %1517 = vmatprep.subr.mxu0 0.0
        %1518 = vmatpush2.msra.mxu0 0.0
        %1519 = vmatprep.subr.mxu0 0.0
        %1520 = vmatpush2.msra.mxu0 0.0
        %1521 = vmatprep.subr.mxu0 0.0
        %1522 = vmatpush2.msra.mxu0 0.0
        %1523 = vmatprep.subr.mxu0 0.0
        %1524 = vmatpush2.msra.mxu0 0.0
        %1525 = vmatprep.subr.mxu0 0.0
        %1526 = vmatpush2.msra.mxu0 0.0
        %1527 = vmatprep.subr.mxu0 0.0
        %1528 = vmatpush2.msra.mxu0 0.0
        %1529 = vmatprep.subr.mxu0 0.0
        %1530 = vmatpush2.msra.mxu0 0.0
        %1531 = vmatprep.subr.mxu0 0.0
        %1532 = vmatpush2.msra.mxu0 0.0
        %1533 = vmatprep.subr.mxu0 0.0
        %1534 = vmatpush2.msra.mxu0 0.0
        %1535 = vmatprep.subr.mxu0 0.0
        %1536 = vmatpush2.msra.mxu0 0.0
        %1537 = vmatprep.subr.mxu0 0.0
        %1538 = vmatpush2.msra.mxu0 0.0
        %1539 = vmatprep.subr.mxu0 0.0
        %1540 = vmatpush2.msra.mxu0 0.0
        %1541 = vmatprep.mubr.f32.mxu0 0.0
        %1542 = vmatmul.mubr.f32.gmra.mxu0 %v1475
        %v1543 = vpop.f32.mrf.mxu0
        %v1544 = vadd.f32 0.0, %v1543
        %v1545 = vpop.f32.mrf.mxu0
        %1546 = vdwg.mxu0
        %v1548 = vsel %vm600, %v1399, 0
        %1550 = vmatprep.subr.mxu0 0.0
        %1551 = vmatpush1.msra.mxu0 0.0
        %1552 = vmatprep.subr.mxu0 0.0
        %1553 = vmatpush1.msra.mxu0 0.0
        %1554 = vmatprep.subr.mxu0 0.0
        %1555 = vmatpush1.msra.mxu0 0.0
        %1556 = vmatprep.subr.mxu0 0.0
        %1557 = vmatpush1.msra.mxu0 0.0
        %1558 = vmatprep.subr.mxu0 0.0
        %1559 = vmatpush1.msra.mxu0 0.0
        %1560 = vmatprep.subr.mxu0 0.0
        %1561 = vmatpush1.msra.mxu0 0.0
        %1562 = vmatprep.subr.mxu0 0.0
        %1563 = vmatpush1.msra.mxu0 0.0
        %1564 = vmatprep.subr.mxu0 0.0
        %1565 = vmatpush1.msra.mxu0 0.0
        %1566 = vmatprep.subr.mxu0 0.0
        %1567 = vmatpush1.msra.mxu0 0.0
        %1568 = vmatprep.subr.mxu0 0.0
        %1569 = vmatpush1.msra.mxu0 0.0
        %1570 = vmatprep.subr.mxu0 0.0
        %1571 = vmatpush1.msra.mxu0 0.0
        %1572 = vmatprep.subr.mxu0 0.0
        %1573 = vmatpush1.msra.mxu0 0.0
        %1574 = vmatprep.subr.mxu0 0.0
        %1575 = vmatpush1.msra.mxu0 0.0
        %1576 = vmatprep.subr.mxu0 0.0
        %1577 = vmatpush1.msra.mxu0 0.0
        %1578 = vmatprep.subr.mxu0 0.0
        %1579 = vmatpush1.msra.mxu0 %v710
        %1580 = vmatprep.subr.mxu0 0.0
        %1581 = vmatpush1.msra.mxu0 %v709
        %1582 = vmatprep.subr.mxu0 0.0
        %1583 = vmatpush2.msra.mxu0 0.0
        %1584 = vmatprep.subr.mxu0 0.0
        %1585 = vmatpush2.msra.mxu0 0.0
        %1586 = vmatprep.subr.mxu0 0.0
        %1587 = vmatpush2.msra.mxu0 0.0
        %1588 = vmatprep.subr.mxu0 0.0
        %1589 = vmatpush2.msra.mxu0 0.0
        %1590 = vmatprep.subr.mxu0 0.0
        %1591 = vmatpush2.msra.mxu0 0.0
        %1592 = vmatprep.subr.mxu0 0.0
        %1593 = vmatpush2.msra.mxu0 0.0
        %1594 = vmatprep.subr.mxu0 0.0
        %1595 = vmatpush2.msra.mxu0 0.0
        %1596 = vmatprep.subr.mxu0 0.0
        %1597 = vmatpush2.msra.mxu0 0.0
        %1598 = vmatprep.subr.mxu0 0.0
        %1599 = vmatpush2.msra.mxu0 0.0
        %1600 = vmatprep.subr.mxu0 0.0
        %1601 = vmatpush2.msra.mxu0 0.0
        %1602 = vmatprep.subr.mxu0 0.0
        %1603 = vmatpush2.msra.mxu0 0.0
        %1604 = vmatprep.subr.mxu0 0.0
        %1605 = vmatpush2.msra.mxu0 0.0
        %1606 = vmatprep.subr.mxu0 0.0
        %1607 = vmatpush2.msra.mxu0 0.0
        %1608 = vmatprep.subr.mxu0 0.0
        %1609 = vmatpush2.msra.mxu0 0.0
        %1610 = vmatprep.subr.mxu0 0.0
        %1611 = vmatpush2.msra.mxu0 0.0
        %1612 = vmatprep.subr.mxu0 0.0
        %1613 = vmatpush2.msra.mxu0 0.0
        %1614 = vmatprep.mubr.f32.mxu0 0.0
        %1615 = vmatmul.mubr.f32.gmra.mxu0 %v1548
        %v1616 = vpop.f32.mrf.mxu0
        %v1617 = vadd.f32 0.0, %v1616
        %v1618 = vpop.f32.mrf.mxu0
        %1619 = vdwg.mxu0
        %v1621 = vsel %vm600, %v1400, 0
        %1623 = vmatprep.subr.mxu0 0.0
        %1624 = vmatpush1.msra.mxu0 0.0
        %1625 = vmatprep.subr.mxu0 0.0
        %1626 = vmatpush1.msra.mxu0 0.0
        %1627 = vmatprep.subr.mxu0 0.0
        %1628 = vmatpush1.msra.mxu0 0.0
        %1629 = vmatprep.subr.mxu0 0.0
        %1630 = vmatpush1.msra.mxu0 0.0
        %1631 = vmatprep.subr.mxu0 0.0
        %1632 = vmatpush1.msra.mxu0 0.0
        %1633 = vmatprep.subr.mxu0 0.0
        %1634 = vmatpush1.msra.mxu0 0.0
        %1635 = vmatprep.subr.mxu0 0.0
        %1636 = vmatpush1.msra.mxu0 0.0
        %1637 = vmatprep.subr.mxu0 0.0
        %1638 = vmatpush1.msra.mxu0 0.0
        %1639 = vmatprep.subr.mxu0 0.0
        %1640 = vmatpush1.msra.mxu0 0.0
        %1641 = vmatprep.subr.mxu0 0.0
        %1642 = vmatpush1.msra.mxu0 0.0
        %1643 = vmatprep.subr.mxu0 0.0
        %1644 = vmatpush1.msra.mxu0 0.0
        %1645 = vmatprep.subr.mxu0 0.0
        %1646 = vmatpush1.msra.mxu0 0.0
        %1647 = vmatprep.subr.mxu0 0.0
        %1648 = vmatpush1.msra.mxu0 0.0
        %1649 = vmatprep.subr.mxu0 0.0
        %1650 = vmatpush1.msra.mxu0 0.0
        %1651 = vmatprep.subr.mxu0 0.0
        %1652 = vmatpush1.msra.mxu0 %v712
        %1653 = vmatprep.subr.mxu0 0.0
        %1654 = vmatpush1.msra.mxu0 %v711
        %1655 = vmatprep.subr.mxu0 0.0
        %1656 = vmatpush2.msra.mxu0 0.0
        %1657 = vmatprep.subr.mxu0 0.0
        %1658 = vmatpush2.msra.mxu0 0.0
        %1659 = vmatprep.subr.mxu0 0.0
        %1660 = vmatpush2.msra.mxu0 0.0
        %1661 = vmatprep.subr.mxu0 0.0
        %1662 = vmatpush2.msra.mxu0 0.0
        %1663 = vmatprep.subr.mxu0 0.0
        %1664 = vmatpush2.msra.mxu0 0.0
        %1665 = vmatprep.subr.mxu0 0.0
        %1666 = vmatpush2.msra.mxu0 0.0
        %1667 = vmatprep.subr.mxu0 0.0
        %1668 = vmatpush2.msra.mxu0 0.0
        %1669 = vmatprep.subr.mxu0 0.0
        %1670 = vmatpush2.msra.mxu0 0.0
        %1671 = vmatprep.subr.mxu0 0.0
        %1672 = vmatpush2.msra.mxu0 0.0
        %1673 = vmatprep.subr.mxu0 0.0
        %1674 = vmatpush2.msra.mxu0 0.0
        %1675 = vmatprep.subr.mxu0 0.0
        %1676 = vmatpush2.msra.mxu0 0.0
        %1677 = vmatprep.subr.mxu0 0.0
        %1678 = vmatpush2.msra.mxu0 0.0
        %1679 = vmatprep.subr.mxu0 0.0
        %1680 = vmatpush2.msra.mxu0 0.0
        %1681 = vmatprep.subr.mxu0 0.0
        %1682 = vmatpush2.msra.mxu0 0.0
        %1683 = vmatprep.subr.mxu0 0.0
        %1684 = vmatpush2.msra.mxu0 0.0
        %1685 = vmatprep.subr.mxu0 0.0
        %1686 = vmatpush2.msra.mxu0 0.0
        %1687 = vmatprep.mubr.f32.mxu0 0.0
        %1688 = vmatmul.mubr.f32.gmra.mxu0 %v1621
        %v1689 = vpop.f32.mrf.mxu0
        %v1690 = vadd.f32 0.0, %v1689
        %v1691 = vpop.f32.mrf.mxu0
        %1692 = vdwg.mxu0
        %v1694 = vlaneseq
        %v1695 = vshrl.u32 %v1694, 7
        %v1696 = vsub.s32 0, %v1695
        %v1697 = vrot.slane %v713, %v1696
        %v1699 = vadd.f32 %v1697, %v1471
        %v1700 = vadd.f32 %v1699, %v1544
        %v1701 = vadd.f32 %v1700, %v1617
        %v1702 = vadd.f32 %v1701, %v1690
        %v1703 = vadd.f32 %v439, %v1702
        %1704 = vst.msk [vmem:[#allocation5] sm:$0xff] %vm443, %v1703
        %v1705 = vld [vmem:[#allocation2 + $0x8] sm:$0xff]
        %v1706 = vld [vmem:[#allocation2 + $0x18] sm:$0xff]
        %v1707 = vld [vmem:[#allocation2 + $0x28] sm:$0xff]
        %v1708 = vld [vmem:[#allocation2 + $0x38] sm:$0xff]
        %v1709 = vld [vmem:[#allocation3] sm:$0xff]
        %v1710 = vld [vmem:[#allocation3 + $0x10] sm:$0xff]
        %v1711 = vld [vmem:[#allocation3 + $0x20] sm:$0xff]
        %v1712 = vld [vmem:[#allocation3 + $0x30] sm:$0xff]
        %v1713 = vld [vmem:[#allocation4] sm:$0xff]
        %v1714 = vld [vmem:[#allocation4 + $0x10] sm:$0xff]
        %v1715 = vld [vmem:[#allocation4 + $0x20] sm:$0xff]
        %v1716 = vld [vmem:[#allocation4 + $0x30] sm:$0xff]
        %v1718 = vsel %vm600, %v1705, 0
        %v1721 = vsel %vm600, %v1709, 0
        %1723 = vmatprep.subr.mxu0 0.0
        %1724 = vmatpush1.xpose.msra.mxu0 0.0
        %1725 = vmatprep.subr.mxu0 0.0
        %1726 = vmatpush1.xpose.msra.mxu0 0.0
        %1727 = vmatprep.subr.mxu0 0.0
        %1728 = vmatpush1.xpose.msra.mxu0 0.0
        %1729 = vmatprep.subr.mxu0 0.0
        %1730 = vmatpush1.xpose.msra.mxu0 0.0
        %1731 = vmatprep.subr.mxu0 0.0
        %1732 = vmatpush1.xpose.msra.mxu0 0.0
        %1733 = vmatprep.subr.mxu0 0.0
        %1734 = vmatpush1.xpose.msra.mxu0 0.0
        %1735 = vmatprep.subr.mxu0 0.0
        %1736 = vmatpush1.xpose.msra.mxu0 0.0
        %1737 = vmatprep.subr.mxu0 0.0
        %1738 = vmatpush1.xpose.msra.mxu0 0.0
        %1739 = vmatprep.subr.mxu0 0.0
        %1740 = vmatpush1.xpose.msra.mxu0 0.0
        %1741 = vmatprep.subr.mxu0 0.0
        %1742 = vmatpush1.xpose.msra.mxu0 0.0
        %1743 = vmatprep.subr.mxu0 0.0
        %1744 = vmatpush1.xpose.msra.mxu0 0.0
        %1745 = vmatprep.subr.mxu0 0.0
        %1746 = vmatpush1.xpose.msra.mxu0 0.0
        %1747 = vmatprep.subr.mxu0 0.0
        %1748 = vmatpush1.xpose.msra.mxu0 0.0
        %1749 = vmatprep.subr.mxu0 0.0
        %1750 = vmatpush1.xpose.msra.mxu0 0.0
        %1751 = vmatprep.subr.mxu0 0.0
        %1752 = vmatpush1.xpose.msra.mxu0 0.0
        %1753 = vmatprep.subr.mxu0 0.0
        %1754 = vmatpush1.xpose.msra.mxu0 %v1721
        %1755 = vmatprep.subr.mxu0 0.0
        %1756 = vmatpush2.xpose.msra.mxu0 0.0
        %1757 = vmatprep.subr.mxu0 0.0
        %1758 = vmatpush2.xpose.msra.mxu0 0.0
        %1759 = vmatprep.subr.mxu0 0.0
        %1760 = vmatpush2.xpose.msra.mxu0 0.0
        %1761 = vmatprep.subr.mxu0 0.0
        %1762 = vmatpush2.xpose.msra.mxu0 0.0
        %1763 = vmatprep.subr.mxu0 0.0
        %1764 = vmatpush2.xpose.msra.mxu0 0.0
        %1765 = vmatprep.subr.mxu0 0.0
        %1766 = vmatpush2.xpose.msra.mxu0 0.0
        %1767 = vmatprep.subr.mxu0 0.0
        %1768 = vmatpush2.xpose.msra.mxu0 0.0
        %1769 = vmatprep.subr.mxu0 0.0
        %1770 = vmatpush2.xpose.msra.mxu0 0.0
        %1771 = vmatprep.subr.mxu0 0.0
        %1772 = vmatpush2.xpose.msra.mxu0 0.0
        %1773 = vmatprep.subr.mxu0 0.0
        %1774 = vmatpush2.xpose.msra.mxu0 0.0
        %1775 = vmatprep.subr.mxu0 0.0
        %1776 = vmatpush2.xpose.msra.mxu0 0.0
        %1777 = vmatprep.subr.mxu0 0.0
        %1778 = vmatpush2.xpose.msra.mxu0 0.0
        %1779 = vmatprep.subr.mxu0 0.0
        %1780 = vmatpush2.xpose.msra.mxu0 0.0
        %1781 = vmatprep.subr.mxu0 0.0
        %1782 = vmatpush2.xpose.msra.mxu0 0.0
        %1783 = vmatprep.subr.mxu0 0.0
        %1784 = vmatpush2.xpose.msra.mxu0 0.0
        %1785 = vmatprep.subr.mxu0 0.0
        %1786 = vmatpush2.xpose.msra.mxu0 0.0
        %1787 = vmatprep.mubr.f32.mxu0 0.0
        %1788 = vmatmul.mubr.f32.gmra.mxu0 %v1718
        %v1789 = vpop.f32.mrf.mxu0
        %v1790 = vadd.f32 0.0, %v1789
        %v1791 = vpop.f32.mrf.mxu0
        %1792 = vdwg.mxu0
        %v1794 = vsel %vm600, %v1706, 0
        %v1797 = vsel %vm600, %v1710, 0
        %1799 = vmatprep.subr.mxu0 0.0
        %1800 = vmatpush1.xpose.msra.mxu0 0.0
        %1801 = vmatprep.subr.mxu0 0.0
        %1802 = vmatpush1.xpose.msra.mxu0 0.0
        %1803 = vmatprep.subr.mxu0 0.0
        %1804 = vmatpush1.xpose.msra.mxu0 0.0
        %1805 = vmatprep.subr.mxu0 0.0
        %1806 = vmatpush1.xpose.msra.mxu0 0.0
        %1807 = vmatprep.subr.mxu0 0.0
        %1808 = vmatpush1.xpose.msra.mxu0 0.0
        %1809 = vmatprep.subr.mxu0 0.0
        %1810 = vmatpush1.xpose.msra.mxu0 0.0
        %1811 = vmatprep.subr.mxu0 0.0
        %1812 = vmatpush1.xpose.msra.mxu0 0.0
        %1813 = vmatprep.subr.mxu0 0.0
        %1814 = vmatpush1.xpose.msra.mxu0 0.0
        %1815 = vmatprep.subr.mxu0 0.0
        %1816 = vmatpush1.xpose.msra.mxu0 0.0
        %1817 = vmatprep.subr.mxu0 0.0
        %1818 = vmatpush1.xpose.msra.mxu0 0.0
        %1819 = vmatprep.subr.mxu0 0.0
        %1820 = vmatpush1.xpose.msra.mxu0 0.0
        %1821 = vmatprep.subr.mxu0 0.0
        %1822 = vmatpush1.xpose.msra.mxu0 0.0
        %1823 = vmatprep.subr.mxu0 0.0
        %1824 = vmatpush1.xpose.msra.mxu0 0.0
        %1825 = vmatprep.subr.mxu0 0.0
        %1826 = vmatpush1.xpose.msra.mxu0 0.0
        %1827 = vmatprep.subr.mxu0 0.0
        %1828 = vmatpush1.xpose.msra.mxu0 0.0
        %1829 = vmatprep.subr.mxu0 0.0
        %1830 = vmatpush1.xpose.msra.mxu0 %v1797
        %1831 = vmatprep.subr.mxu0 0.0
        %1832 = vmatpush2.xpose.msra.mxu0 0.0
        %1833 = vmatprep.subr.mxu0 0.0
        %1834 = vmatpush2.xpose.msra.mxu0 0.0
        %1835 = vmatprep.subr.mxu0 0.0
        %1836 = vmatpush2.xpose.msra.mxu0 0.0
        %1837 = vmatprep.subr.mxu0 0.0
        %1838 = vmatpush2.xpose.msra.mxu0 0.0
        %1839 = vmatprep.subr.mxu0 0.0
        %1840 = vmatpush2.xpose.msra.mxu0 0.0
        %1841 = vmatprep.subr.mxu0 0.0
        %1842 = vmatpush2.xpose.msra.mxu0 0.0
        %1843 = vmatprep.subr.mxu0 0.0
        %1844 = vmatpush2.xpose.msra.mxu0 0.0
        %1845 = vmatprep.subr.mxu0 0.0
        %1846 = vmatpush2.xpose.msra.mxu0 0.0
        %1847 = vmatprep.subr.mxu0 0.0
        %1848 = vmatpush2.xpose.msra.mxu0 0.0
        %1849 = vmatprep.subr.mxu0 0.0
        %1850 = vmatpush2.xpose.msra.mxu0 0.0
        %1851 = vmatprep.subr.mxu0 0.0
        %1852 = vmatpush2.xpose.msra.mxu0 0.0
        %1853 = vmatprep.subr.mxu0 0.0
        %1854 = vmatpush2.xpose.msra.mxu0 0.0
        %1855 = vmatprep.subr.mxu0 0.0
        %1856 = vmatpush2.xpose.msra.mxu0 0.0
        %1857 = vmatprep.subr.mxu0 0.0
        %1858 = vmatpush2.xpose.msra.mxu0 0.0
        %1859 = vmatprep.subr.mxu0 0.0
        %1860 = vmatpush2.xpose.msra.mxu0 0.0
        %1861 = vmatprep.subr.mxu0 0.0
        %1862 = vmatpush2.xpose.msra.mxu0 0.0
        %1863 = vmatprep.mubr.f32.mxu0 0.0
        %1864 = vmatmul.mubr.f32.gmra.mxu0 %v1794
        %v1865 = vpop.f32.mrf.mxu0
        %v1866 = vadd.f32 0.0, %v1865
        %v1867 = vpop.f32.mrf.mxu0
        %1868 = vdwg.mxu0
        %v1870 = vsel %vm600, %v1707, 0
        %v1873 = vsel %vm600, %v1711, 0
        %1875 = vmatprep.subr.mxu0 0.0
        %1876 = vmatpush1.xpose.msra.mxu0 0.0
        %1877 = vmatprep.subr.mxu0 0.0
        %1878 = vmatpush1.xpose.msra.mxu0 0.0
        %1879 = vmatprep.subr.mxu0 0.0
        %1880 = vmatpush1.xpose.msra.mxu0 0.0
        %1881 = vmatprep.subr.mxu0 0.0
        %1882 = vmatpush1.xpose.msra.mxu0 0.0
        %1883 = vmatprep.subr.mxu0 0.0
        %1884 = vmatpush1.xpose.msra.mxu0 0.0
        %1885 = vmatprep.subr.mxu0 0.0
        %1886 = vmatpush1.xpose.msra.mxu0 0.0
        %1887 = vmatprep.subr.mxu0 0.0
        %1888 = vmatpush1.xpose.msra.mxu0 0.0
        %1889 = vmatprep.subr.mxu0 0.0
        %1890 = vmatpush1.xpose.msra.mxu0 0.0
        %1891 = vmatprep.subr.mxu0 0.0
        %1892 = vmatpush1.xpose.msra.mxu0 0.0
        %1893 = vmatprep.subr.mxu0 0.0
        %1894 = vmatpush1.xpose.msra.mxu0 0.0
        %1895 = vmatprep.subr.mxu0 0.0
        %1896 = vmatpush1.xpose.msra.mxu0 0.0
        %1897 = vmatprep.subr.mxu0 0.0
        %1898 = vmatpush1.xpose.msra.mxu0 0.0
        %1899 = vmatprep.subr.mxu0 0.0
        %1900 = vmatpush1.xpose.msra.mxu0 0.0
        %1901 = vmatprep.subr.mxu0 0.0
        %1902 = vmatpush1.xpose.msra.mxu0 0.0
        %1903 = vmatprep.subr.mxu0 0.0
        %1904 = vmatpush1.xpose.msra.mxu0 0.0
        %1905 = vmatprep.subr.mxu0 0.0
        %1906 = vmatpush1.xpose.msra.mxu0 %v1873
        %1907 = vmatprep.subr.mxu0 0.0
        %1908 = vmatpush2.xpose.msra.mxu0 0.0
        %1909 = vmatprep.subr.mxu0 0.0
        %1910 = vmatpush2.xpose.msra.mxu0 0.0
        %1911 = vmatprep.subr.mxu0 0.0
        %1912 = vmatpush2.xpose.msra.mxu0 0.0
        %1913 = vmatprep.subr.mxu0 0.0
        %1914 = vmatpush2.xpose.msra.mxu0 0.0
        %1915 = vmatprep.subr.mxu0 0.0
        %1916 = vmatpush2.xpose.msra.mxu0 0.0
        %1917 = vmatprep.subr.mxu0 0.0
        %1918 = vmatpush2.xpose.msra.mxu0 0.0
        %1919 = vmatprep.subr.mxu0 0.0
        %1920 = vmatpush2.xpose.msra.mxu0 0.0
        %1921 = vmatprep.subr.mxu0 0.0
        %1922 = vmatpush2.xpose.msra.mxu0 0.0
        %1923 = vmatprep.subr.mxu0 0.0
        %1924 = vmatpush2.xpose.msra.mxu0 0.0
        %1925 = vmatprep.subr.mxu0 0.0
        %1926 = vmatpush2.xpose.msra.mxu0 0.0
        %1927 = vmatprep.subr.mxu0 0.0
        %1928 = vmatpush2.xpose.msra.mxu0 0.0
        %1929 = vmatprep.subr.mxu0 0.0
        %1930 = vmatpush2.xpose.msra.mxu0 0.0
        %1931 = vmatprep.subr.mxu0 0.0
        %1932 = vmatpush2.xpose.msra.mxu0 0.0
        %1933 = vmatprep.subr.mxu0 0.0
        %1934 = vmatpush2.xpose.msra.mxu0 0.0
        %1935 = vmatprep.subr.mxu0 0.0
        %1936 = vmatpush2.xpose.msra.mxu0 0.0
        %1937 = vmatprep.subr.mxu0 0.0
        %1938 = vmatpush2.xpose.msra.mxu0 0.0
        %1939 = vmatprep.mubr.f32.mxu0 0.0
        %1940 = vmatmul.mubr.f32.gmra.mxu0 %v1870
        %v1941 = vpop.f32.mrf.mxu0
        %v1942 = vadd.f32 0.0, %v1941
        %v1943 = vpop.f32.mrf.mxu0
        %1944 = vdwg.mxu0
        %v1946 = vsel %vm600, %v1708, 0
        %v1949 = vsel %vm600, %v1712, 0
        %1951 = vmatprep.subr.mxu0 0.0
        %1952 = vmatpush1.xpose.msra.mxu0 0.0
        %1953 = vmatprep.subr.mxu0 0.0
        %1954 = vmatpush1.xpose.msra.mxu0 0.0
        %1955 = vmatprep.subr.mxu0 0.0
        %1956 = vmatpush1.xpose.msra.mxu0 0.0
        %1957 = vmatprep.subr.mxu0 0.0
        %1958 = vmatpush1.xpose.msra.mxu0 0.0
        %1959 = vmatprep.subr.mxu0 0.0
        %1960 = vmatpush1.xpose.msra.mxu0 0.0
        %1961 = vmatprep.subr.mxu0 0.0
        %1962 = vmatpush1.xpose.msra.mxu0 0.0
        %1963 = vmatprep.subr.mxu0 0.0
        %1964 = vmatpush1.xpose.msra.mxu0 0.0
        %1965 = vmatprep.subr.mxu0 0.0
        %1966 = vmatpush1.xpose.msra.mxu0 0.0
        %1967 = vmatprep.subr.mxu0 0.0
        %1968 = vmatpush1.xpose.msra.mxu0 0.0
        %1969 = vmatprep.subr.mxu0 0.0
        %1970 = vmatpush1.xpose.msra.mxu0 0.0
        %1971 = vmatprep.subr.mxu0 0.0
        %1972 = vmatpush1.xpose.msra.mxu0 0.0
        %1973 = vmatprep.subr.mxu0 0.0
        %1974 = vmatpush1.xpose.msra.mxu0 0.0
        %1975 = vmatprep.subr.mxu0 0.0
        %1976 = vmatpush1.xpose.msra.mxu0 0.0
        %1977 = vmatprep.subr.mxu0 0.0
        %1978 = vmatpush1.xpose.msra.mxu0 0.0
        %1979 = vmatprep.subr.mxu0 0.0
        %1980 = vmatpush1.xpose.msra.mxu0 0.0
        %1981 = vmatprep.subr.mxu0 0.0
        %1982 = vmatpush1.xpose.msra.mxu0 %v1949
        %1983 = vmatprep.subr.mxu0 0.0
        %1984 = vmatpush2.xpose.msra.mxu0 0.0
        %1985 = vmatprep.subr.mxu0 0.0
        %1986 = vmatpush2.xpose.msra.mxu0 0.0
        %1987 = vmatprep.subr.mxu0 0.0
        %1988 = vmatpush2.xpose.msra.mxu0 0.0
        %1989 = vmatprep.subr.mxu0 0.0
        %1990 = vmatpush2.xpose.msra.mxu0 0.0
        %1991 = vmatprep.subr.mxu0 0.0
        %1992 = vmatpush2.xpose.msra.mxu0 0.0
        %1993 = vmatprep.subr.mxu0 0.0
        %1994 = vmatpush2.xpose.msra.mxu0 0.0
        %1995 = vmatprep.subr.mxu0 0.0
        %1996 = vmatpush2.xpose.msra.mxu0 0.0
        %1997 = vmatprep.subr.mxu0 0.0
        %1998 = vmatpush2.xpose.msra.mxu0 0.0
        %1999 = vmatprep.subr.mxu0 0.0
        %2000 = vmatpush2.xpose.msra.mxu0 0.0
        %2001 = vmatprep.subr.mxu0 0.0
        %2002 = vmatpush2.xpose.msra.mxu0 0.0
        %2003 = vmatprep.subr.mxu0 0.0
        %2004 = vmatpush2.xpose.msra.mxu0 0.0
        %2005 = vmatprep.subr.mxu0 0.0
        %2006 = vmatpush2.xpose.msra.mxu0 0.0
        %2007 = vmatprep.subr.mxu0 0.0
        %2008 = vmatpush2.xpose.msra.mxu0 0.0
        %2009 = vmatprep.subr.mxu0 0.0
        %2010 = vmatpush2.xpose.msra.mxu0 0.0
        %2011 = vmatprep.subr.mxu0 0.0
        %2012 = vmatpush2.xpose.msra.mxu0 0.0
        %2013 = vmatprep.subr.mxu0 0.0
        %2014 = vmatpush2.xpose.msra.mxu0 0.0
        %2015 = vmatprep.mubr.f32.mxu0 0.0
        %2016 = vmatmul.mubr.f32.gmra.mxu0 %v1946
        %v2017 = vpop.f32.mrf.mxu0
        %v2018 = vadd.f32 0.0, %v2017
        %v2019 = vpop.f32.mrf.mxu0
        %2020 = vdwg.mxu0
        %v2021 = vsel %vm1036, %v1790, -inf
        %2022 = vmax.xlane.f32.xlu0 %v2021
        %v2023 = vpop.xlane.xlu0 %2022
        %v2024 = vsel %vm1036, %v1866, -inf
        %2025 = vmax.xlane.f32.xlu0 %v2024
        %v2026 = vpop.xlane.xlu0 %2025
        %v2027 = vsel %vm1036, %v1942, -inf
        %2028 = vmax.xlane.f32.xlu0 %v2027
        %v2029 = vpop.xlane.xlu0 %2028
        %v2030 = vsel %vm1036, %v2018, -inf
        %2031 = vmax.xlane.f32.xlu0 %v2030
        %v2032 = vpop.xlane.xlu0 %2031
        %v2033 = vmax.f32 %v2023, -1e+30
        %v2034 = vmax.f32 %v2026, -1e+30
        %v2035 = vmax.f32 %v2029, -1e+30
        %v2036 = vmax.f32 %v2032, -1e+30
        %v2037 = vsub.f32 -1e+30, %v2033
        %v2038 = vsub.f32 -1e+30, %v2034
        %v2039 = vsub.f32 -1e+30, %v2035
        %v2040 = vsub.f32 -1e+30, %v2036
        %v2041 = vmul.f32 %v2037, 1.442695
        %v2042 = vpow.pop %v2041
        %v2043 = vmul.f32 %v2038, 1.442695
        %v2044 = vpow.pop %v2043
        %v2045 = vmul.f32 %v2039, 1.442695
        %v2046 = vpow.pop %v2045
        %v2047 = vmul.f32 %v2040, 1.442695
        %v2048 = vpow.pop %v2047
        %v2049 = vsub.f32 %v1790, %v2033
        %v2050 = vsub.f32 %v1866, %v2034
        %v2051 = vsub.f32 %v1942, %v2035
        %v2052 = vsub.f32 %v2018, %v2036
        %v2053 = vmul.f32 %v2049, 1.442695
        %v2054 = vpow.pop %v2053
        %v2055 = vmul.f32 %v2050, 1.442695
        %v2056 = vpow.pop %v2055
        %v2057 = vmul.f32 %v2051, 1.442695
        %v2058 = vpow.pop %v2057
        %v2059 = vmul.f32 %v2052, 1.442695
        %v2060 = vpow.pop %v2059
        %v2061 = vmul.f32 %v2042, 0.0
        %v2062 = vmul.f32 %v2044, 0.0
        %v2063 = vmul.f32 %v2046, 0.0
        %v2064 = vmul.f32 %v2048, 0.0
        %v2065 = vsel %vm1036, %v2054, 0.0
        %2066 = vadd.xlane.f32.xlu0 %v2065
        %v2067 = vpop.xlane.xlu0 %2066
        %v2068 = vsel %vm1036, %v2056, 0.0
        %2069 = vadd.xlane.f32.xlu0 %v2068
        %v2070 = vpop.xlane.xlu0 %2069
        %v2071 = vsel %vm1036, %v2058, 0.0
        %2072 = vadd.xlane.f32.xlu0 %v2071
        %v2073 = vpop.xlane.xlu0 %2072
        %v2074 = vsel %vm1036, %v2060, 0.0
        %2075 = vadd.xlane.f32.xlu0 %v2074
        %v2076 = vpop.xlane.xlu0 %2075
        %v2077 = vadd.f32 %v2061, %v2067
        %v2078 = vadd.f32 %v2062, %v2070
        %v2079 = vadd.f32 %v2063, %v2073
        %v2080 = vadd.f32 %v2064, %v2076
        %v2082 = vsel %vm1036, %v2054, 0
        %2084 = vmatprep.subr.mxu0 0.0
        %2085 = vmatpush1.msra.mxu0 0.0
        %2086 = vmatprep.subr.mxu0 0.0
        %2087 = vmatpush1.msra.mxu0 0.0
        %2088 = vmatprep.subr.mxu0 0.0
        %2089 = vmatpush1.msra.mxu0 0.0
        %2090 = vmatprep.subr.mxu0 0.0
        %2091 = vmatpush1.msra.mxu0 0.0
        %2092 = vmatprep.subr.mxu0 0.0
        %2093 = vmatpush1.msra.mxu0 0.0
        %2094 = vmatprep.subr.mxu0 0.0
        %2095 = vmatpush1.msra.mxu0 0.0
        %2096 = vmatprep.subr.mxu0 0.0
        %2097 = vmatpush1.msra.mxu0 0.0
        %2098 = vmatprep.subr.mxu0 0.0
        %2099 = vmatpush1.msra.mxu0 0.0
        %2100 = vmatprep.subr.mxu0 0.0
        %2101 = vmatpush1.msra.mxu0 0.0
        %2102 = vmatprep.subr.mxu0 0.0
        %2103 = vmatpush1.msra.mxu0 0.0
        %2104 = vmatprep.subr.mxu0 0.0
        %2105 = vmatpush1.msra.mxu0 0.0
        %2106 = vmatprep.subr.mxu0 0.0
        %2107 = vmatpush1.msra.mxu0 0.0
        %2108 = vmatprep.subr.mxu0 0.0
        %2109 = vmatpush1.msra.mxu0 0.0
        %2110 = vmatprep.subr.mxu0 0.0
        %2111 = vmatpush1.msra.mxu0 0.0
        %2112 = vmatprep.subr.mxu0 0.0
        %2113 = vmatpush1.msra.mxu0 0.0
        %2114 = vmatprep.subr.mxu0 0.0
        %2115 = vmatpush1.msra.mxu0 %v1713
        %2116 = vmatprep.subr.mxu0 0.0
        %2117 = vmatpush2.msra.mxu0 0.0
        %2118 = vmatprep.subr.mxu0 0.0
        %2119 = vmatpush2.msra.mxu0 0.0
        %2120 = vmatprep.subr.mxu0 0.0
        %2121 = vmatpush2.msra.mxu0 0.0
        %2122 = vmatprep.subr.mxu0 0.0
        %2123 = vmatpush2.msra.mxu0 0.0
        %2124 = vmatprep.subr.mxu0 0.0
        %2125 = vmatpush2.msra.mxu0 0.0
        %2126 = vmatprep.subr.mxu0 0.0
        %2127 = vmatpush2.msra.mxu0 0.0
        %2128 = vmatprep.subr.mxu0 0.0
        %2129 = vmatpush2.msra.mxu0 0.0
        %2130 = vmatprep.subr.mxu0 0.0
        %2131 = vmatpush2.msra.mxu0 0.0
        %2132 = vmatprep.subr.mxu0 0.0
        %2133 = vmatpush2.msra.mxu0 0.0
        %2134 = vmatprep.subr.mxu0 0.0
        %2135 = vmatpush2.msra.mxu0 0.0
        %2136 = vmatprep.subr.mxu0 0.0
        %2137 = vmatpush2.msra.mxu0 0.0
        %2138 = vmatprep.subr.mxu0 0.0
        %2139 = vmatpush2.msra.mxu0 0.0
        %2140 = vmatprep.subr.mxu0 0.0
        %2141 = vmatpush2.msra.mxu0 0.0
        %2142 = vmatprep.subr.mxu0 0.0
        %2143 = vmatpush2.msra.mxu0 0.0
        %2144 = vmatprep.subr.mxu0 0.0
        %2145 = vmatpush2.msra.mxu0 0.0
        %2146 = vmatprep.subr.mxu0 0.0
        %2147 = vmatpush2.msra.mxu0 0.0
        %2148 = vmatprep.mubr.f32.mxu0 0.0
        %2149 = vmatmul.mubr.f32.gmra.mxu0 %v2082
        %v2150 = vpop.f32.mrf.mxu0
        %v2151 = vadd.f32 0.0, %v2150
        %v2152 = vpop.f32.mrf.mxu0
        %2153 = vdwg.mxu0
        %v2155 = vsel %vm1036, %v2056, 0
        %2157 = vmatprep.subr.mxu0 0.0
        %2158 = vmatpush1.msra.mxu0 0.0
        %2159 = vmatprep.subr.mxu0 0.0
        %2160 = vmatpush1.msra.mxu0 0.0
        %2161 = vmatprep.subr.mxu0 0.0
        %2162 = vmatpush1.msra.mxu0 0.0
        %2163 = vmatprep.subr.mxu0 0.0
        %2164 = vmatpush1.msra.mxu0 0.0
        %2165 = vmatprep.subr.mxu0 0.0
        %2166 = vmatpush1.msra.mxu0 0.0
        %2167 = vmatprep.subr.mxu0 0.0
        %2168 = vmatpush1.msra.mxu0 0.0
        %2169 = vmatprep.subr.mxu0 0.0
        %2170 = vmatpush1.msra.mxu0 0.0
        %2171 = vmatprep.subr.mxu0 0.0
        %2172 = vmatpush1.msra.mxu0 0.0
        %2173 = vmatprep.subr.mxu0 0.0
        %2174 = vmatpush1.msra.mxu0 0.0
        %2175 = vmatprep.subr.mxu0 0.0
        %2176 = vmatpush1.msra.mxu0 0.0
        %2177 = vmatprep.subr.mxu0 0.0
        %2178 = vmatpush1.msra.mxu0 0.0
        %2179 = vmatprep.subr.mxu0 0.0
        %2180 = vmatpush1.msra.mxu0 0.0
        %2181 = vmatprep.subr.mxu0 0.0
        %2182 = vmatpush1.msra.mxu0 0.0
        %2183 = vmatprep.subr.mxu0 0.0
        %2184 = vmatpush1.msra.mxu0 0.0
        %2185 = vmatprep.subr.mxu0 0.0
        %2186 = vmatpush1.msra.mxu0 0.0
        %2187 = vmatprep.subr.mxu0 0.0
        %2188 = vmatpush1.msra.mxu0 %v1714
        %2189 = vmatprep.subr.mxu0 0.0
        %2190 = vmatpush2.msra.mxu0 0.0
        %2191 = vmatprep.subr.mxu0 0.0
        %2192 = vmatpush2.msra.mxu0 0.0
        %2193 = vmatprep.subr.mxu0 0.0
        %2194 = vmatpush2.msra.mxu0 0.0
        %2195 = vmatprep.subr.mxu0 0.0
        %2196 = vmatpush2.msra.mxu0 0.0
        %2197 = vmatprep.subr.mxu0 0.0
        %2198 = vmatpush2.msra.mxu0 0.0
        %2199 = vmatprep.subr.mxu0 0.0
        %2200 = vmatpush2.msra.mxu0 0.0
        %2201 = vmatprep.subr.mxu0 0.0
        %2202 = vmatpush2.msra.mxu0 0.0
        %2203 = vmatprep.subr.mxu0 0.0
        %2204 = vmatpush2.msra.mxu0 0.0
        %2205 = vmatprep.subr.mxu0 0.0
        %2206 = vmatpush2.msra.mxu0 0.0
        %2207 = vmatprep.subr.mxu0 0.0
        %2208 = vmatpush2.msra.mxu0 0.0
        %2209 = vmatprep.subr.mxu0 0.0
        %2210 = vmatpush2.msra.mxu0 0.0
        %2211 = vmatprep.subr.mxu0 0.0
        %2212 = vmatpush2.msra.mxu0 0.0
        %2213 = vmatprep.subr.mxu0 0.0
        %2214 = vmatpush2.msra.mxu0 0.0
        %2215 = vmatprep.subr.mxu0 0.0
        %2216 = vmatpush2.msra.mxu0 0.0
        %2217 = vmatprep.subr.mxu0 0.0
        %2218 = vmatpush2.msra.mxu0 0.0
        %2219 = vmatprep.subr.mxu0 0.0
        %2220 = vmatpush2.msra.mxu0 0.0
        %2221 = vmatprep.mubr.f32.mxu0 0.0
        %2222 = vmatmul.mubr.f32.gmra.mxu0 %v2155
        %v2223 = vpop.f32.mrf.mxu0
        %v2224 = vadd.f32 0.0, %v2223
        %v2225 = vpop.f32.mrf.mxu0
        %2226 = vdwg.mxu0
        %v2228 = vsel %vm1036, %v2058, 0
        %2230 = vmatprep.subr.mxu0 0.0
        %2231 = vmatpush1.msra.mxu0 0.0
        %2232 = vmatprep.subr.mxu0 0.0
        %2233 = vmatpush1.msra.mxu0 0.0
        %2234 = vmatprep.subr.mxu0 0.0
        %2235 = vmatpush1.msra.mxu0 0.0
        %2236 = vmatprep.subr.mxu0 0.0
        %2237 = vmatpush1.msra.mxu0 0.0
        %2238 = vmatprep.subr.mxu0 0.0
        %2239 = vmatpush1.msra.mxu0 0.0
        %2240 = vmatprep.subr.mxu0 0.0
        %2241 = vmatpush1.msra.mxu0 0.0
        %2242 = vmatprep.subr.mxu0 0.0
        %2243 = vmatpush1.msra.mxu0 0.0
        %2244 = vmatprep.subr.mxu0 0.0
        %2245 = vmatpush1.msra.mxu0 0.0
        %2246 = vmatprep.subr.mxu0 0.0
        %2247 = vmatpush1.msra.mxu0 0.0
        %2248 = vmatprep.subr.mxu0 0.0
        %2249 = vmatpush1.msra.mxu0 0.0
        %2250 = vmatprep.subr.mxu0 0.0
        %2251 = vmatpush1.msra.mxu0 0.0
        %2252 = vmatprep.subr.mxu0 0.0
        %2253 = vmatpush1.msra.mxu0 0.0
        %2254 = vmatprep.subr.mxu0 0.0
        %2255 = vmatpush1.msra.mxu0 0.0
        %2256 = vmatprep.subr.mxu0 0.0
        %2257 = vmatpush1.msra.mxu0 0.0
        %2258 = vmatprep.subr.mxu0 0.0
        %2259 = vmatpush1.msra.mxu0 0.0
        %2260 = vmatprep.subr.mxu0 0.0
        %2261 = vmatpush1.msra.mxu0 %v1715
        %2262 = vmatprep.subr.mxu0 0.0
        %2263 = vmatpush2.msra.mxu0 0.0
        %2264 = vmatprep.subr.mxu0 0.0
        %2265 = vmatpush2.msra.mxu0 0.0
        %2266 = vmatprep.subr.mxu0 0.0
        %2267 = vmatpush2.msra.mxu0 0.0
        %2268 = vmatprep.subr.mxu0 0.0
        %2269 = vmatpush2.msra.mxu0 0.0
        %2270 = vmatprep.subr.mxu0 0.0
        %2271 = vmatpush2.msra.mxu0 0.0
        %2272 = vmatprep.subr.mxu0 0.0
        %2273 = vmatpush2.msra.mxu0 0.0
        %2274 = vmatprep.subr.mxu0 0.0
        %2275 = vmatpush2.msra.mxu0 0.0
        %2276 = vmatprep.subr.mxu0 0.0
        %2277 = vmatpush2.msra.mxu0 0.0
        %2278 = vmatprep.subr.mxu0 0.0
        %2279 = vmatpush2.msra.mxu0 0.0
        %2280 = vmatprep.subr.mxu0 0.0
        %2281 = vmatpush2.msra.mxu0 0.0
        %2282 = vmatprep.subr.mxu0 0.0
        %2283 = vmatpush2.msra.mxu0 0.0
        %2284 = vmatprep.subr.mxu0 0.0
        %2285 = vmatpush2.msra.mxu0 0.0
        %2286 = vmatprep.subr.mxu0 0.0
        %2287 = vmatpush2.msra.mxu0 0.0
        %2288 = vmatprep.subr.mxu0 0.0
        %2289 = vmatpush2.msra.mxu0 0.0
        %2290 = vmatprep.subr.mxu0 0.0
        %2291 = vmatpush2.msra.mxu0 0.0
        %2292 = vmatprep.subr.mxu0 0.0
        %2293 = vmatpush2.msra.mxu0 0.0
        %2294 = vmatprep.mubr.f32.mxu0 0.0
        %2295 = vmatmul.mubr.f32.gmra.mxu0 %v2228
        %v2296 = vpop.f32.mrf.mxu0
        %v2297 = vadd.f32 0.0, %v2296
        %v2298 = vpop.f32.mrf.mxu0
        %2299 = vdwg.mxu0
        %v2301 = vsel %vm1036, %v2060, 0
        %2303 = vmatprep.subr.mxu0 0.0
        %2304 = vmatpush1.msra.mxu0 0.0
        %2305 = vmatprep.subr.mxu0 0.0
        %2306 = vmatpush1.msra.mxu0 0.0
        %2307 = vmatprep.subr.mxu0 0.0
        %2308 = vmatpush1.msra.mxu0 0.0
        %2309 = vmatprep.subr.mxu0 0.0
        %2310 = vmatpush1.msra.mxu0 0.0
        %2311 = vmatprep.subr.mxu0 0.0
        %2312 = vmatpush1.msra.mxu0 0.0
        %2313 = vmatprep.subr.mxu0 0.0
        %2314 = vmatpush1.msra.mxu0 0.0
        %2315 = vmatprep.subr.mxu0 0.0
        %2316 = vmatpush1.msra.mxu0 0.0
        %2317 = vmatprep.subr.mxu0 0.0
        %2318 = vmatpush1.msra.mxu0 0.0
        %2319 = vmatprep.subr.mxu0 0.0
        %2320 = vmatpush1.msra.mxu0 0.0
        %2321 = vmatprep.subr.mxu0 0.0
        %2322 = vmatpush1.msra.mxu0 0.0
        %2323 = vmatprep.subr.mxu0 0.0
        %2324 = vmatpush1.msra.mxu0 0.0
        %2325 = vmatprep.subr.mxu0 0.0
        %2326 = vmatpush1.msra.mxu0 0.0
        %2327 = vmatprep.subr.mxu0 0.0
        %2328 = vmatpush1.msra.mxu0 0.0
        %2329 = vmatprep.subr.mxu0 0.0
        %2330 = vmatpush1.msra.mxu0 0.0
        %2331 = vmatprep.subr.mxu0 0.0
        %2332 = vmatpush1.msra.mxu0 0.0
        %2333 = vmatprep.subr.mxu0 0.0
        %2334 = vmatpush1.msra.mxu0 %v1716
        %2335 = vmatprep.subr.mxu0 0.0
        %2336 = vmatpush2.msra.mxu0 0.0
        %2337 = vmatprep.subr.mxu0 0.0
        %2338 = vmatpush2.msra.mxu0 0.0
        %2339 = vmatprep.subr.mxu0 0.0
        %2340 = vmatpush2.msra.mxu0 0.0
        %2341 = vmatprep.subr.mxu0 0.0
        %2342 = vmatpush2.msra.mxu0 0.0
        %2343 = vmatprep.subr.mxu0 0.0
        %2344 = vmatpush2.msra.mxu0 0.0
        %2345 = vmatprep.subr.mxu0 0.0
        %2346 = vmatpush2.msra.mxu0 0.0
        %2347 = vmatprep.subr.mxu0 0.0
        %2348 = vmatpush2.msra.mxu0 0.0
        %2349 = vmatprep.subr.mxu0 0.0
        %2350 = vmatpush2.msra.mxu0 0.0
        %2351 = vmatprep.subr.mxu0 0.0
        %2352 = vmatpush2.msra.mxu0 0.0
        %2353 = vmatprep.subr.mxu0 0.0
        %2354 = vmatpush2.msra.mxu0 0.0
        %2355 = vmatprep.subr.mxu0 0.0
        %2356 = vmatpush2.msra.mxu0 0.0
        %2357 = vmatprep.subr.mxu0 0.0
        %2358 = vmatpush2.msra.mxu0 0.0
        %2359 = vmatprep.subr.mxu0 0.0
        %2360 = vmatpush2.msra.mxu0 0.0
        %2361 = vmatprep.subr.mxu0 0.0
        %2362 = vmatpush2.msra.mxu0 0.0
        %2363 = vmatprep.subr.mxu0 0.0
        %2364 = vmatpush2.msra.mxu0 0.0
        %2365 = vmatprep.subr.mxu0 0.0
        %2366 = vmatpush2.msra.mxu0 0.0
        %2367 = vmatprep.mubr.f32.mxu0 0.0
        %2368 = vmatmul.mubr.f32.gmra.mxu0 %v2301
        %v2369 = vpop.f32.mrf.mxu0
        %v2370 = vadd.f32 0.0, %v2369
        %v2371 = vpop.f32.mrf.mxu0
        %2372 = vdwg.mxu0
        %v2373 = vadd.f32 %v2061, %v2151
        %v2374 = vadd.f32 %v2062, %v2224
        %v2375 = vadd.f32 %v2063, %v2297
        %v2376 = vadd.f32 %v2064, %v2370
        %v2377 = vld [vmem:[#allocation3 + $0x8] sm:$0xff]
        %v2378 = vld [vmem:[#allocation3 + $0x18] sm:$0xff]
        %v2379 = vld [vmem:[#allocation3 + $0x28] sm:$0xff]
        %v2380 = vld [vmem:[#allocation3 + $0x38] sm:$0xff]
        %v2381 = vld [vmem:[#allocation4 + $0x8] sm:$0xff]
        %v2382 = vld [vmem:[#allocation4 + $0x18] sm:$0xff]
        %v2383 = vld [vmem:[#allocation4 + $0x28] sm:$0xff]
        %v2384 = vld [vmem:[#allocation4 + $0x38] sm:$0xff]
        %v2386 = vsel %vm600, %v2377, 0
        %2388 = vmatprep.subr.mxu0 0.0
        %2389 = vmatpush1.xpose.msra.mxu0 0.0
        %2390 = vmatprep.subr.mxu0 0.0
        %2391 = vmatpush1.xpose.msra.mxu0 0.0
        %2392 = vmatprep.subr.mxu0 0.0
        %2393 = vmatpush1.xpose.msra.mxu0 0.0
        %2394 = vmatprep.subr.mxu0 0.0
        %2395 = vmatpush1.xpose.msra.mxu0 0.0
        %2396 = vmatprep.subr.mxu0 0.0
        %2397 = vmatpush1.xpose.msra.mxu0 0.0
        %2398 = vmatprep.subr.mxu0 0.0
        %2399 = vmatpush1.xpose.msra.mxu0 0.0
        %2400 = vmatprep.subr.mxu0 0.0
        %2401 = vmatpush1.xpose.msra.mxu0 0.0
        %2402 = vmatprep.subr.mxu0 0.0
        %2403 = vmatpush1.xpose.msra.mxu0 0.0
        %2404 = vmatprep.subr.mxu0 0.0
        %2405 = vmatpush1.xpose.msra.mxu0 0.0
        %2406 = vmatprep.subr.mxu0 0.0
        %2407 = vmatpush1.xpose.msra.mxu0 0.0
        %2408 = vmatprep.subr.mxu0 0.0
        %2409 = vmatpush1.xpose.msra.mxu0 0.0
        %2410 = vmatprep.subr.mxu0 0.0
        %2411 = vmatpush1.xpose.msra.mxu0 0.0
        %2412 = vmatprep.subr.mxu0 0.0
        %2413 = vmatpush1.xpose.msra.mxu0 0.0
        %2414 = vmatprep.subr.mxu0 0.0
        %2415 = vmatpush1.xpose.msra.mxu0 0.0
        %2416 = vmatprep.subr.mxu0 0.0
        %2417 = vmatpush1.xpose.msra.mxu0 0.0
        %2418 = vmatprep.subr.mxu0 0.0
        %2419 = vmatpush1.xpose.msra.mxu0 %v2386
        %2420 = vmatprep.subr.mxu0 0.0
        %2421 = vmatpush2.xpose.msra.mxu0 0.0
        %2422 = vmatprep.subr.mxu0 0.0
        %2423 = vmatpush2.xpose.msra.mxu0 0.0
        %2424 = vmatprep.subr.mxu0 0.0
        %2425 = vmatpush2.xpose.msra.mxu0 0.0
        %2426 = vmatprep.subr.mxu0 0.0
        %2427 = vmatpush2.xpose.msra.mxu0 0.0
        %2428 = vmatprep.subr.mxu0 0.0
        %2429 = vmatpush2.xpose.msra.mxu0 0.0
        %2430 = vmatprep.subr.mxu0 0.0
        %2431 = vmatpush2.xpose.msra.mxu0 0.0
        %2432 = vmatprep.subr.mxu0 0.0
        %2433 = vmatpush2.xpose.msra.mxu0 0.0
        %2434 = vmatprep.subr.mxu0 0.0
        %2435 = vmatpush2.xpose.msra.mxu0 0.0
        %2436 = vmatprep.subr.mxu0 0.0
        %2437 = vmatpush2.xpose.msra.mxu0 0.0
        %2438 = vmatprep.subr.mxu0 0.0
        %2439 = vmatpush2.xpose.msra.mxu0 0.0
        %2440 = vmatprep.subr.mxu0 0.0
        %2441 = vmatpush2.xpose.msra.mxu0 0.0
        %2442 = vmatprep.subr.mxu0 0.0
        %2443 = vmatpush2.xpose.msra.mxu0 0.0
        %2444 = vmatprep.subr.mxu0 0.0
        %2445 = vmatpush2.xpose.msra.mxu0 0.0
        %2446 = vmatprep.subr.mxu0 0.0
        %2447 = vmatpush2.xpose.msra.mxu0 0.0
        %2448 = vmatprep.subr.mxu0 0.0
        %2449 = vmatpush2.xpose.msra.mxu0 0.0
        %2450 = vmatprep.subr.mxu0 0.0
        %2451 = vmatpush2.xpose.msra.mxu0 0.0
        %2452 = vmatprep.mubr.f32.mxu0 0.0
        %2453 = vmatmul.mubr.f32.gmra.mxu0 %v1718
        %v2454 = vpop.f32.mrf.mxu0
        %v2455 = vadd.f32 0.0, %v2454
        %v2456 = vpop.f32.mrf.mxu0
        %2457 = vdwg.mxu0
        %v2459 = vsel %vm600, %v2378, 0
        %2461 = vmatprep.subr.mxu0 0.0
        %2462 = vmatpush1.xpose.msra.mxu0 0.0
        %2463 = vmatprep.subr.mxu0 0.0
        %2464 = vmatpush1.xpose.msra.mxu0 0.0
        %2465 = vmatprep.subr.mxu0 0.0
        %2466 = vmatpush1.xpose.msra.mxu0 0.0
        %2467 = vmatprep.subr.mxu0 0.0
        %2468 = vmatpush1.xpose.msra.mxu0 0.0
        %2469 = vmatprep.subr.mxu0 0.0
        %2470 = vmatpush1.xpose.msra.mxu0 0.0
        %2471 = vmatprep.subr.mxu0 0.0
        %2472 = vmatpush1.xpose.msra.mxu0 0.0
        %2473 = vmatprep.subr.mxu0 0.0
        %2474 = vmatpush1.xpose.msra.mxu0 0.0
        %2475 = vmatprep.subr.mxu0 0.0
        %2476 = vmatpush1.xpose.msra.mxu0 0.0
        %2477 = vmatprep.subr.mxu0 0.0
        %2478 = vmatpush1.xpose.msra.mxu0 0.0
        %2479 = vmatprep.subr.mxu0 0.0
        %2480 = vmatpush1.xpose.msra.mxu0 0.0
        %2481 = vmatprep.subr.mxu0 0.0
        %2482 = vmatpush1.xpose.msra.mxu0 0.0
        %2483 = vmatprep.subr.mxu0 0.0
        %2484 = vmatpush1.xpose.msra.mxu0 0.0
        %2485 = vmatprep.subr.mxu0 0.0
        %2486 = vmatpush1.xpose.msra.mxu0 0.0
        %2487 = vmatprep.subr.mxu0 0.0
        %2488 = vmatpush1.xpose.msra.mxu0 0.0
        %2489 = vmatprep.subr.mxu0 0.0
        %2490 = vmatpush1.xpose.msra.mxu0 0.0
        %2491 = vmatprep.subr.mxu0 0.0
        %2492 = vmatpush1.xpose.msra.mxu0 %v2459
        %2493 = vmatprep.subr.mxu0 0.0
        %2494 = vmatpush2.xpose.msra.mxu0 0.0
        %2495 = vmatprep.subr.mxu0 0.0
        %2496 = vmatpush2.xpose.msra.mxu0 0.0
        %2497 = vmatprep.subr.mxu0 0.0
        %2498 = vmatpush2.xpose.msra.mxu0 0.0
        %2499 = vmatprep.subr.mxu0 0.0
        %2500 = vmatpush2.xpose.msra.mxu0 0.0
        %2501 = vmatprep.subr.mxu0 0.0
        %2502 = vmatpush2.xpose.msra.mxu0 0.0
        %2503 = vmatprep.subr.mxu0 0.0
        %2504 = vmatpush2.xpose.msra.mxu0 0.0
        %2505 = vmatprep.subr.mxu0 0.0
        %2506 = vmatpush2.xpose.msra.mxu0 0.0
        %2507 = vmatprep.subr.mxu0 0.0
        %2508 = vmatpush2.xpose.msra.mxu0 0.0
        %2509 = vmatprep.subr.mxu0 0.0
        %2510 = vmatpush2.xpose.msra.mxu0 0.0
        %2511 = vmatprep.subr.mxu0 0.0
        %2512 = vmatpush2.xpose.msra.mxu0 0.0
        %2513 = vmatprep.subr.mxu0 0.0
        %2514 = vmatpush2.xpose.msra.mxu0 0.0
        %2515 = vmatprep.subr.mxu0 0.0
        %2516 = vmatpush2.xpose.msra.mxu0 0.0
        %2517 = vmatprep.subr.mxu0 0.0
        %2518 = vmatpush2.xpose.msra.mxu0 0.0
        %2519 = vmatprep.subr.mxu0 0.0
        %2520 = vmatpush2.xpose.msra.mxu0 0.0
        %2521 = vmatprep.subr.mxu0 0.0
        %2522 = vmatpush2.xpose.msra.mxu0 0.0
        %2523 = vmatprep.subr.mxu0 0.0
        %2524 = vmatpush2.xpose.msra.mxu0 0.0
        %2525 = vmatprep.mubr.f32.mxu0 0.0
        %2526 = vmatmul.mubr.f32.gmra.mxu0 %v1794
        %v2527 = vpop.f32.mrf.mxu0
        %v2528 = vadd.f32 0.0, %v2527
        %v2529 = vpop.f32.mrf.mxu0
        %2530 = vdwg.mxu0
        %v2532 = vsel %vm600, %v2379, 0
        %2534 = vmatprep.subr.mxu0 0.0
        %2535 = vmatpush1.xpose.msra.mxu0 0.0
        %2536 = vmatprep.subr.mxu0 0.0
        %2537 = vmatpush1.xpose.msra.mxu0 0.0
        %2538 = vmatprep.subr.mxu0 0.0
        %2539 = vmatpush1.xpose.msra.mxu0 0.0
        %2540 = vmatprep.subr.mxu0 0.0
        %2541 = vmatpush1.xpose.msra.mxu0 0.0
        %2542 = vmatprep.subr.mxu0 0.0
        %2543 = vmatpush1.xpose.msra.mxu0 0.0
        %2544 = vmatprep.subr.mxu0 0.0
        %2545 = vmatpush1.xpose.msra.mxu0 0.0
        %2546 = vmatprep.subr.mxu0 0.0
        %2547 = vmatpush1.xpose.msra.mxu0 0.0
        %2548 = vmatprep.subr.mxu0 0.0
        %2549 = vmatpush1.xpose.msra.mxu0 0.0
        %2550 = vmatprep.subr.mxu0 0.0
        %2551 = vmatpush1.xpose.msra.mxu0 0.0
        %2552 = vmatprep.subr.mxu0 0.0
        %2553 = vmatpush1.xpose.msra.mxu0 0.0
        %2554 = vmatprep.subr.mxu0 0.0
        %2555 = vmatpush1.xpose.msra.mxu0 0.0
        %2556 = vmatprep.subr.mxu0 0.0
        %2557 = vmatpush1.xpose.msra.mxu0 0.0
        %2558 = vmatprep.subr.mxu0 0.0
        %2559 = vmatpush1.xpose.msra.mxu0 0.0
        %2560 = vmatprep.subr.mxu0 0.0
        %2561 = vmatpush1.xpose.msra.mxu0 0.0
        %2562 = vmatprep.subr.mxu0 0.0
        %2563 = vmatpush1.xpose.msra.mxu0 0.0
        %2564 = vmatprep.subr.mxu0 0.0
        %2565 = vmatpush1.xpose.msra.mxu0 %v2532
        %2566 = vmatprep.subr.mxu0 0.0
        %2567 = vmatpush2.xpose.msra.mxu0 0.0
        %2568 = vmatprep.subr.mxu0 0.0
        %2569 = vmatpush2.xpose.msra.mxu0 0.0
        %2570 = vmatprep.subr.mxu0 0.0
        %2571 = vmatpush2.xpose.msra.mxu0 0.0
        %2572 = vmatprep.subr.mxu0 0.0
        %2573 = vmatpush2.xpose.msra.mxu0 0.0
        %2574 = vmatprep.subr.mxu0 0.0
        %2575 = vmatpush2.xpose.msra.mxu0 0.0
        %2576 = vmatprep.subr.mxu0 0.0
        %2577 = vmatpush2.xpose.msra.mxu0 0.0
        %2578 = vmatprep.subr.mxu0 0.0
        %2579 = vmatpush2.xpose.msra.mxu0 0.0
        %2580 = vmatprep.subr.mxu0 0.0
        %2581 = vmatpush2.xpose.msra.mxu0 0.0
        %2582 = vmatprep.subr.mxu0 0.0
        %2583 = vmatpush2.xpose.msra.mxu0 0.0
        %2584 = vmatprep.subr.mxu0 0.0
        %2585 = vmatpush2.xpose.msra.mxu0 0.0
        %2586 = vmatprep.subr.mxu0 0.0
        %2587 = vmatpush2.xpose.msra.mxu0 0.0
        %2588 = vmatprep.subr.mxu0 0.0
        %2589 = vmatpush2.xpose.msra.mxu0 0.0
        %2590 = vmatprep.subr.mxu0 0.0
        %2591 = vmatpush2.xpose.msra.mxu0 0.0
        %2592 = vmatprep.subr.mxu0 0.0
        %2593 = vmatpush2.xpose.msra.mxu0 0.0
        %2594 = vmatprep.subr.mxu0 0.0
        %2595 = vmatpush2.xpose.msra.mxu0 0.0
        %2596 = vmatprep.subr.mxu0 0.0
        %2597 = vmatpush2.xpose.msra.mxu0 0.0
        %2598 = vmatprep.mubr.f32.mxu0 0.0
        %2599 = vmatmul.mubr.f32.gmra.mxu0 %v1870
        %v2600 = vpop.f32.mrf.mxu0
        %v2601 = vadd.f32 0.0, %v2600
        %v2602 = vpop.f32.mrf.mxu0
        %2603 = vdwg.mxu0
        %v2605 = vsel %vm600, %v2380, 0
        %2607 = vmatprep.subr.mxu0 0.0
        %2608 = vmatpush1.xpose.msra.mxu0 0.0
        %2609 = vmatprep.subr.mxu0 0.0
        %2610 = vmatpush1.xpose.msra.mxu0 0.0
        %2611 = vmatprep.subr.mxu0 0.0
        %2612 = vmatpush1.xpose.msra.mxu0 0.0
        %2613 = vmatprep.subr.mxu0 0.0
        %2614 = vmatpush1.xpose.msra.mxu0 0.0
        %2615 = vmatprep.subr.mxu0 0.0
        %2616 = vmatpush1.xpose.msra.mxu0 0.0
        %2617 = vmatprep.subr.mxu0 0.0
        %2618 = vmatpush1.xpose.msra.mxu0 0.0
        %2619 = vmatprep.subr.mxu0 0.0
        %2620 = vmatpush1.xpose.msra.mxu0 0.0
        %2621 = vmatprep.subr.mxu0 0.0
        %2622 = vmatpush1.xpose.msra.mxu0 0.0
        %2623 = vmatprep.subr.mxu0 0.0
        %2624 = vmatpush1.xpose.msra.mxu0 0.0
        %2625 = vmatprep.subr.mxu0 0.0
        %2626 = vmatpush1.xpose.msra.mxu0 0.0
        %2627 = vmatprep.subr.mxu0 0.0
        %2628 = vmatpush1.xpose.msra.mxu0 0.0
        %2629 = vmatprep.subr.mxu0 0.0
        %2630 = vmatpush1.xpose.msra.mxu0 0.0
        %2631 = vmatprep.subr.mxu0 0.0
        %2632 = vmatpush1.xpose.msra.mxu0 0.0
        %2633 = vmatprep.subr.mxu0 0.0
        %2634 = vmatpush1.xpose.msra.mxu0 0.0
        %2635 = vmatprep.subr.mxu0 0.0
        %2636 = vmatpush1.xpose.msra.mxu0 0.0
        %2637 = vmatprep.subr.mxu0 0.0
        %2638 = vmatpush1.xpose.msra.mxu0 %v2605
        %2639 = vmatprep.subr.mxu0 0.0
        %2640 = vmatpush2.xpose.msra.mxu0 0.0
        %2641 = vmatprep.subr.mxu0 0.0
        %2642 = vmatpush2.xpose.msra.mxu0 0.0
        %2643 = vmatprep.subr.mxu0 0.0
        %2644 = vmatpush2.xpose.msra.mxu0 0.0
        %2645 = vmatprep.subr.mxu0 0.0
        %2646 = vmatpush2.xpose.msra.mxu0 0.0
        %2647 = vmatprep.subr.mxu0 0.0
        %2648 = vmatpush2.xpose.msra.mxu0 0.0
        %2649 = vmatprep.subr.mxu0 0.0
        %2650 = vmatpush2.xpose.msra.mxu0 0.0
        %2651 = vmatprep.subr.mxu0 0.0
        %2652 = vmatpush2.xpose.msra.mxu0 0.0
        %2653 = vmatprep.subr.mxu0 0.0
        %2654 = vmatpush2.xpose.msra.mxu0 0.0
        %2655 = vmatprep.subr.mxu0 0.0
        %2656 = vmatpush2.xpose.msra.mxu0 0.0
        %2657 = vmatprep.subr.mxu0 0.0
        %2658 = vmatpush2.xpose.msra.mxu0 0.0
        %2659 = vmatprep.subr.mxu0 0.0
        %2660 = vmatpush2.xpose.msra.mxu0 0.0
        %2661 = vmatprep.subr.mxu0 0.0
        %2662 = vmatpush2.xpose.msra.mxu0 0.0
        %2663 = vmatprep.subr.mxu0 0.0
        %2664 = vmatpush2.xpose.msra.mxu0 0.0
        %2665 = vmatprep.subr.mxu0 0.0
        %2666 = vmatpush2.xpose.msra.mxu0 0.0
        %2667 = vmatprep.subr.mxu0 0.0
        %2668 = vmatpush2.xpose.msra.mxu0 0.0
        %2669 = vmatprep.subr.mxu0 0.0
        %2670 = vmatpush2.xpose.msra.mxu0 0.0
        %2671 = vmatprep.mubr.f32.mxu0 0.0
        %2672 = vmatmul.mubr.f32.gmra.mxu0 %v1946
        %v2673 = vpop.f32.mrf.mxu0
        %v2674 = vadd.f32 0.0, %v2673
        %v2675 = vpop.f32.mrf.mxu0
        %2676 = vdwg.mxu0
        %v2677 = vsel %vm1031, %v2455, -1e+30
        %v2678 = vsel %vm1031, %v2528, -1e+30
        %v2679 = vsel %vm1031, %v2601, -1e+30
        %v2680 = vsel %vm1031, %v2674, -1e+30
        %v2681 = vsel %vm1036, %v2677, -inf
        %2682 = vmax.xlane.f32.xlu0 %v2681
        %v2683 = vpop.xlane.xlu0 %2682
        %v2684 = vsel %vm1036, %v2678, -inf
        %2685 = vmax.xlane.f32.xlu0 %v2684
        %v2686 = vpop.xlane.xlu0 %2685
        %v2687 = vsel %vm1036, %v2679, -inf
        %2688 = vmax.xlane.f32.xlu0 %v2687
        %v2689 = vpop.xlane.xlu0 %2688
        %v2690 = vsel %vm1036, %v2680, -inf
        %2691 = vmax.xlane.f32.xlu0 %v2690
        %v2692 = vpop.xlane.xlu0 %2691
        %v2693 = vmax.f32 %v2033, %v2683
        %v2694 = vmax.f32 %v2034, %v2686
        %v2695 = vmax.f32 %v2035, %v2689
        %v2696 = vmax.f32 %v2036, %v2692
        %v2697 = vsub.f32 %v2033, %v2693
        %v2698 = vsub.f32 %v2034, %v2694
        %v2699 = vsub.f32 %v2035, %v2695
        %v2700 = vsub.f32 %v2036, %v2696
        %v2701 = vmul.f32 %v2697, 1.442695
        %v2702 = vpow.pop %v2701
        %v2703 = vmul.f32 %v2698, 1.442695
        %v2704 = vpow.pop %v2703
        %v2705 = vmul.f32 %v2699, 1.442695
        %v2706 = vpow.pop %v2705
        %v2707 = vmul.f32 %v2700, 1.442695
        %v2708 = vpow.pop %v2707
        %v2709 = vsub.f32 %v2677, %v2693
        %v2710 = vsub.f32 %v2678, %v2694
        %v2711 = vsub.f32 %v2679, %v2695
        %v2712 = vsub.f32 %v2680, %v2696
        %v2713 = vmul.f32 %v2709, 1.442695
        %v2714 = vpow.pop %v2713
        %v2715 = vmul.f32 %v2710, 1.442695
        %v2716 = vpow.pop %v2715
        %v2717 = vmul.f32 %v2711, 1.442695
        %v2718 = vpow.pop %v2717
        %v2719 = vmul.f32 %v2712, 1.442695
        %v2720 = vpow.pop %v2719
        %v2721 = vmul.f32 %v2702, %v2077
        %v2722 = vmul.f32 %v2704, %v2078
        %v2723 = vmul.f32 %v2706, %v2079
        %v2724 = vmul.f32 %v2708, %v2080
        %v2725 = vsel %vm1036, %v2714, 0.0
        %2726 = vadd.xlane.f32.xlu0 %v2725
        %v2727 = vpop.xlane.xlu0 %2726
        %v2728 = vsel %vm1036, %v2716, 0.0
        %2729 = vadd.xlane.f32.xlu0 %v2728
        %v2730 = vpop.xlane.xlu0 %2729
        %v2731 = vsel %vm1036, %v2718, 0.0
        %2732 = vadd.xlane.f32.xlu0 %v2731
        %v2733 = vpop.xlane.xlu0 %2732
        %v2734 = vsel %vm1036, %v2720, 0.0
        %2735 = vadd.xlane.f32.xlu0 %v2734
        %v2736 = vpop.xlane.xlu0 %2735
        %v2737 = vadd.f32 %v2721, %v2727
        %v2738 = vadd.f32 %v2722, %v2730
        %v2739 = vadd.f32 %v2723, %v2733
        %v2740 = vadd.f32 %v2724, %v2736
        %v2741 = vmul.f32 %v2702, %v2373
        %v2742 = vmul.f32 %v2704, %v2374
        %v2743 = vmul.f32 %v2706, %v2375
        %v2744 = vmul.f32 %v2708, %v2376
        %v2746 = vsel %vm1036, %v2714, 0
        %2748 = vmatprep.subr.mxu0 0.0
        %2749 = vmatpush1.msra.mxu0 0.0
        %2750 = vmatprep.subr.mxu0 0.0
        %2751 = vmatpush1.msra.mxu0 0.0
        %2752 = vmatprep.subr.mxu0 0.0
        %2753 = vmatpush1.msra.mxu0 0.0
        %2754 = vmatprep.subr.mxu0 0.0
        %2755 = vmatpush1.msra.mxu0 0.0
        %2756 = vmatprep.subr.mxu0 0.0
        %2757 = vmatpush1.msra.mxu0 0.0
        %2758 = vmatprep.subr.mxu0 0.0
        %2759 = vmatpush1.msra.mxu0 0.0
        %2760 = vmatprep.subr.mxu0 0.0
        %2761 = vmatpush1.msra.mxu0 0.0
        %2762 = vmatprep.subr.mxu0 0.0
        %2763 = vmatpush1.msra.mxu0 0.0
        %2764 = vmatprep.subr.mxu0 0.0
        %2765 = vmatpush1.msra.mxu0 0.0
        %2766 = vmatprep.subr.mxu0 0.0
        %2767 = vmatpush1.msra.mxu0 0.0
        %2768 = vmatprep.subr.mxu0 0.0
        %2769 = vmatpush1.msra.mxu0 0.0
        %2770 = vmatprep.subr.mxu0 0.0
        %2771 = vmatpush1.msra.mxu0 0.0
        %2772 = vmatprep.subr.mxu0 0.0
        %2773 = vmatpush1.msra.mxu0 0.0
        %2774 = vmatprep.subr.mxu0 0.0
        %2775 = vmatpush1.msra.mxu0 0.0
        %2776 = vmatprep.subr.mxu0 0.0
        %2777 = vmatpush1.msra.mxu0 0.0
        %2778 = vmatprep.subr.mxu0 0.0
        %2779 = vmatpush1.msra.mxu0 %v2381
        %2780 = vmatprep.subr.mxu0 0.0
        %2781 = vmatpush2.msra.mxu0 0.0
        %2782 = vmatprep.subr.mxu0 0.0
        %2783 = vmatpush2.msra.mxu0 0.0
        %2784 = vmatprep.subr.mxu0 0.0
        %2785 = vmatpush2.msra.mxu0 0.0
        %2786 = vmatprep.subr.mxu0 0.0
        %2787 = vmatpush2.msra.mxu0 0.0
        %2788 = vmatprep.subr.mxu0 0.0
        %2789 = vmatpush2.msra.mxu0 0.0
        %2790 = vmatprep.subr.mxu0 0.0
        %2791 = vmatpush2.msra.mxu0 0.0
        %2792 = vmatprep.subr.mxu0 0.0
        %2793 = vmatpush2.msra.mxu0 0.0
        %2794 = vmatprep.subr.mxu0 0.0
        %2795 = vmatpush2.msra.mxu0 0.0
        %2796 = vmatprep.subr.mxu0 0.0
        %2797 = vmatpush2.msra.mxu0 0.0
        %2798 = vmatprep.subr.mxu0 0.0
        %2799 = vmatpush2.msra.mxu0 0.0
        %2800 = vmatprep.subr.mxu0 0.0
        %2801 = vmatpush2.msra.mxu0 0.0
        %2802 = vmatprep.subr.mxu0 0.0
        %2803 = vmatpush2.msra.mxu0 0.0
        %2804 = vmatprep.subr.mxu0 0.0
        %2805 = vmatpush2.msra.mxu0 0.0
        %2806 = vmatprep.subr.mxu0 0.0
        %2807 = vmatpush2.msra.mxu0 0.0
        %2808 = vmatprep.subr.mxu0 0.0
        %2809 = vmatpush2.msra.mxu0 0.0
        %2810 = vmatprep.subr.mxu0 0.0
        %2811 = vmatpush2.msra.mxu0 0.0
        %2812 = vmatprep.mubr.f32.mxu0 0.0
        %2813 = vmatmul.mubr.f32.gmra.mxu0 %v2746
        %v2814 = vpop.f32.mrf.mxu0
        %v2815 = vadd.f32 0.0, %v2814
        %v2816 = vpop.f32.mrf.mxu0
        %2817 = vdwg.mxu0
        %v2819 = vsel %vm1036, %v2716, 0
        %2821 = vmatprep.subr.mxu0 0.0
        %2822 = vmatpush1.msra.mxu0 0.0
        %2823 = vmatprep.subr.mxu0 0.0
        %2824 = vmatpush1.msra.mxu0 0.0
        %2825 = vmatprep.subr.mxu0 0.0
        %2826 = vmatpush1.msra.mxu0 0.0
        %2827 = vmatprep.subr.mxu0 0.0
        %2828 = vmatpush1.msra.mxu0 0.0
        %2829 = vmatprep.subr.mxu0 0.0
        %2830 = vmatpush1.msra.mxu0 0.0
        %2831 = vmatprep.subr.mxu0 0.0
        %2832 = vmatpush1.msra.mxu0 0.0
        %2833 = vmatprep.subr.mxu0 0.0
        %2834 = vmatpush1.msra.mxu0 0.0
        %2835 = vmatprep.subr.mxu0 0.0
        %2836 = vmatpush1.msra.mxu0 0.0
        %2837 = vmatprep.subr.mxu0 0.0
        %2838 = vmatpush1.msra.mxu0 0.0
        %2839 = vmatprep.subr.mxu0 0.0
        %2840 = vmatpush1.msra.mxu0 0.0
        %2841 = vmatprep.subr.mxu0 0.0
        %2842 = vmatpush1.msra.mxu0 0.0
        %2843 = vmatprep.subr.mxu0 0.0
        %2844 = vmatpush1.msra.mxu0 0.0
        %2845 = vmatprep.subr.mxu0 0.0
        %2846 = vmatpush1.msra.mxu0 0.0
        %2847 = vmatprep.subr.mxu0 0.0
        %2848 = vmatpush1.msra.mxu0 0.0
        %2849 = vmatprep.subr.mxu0 0.0
        %2850 = vmatpush1.msra.mxu0 0.0
        %2851 = vmatprep.subr.mxu0 0.0
        %2852 = vmatpush1.msra.mxu0 %v2382
        %2853 = vmatprep.subr.mxu0 0.0
        %2854 = vmatpush2.msra.mxu0 0.0
        %2855 = vmatprep.subr.mxu0 0.0
        %2856 = vmatpush2.msra.mxu0 0.0
        %2857 = vmatprep.subr.mxu0 0.0
        %2858 = vmatpush2.msra.mxu0 0.0
        %2859 = vmatprep.subr.mxu0 0.0
        %2860 = vmatpush2.msra.mxu0 0.0
        %2861 = vmatprep.subr.mxu0 0.0
        %2862 = vmatpush2.msra.mxu0 0.0
        %2863 = vmatprep.subr.mxu0 0.0
        %2864 = vmatpush2.msra.mxu0 0.0
        %2865 = vmatprep.subr.mxu0 0.0
        %2866 = vmatpush2.msra.mxu0 0.0
        %2867 = vmatprep.subr.mxu0 0.0
        %2868 = vmatpush2.msra.mxu0 0.0
        %2869 = vmatprep.subr.mxu0 0.0
        %2870 = vmatpush2.msra.mxu0 0.0
        %2871 = vmatprep.subr.mxu0 0.0
        %2872 = vmatpush2.msra.mxu0 0.0
        %2873 = vmatprep.subr.mxu0 0.0
        %2874 = vmatpush2.msra.mxu0 0.0
        %2875 = vmatprep.subr.mxu0 0.0
        %2876 = vmatpush2.msra.mxu0 0.0
        %2877 = vmatprep.subr.mxu0 0.0
        %2878 = vmatpush2.msra.mxu0 0.0
        %2879 = vmatprep.subr.mxu0 0.0
        %2880 = vmatpush2.msra.mxu0 0.0
        %2881 = vmatprep.subr.mxu0 0.0
        %2882 = vmatpush2.msra.mxu0 0.0
        %2883 = vmatprep.subr.mxu0 0.0
        %2884 = vmatpush2.msra.mxu0 0.0
        %2885 = vmatprep.mubr.f32.mxu0 0.0
        %2886 = vmatmul.mubr.f32.gmra.mxu0 %v2819
        %v2887 = vpop.f32.mrf.mxu0
        %v2888 = vadd.f32 0.0, %v2887
        %v2889 = vpop.f32.mrf.mxu0
        %2890 = vdwg.mxu0
        %v2892 = vsel %vm1036, %v2718, 0
        %2894 = vmatprep.subr.mxu0 0.0
        %2895 = vmatpush1.msra.mxu0 0.0
        %2896 = vmatprep.subr.mxu0 0.0
        %2897 = vmatpush1.msra.mxu0 0.0
        %2898 = vmatprep.subr.mxu0 0.0
        %2899 = vmatpush1.msra.mxu0 0.0
        %2900 = vmatprep.subr.mxu0 0.0
        %2901 = vmatpush1.msra.mxu0 0.0
        %2902 = vmatprep.subr.mxu0 0.0
        %2903 = vmatpush1.msra.mxu0 0.0
        %2904 = vmatprep.subr.mxu0 0.0
        %2905 = vmatpush1.msra.mxu0 0.0
        %2906 = vmatprep.subr.mxu0 0.0
        %2907 = vmatpush1.msra.mxu0 0.0
        %2908 = vmatprep.subr.mxu0 0.0
        %2909 = vmatpush1.msra.mxu0 0.0
        %2910 = vmatprep.subr.mxu0 0.0
        %2911 = vmatpush1.msra.mxu0 0.0
        %2912 = vmatprep.subr.mxu0 0.0
        %2913 = vmatpush1.msra.mxu0 0.0
        %2914 = vmatprep.subr.mxu0 0.0
        %2915 = vmatpush1.msra.mxu0 0.0
        %2916 = vmatprep.subr.mxu0 0.0
        %2917 = vmatpush1.msra.mxu0 0.0
        %2918 = vmatprep.subr.mxu0 0.0
        %2919 = vmatpush1.msra.mxu0 0.0
        %2920 = vmatprep.subr.mxu0 0.0
        %2921 = vmatpush1.msra.mxu0 0.0
        %2922 = vmatprep.subr.mxu0 0.0
        %2923 = vmatpush1.msra.mxu0 0.0
        %2924 = vmatprep.subr.mxu0 0.0
        %2925 = vmatpush1.msra.mxu0 %v2383
        %2926 = vmatprep.subr.mxu0 0.0
        %2927 = vmatpush2.msra.mxu0 0.0
        %2928 = vmatprep.subr.mxu0 0.0
        %2929 = vmatpush2.msra.mxu0 0.0
        %2930 = vmatprep.subr.mxu0 0.0
        %2931 = vmatpush2.msra.mxu0 0.0
        %2932 = vmatprep.subr.mxu0 0.0
        %2933 = vmatpush2.msra.mxu0 0.0
        %2934 = vmatprep.subr.mxu0 0.0
        %2935 = vmatpush2.msra.mxu0 0.0
        %2936 = vmatprep.subr.mxu0 0.0
        %2937 = vmatpush2.msra.mxu0 0.0
        %2938 = vmatprep.subr.mxu0 0.0
        %2939 = vmatpush2.msra.mxu0 0.0
        %2940 = vmatprep.subr.mxu0 0.0
        %2941 = vmatpush2.msra.mxu0 0.0
        %2942 = vmatprep.subr.mxu0 0.0
        %2943 = vmatpush2.msra.mxu0 0.0
        %2944 = vmatprep.subr.mxu0 0.0
        %2945 = vmatpush2.msra.mxu0 0.0
        %2946 = vmatprep.subr.mxu0 0.0
        %2947 = vmatpush2.msra.mxu0 0.0
        %2948 = vmatprep.subr.mxu0 0.0
        %2949 = vmatpush2.msra.mxu0 0.0
        %2950 = vmatprep.subr.mxu0 0.0
        %2951 = vmatpush2.msra.mxu0 0.0
        %2952 = vmatprep.subr.mxu0 0.0
        %2953 = vmatpush2.msra.mxu0 0.0
        %2954 = vmatprep.subr.mxu0 0.0
        %2955 = vmatpush2.msra.mxu0 0.0
        %2956 = vmatprep.subr.mxu0 0.0
        %2957 = vmatpush2.msra.mxu0 0.0
        %2958 = vmatprep.mubr.f32.mxu0 0.0
        %2959 = vmatmul.mubr.f32.gmra.mxu0 %v2892
        %v2960 = vpop.f32.mrf.mxu0
        %v2961 = vadd.f32 0.0, %v2960
        %v2962 = vpop.f32.mrf.mxu0
        %2963 = vdwg.mxu0
        %v2965 = vsel %vm1036, %v2720, 0
        %2967 = vmatprep.subr.mxu0 0.0
        %2968 = vmatpush1.msra.mxu0 0.0
        %2969 = vmatprep.subr.mxu0 0.0
        %2970 = vmatpush1.msra.mxu0 0.0
        %2971 = vmatprep.subr.mxu0 0.0
        %2972 = vmatpush1.msra.mxu0 0.0
        %2973 = vmatprep.subr.mxu0 0.0
        %2974 = vmatpush1.msra.mxu0 0.0
        %2975 = vmatprep.subr.mxu0 0.0
        %2976 = vmatpush1.msra.mxu0 0.0
        %2977 = vmatprep.subr.mxu0 0.0
        %2978 = vmatpush1.msra.mxu0 0.0
        %2979 = vmatprep.subr.mxu0 0.0
        %2980 = vmatpush1.msra.mxu0 0.0
        %2981 = vmatprep.subr.mxu0 0.0
        %2982 = vmatpush1.msra.mxu0 0.0
        %2983 = vmatprep.subr.mxu0 0.0
        %2984 = vmatpush1.msra.mxu0 0.0
        %2985 = vmatprep.subr.mxu0 0.0
        %2986 = vmatpush1.msra.mxu0 0.0
        %2987 = vmatprep.subr.mxu0 0.0
        %2988 = vmatpush1.msra.mxu0 0.0
        %2989 = vmatprep.subr.mxu0 0.0
        %2990 = vmatpush1.msra.mxu0 0.0
        %2991 = vmatprep.subr.mxu0 0.0
        %2992 = vmatpush1.msra.mxu0 0.0
        %2993 = vmatprep.subr.mxu0 0.0
        %2994 = vmatpush1.msra.mxu0 0.0
        %2995 = vmatprep.subr.mxu0 0.0
        %2996 = vmatpush1.msra.mxu0 0.0
        %2997 = vmatprep.subr.mxu0 0.0
        %2998 = vmatpush1.msra.mxu0 %v2384
        %2999 = vmatprep.subr.mxu0 0.0
        %3000 = vmatpush2.msra.mxu0 0.0
        %3001 = vmatprep.subr.mxu0 0.0
        %3002 = vmatpush2.msra.mxu0 0.0
        %3003 = vmatprep.subr.mxu0 0.0
        %3004 = vmatpush2.msra.mxu0 0.0
        %3005 = vmatprep.subr.mxu0 0.0
        %3006 = vmatpush2.msra.mxu0 0.0
        %3007 = vmatprep.subr.mxu0 0.0
        %3008 = vmatpush2.msra.mxu0 0.0
        %3009 = vmatprep.subr.mxu0 0.0
        %3010 = vmatpush2.msra.mxu0 0.0
        %3011 = vmatprep.subr.mxu0 0.0
        %3012 = vmatpush2.msra.mxu0 0.0
        %3013 = vmatprep.subr.mxu0 0.0
        %3014 = vmatpush2.msra.mxu0 0.0
        %3015 = vmatprep.subr.mxu0 0.0
        %3016 = vmatpush2.msra.mxu0 0.0
        %3017 = vmatprep.subr.mxu0 0.0
        %3018 = vmatpush2.msra.mxu0 0.0
        %3019 = vmatprep.subr.mxu0 0.0
        %3020 = vmatpush2.msra.mxu0 0.0
        %3021 = vmatprep.subr.mxu0 0.0
        %3022 = vmatpush2.msra.mxu0 0.0
        %3023 = vmatprep.subr.mxu0 0.0
        %3024 = vmatpush2.msra.mxu0 0.0
        %3025 = vmatprep.subr.mxu0 0.0
        %3026 = vmatpush2.msra.mxu0 0.0
        %3027 = vmatprep.subr.mxu0 0.0
        %3028 = vmatpush2.msra.mxu0 0.0
        %3029 = vmatprep.subr.mxu0 0.0
        %3030 = vmatpush2.msra.mxu0 0.0
        %3031 = vmatprep.mubr.f32.mxu0 0.0
        %3032 = vmatmul.mubr.f32.gmra.mxu0 %v2965
        %v3033 = vpop.f32.mrf.mxu0
        %v3034 = vadd.f32 0.0, %v3033
        %v3035 = vpop.f32.mrf.mxu0
        %3036 = vdwg.mxu0
        %v3037 = vadd.f32 %v2741, %v2815
        %v3038 = vadd.f32 %v2742, %v2888
        %v3039 = vadd.f32 %v2743, %v2961
        %v3040 = vadd.f32 %v2744, %v3034
        %v3041 = vrcp.pop %v2737
        %v3042 = vrcp.pop %v2738
        %v3043 = vrcp.pop %v2739
        %v3044 = vrcp.pop %v2740
        %v3045 = vmul.f32 %v3037, %v3041
        %v3046 = vmul.f32 %v3038, %v3042
        %v3047 = vmul.f32 %v3039, %v3043
        %v3048 = vmul.f32 %v3040, %v3044
        %v3050 = vsel %vm600, %v3045, 0
        %3052 = vmatprep.subr.mxu0 0.0
        %3053 = vmatpush1.msra.mxu0 0.0
        %3054 = vmatprep.subr.mxu0 0.0
        %3055 = vmatpush1.msra.mxu0 0.0
        %3056 = vmatprep.subr.mxu0 0.0
        %3057 = vmatpush1.msra.mxu0 0.0
        %3058 = vmatprep.subr.mxu0 0.0
        %3059 = vmatpush1.msra.mxu0 0.0
        %3060 = vmatprep.subr.mxu0 0.0
        %3061 = vmatpush1.msra.mxu0 0.0
        %3062 = vmatprep.subr.mxu0 0.0
        %3063 = vmatpush1.msra.mxu0 0.0
        %3064 = vmatprep.subr.mxu0 0.0
        %3065 = vmatpush1.msra.mxu0 0.0
        %3066 = vmatprep.subr.mxu0 0.0
        %3067 = vmatpush1.msra.mxu0 0.0
        %3068 = vmatprep.subr.mxu0 0.0
        %3069 = vmatpush1.msra.mxu0 0.0
        %3070 = vmatprep.subr.mxu0 0.0
        %3071 = vmatpush1.msra.mxu0 0.0
        %3072 = vmatprep.subr.mxu0 0.0
        %3073 = vmatpush1.msra.mxu0 0.0
        %3074 = vmatprep.subr.mxu0 0.0
        %3075 = vmatpush1.msra.mxu0 0.0
        %3076 = vmatprep.subr.mxu0 0.0
        %3077 = vmatpush1.msra.mxu0 0.0
        %3078 = vmatprep.subr.mxu0 0.0
        %3079 = vmatpush1.msra.mxu0 0.0
        %3080 = vmatprep.subr.mxu0 0.0
        %3081 = vmatpush1.msra.mxu0 %v706
        %3082 = vmatprep.subr.mxu0 0.0
        %3083 = vmatpush1.msra.mxu0 %v705
        %3084 = vmatprep.subr.mxu0 0.0
        %3085 = vmatpush2.msra.mxu0 0.0
        %3086 = vmatprep.subr.mxu0 0.0
        %3087 = vmatpush2.msra.mxu0 0.0
        %3088 = vmatprep.subr.mxu0 0.0
        %3089 = vmatpush2.msra.mxu0 0.0
        %3090 = vmatprep.subr.mxu0 0.0
        %3091 = vmatpush2.msra.mxu0 0.0
        %3092 = vmatprep.subr.mxu0 0.0
        %3093 = vmatpush2.msra.mxu0 0.0
        %3094 = vmatprep.subr.mxu0 0.0
        %3095 = vmatpush2.msra.mxu0 0.0
        %3096 = vmatprep.subr.mxu0 0.0
        %3097 = vmatpush2.msra.mxu0 0.0
        %3098 = vmatprep.subr.mxu0 0.0
        %3099 = vmatpush2.msra.mxu0 0.0
        %3100 = vmatprep.subr.mxu0 0.0
        %3101 = vmatpush2.msra.mxu0 0.0
        %3102 = vmatprep.subr.mxu0 0.0
        %3103 = vmatpush2.msra.mxu0 0.0
        %3104 = vmatprep.subr.mxu0 0.0
        %3105 = vmatpush2.msra.mxu0 0.0
        %3106 = vmatprep.subr.mxu0 0.0
        %3107 = vmatpush2.msra.mxu0 0.0
        %3108 = vmatprep.subr.mxu0 0.0
        %3109 = vmatpush2.msra.mxu0 0.0
        %3110 = vmatprep.subr.mxu0 0.0
        %3111 = vmatpush2.msra.mxu0 0.0
        %3112 = vmatprep.subr.mxu0 0.0
        %3113 = vmatpush2.msra.mxu0 0.0
        %3114 = vmatprep.subr.mxu0 0.0
        %3115 = vmatpush2.msra.mxu0 0.0
        %3116 = vmatprep.mubr.f32.mxu0 0.0
        %3117 = vmatmul.mubr.f32.gmra.mxu0 %v3050
        %v3118 = vpop.f32.mrf.mxu0
        %v3119 = vadd.f32 0.0, %v3118
        %v3120 = vpop.f32.mrf.mxu0
        %3121 = vdwg.mxu0
        %v3123 = vsel %vm600, %v3046, 0
        %3125 = vmatprep.subr.mxu0 0.0
        %3126 = vmatpush1.msra.mxu0 0.0
        %3127 = vmatprep.subr.mxu0 0.0
        %3128 = vmatpush1.msra.mxu0 0.0
        %3129 = vmatprep.subr.mxu0 0.0
        %3130 = vmatpush1.msra.mxu0 0.0
        %3131 = vmatprep.subr.mxu0 0.0
        %3132 = vmatpush1.msra.mxu0 0.0
        %3133 = vmatprep.subr.mxu0 0.0
        %3134 = vmatpush1.msra.mxu0 0.0
        %3135 = vmatprep.subr.mxu0 0.0
        %3136 = vmatpush1.msra.mxu0 0.0
        %3137 = vmatprep.subr.mxu0 0.0
        %3138 = vmatpush1.msra.mxu0 0.0
        %3139 = vmatprep.subr.mxu0 0.0
        %3140 = vmatpush1.msra.mxu0 0.0
        %3141 = vmatprep.subr.mxu0 0.0
        %3142 = vmatpush1.msra.mxu0 0.0
        %3143 = vmatprep.subr.mxu0 0.0
        %3144 = vmatpush1.msra.mxu0 0.0
        %3145 = vmatprep.subr.mxu0 0.0
        %3146 = vmatpush1.msra.mxu0 0.0
        %3147 = vmatprep.subr.mxu0 0.0
        %3148 = vmatpush1.msra.mxu0 0.0
        %3149 = vmatprep.subr.mxu0 0.0
        %3150 = vmatpush1.msra.mxu0 0.0
        %3151 = vmatprep.subr.mxu0 0.0
        %3152 = vmatpush1.msra.mxu0 0.0
        %3153 = vmatprep.subr.mxu0 0.0
        %3154 = vmatpush1.msra.mxu0 %v708
        %3155 = vmatprep.subr.mxu0 0.0
        %3156 = vmatpush1.msra.mxu0 %v707
        %3157 = vmatprep.subr.mxu0 0.0
        %3158 = vmatpush2.msra.mxu0 0.0
        %3159 = vmatprep.subr.mxu0 0.0
        %3160 = vmatpush2.msra.mxu0 0.0
        %3161 = vmatprep.subr.mxu0 0.0
        %3162 = vmatpush2.msra.mxu0 0.0
        %3163 = vmatprep.subr.mxu0 0.0
        %3164 = vmatpush2.msra.mxu0 0.0
        %3165 = vmatprep.subr.mxu0 0.0
        %3166 = vmatpush2.msra.mxu0 0.0
        %3167 = vmatprep.subr.mxu0 0.0
        %3168 = vmatpush2.msra.mxu0 0.0
        %3169 = vmatprep.subr.mxu0 0.0
        %3170 = vmatpush2.msra.mxu0 0.0
        %3171 = vmatprep.subr.mxu0 0.0
        %3172 = vmatpush2.msra.mxu0 0.0
        %3173 = vmatprep.subr.mxu0 0.0
        %3174 = vmatpush2.msra.mxu0 0.0
        %3175 = vmatprep.subr.mxu0 0.0
        %3176 = vmatpush2.msra.mxu0 0.0
        %3177 = vmatprep.subr.mxu0 0.0
        %3178 = vmatpush2.msra.mxu0 0.0
        %3179 = vmatprep.subr.mxu0 0.0
        %3180 = vmatpush2.msra.mxu0 0.0
        %3181 = vmatprep.subr.mxu0 0.0
        %3182 = vmatpush2.msra.mxu0 0.0
        %3183 = vmatprep.subr.mxu0 0.0
        %3184 = vmatpush2.msra.mxu0 0.0
        %3185 = vmatprep.subr.mxu0 0.0
        %3186 = vmatpush2.msra.mxu0 0.0
        %3187 = vmatprep.subr.mxu0 0.0
        %3188 = vmatpush2.msra.mxu0 0.0
        %3189 = vmatprep.mubr.f32.mxu0 0.0
        %3190 = vmatmul.mubr.f32.gmra.mxu0 %v3123
        %v3191 = vpop.f32.mrf.mxu0
        %v3192 = vadd.f32 0.0, %v3191
        %v3193 = vpop.f32.mrf.mxu0
        %3194 = vdwg.mxu0
        %v3196 = vsel %vm600, %v3047, 0
        %3198 = vmatprep.subr.mxu0 0.0
        %3199 = vmatpush1.msra.mxu0 0.0
        %3200 = vmatprep.subr.mxu0 0.0
        %3201 = vmatpush1.msra.mxu0 0.0
        %3202 = vmatprep.subr.mxu0 0.0
        %3203 = vmatpush1.msra.mxu0 0.0
        %3204 = vmatprep.subr.mxu0 0.0
        %3205 = vmatpush1.msra.mxu0 0.0
        %3206 = vmatprep.subr.mxu0 0.0
        %3207 = vmatpush1.msra.mxu0 0.0
        %3208 = vmatprep.subr.mxu0 0.0
        %3209 = vmatpush1.msra.mxu0 0.0
        %3210 = vmatprep.subr.mxu0 0.0
        %3211 = vmatpush1.msra.mxu0 0.0
        %3212 = vmatprep.subr.mxu0 0.0
        %3213 = vmatpush1.msra.mxu0 0.0
        %3214 = vmatprep.subr.mxu0 0.0
        %3215 = vmatpush1.msra.mxu0 0.0
        %3216 = vmatprep.subr.mxu0 0.0
        %3217 = vmatpush1.msra.mxu0 0.0
        %3218 = vmatprep.subr.mxu0 0.0
        %3219 = vmatpush1.msra.mxu0 0.0
        %3220 = vmatprep.subr.mxu0 0.0
        %3221 = vmatpush1.msra.mxu0 0.0
        %3222 = vmatprep.subr.mxu0 0.0
        %3223 = vmatpush1.msra.mxu0 0.0
        %3224 = vmatprep.subr.mxu0 0.0
        %3225 = vmatpush1.msra.mxu0 0.0
        %3226 = vmatprep.subr.mxu0 0.0
        %3227 = vmatpush1.msra.mxu0 %v710
        %3228 = vmatprep.subr.mxu0 0.0
        %3229 = vmatpush1.msra.mxu0 %v709
        %3230 = vmatprep.subr.mxu0 0.0
        %3231 = vmatpush2.msra.mxu0 0.0
        %3232 = vmatprep.subr.mxu0 0.0
        %3233 = vmatpush2.msra.mxu0 0.0
        %3234 = vmatprep.subr.mxu0 0.0
        %3235 = vmatpush2.msra.mxu0 0.0
        %3236 = vmatprep.subr.mxu0 0.0
        %3237 = vmatpush2.msra.mxu0 0.0
        %3238 = vmatprep.subr.mxu0 0.0
        %3239 = vmatpush2.msra.mxu0 0.0
        %3240 = vmatprep.subr.mxu0 0.0
        %3241 = vmatpush2.msra.mxu0 0.0
        %3242 = vmatprep.subr.mxu0 0.0
        %3243 = vmatpush2.msra.mxu0 0.0
        %3244 = vmatprep.subr.mxu0 0.0
        %3245 = vmatpush2.msra.mxu0 0.0
        %3246 = vmatprep.subr.mxu0 0.0
        %3247 = vmatpush2.msra.mxu0 0.0
        %3248 = vmatprep.subr.mxu0 0.0
        %3249 = vmatpush2.msra.mxu0 0.0
        %3250 = vmatprep.subr.mxu0 0.0
        %3251 = vmatpush2.msra.mxu0 0.0
        %3252 = vmatprep.subr.mxu0 0.0
        %3253 = vmatpush2.msra.mxu0 0.0
        %3254 = vmatprep.subr.mxu0 0.0
        %3255 = vmatpush2.msra.mxu0 0.0
        %3256 = vmatprep.subr.mxu0 0.0
        %3257 = vmatpush2.msra.mxu0 0.0
        %3258 = vmatprep.subr.mxu0 0.0
        %3259 = vmatpush2.msra.mxu0 0.0
        %3260 = vmatprep.subr.mxu0 0.0
        %3261 = vmatpush2.msra.mxu0 0.0
        %3262 = vmatprep.mubr.f32.mxu0 0.0
        %3263 = vmatmul.mubr.f32.gmra.mxu0 %v3196
        %v3264 = vpop.f32.mrf.mxu0
        %v3265 = vadd.f32 0.0, %v3264
        %v3266 = vpop.f32.mrf.mxu0
        %3267 = vdwg.mxu0
        %v3269 = vsel %vm600, %v3048, 0
        %3271 = vmatprep.subr.mxu0 0.0
        %3272 = vmatpush1.msra.mxu0 0.0
        %3273 = vmatprep.subr.mxu0 0.0
        %3274 = vmatpush1.msra.mxu0 0.0
        %3275 = vmatprep.subr.mxu0 0.0
        %3276 = vmatpush1.msra.mxu0 0.0
        %3277 = vmatprep.subr.mxu0 0.0
        %3278 = vmatpush1.msra.mxu0 0.0
        %3279 = vmatprep.subr.mxu0 0.0
        %3280 = vmatpush1.msra.mxu0 0.0
        %3281 = vmatprep.subr.mxu0 0.0
        %3282 = vmatpush1.msra.mxu0 0.0
        %3283 = vmatprep.subr.mxu0 0.0
        %3284 = vmatpush1.msra.mxu0 0.0
        %3285 = vmatprep.subr.mxu0 0.0
        %3286 = vmatpush1.msra.mxu0 0.0
        %3287 = vmatprep.subr.mxu0 0.0
        %3288 = vmatpush1.msra.mxu0 0.0
        %3289 = vmatprep.subr.mxu0 0.0
        %3290 = vmatpush1.msra.mxu0 0.0
        %3291 = vmatprep.subr.mxu0 0.0
        %3292 = vmatpush1.msra.mxu0 0.0
        %3293 = vmatprep.subr.mxu0 0.0
        %3294 = vmatpush1.msra.mxu0 0.0
        %3295 = vmatprep.subr.mxu0 0.0
        %3296 = vmatpush1.msra.mxu0 0.0
        %3297 = vmatprep.subr.mxu0 0.0
        %3298 = vmatpush1.msra.mxu0 0.0
        %3299 = vmatprep.subr.mxu0 0.0
        %3300 = vmatpush1.msra.mxu0 %v712
        %3301 = vmatprep.subr.mxu0 0.0
        %3302 = vmatpush1.msra.mxu0 %v711
        %3303 = vmatprep.subr.mxu0 0.0
        %3304 = vmatpush2.msra.mxu0 0.0
        %3305 = vmatprep.subr.mxu0 0.0
        %3306 = vmatpush2.msra.mxu0 0.0
        %3307 = vmatprep.subr.mxu0 0.0
        %3308 = vmatpush2.msra.mxu0 0.0
        %3309 = vmatprep.subr.mxu0 0.0
        %3310 = vmatpush2.msra.mxu0 0.0
        %3311 = vmatprep.subr.mxu0 0.0
        %3312 = vmatpush2.msra.mxu0 0.0
        %3313 = vmatprep.subr.mxu0 0.0
        %3314 = vmatpush2.msra.mxu0 0.0
        %3315 = vmatprep.subr.mxu0 0.0
        %3316 = vmatpush2.msra.mxu0 0.0
        %3317 = vmatprep.subr.mxu0 0.0
        %3318 = vmatpush2.msra.mxu0 0.0
        %3319 = vmatprep.subr.mxu0 0.0
        %3320 = vmatpush2.msra.mxu0 0.0
        %3321 = vmatprep.subr.mxu0 0.0
        %3322 = vmatpush2.msra.mxu0 0.0
        %3323 = vmatprep.subr.mxu0 0.0
        %3324 = vmatpush2.msra.mxu0 0.0
        %3325 = vmatprep.subr.mxu0 0.0
        %3326 = vmatpush2.msra.mxu0 0.0
        %3327 = vmatprep.subr.mxu0 0.0
        %3328 = vmatpush2.msra.mxu0 0.0
        %3329 = vmatprep.subr.mxu0 0.0
        %3330 = vmatpush2.msra.mxu0 0.0
        %3331 = vmatprep.subr.mxu0 0.0
        %3332 = vmatpush2.msra.mxu0 0.0
        %3333 = vmatprep.subr.mxu0 0.0
        %3334 = vmatpush2.msra.mxu0 0.0
        %3335 = vmatprep.mubr.f32.mxu0 0.0
        %3336 = vmatmul.mubr.f32.gmra.mxu0 %v3269
        %v3337 = vpop.f32.mrf.mxu0
        %v3338 = vadd.f32 0.0, %v3337
        %v3339 = vpop.f32.mrf.mxu0
        %3340 = vdwg.mxu0
        %v3341 = vadd.f32 %v1697, %v3119
        %v3342 = vadd.f32 %v3341, %v3192
        %v3343 = vadd.f32 %v3342, %v3265
        %v3344 = vadd.f32 %v3343, %v3338
        %v3345 = vadd.f32 %v440, %v3344
        %3346 = vst.msk [vmem:[#allocation5 + $0x8] sm:$0xff] %vm443, %v3345
        %v3347 = vld [vmem:[#allocation5] sm:$0xff]
        %v3348 = vld [vmem:[#allocation5 + $0x8] sm:$0xff]
        %v3349 = vld [vmem:[%s7] sm:$0x1]
        %v3350 = vld [vmem:[%s8] sm:$0x1]
        %v3351 = vsel %vm443, %v3347, 0.0
        %3352 = vadd.xlane.f32.xlu0 %v3351
        %v3353 = vpop.xlane.xlu0 %3352
        %v3354 = vsel %vm443, %v3348, 0.0
        %3355 = vadd.xlane.f32.xlu0 %v3354
        %v3356 = vpop.xlane.xlu0 %3355
        %v3357 = vmul.f32 %v3353, %v450
        %v3358 = vmul.f32 %v3356, %v450
        %v3359 = vsub.f32 %v3347, %v3357
        %v3360 = vsub.f32 %v3348, %v3358
        %v3361 = vmul.f32 %v3359, %v3359
        %v3362 = vmul.f32 %v3360, %v3360
        %v3363 = vsel %vm443, %v3361, 0.0
        %3364 = vadd.xlane.f32.xlu0 %v3363
        %v3365 = vpop.xlane.xlu0 %3364
        %v3366 = vsel %vm443, %v3362, 0.0
        %3367 = vadd.xlane.f32.xlu0 %v3366
        %v3368 = vpop.xlane.xlu0 %3367
        %v3369 = vmul.f32 %v3365, %v450
        %v3370 = vmul.f32 %v3368, %v450
        %v3371 = vadd.f32 %v3369, 1e-05
        %v3372 = vadd.f32 %v3370, 1e-05
        %v3373 = vrsqrt.pop %v3371
        %v3374 = vrsqrt.pop %v3372
        %v3375 = vmul.f32 %v3359, %v3373
        %v3376 = vmul.f32 %v3360, %v3374
        %v3378 = vlaneseq
        %v3379 = vshrl.u32 %v3378, 7
        %v3380 = vsub.s32 0, %v3379
        %v3381 = vrot.slane %v3349, %v3380
        %v3383 = vmul.f32 %v3375, %v3381
        %v3384 = vmul.f32 %v3376, %v3381
        %v3386 = vlaneseq
        %v3387 = vshrl.u32 %v3386, 7
        %v3388 = vsub.s32 0, %v3387
        %v3389 = vrot.slane %v3350, %v3388
        %v3391 = vadd.f32 %v3383, %v3389
        %v3392 = vadd.f32 %v3384, %v3389
        %v3393 = vld [vmem:[%s9] sm:$0xff]
        %v3394 = vld [vmem:[%s9 + $0x10] sm:$0xff]
        %v3395 = vld [vmem:[%s9 + $0x20] sm:$0xff]
        %v3396 = vld [vmem:[%s9 + $0x30] sm:$0xff]
        %v3397 = vld [vmem:[%s9 + $0x40] sm:$0xff]
        %v3398 = vld [vmem:[%s9 + $0x50] sm:$0xff]
        %v3399 = vld [vmem:[%s9 + $0x60] sm:$0xff]
        %v3400 = vld [vmem:[%s9 + $0x70] sm:$0xff]
        %v3401 = vld [vmem:[%s10] sm:$0x1]
        %v3403 = vlaneseq
        %v3404 = vshrl.u32 %v3403, 7
        %v3405 = vsub.s32 0, %v3404
        %v3406 = vrot.slane %v3401, %v3405
        %v3409 = vsel %vm443, %v3391, 0
        %v3412 = vsel %vm443, %v3392, 0
        %3414 = vmatprep.subr.mxu0 0.0
        %3415 = vmatpush1.msra.mxu0 0.0
        %3416 = vmatprep.subr.mxu0 0.0
        %3417 = vmatpush1.msra.mxu0 0.0
        %3418 = vmatprep.subr.mxu0 0.0
        %3419 = vmatpush1.msra.mxu0 0.0
        %3420 = vmatprep.subr.mxu0 0.0
        %3421 = vmatpush1.msra.mxu0 0.0
        %3422 = vmatprep.subr.mxu0 0.0
        %3423 = vmatpush1.msra.mxu0 0.0
        %3424 = vmatprep.subr.mxu0 0.0
        %3425 = vmatpush1.msra.mxu0 0.0
        %3426 = vmatprep.subr.mxu0 0.0
        %3427 = vmatpush1.msra.mxu0 0.0
        %3428 = vmatprep.subr.mxu0 0.0
        %3429 = vmatpush1.msra.mxu0 0.0
        %3430 = vmatprep.subr.mxu0 0.0
        %3431 = vmatpush1.msra.mxu0 %v3400
        %3432 = vmatprep.subr.mxu0 0.0
        %3433 = vmatpush1.msra.mxu0 %v3399
        %3434 = vmatprep.subr.mxu0 0.0
        %3435 = vmatpush1.msra.mxu0 %v3398
        %3436 = vmatprep.subr.mxu0 0.0
        %3437 = vmatpush1.msra.mxu0 %v3397
        %3438 = vmatprep.subr.mxu0 0.0
        %3439 = vmatpush1.msra.mxu0 %v3396
        %3440 = vmatprep.subr.mxu0 0.0
        %3441 = vmatpush1.msra.mxu0 %v3395
        %3442 = vmatprep.subr.mxu0 0.0
        %3443 = vmatpush1.msra.mxu0 %v3394
        %3444 = vmatprep.subr.mxu0 0.0
        %3445 = vmatpush1.msra.mxu0 %v3393
        %3446 = vmatprep.subr.mxu0 0.0
        %3447 = vmatpush2.msra.mxu0 0.0
        %3448 = vmatprep.subr.mxu0 0.0
        %3449 = vmatpush2.msra.mxu0 0.0
        %3450 = vmatprep.subr.mxu0 0.0
        %3451 = vmatpush2.msra.mxu0 0.0
        %3452 = vmatprep.subr.mxu0 0.0
        %3453 = vmatpush2.msra.mxu0 0.0
        %3454 = vmatprep.subr.mxu0 0.0
        %3455 = vmatpush2.msra.mxu0 0.0
        %3456 = vmatprep.subr.mxu0 0.0
        %3457 = vmatpush2.msra.mxu0 0.0
        %3458 = vmatprep.subr.mxu0 0.0
        %3459 = vmatpush2.msra.mxu0 0.0
        %3460 = vmatprep.subr.mxu0 0.0
        %3461 = vmatpush2.msra.mxu0 0.0
        %3462 = vmatprep.subr.mxu0 0.0
        %3463 = vmatpush2.msra.mxu0 0.0
        %3464 = vmatprep.subr.mxu0 0.0
        %3465 = vmatpush2.msra.mxu0 0.0
        %3466 = vmatprep.subr.mxu0 0.0
        %3467 = vmatpush2.msra.mxu0 0.0
        %3468 = vmatprep.subr.mxu0 0.0
        %3469 = vmatpush2.msra.mxu0 0.0
        %3470 = vmatprep.subr.mxu0 0.0
        %3471 = vmatpush2.msra.mxu0 0.0
        %3472 = vmatprep.subr.mxu0 0.0
        %3473 = vmatpush2.msra.mxu0 0.0
        %3474 = vmatprep.subr.mxu0 0.0
        %3475 = vmatpush2.msra.mxu0 0.0
        %3476 = vmatprep.subr.mxu0 0.0
        %3477 = vmatpush2.msra.mxu0 0.0
        %3478 = vmatprep.mubr.f32.mxu0 0.0
        %3479 = vmatmul.mubr.f32.gmra.mxu0 %v3409
        %v3480 = vpop.f32.mrf.mxu0
        %v3481 = vadd.f32 %v3406, %v3480
        %v3482 = vpop.f32.mrf.mxu0
        %3483 = vmatprep.mubr.f32.mxu0 0.0
        %3484 = vmatmul.mubr.f32.gmra.mxu0 %v3412
        %v3485 = vpop.f32.mrf.mxu0
        %v3486 = vadd.f32 %v3406, %v3485
        %v3487 = vpop.f32.mrf.mxu0
        %3488 = vdwg.mxu0
        %v3489 = vmul.f32 %v3481, 0.5
        %v3490 = vmul.f32 %v3486, 0.5
        %v3491 = vmul.f32 %v3481, 0.70710677
        %v3492 = vmul.f32 %v3486, 0.70710677
        %v3493 = verf.f32.pop %v3491
        %v3494 = verf.f32.pop %v3492
        %v3495 = vadd.f32 %v3493, 1.0
        %v3496 = vadd.f32 %v3494, 1.0
        %v3497 = vmul.f32 %v3489, %v3495
        %v3498 = vmul.f32 %v3490, %v3496
        %v3499 = vld [vmem:[%s11] sm:$0xff]
        %v3500 = vld [vmem:[%s11 + $0x8] sm:$0xff]
        %v3501 = vld [vmem:[%s11 + $0x10] sm:$0xff]
        %v3502 = vld [vmem:[%s11 + $0x18] sm:$0xff]
        %v3503 = vld [vmem:[%s11 + $0x20] sm:$0xff]
        %v3504 = vld [vmem:[%s11 + $0x28] sm:$0xff]
        %v3505 = vld [vmem:[%s11 + $0x30] sm:$0xff]
        %v3506 = vld [vmem:[%s11 + $0x38] sm:$0xff]
        %v3507 = vld [vmem:[%s11 + $0x40] sm:$0xff]
        %v3508 = vld [vmem:[%s11 + $0x48] sm:$0xff]
        %v3509 = vld [vmem:[%s11 + $0x50] sm:$0xff]
        %v3510 = vld [vmem:[%s11 + $0x58] sm:$0xff]
        %v3511 = vld [vmem:[%s11 + $0x60] sm:$0xff]
        %v3512 = vld [vmem:[%s11 + $0x68] sm:$0xff]
        %v3513 = vld [vmem:[%s11 + $0x70] sm:$0xff]
        %v3514 = vld [vmem:[%s11 + $0x78] sm:$0xff]
        %v3515 = vld [vmem:[%s9 + $0x8] sm:$0xff]
        %v3516 = vld [vmem:[%s9 + $0x18] sm:$0xff]
        %v3517 = vld [vmem:[%s9 + $0x28] sm:$0xff]
        %v3518 = vld [vmem:[%s9 + $0x38] sm:$0xff]
        %v3519 = vld [vmem:[%s9 + $0x48] sm:$0xff]
        %v3520 = vld [vmem:[%s9 + $0x58] sm:$0xff]
        %v3521 = vld [vmem:[%s9 + $0x68] sm:$0xff]
        %v3522 = vld [vmem:[%s9 + $0x78] sm:$0xff]
        %v3523 = vld [vmem:[%s10 + $0x1] sm:$0x1]
        %v3525 = vlaneseq
        %v3526 = vshrl.u32 %v3525, 7
        %v3527 = vsub.s32 0, %v3526
        %v3528 = vrot.slane %v3523, %v3527
        %3530 = vmatprep.subr.mxu0 0.0
        %3531 = vmatpush1.msra.mxu0 0.0
        %3532 = vmatprep.subr.mxu0 0.0
        %3533 = vmatpush1.msra.mxu0 0.0
        %3534 = vmatprep.subr.mxu0 0.0
        %3535 = vmatpush1.msra.mxu0 0.0
        %3536 = vmatprep.subr.mxu0 0.0
        %3537 = vmatpush1.msra.mxu0 0.0
        %3538 = vmatprep.subr.mxu0 0.0
        %3539 = vmatpush1.msra.mxu0 0.0
        %3540 = vmatprep.subr.mxu0 0.0
        %3541 = vmatpush1.msra.mxu0 0.0
        %3542 = vmatprep.subr.mxu0 0.0
        %3543 = vmatpush1.msra.mxu0 0.0
        %3544 = vmatprep.subr.mxu0 0.0
        %3545 = vmatpush1.msra.mxu0 0.0
        %3546 = vmatprep.subr.mxu0 0.0
        %3547 = vmatpush1.msra.mxu0 %v3522
        %3548 = vmatprep.subr.mxu0 0.0
        %3549 = vmatpush1.msra.mxu0 %v3521
        %3550 = vmatprep.subr.mxu0 0.0
        %3551 = vmatpush1.msra.mxu0 %v3520
        %3552 = vmatprep.subr.mxu0 0.0
        %3553 = vmatpush1.msra.mxu0 %v3519
        %3554 = vmatprep.subr.mxu0 0.0
        %3555 = vmatpush1.msra.mxu0 %v3518
        %3556 = vmatprep.subr.mxu0 0.0
        %3557 = vmatpush1.msra.mxu0 %v3517
        %3558 = vmatprep.subr.mxu0 0.0
        %3559 = vmatpush1.msra.mxu0 %v3516
        %3560 = vmatprep.subr.mxu0 0.0
        %3561 = vmatpush1.msra.mxu0 %v3515
        %3562 = vmatprep.subr.mxu0 0.0
        %3563 = vmatpush2.msra.mxu0 0.0
        %3564 = vmatprep.subr.mxu0 0.0
        %3565 = vmatpush2.msra.mxu0 0.0
        %3566 = vmatprep.subr.mxu0 0.0
        %3567 = vmatpush2.msra.mxu0 0.0
        %3568 = vmatprep.subr.mxu0 0.0
        %3569 = vmatpush2.msra.mxu0 0.0
        %3570 = vmatprep.subr.mxu0 0.0
        %3571 = vmatpush2.msra.mxu0 0.0
        %3572 = vmatprep.subr.mxu0 0.0
        %3573 = vmatpush2.msra.mxu0 0.0
        %3574 = vmatprep.subr.mxu0 0.0
        %3575 = vmatpush2.msra.mxu0 0.0
        %3576 = vmatprep.subr.mxu0 0.0
        %3577 = vmatpush2.msra.mxu0 0.0
        %3578 = vmatprep.subr.mxu0 0.0
        %3579 = vmatpush2.msra.mxu0 0.0
        %3580 = vmatprep.subr.mxu0 0.0
        %3581 = vmatpush2.msra.mxu0 0.0
        %3582 = vmatprep.subr.mxu0 0.0
        %3583 = vmatpush2.msra.mxu0 0.0
        %3584 = vmatprep.subr.mxu0 0.0
        %3585 = vmatpush2.msra.mxu0 0.0
        %3586 = vmatprep.subr.mxu0 0.0
        %3587 = vmatpush2.msra.mxu0 0.0
        %3588 = vmatprep.subr.mxu0 0.0
        %3589 = vmatpush2.msra.mxu0 0.0
        %3590 = vmatprep.subr.mxu0 0.0
        %3591 = vmatpush2.msra.mxu0 0.0
        %3592 = vmatprep.subr.mxu0 0.0
        %3593 = vmatpush2.msra.mxu0 0.0
        %3594 = vmatprep.mubr.f32.mxu0 0.0
        %3595 = vmatmul.mubr.f32.gmra.mxu0 %v3409
        %v3596 = vpop.f32.mrf.mxu0
        %v3597 = vadd.f32 %v3528, %v3596
        %v3598 = vpop.f32.mrf.mxu0
        %3599 = vmatprep.mubr.f32.mxu0 0.0
        %3600 = vmatmul.mubr.f32.gmra.mxu0 %v3412
        %v3601 = vpop.f32.mrf.mxu0
        %v3602 = vadd.f32 %v3528, %v3601
        %v3603 = vpop.f32.mrf.mxu0
        %3604 = vdwg.mxu0
        %v3605 = vmul.f32 %v3597, 0.5
        %v3606 = vmul.f32 %v3602, 0.5
        %v3607 = vmul.f32 %v3597, 0.70710677
        %v3608 = vmul.f32 %v3602, 0.70710677
        %v3609 = verf.f32.pop %v3607
        %v3610 = verf.f32.pop %v3608
        %v3611 = vadd.f32 %v3609, 1.0
        %v3612 = vadd.f32 %v3610, 1.0
        %v3613 = vmul.f32 %v3605, %v3611
        %v3614 = vmul.f32 %v3606, %v3612
        %v3615 = vld [vmem:[%s11 + $0x80] sm:$0xff]
        %v3616 = vld [vmem:[%s11 + $0x88] sm:$0xff]
        %v3617 = vld [vmem:[%s11 + $0x90] sm:$0xff]
        %v3618 = vld [vmem:[%s11 + $0x98] sm:$0xff]
        %v3619 = vld [vmem:[%s11 + $0xa0] sm:$0xff]
        %v3620 = vld [vmem:[%s11 + $0xa8] sm:$0xff]
        %v3621 = vld [vmem:[%s11 + $0xb0] sm:$0xff]
        %v3622 = vld [vmem:[%s11 + $0xb8] sm:$0xff]
        %v3623 = vld [vmem:[%s11 + $0xc0] sm:$0xff]
        %v3624 = vld [vmem:[%s11 + $0xc8] sm:$0xff]
        %v3625 = vld [vmem:[%s11 + $0xd0] sm:$0xff]
        %v3626 = vld [vmem:[%s11 + $0xd8] sm:$0xff]
        %v3627 = vld [vmem:[%s11 + $0xe0] sm:$0xff]
        %v3628 = vld [vmem:[%s11 + $0xe8] sm:$0xff]
        %v3629 = vld [vmem:[%s11 + $0xf0] sm:$0xff]
        %v3630 = vld [vmem:[%s11 + $0xf8] sm:$0xff]
        %3631 = vmatprep.subr.mxu0 0.0
        %3632 = vmatpush1.msra.mxu0 %v3630
        %3633 = vmatprep.subr.mxu0 0.0
        %3634 = vmatpush1.msra.mxu0 %v3629
        %3635 = vmatprep.subr.mxu0 0.0
        %3636 = vmatpush1.msra.mxu0 %v3628
        %3637 = vmatprep.subr.mxu0 0.0
        %3638 = vmatpush1.msra.mxu0 %v3627
        %3639 = vmatprep.subr.mxu0 0.0
        %3640 = vmatpush1.msra.mxu0 %v3626
        %3641 = vmatprep.subr.mxu0 0.0
        %3642 = vmatpush1.msra.mxu0 %v3625
        %3643 = vmatprep.subr.mxu0 0.0
        %3644 = vmatpush1.msra.mxu0 %v3624
        %3645 = vmatprep.subr.mxu0 0.0
        %3646 = vmatpush1.msra.mxu0 %v3623
        %3647 = vmatprep.subr.mxu0 0.0
        %3648 = vmatpush1.msra.mxu0 %v3622
        %3649 = vmatprep.subr.mxu0 0.0
        %3650 = vmatpush1.msra.mxu0 %v3621
        %3651 = vmatprep.subr.mxu0 0.0
        %3652 = vmatpush1.msra.mxu0 %v3620
        %3653 = vmatprep.subr.mxu0 0.0
        %3654 = vmatpush1.msra.mxu0 %v3619
        %3655 = vmatprep.subr.mxu0 0.0
        %3656 = vmatpush1.msra.mxu0 %v3618
        %3657 = vmatprep.subr.mxu0 0.0
        %3658 = vmatpush1.msra.mxu0 %v3617
        %3659 = vmatprep.subr.mxu0 0.0
        %3660 = vmatpush1.msra.mxu0 %v3616
        %3661 = vmatprep.subr.mxu0 0.0
        %3662 = vmatpush1.msra.mxu0 %v3615
        %3663 = vmatprep.subr.mxu0 0.0
        %3664 = vmatpush2.msra.mxu0 0.0
        %3665 = vmatprep.subr.mxu0 0.0
        %3666 = vmatpush2.msra.mxu0 0.0
        %3667 = vmatprep.subr.mxu0 0.0
        %3668 = vmatpush2.msra.mxu0 0.0
        %3669 = vmatprep.subr.mxu0 0.0
        %3670 = vmatpush2.msra.mxu0 0.0
        %3671 = vmatprep.subr.mxu0 0.0
        %3672 = vmatpush2.msra.mxu0 0.0
        %3673 = vmatprep.subr.mxu0 0.0
        %3674 = vmatpush2.msra.mxu0 0.0
        %3675 = vmatprep.subr.mxu0 0.0
        %3676 = vmatpush2.msra.mxu0 0.0
        %3677 = vmatprep.subr.mxu0 0.0
        %3678 = vmatpush2.msra.mxu0 0.0
        %3679 = vmatprep.subr.mxu0 0.0
        %3680 = vmatpush2.msra.mxu0 0.0
        %3681 = vmatprep.subr.mxu0 0.0
        %3682 = vmatpush2.msra.mxu0 0.0
        %3683 = vmatprep.subr.mxu0 0.0
        %3684 = vmatpush2.msra.mxu0 0.0
        %3685 = vmatprep.subr.mxu0 0.0
        %3686 = vmatpush2.msra.mxu0 0.0
        %3687 = vmatprep.subr.mxu0 0.0
        %3688 = vmatpush2.msra.mxu0 0.0
        %3689 = vmatprep.subr.mxu0 0.0
        %3690 = vmatpush2.msra.mxu0 0.0
        %3691 = vmatprep.subr.mxu0 0.0
        %3692 = vmatpush2.msra.mxu0 0.0
        %3693 = vmatprep.subr.mxu0 0.0
        %3694 = vmatpush2.msra.mxu0 0.0
        %3695 = vmatprep.mubr.f32.mxu0 0.0
        %3696 = vmatmul.mubr.f32.gmra.mxu0 %v3613
        %v3697 = vpop.f32.mrf.mxu0
        %v3698 = vadd.f32 0.0, %v3697
        %v3699 = vpop.f32.mrf.mxu0
        %3700 = vmatprep.mubr.f32.mxu0 0.0
        %3701 = vmatmul.mubr.f32.gmra.mxu0 %v3614
        %v3702 = vpop.f32.mrf.mxu0
        %v3703 = vadd.f32 0.0, %v3702
        %v3704 = vpop.f32.mrf.mxu0
        %3705 = vdwg.mxu0
        %3706 = vmatprep.subr.mxu0 0.0
        %3707 = vmatpush1.msra.mxu0 %v3514
        %3708 = vmatprep.subr.mxu0 0.0
        %3709 = vmatpush1.msra.mxu0 %v3513
        %3710 = vmatprep.subr.mxu0 0.0
        %3711 = vmatpush1.msra.mxu0 %v3512
        %3712 = vmatprep.subr.mxu0 0.0
        %3713 = vmatpush1.msra.mxu0 %v3511
        %3714 = vmatprep.subr.mxu0 0.0
        %3715 = vmatpush1.msra.mxu0 %v3510
        %3716 = vmatprep.subr.mxu0 0.0
        %3717 = vmatpush1.msra.mxu0 %v3509
        %3718 = vmatprep.subr.mxu0 0.0
        %3719 = vmatpush1.msra.mxu0 %v3508
        %3720 = vmatprep.subr.mxu0 0.0
        %3721 = vmatpush1.msra.mxu0 %v3507
        %3722 = vmatprep.subr.mxu0 0.0
        %3723 = vmatpush1.msra.mxu0 %v3506
        %3724 = vmatprep.subr.mxu0 0.0
        %3725 = vmatpush1.msra.mxu0 %v3505
        %3726 = vmatprep.subr.mxu0 0.0
        %3727 = vmatpush1.msra.mxu0 %v3504
        %3728 = vmatprep.subr.mxu0 0.0
        %3729 = vmatpush1.msra.mxu0 %v3503
        %3730 = vmatprep.subr.mxu0 0.0
        %3731 = vmatpush1.msra.mxu0 %v3502
        %3732 = vmatprep.subr.mxu0 0.0
        %3733 = vmatpush1.msra.mxu0 %v3501
        %3734 = vmatprep.subr.mxu0 0.0
        %3735 = vmatpush1.msra.mxu0 %v3500
        %3736 = vmatprep.subr.mxu0 0.0
        %3737 = vmatpush1.msra.mxu0 %v3499
        %3738 = vmatprep.subr.mxu0 0.0
        %3739 = vmatpush2.msra.mxu0 0.0
        %3740 = vmatprep.subr.mxu0 0.0
        %3741 = vmatpush2.msra.mxu0 0.0
        %3742 = vmatprep.subr.mxu0 0.0
        %3743 = vmatpush2.msra.mxu0 0.0
        %3744 = vmatprep.subr.mxu0 0.0
        %3745 = vmatpush2.msra.mxu0 0.0
        %3746 = vmatprep.subr.mxu0 0.0
        %3747 = vmatpush2.msra.mxu0 0.0
        %3748 = vmatprep.subr.mxu0 0.0
        %3749 = vmatpush2.msra.mxu0 0.0
        %3750 = vmatprep.subr.mxu0 0.0
        %3751 = vmatpush2.msra.mxu0 0.0
        %3752 = vmatprep.subr.mxu0 0.0
        %3753 = vmatpush2.msra.mxu0 0.0
        %3754 = vmatprep.subr.mxu0 0.0
        %3755 = vmatpush2.msra.mxu0 0.0
        %3756 = vmatprep.subr.mxu0 0.0
        %3757 = vmatpush2.msra.mxu0 0.0
        %3758 = vmatprep.subr.mxu0 0.0
        %3759 = vmatpush2.msra.mxu0 0.0
        %3760 = vmatprep.subr.mxu0 0.0
        %3761 = vmatpush2.msra.mxu0 0.0
        %3762 = vmatprep.subr.mxu0 0.0
        %3763 = vmatpush2.msra.mxu0 0.0
        %3764 = vmatprep.subr.mxu0 0.0
        %3765 = vmatpush2.msra.mxu0 0.0
        %3766 = vmatprep.subr.mxu0 0.0
        %3767 = vmatpush2.msra.mxu0 0.0
        %3768 = vmatprep.subr.mxu0 0.0
        %3769 = vmatpush2.msra.mxu0 0.0
        %3770 = vmatprep.mubr.f32.mxu0 0.0
        %3771 = vmatmul.mubr.f32.gmra.mxu0 %v3497
        %v3772 = vpop.f32.mrf.mxu0
        %v3773 = vadd.f32 %v3698, %v3772
        %v3774 = vpop.f32.mrf.mxu0
        %3775 = vmatprep.mubr.f32.mxu0 0.0
        %3776 = vmatmul.mubr.f32.gmra.mxu0 %v3498
        %v3777 = vpop.f32.mrf.mxu0
        %v3778 = vadd.f32 %v3703, %v3777
        %v3779 = vpop.f32.mrf.mxu0
        %3780 = vdwg.mxu0
        %v3781 = vadd.f32 %v3347, %v3773
        %v3782 = vadd.f32 %v3348, %v3778
        %v3783 = vld [vmem:[%s12] sm:$0x1]
        %v3785 = vlaneseq
        %v3786 = vshrl.u32 %v3785, 7
        %v3787 = vsub.s32 0, %v3786
        %v3788 = vrot.slane %v3783, %v3787
        %v3790 = vadd.f32 %v3781, %v3788
        %v3791 = vadd.f32 %v3782, %v3788
        %3792 = vst.msk [vmem:[%s433] sm:$0xff] %vm443, %v3790
        %3793 = vst.msk [vmem:[%s433 + $0x8] sm:$0xff] %vm443, %v3791
        %s3794 = sand.u32 %s313, 1
        %s3795 = scalar_lea.sflag [#allocation7], %s3794
        %s3796 = sand.u32 %s313, 1
        %s3797 = smul.addr %s3796, 16
        %s3798 = scalar_lea.vmem [#allocation6], %s3797
        // Predicated region
        $region73: #{tpu_custom_call.1} parent=71 // pred_check
          %p3799 = pneg %p323
        $region74: #{tpu_custom_call.1} parent=71 // pred_check_branch
          %3801 = sbr.rel (%p3799) target = $region76
        $region75: #{tpu_custom_call.1} parent=71 // pred_region
          %s3803 = ssub.s32 256, 256
          %3804 = vsyncadd %s3795, %s3803
          %s3805 = smul.addr %s27, 2
          %s3806 = smul.addr %s3805, 128
          %s3807 = scalar_lea.hbm %s13, %s3806
          %s3808 = sshll.u32 %s3798, 4
          %s3809 = int_to_ptr.vmem [resolvable:$true] %s3808
          %3814 = dma.vmem_to_hbm [thread:$0]  %s3809, 256, %s3807, %s3795, 128, 128, 8
        $region76: #{tpu_custom_call.1} parent=71 // pred_fallthru
          _
      $region72: #{tpu_custom_call.1} parent=5 // pred_fallthru
        _
      %p3815 = scmp.le.s32.totalorder 2, %s22
      // Predicated region
      $region77: #{tpu_custom_call.1} parent=5 // pred_check
        %p3816 = pneg %p3815
      $region78: #{tpu_custom_call.1} parent=5 // pred_check_branch
        %3818 = sbr.rel (%p3816) target = $region80
      $region79: #{tpu_custom_call.1} parent=5 // pred_region
        %s3819 = ssub.s32 %s22, 2
        // Predicated region
        $region81: #{tpu_custom_call.1} parent=79 // pred_check
          %p3820 = pneg %p329
        $region82: #{tpu_custom_call.1} parent=79 // pred_check_branch
          %3822 = sbr.rel (%p3820) target = $region84
        $region83: #{tpu_custom_call.1} parent=79 // pred_region
          %s3823 = sand.u32 %s314, 1
          %s3824 = scalar_lea.sflag [#allocation7], %s3823
          %s3825 = sand.u32 %s314, 1
          %s3826 = smul.addr %s3825, 16
          %s3827 = scalar_lea.vmem [#allocation6], %s3826
          %3828 = dma.done %s3824, 256
        $region84: #{tpu_custom_call.1} parent=79 // pred_fallthru
          _
      $region80: #{tpu_custom_call.1} parent=5 // pred_fallthru
        _
    $region6: #{tpu_custom_call.1} parent=1 // loop_footer
      %s26 = sadd.s32 1, %s22
    $region7: #{tpu_custom_call.1} parent=1 // loop_footer_branch
      %21 = sbr.rel target = $region3
    $region8: #{tpu_custom_call.1} parent=1 // loop_exit
      _
    %3829 = vsyncpa [#allocation7], 1
    %s3830 = scalar_lea.sflag [#allocation7], 1
    %3831 = vsyncpa %s3830, 1

</llo_original>
